<compile_context>
chip_gen: v7x
topology: tpu7x:2x2x1
jax: 0.10.0
libtpu: 0.0.40
codegen_flags: <defaults>
</compile_context>

<pallas_src>
import math
import functools

import jax
import jax.numpy as jnp
from jax import lax
from jax.experimental import pallas as pl
from jax.experimental.pallas import tpu as pltpu

_BN_SCALE = 1.0 / math.sqrt(1.0 + 1e-5)   # eval-mode BN with init stats


# ----------------------------------------------------------------------------
# Generation-aware VMEM budget (v5e/v6e: 128 MiB physical, v7x: 64 MiB per TC)
# ----------------------------------------------------------------------------
def _vmem_budget_and_limit():
    cap = 64 * 1024 * 1024            # conservative default (safe on every gen)
    try:
        info = pltpu.get_tpu_info()
        c = int(getattr(info, "vmem_capacity_bytes", 0) or 0)
        if c > 0:
            cap = c
    except Exception:
        pass
    budget = min(cap // 2, 64 * 1024 * 1024)          # tile-sizing budget
    limit = min((cap * 3) // 4, 96 * 1024 * 1024)     # scoped VMEM limit
    return int(budget), int(limit)


_VMEM_BUDGET, _VMEM_LIMIT = _vmem_budget_and_limit()

# Pallas routing guard: lane-dense output tiles and a non-trivial contraction.
_PALLAS_MIN_M = 128
_PALLAS_MIN_N = 128
_PALLAS_MIN_K = 128


# ----------------------------------------------------------------------------
# Fused, K-blocked Pallas matmul:  act((x @ w + bias) * scale + residual)
# ----------------------------------------------------------------------------
def _make_mm_kernel(has_bias, has_res, scale, act_relu):
    def kernel(*refs):
        i = 0
        x_ref = refs[i]; i += 1
        w_ref = refs[i]; i += 1
        if has_bias:
            b_ref = refs[i]; i += 1
        if has_res:
            r_ref = refs[i]; i += 1
        o_ref = refs[i]; i += 1
        acc_ref = refs[i]

        k = pl.program_id(2)

        @pl.when(k == 0)
        def _():
            acc_ref[...] = jnp.zeros_like(acc_ref)

        acc_ref[...] += jnp.dot(x_ref[...], w_ref[...],
                                preferred_element_type=jnp.float32)

        @pl.when(k == pl.num_programs(2) - 1)
        def _():
            acc = acc_ref[...]
            if has_bias:
                acc = acc + b_ref[...]                  # (1, tn) broadcast
            if scale != 1.0:
                acc = acc * scale
            if has_res:
                acc = acc + r_ref[...].astype(jnp.float32)
            if act_relu:
                acc = jnp.maximum(acc, 0.0)
            o_ref[...] = acc.astype(o_ref.dtype)

    return kernel


def _mm_vmem_bytes(tm, tk, tn, has_bias, res_itemsize, out_itemsize):
    b = 2 * 2 * (tm * tk + tk * tn)          # double-buffered bf16 LHS/RHS
    if has_bias:
        b += 2 * 4 * tn
    if res_itemsize:
        b += 2 * res_itemsize * tm * tn
    b += 2 * out_itemsize * tm * tn          # double-buffered out block
    b += 4 * tm * tn                         # f32 accumulator scratch
    return b


def _pick_tn(N):
    if N <= 512:
        return N                             # full-N block (always legal)
    for t in (512, 256):                     # 256-multiples: MXU is 256 wide
        if N % t == 0:
            return t
    if N % 128 == 0:
        return 128
    return 256                               # cdiv; only last block masked


def _pick_tk(K, tn, has_bias, res_it, out_it, budget):
    def fits(t):
        return _mm_vmem_bytes(128, t, tn, has_bias, res_it, out_it) <= budget
    if K <= 512:
        return K if fits(K) else None
    for t in (512, 1024, 256):               # exact tiling only (no garbage K)
        if K % t == 0 and fits(t):
            return t
    if fits(K):
        return K
    return None


def _pick_tm(M, N, tk, tn, has_bias, res_it, out_it, budget):
    def fits(t):
        return _mm_vmem_bytes(t, tk, tn, has_bias, res_it, out_it) <= budget
    nn_tiles = pl.cdiv(N, tn)
    divs = [t for t in (1024, 512, 256, 128) if M % t == 0 and fits(t)]
    if divs:
        if nn_tiles >= 2:
            return divs[0]
        multi = [t for t in divs if M // t >= 2]   # keep both v7x TCs busy
        return multi[0] if multi else divs[0]
    if M <= 1024 and fits(M):
        return M                                   # single full-M block
    for t in (512, 256, 128):
        if fits(t):
            return t                               # cdiv; last block masked
    return None


def fused_matmul(x, w, bias=None, *, scale=1.0, act_relu=False,
                 residual=None, out_dtype=jnp.float32):
    """act((x @ w + bias) * scale + residual); w pre-stored (K, N) bf16."""
    M, K = x.shape
    K2, N = w.shape
    assert K2 == K
    if w.dtype != jnp.bfloat16:
        w = w.astype(jnp.bfloat16)

    has_bias = bias is not None
    has_res = residual is not None
    res_it = residual.dtype.itemsize if has_res else 0
    out_it = jnp.dtype(out_dtype).itemsize

    use_pallas = (M >= _PALLAS_MIN_M and K >= _PALLAS_MIN_K
                  and N >= _PALLAS_MIN_N)
    tn = tk = tm = None
    if use_pallas:
        tn = _pick_tn(N)
        tk = _pick_tk(K, tn, has_bias, res_it, out_it, _VMEM_BUDGET)
        if tk is not None:
            tm = _pick_tm(M, N, tk, tn, has_bias, res_it, out_it, _VMEM_BUDGET)
        use_pallas = tk is not None and tm is not None

    if not use_pallas:
        # Tiny / irregular matmul: per-call Pallas overhead would dominate.
        y = jnp.dot(x.astype(jnp.bfloat16), w,
                    preferred_element_type=jnp.float32)
        if has_bias:
            y = y + bias.astype(jnp.float32)[None, :]
        if scale != 1.0:
            y = y * scale
        if has_res:
            y = y + residual.astype(jnp.float32)
        if act_relu:
            y = jnp.maximum(y, 0.0)
        return y.astype(out_dtype)

    xb = x if x.dtype == jnp.bfloat16 else x.astype(jnp.bfloat16)
    grid = (pl.cdiv(M, tm), pl.cdiv(N, tn), pl.cdiv(K, tk))

    in_specs = [pl.BlockSpec((tm, tk), lambda i, j, k: (i, k)),
                pl.BlockSpec((tk, tn), lambda i, j, k: (k, j))]
    operands = [xb, w]
    if has_bias:
        in_specs.append(pl.BlockSpec((1, tn), lambda i, j, k: (0, j)))
        operands.append(bias.astype(jnp.float32).reshape(1, N))
    if has_res:
        in_specs.append(pl.BlockSpec((tm, tn), lambda i, j, k: (i, j)))
        operands.append(residual)

    kernel = _make_mm_kernel(has_bias, has_res, float(scale), bool(act_relu))
    return pl.pallas_call(
        kernel,
        out_shape=jax.ShapeDtypeStruct((M, N), out_dtype),
        grid_spec=pltpu.PrefetchScalarGridSpec(
            num_scalar_prefetch=0,
            grid=grid,
            in_specs=in_specs,
            out_specs=pl.BlockSpec((tm, tn), lambda i, j, k: (i, j)),
            scratch_shapes=[pltpu.VMEM((tm, tn), jnp.float32)]),
        compiler_params=pltpu.CompilerParams(
            dimension_semantics=("parallel", "parallel", "arbitrary"),
            vmem_limit_bytes=_VMEM_LIMIT),
    )(*operands)


# ----------------------------------------------------------------------------
# Convolutions (channel-last, bf16 activations, f32 accumulation)
# ----------------------------------------------------------------------------
def conv_spatial(x, w, bias, strides, padding, *, scale=1.0, relu=False,
                 residual=None, out_dtype=jnp.bfloat16):
    """Implicit conv (no im2col). x: (B, *spatial, C) bf16; w: (*k, C, O) bf16."""
    nd = x.ndim - 2
    dn = ('NDHWC', 'DHWIO', 'NDHWC') if nd == 3 else ('NHWC', 'HWIO', 'NHWC')
    y = lax.conv_general_dilated(
        x, w, window_strides=tuple(strides),
        padding=[(p, p) for p in padding],
        dimension_numbers=dn,
        preferred_element_type=jnp.float32)
    if bias is not None:
        y = y + bias.astype(jnp.float32)
    if scale != 1.0:
        y = y * scale
    if residual is not None:
        y = y + residual.astype(jnp.float32)     # residual fused in epilogue pass
    if relu:
        y = jnp.maximum(y, 0.0)
    return y.astype(out_dtype)


def conv1x1(x, wmat, bias=None, strides=None, *, scale=1.0, relu=False,
            out_dtype=jnp.float32):
    """1x1(x1) conv == channel matmul (channel-last => free reshape)."""
    if strides is not None and any(s != 1 for s in strides):
        slc = ((slice(None),)
               + tuple(slice(None, None, s) for s in strides)
               + (slice(None),))
        x = x[slc]
    lead = x.shape[:-1]
    C = x.shape[-1]
    y = fused_matmul(x.reshape(-1, C), wmat, bias, scale=scale,
                     act_relu=relu, out_dtype=out_dtype)
    return y.reshape(lead + (wmat.shape[1],))


# ----------------------------------------------------------------------------
# ResNet-style encoders (channel-last, bias/BN/ReLU/residual fused post-conv)
# ----------------------------------------------------------------------------
def basic_block3d(x, p, stride):
    if 'down_w' in p:
        identity = conv1x1(x, p['down_w'], None, strides=stride,
                           scale=_BN_SCALE, out_dtype=jnp.bfloat16)
    else:
        identity = x
    out = conv_spatial(x, p['conv1_w'], None, stride, (1, 1, 1),
                       scale=_BN_SCALE, relu=True)
    out = conv_spatial(out, p['conv2_w'], None, (1, 1, 1), (1, 1, 1),
                       scale=_BN_SCALE, relu=True, residual=identity)
    return out


def basic_block2d(x, p, stride):
    if 'down_w' in p:
        identity = conv1x1(x, p['down_w'], None, strides=stride,
                           scale=_BN_SCALE, out_dtype=jnp.bfloat16)
    else:
        identity = x
    out = conv_spatial(x, p['conv1_w'], None, stride, (1, 1),
                       scale=_BN_SCALE, relu=True)
    out = conv_spatial(out, p['conv2_w'], None, (1, 1), (1, 1),
                       scale=_BN_SCALE, relu=True, residual=identity)
    return out


def encoder3d_fwd(p, x):
    x = conv_spatial(x, p['conv1_w'], p['conv1_b'], (1, 1, 1), (1, 1, 1),
                     scale=_BN_SCALE, relu=True)
    strides = [(2, 2, 2), (2, 2, 2), (1, 2, 2)]
    for blocks, s in zip(p['layers'], strides):
        x = basic_block3d(x, blocks[0], s)
        for blk in blocks[1:]:
            x = basic_block3d(x, blk, (1, 1, 1))
    return x


def encoder2d_fwd(p, x):
    x = conv_spatial(x, p['conv1_w'], None, (2, 2), (3, 3),
                     scale=_BN_SCALE, relu=True)
    for blocks in p['layers']:
        x = basic_block2d(x, blocks[0], (2, 2))
        for blk in blocks[1:]:
            x = basic_block2d(x, blk, (1, 1))
    return x


# ----------------------------------------------------------------------------
# Transformer (residual adds fused into the Pallas matmul epilogue)
# ----------------------------------------------------------------------------
def layernorm(x, eps=1e-5):
    mu = jnp.mean(x, axis=-1, keepdims=True)
    var = jnp.mean((x - mu) ** 2, axis=-1, keepdims=True)
    return (x - mu) / jnp.sqrt(var + eps)


def attention_core(xn, p, heads):
    """LN'd input -> pre-projection attention output, flattened (B*N, C)."""
    B, N, C = xn.shape
    hd = C // heads
    scale = hd ** (-0.5)
    qkv = fused_matmul(xn.reshape(B * N, C), p['qkv_w'])       # qkv_bias=False
    qkv = qkv.reshape(B, N, 3, heads, hd)
    q = qkv[:, :, 0].transpose(0, 2, 1, 3)
    k = qkv[:, :, 1].transpose(0, 2, 1, 3)
    v = qkv[:, :, 2].transpose(0, 2, 1, 3)
    # TODO(synk): at large token counts this would be a flash-attention Pallas
    #             kernel; at these token counts XLA einsums are faster.
    attn = jnp.einsum('bhqd,bhkd->bhqk', q, k) * scale
    attn = jax.nn.softmax(attn, axis=-1)
    out = jnp.einsum('bhqk,bhkd->bhqd', attn, v)
    return out.transpose(0, 2, 1, 3).reshape(B * N, C)


def transformer_block(x, blk, heads):
    B, N, C = x.shape
    # Residual(PreNormDrop(SelfAttention)); residual fused into proj epilogue.
    xf = x.reshape(B * N, C)
    a = attention_core(layernorm(x), blk['attn'], heads)
    x = fused_matmul(a, blk['attn']['proj_w'], blk['attn']['proj_b'],
                     residual=xf).reshape(B, N, C)
    # Residual(PreNorm(FeedForward)); residual fused into 2nd linear epilogue.
    xf = x.reshape(B * N, C)
    h = fused_matmul(layernorm(x).reshape(B * N, C),
                     blk['ffn']['w1'], blk['ffn']['b1'])
    h = jax.nn.gelu(h, approximate=False)                       # exact F.gelu
    x = fused_matmul(h, blk['ffn']['w2'], blk['ffn']['b2'],
                     residual=xf).reshape(B, N, C)
    return x


def transformer_fwd(x, pos, p, heads):
    for blk in p['blocks']:
        x = x + pos
        x = transformer_block(x, blk, heads)
    return x


# ----------------------------------------------------------------------------
# Full model forward
# ----------------------------------------------------------------------------
def model_forward(params, ct, mr, x_img, clinical, mask, *, heads, tdim):
    B = x_img.shape[0]

    # One layout change + one cast at entry; channel-last bf16 thereafter.
    ct = jnp.transpose(ct, (0, 2, 3, 4, 1)).astype(jnp.bfloat16)
    mr = jnp.transpose(mr, (0, 2, 3, 4, 1)).astype(jnp.bfloat16)
    x2 = jnp.transpose(x_img, (0, 2, 3, 1)).astype(jnp.bfloat16)

    ct_feat = encoder3d_fwd(params['ct_enc'], ct)      # (B, d, h, w, 8*bd)
    mr_feat = encoder3d_fwd(params['mr_enc'], mr)
    x_feat = encoder2d_fwd(params['x_enc'], x2)        # (B, h, w, 16*bd)

    # 1x1 projection convs -> tokens (channel-last: plain reshape, no permute)
    ct_tok = conv1x1(ct_feat, params['ct_proj_w'],
                     params['ct_proj_b']).reshape(B, -1, tdim)
    mr_tok = conv1x1(mr_feat, params['mr_proj_w'],
                     params['mr_proj_b']).reshape(B, -1, tdim)
    x_tok = conv1x1(x_feat, params['x_proj_w'],
                    params['x_proj_b']).reshape(B, -1, tdim)

    # MaskModal_tensor: zero out whole-sample modalities per boolean mask
    ct_tok = jnp.where(mask[:, 0][:, None, None], ct_tok, 0.0)
    mr_tok = jnp.where(mask[:, 1][:, None, None], mr_tok, 0.0)
    x_tok = jnp.where(mask[:, 2][:, None, None], x_tok, 0.0)

    tokens = jnp.concatenate([ct_tok, mr_tok, x_tok], axis=1)
    pos = jnp.concatenate([params['ct_pos'], params['mr_pos'],
                           params['x_pos']], axis=1)

    out = transformer_fwd(tokens, pos, params['transformer'], heads)
    # permute(0,2,1) + AdaptiveAvgPool1d(1) + flatten == mean over tokens
    avg = jnp.mean(out, axis=1)
    # Dropout -> identity (eval)
    info = jnp.concatenate([avg, clinical], axis=1)
    preds = fused_matmul(info, params['fc_w'], params['fc_b'])
    probs = jax.nn.softmax(preds, axis=1)
    return preds, probs


# ----------------------------------------------------------------------------
# Deterministic parameter init (weights stored bf16 in matmul-ready layouts)
# ----------------------------------------------------------------------------
class KeyGen:
    def __init__(self, key):
        self.key = key

    def __call__(self):
        self.key, sub = jax.random.split(self.key)
        return sub


def spatial_conv_w(key, ksize, in_c, out_c):
    """Kaiming-normal conv weight, channel-last (*k, C, O), bf16."""
    fan_in = in_c * math.prod(ksize)
    std = math.sqrt(2.0 / fan_in)
    w = std * jax.random.normal(key, tuple(ksize) + (in_c, out_c), jnp.float32)
    return w.astype(jnp.bfloat16)


def mat_conv_w(key, in_c, out_c):
    """Kaiming-normal 1x1 conv weight as a (C, O) bf16 matrix."""
    std = math.sqrt(2.0 / in_c)
    return (std * jax.random.normal(key, (in_c, out_c),
                                    jnp.float32)).astype(jnp.bfloat16)


def lin_w(key, in_f, out_f):
    return (jax.random.normal(key, (in_f, out_f), jnp.float32)
            / math.sqrt(in_f)).astype(jnp.bfloat16)


def init_encoder3d(kg, in_ch, bd):
    p = {'conv1_w': spatial_conv_w(kg(), (3, 3, 3), in_ch, bd),
         'conv1_b': jnp.zeros((bd,), jnp.float32),
         'layers': []}
    chans = [(bd, 2 * bd), (2 * bd, 4 * bd), (4 * bd, 8 * bd)]
    for cin, cout in chans:
        blocks = [
            {'conv1_w': spatial_conv_w(kg(), (3, 3, 3), cin, cout),
             'conv2_w': spatial_conv_w(kg(), (3, 3, 3), cout, cout),
             'down_w': mat_conv_w(kg(), cin, cout)},
            {'conv1_w': spatial_conv_w(kg(), (3, 3, 3), cout, cout),
             'conv2_w': spatial_conv_w(kg(), (3, 3, 3), cout, cout)},
        ]
        p['layers'].append(blocks)
    return p


def init_encoder2d(kg, in_ch, bd):
    p = {'conv1_w': spatial_conv_w(kg(), (7, 7), in_ch, bd),
         'layers': []}
    chans = [(bd, 2 * bd), (2 * bd, 4 * bd), (4 * bd, 8 * bd),
             (8 * bd, 16 * bd)]
    for cin, cout in chans:
        blocks = [
            {'conv1_w': spatial_conv_w(kg(), (3, 3), cin, cout),
             'conv2_w': spatial_conv_w(kg(), (3, 3), cout, cout),
             'down_w': mat_conv_w(kg(), cin, cout)},
            {'conv1_w': spatial_conv_w(kg(), (3, 3), cout, cout),
             'conv2_w': spatial_conv_w(kg(), (3, 3), cout, cout)},
        ]
        p['layers'].append(blocks)
    return p


def init_model(key, bd, tdim, heads, mlp_dim, depth, num_classes, clin_dims,
               n_ct, n_mr, n_x):
    kg = KeyGen(key)
    p = {'ct_enc': init_encoder3d(kg, 1, bd),
         'mr_enc': init_encoder3d(kg, 2, bd),
         'x_enc': init_encoder2d(kg, 1, bd),
         'ct_proj_w': mat_conv_w(kg(), 8 * bd, tdim),
         'ct_proj_b': jnp.zeros((tdim,), jnp.float32),
         'mr_proj_w': mat_conv_w(kg(), 8 * bd, tdim),
         'mr_proj_b': jnp.zeros((tdim,), jnp.float32),
         'x_proj_w': mat_conv_w(kg(), 16 * bd, tdim),
         'x_proj_b': jnp.zeros((tdim,), jnp.float32),
         'ct_pos': jnp.zeros((1, n_ct, tdim), jnp.float32),
         'mr_pos': jnp.zeros((1, n_mr, tdim), jnp.float32),
         'x_pos': jnp.zeros((1, n_x, tdim), jnp.float32)}
    blocks = []
    for _ in range(depth):
        blocks.append({
            'attn': {'qkv_w': lin_w(kg(), tdim, 3 * tdim),
                     'proj_w': lin_w(kg(), tdim, tdim),
                     'proj_b': jnp.zeros((tdim,), jnp.float32)},
            'ffn': {'w1': lin_w(kg(), tdim, mlp_dim),
                    'b1': jnp.zeros((mlp_dim,), jnp.float32),
                    'w2': lin_w(kg(), mlp_dim, tdim),
                    'b2': jnp.zeros((tdim,), jnp.float32)},
        })
    p['transformer'] = {'blocks': blocks}
    p['fc_w'] = lin_w(kg(), tdim + clin_dims, num_classes)
    p['fc_b'] = jnp.zeros((num_classes,), jnp.float32)
    return p


# ----------------------------------------------------------------------------
if __name__ == "__main__":
    B = 2
    BASIC_DIM = 16         # small stand-in for basic_dim=32
    TDIM = 256             # small stand-in for transformer_basic_dim=512
    HEADS = 8
    MLP_DIM = 1024         # small stand-in for mlp_dim=4096
    DEPTH = 1
    NUM_CLASSES = 3
    CLIN_DIMS = 13

    key = jax.random.PRNGKey(0)
    kct, kmr, kx, kclin, kparam = jax.random.split(key, 5)
    ct = jax.random.normal(kct, (B, 1, 8, 48, 48), jnp.float32)
    mr = jax.random.normal(kmr, (B, 2, 8, 48, 48), jnp.float32)
    x_img = jax.random.normal(kx, (B, 1, 96, 96), jnp.float32)
    clinical = jax.random.normal(kclin, (B, CLIN_DIMS), jnp.float32)
    mask = jnp.array([[True, True, True], [True, False, True]], dtype=bool)

    # Token counts implied by these input sizes:
    # CT/MR (8,48,48) -> encoder3d feature (2,6,6) -> 72 tokens each
    # X-ray 96x96     -> encoder2d feature 3x3     -> 9 tokens
    N_CT, N_MR, N_X = 72, 72, 9

    params = init_model(kparam, BASIC_DIM, TDIM, HEADS, MLP_DIM, DEPTH,
                        NUM_CLASSES, CLIN_DIMS, N_CT, N_MR, N_X)

    fwd = jax.jit(functools.partial(model_forward, heads=HEADS, tdim=TDIM))
    preds, probs = fwd(params, ct, mr, x_img, clinical, mask)
    jax.block_until_ready((preds, probs))
    assert preds.shape == (B, NUM_CLASSES)
    assert probs.shape == (B, NUM_CLASSES)
    assert bool(jnp.all(jnp.isfinite(preds)))
    print("KERNEL_OK")
</pallas_src>

<mosaic_0001>
module attributes {stable_mosaic.version = 11 : i64} {
  func.func @kernel(%arg0: i32, %arg1: i32, %arg2: i32, %arg3: memref<144x128xbf16, #tpu.memory_space<vmem>>, %arg4: memref<128x256xbf16, #tpu.memory_space<vmem>>, %arg5: memref<1x256xf32, #tpu.memory_space<vmem>>, %arg6: memref<144x256xf32, #tpu.memory_space<vmem>>, %arg7: memref<144x256xf32, #tpu.memory_space<vmem>>) attributes {dimension_semantics = [#tpu.dimension_semantics<parallel>, #tpu.dimension_semantics<parallel>, #tpu.dimension_semantics<arbitrary>], iteration_bounds = array<i64: 1, 1, 1>, scalar_prefetch = 0 : i64, scratch_operands = 1 : i64, tpu.core_type = #tpu.core_type<tc>, window_params = [{transform_indices = @transform_0, window_bounds = array<i64: 144, 128>}, {transform_indices = @transform_1, window_bounds = array<i64: 128, 256>}, {transform_indices = @transform_2, window_bounds = array<i64: 1, 256>}, {transform_indices = @transform_3, window_bounds = array<i64: 144, 256>}]} {
    %c0_i32 = arith.constant 0 : i32
    %0 = arith.cmpi eq, %arg2, %c0_i32 : i32
    %1 = arith.extui %0 : i1 to i32
    %c0_i32_0 = arith.constant 0 : i32
    %2 = arith.cmpi ne, %1, %c0_i32_0 : i32
    scf.if %2 {
      %cst_10 = arith.constant 0.000000e+00 : f32
      %12 = vector.broadcast %cst_10 : f32 to vector<144x256xf32>
      %c0_11 = arith.constant 0 : index
      %c0_12 = arith.constant 0 : index
      %13 = vector.load %arg7[%c0_11, %c0_12] : memref<144x256xf32, #tpu.memory_space<vmem>>, vector<144x256xf32>
      tpu.vector_store %arg7[%c0_11, %c0_12], %12 {strides = array<i32>} : memref<144x256xf32, #tpu.memory_space<vmem>>, vector<144x256xf32>,
    } else {
    }
    %c0 = arith.constant 0 : index
    %c0_1 = arith.constant 0 : index
    %3 = vector.load %arg7[%c0, %c0_1] : memref<144x256xf32, #tpu.memory_space<vmem>>, vector<144x256xf32>
    %c0_2 = arith.constant 0 : index
    %c0_3 = arith.constant 0 : index
    %4 = vector.load %arg3[%c0_2, %c0_3] : memref<144x128xbf16, #tpu.memory_space<vmem>>, vector<144x128xbf16>
    %c0_4 = arith.constant 0 : index
    %c0_5 = arith.constant 0 : index
    %5 = vector.load %arg4[%c0_4, %c0_5] : memref<128x256xbf16, #tpu.memory_space<vmem>>, vector<128x256xbf16>
    %cst = arith.constant dense<0.000000e+00> : vector<144x256xf32>
    %6 = tpu.matmul %4, %5, %cst {dimension_numbers = #tpu.dot_dimension_numbers<[1], [0], [0], [1], [0, 0, 1, 1], [], []>} : vector<144x128xbf16>, vector<128x256xbf16>, vector<144x256xf32> -> vector<144x256xf32>
    %7 = arith.addf %3, %6 : vector<144x256xf32>
    %c0_6 = arith.constant 0 : index
    %c0_7 = arith.constant 0 : index
    %8 = vector.load %arg7[%c0_6, %c0_7] : memref<144x256xf32, #tpu.memory_space<vmem>>, vector<144x256xf32>
    tpu.vector_store %arg7[%c0_6, %c0_7], %7 {strides = array<i32>} : memref<144x256xf32, #tpu.memory_space<vmem>>, vector<144x256xf32>,
    %c0_i32_8 = arith.constant 0 : i32
    %9 = arith.cmpi eq, %arg2, %c0_i32_8 : i32
    %10 = arith.extui %9 : i1 to i32
    %c0_i32_9 = arith.constant 0 : i32
    %11 = arith.cmpi ne, %10, %c0_i32_9 : i32
    scf.if %11 {
      %c0_10 = arith.constant 0 : index
      %c0_11 = arith.constant 0 : index
      %12 = vector.load %arg7[%c0_10, %c0_11] : memref<144x256xf32, #tpu.memory_space<vmem>>, vector<144x256xf32>
      %c0_12 = arith.constant 0 : index
      %c0_13 = arith.constant 0 : index
      %13 = vector.load %arg5[%c0_12, %c0_13] : memref<1x256xf32, #tpu.memory_space<vmem>>, vector<1x256xf32>
      %14 = vector.broadcast %13 : vector<1x256xf32> to vector<144x256xf32>
      %15 = arith.addf %12, %14 : vector<144x256xf32>
      %c0_14 = arith.constant 0 : index
      %c0_15 = arith.constant 0 : index
      %16 = vector.load %arg6[%c0_14, %c0_15] : memref<144x256xf32, #tpu.memory_space<vmem>>, vector<144x256xf32>
      tpu.vector_store %arg6[%c0_14, %c0_15], %15 {strides = array<i32>} : memref<144x256xf32, #tpu.memory_space<vmem>>, vector<144x256xf32>,
    } else {
    }
    return
  }
  func.func @transform_0(%arg0: i32, %arg1: i32, %arg2: i32) -> (i32, i32) {
    %c0_i32 = arith.constant 0 : i32
    return %arg0, %arg2 : i32, i32
  }
  func.func @transform_1(%arg0: i32, %arg1: i32, %arg2: i32) -> (i32, i32) {
    %c0_i32 = arith.constant 0 : i32
    return %arg2, %arg1 : i32, i32
  }
  func.func @transform_2(%arg0: i32, %arg1: i32, %arg2: i32) -> (i32, i32) {
    %c0_i32 = arith.constant 0 : i32
    %c0_i32_0 = arith.constant 0 : i32
    return %c0_i32, %arg1 : i32, i32
  }
  func.func @transform_3(%arg0: i32, %arg1: i32, %arg2: i32) -> (i32, i32) {
    %c0_i32 = arith.constant 0 : i32
    return %arg0, %arg1 : i32, i32
  }
}

module attributes {stable_mosaic.version = 11 : i64} {
  func.func @kernel(%arg0: i32, %arg1: i32, %arg2: i32, %arg3: memref<306x256xbf16, #tpu.memory_space<vmem>>, %arg4: memref<256x256xbf16, #tpu.memory_space<vmem>>, %arg5: memref<306x256xf32, #tpu.memory_space<vmem>>, %arg6: memref<306x256xf32, #tpu.memory_space<vmem>>) attributes {dimension_semantics = [#tpu.dimension_semantics<parallel>, #tpu.dimension_semantics<parallel>, #tpu.dimension_semantics<arbitrary>], iteration_bounds = array<i64: 1, 3, 1>, scalar_prefetch = 0 : i64, scratch_operands = 1 : i64, tpu.core_type = #tpu.core_type<tc>, window_params = [{transform_indices = @transform_0, window_bounds = array<i64: 306, 256>}, {transform_indices = @transform_1, window_bounds = array<i64: 256, 256>}, {transform_indices = @transform_2, window_bounds = array<i64: 306, 256>}]} {
    %c0_i32 = arith.constant 0 : i32
    %0 = arith.cmpi eq, %arg2, %c0_i32 : i32
    %1 = arith.extui %0 : i1 to i32
    %c0_i32_0 = arith.constant 0 : i32
    %2 = arith.cmpi ne, %1, %c0_i32_0 : i32
    scf.if %2 {
      %cst_10 = arith.constant 0.000000e+00 : f32
      %12 = vector.broadcast %cst_10 : f32 to vector<306x256xf32>
      %c0_11 = arith.constant 0 : index
      %c0_12 = arith.constant 0 : index
      %13 = vector.load %arg6[%c0_11, %c0_12] : memref<306x256xf32, #tpu.memory_space<vmem>>, vector<306x256xf32>
      tpu.vector_store %arg6[%c0_11, %c0_12], %12 {strides = array<i32>} : memref<306x256xf32, #tpu.memory_space<vmem>>, vector<306x256xf32>,
    } else {
    }
    %c0 = arith.constant 0 : index
    %c0_1 = arith.constant 0 : index
    %3 = vector.load %arg6[%c0, %c0_1] : memref<306x256xf32, #tpu.memory_space<vmem>>, vector<306x256xf32>
    %c0_2 = arith.constant 0 : index
    %c0_3 = arith.constant 0 : index
    %4 = vector.load %arg3[%c0_2, %c0_3] : memref<306x256xbf16, #tpu.memory_space<vmem>>, vector<306x256xbf16>
    %c0_4 = arith.constant 0 : index
    %c0_5 = arith.constant 0 : index
    %5 = vector.load %arg4[%c0_4, %c0_5] : memref<256x256xbf16, #tpu.memory_space<vmem>>, vector<256x256xbf16>
    %cst = arith.constant dense<0.000000e+00> : vector<306x256xf32>
    %6 = tpu.matmul %4, %5, %cst {dimension_numbers = #tpu.dot_dimension_numbers<[1], [0], [0], [1], [0, 0, 1, 1], [], []>} : vector<306x256xbf16>, vector<256x256xbf16>, vector<306x256xf32> -> vector<306x256xf32>
    %7 = arith.addf %3, %6 : vector<306x256xf32>
    %c0_6 = arith.constant 0 : index
    %c0_7 = arith.constant 0 : index
    %8 = vector.load %arg6[%c0_6, %c0_7] : memref<306x256xf32, #tpu.memory_space<vmem>>, vector<306x256xf32>
    tpu.vector_store %arg6[%c0_6, %c0_7], %7 {strides = array<i32>} : memref<306x256xf32, #tpu.memory_space<vmem>>, vector<306x256xf32>,
    %c0_i32_8 = arith.constant 0 : i32
    %9 = arith.cmpi eq, %arg2, %c0_i32_8 : i32
    %10 = arith.extui %9 : i1 to i32
    %c0_i32_9 = arith.constant 0 : i32
    %11 = arith.cmpi ne, %10, %c0_i32_9 : i32
    scf.if %11 {
      %c0_10 = arith.constant 0 : index
      %c0_11 = arith.constant 0 : index
      %12 = vector.load %arg6[%c0_10, %c0_11] : memref<306x256xf32, #tpu.memory_space<vmem>>, vector<306x256xf32>
      %c0_12 = arith.constant 0 : index
      %c0_13 = arith.constant 0 : index
      %13 = vector.load %arg5[%c0_12, %c0_13] : memref<306x256xf32, #tpu.memory_space<vmem>>, vector<306x256xf32>
      tpu.vector_store %arg5[%c0_12, %c0_13], %12 {strides = array<i32>} : memref<306x256xf32, #tpu.memory_space<vmem>>, vector<306x256xf32>,
    } else {
    }
    return
  }
  func.func @transform_0(%arg0: i32, %arg1: i32, %arg2: i32) -> (i32, i32) {
    %c0_i32 = arith.constant 0 : i32
    return %arg0, %arg2 : i32, i32
  }
  func.func @transform_1(%arg0: i32, %arg1: i32, %arg2: i32) -> (i32, i32) {
    %c0_i32 = arith.constant 0 : i32
    return %arg2, %arg1 : i32, i32
  }
  func.func @transform_2(%arg0: i32, %arg1: i32, %arg2: i32) -> (i32, i32) {
    %c0_i32 = arith.constant 0 : i32
    return %arg0, %arg1 : i32, i32
  }
}

module attributes {stable_mosaic.version = 11 : i64} {
  func.func @kernel(%arg0: i32, %arg1: i32, %arg2: i32, %arg3: memref<306x256xbf16, #tpu.memory_space<vmem>>, %arg4: memref<256x256xbf16, #tpu.memory_space<vmem>>, %arg5: memref<1x256xf32, #tpu.memory_space<vmem>>, %arg6: memref<306x256xf32, #tpu.memory_space<vmem>>, %arg7: memref<306x256xf32, #tpu.memory_space<vmem>>, %arg8: memref<306x256xf32, #tpu.memory_space<vmem>>) attributes {dimension_semantics = [#tpu.dimension_semantics<parallel>, #tpu.dimension_semantics<parallel>, #tpu.dimension_semantics<arbitrary>], iteration_bounds = array<i64: 1, 1, 1>, scalar_prefetch = 0 : i64, scratch_operands = 1 : i64, tpu.core_type = #tpu.core_type<tc>, window_params = [{transform_indices = @transform_0, window_bounds = array<i64: 306, 256>}, {transform_indices = @transform_1, window_bounds = array<i64: 256, 256>}, {transform_indices = @transform_2, window_bounds = array<i64: 1, 256>}, {transform_indices = @transform_3, window_bounds = array<i64: 306, 256>}, {transform_indices = @transform_4, window_bounds = array<i64: 306, 256>}]} {
    %c0_i32 = arith.constant 0 : i32
    %0 = arith.cmpi eq, %arg2, %c0_i32 : i32
    %1 = arith.extui %0 : i1 to i32
    %c0_i32_0 = arith.constant 0 : i32
    %2 = arith.cmpi ne, %1, %c0_i32_0 : i32
    scf.if %2 {
      %cst_10 = arith.constant 0.000000e+00 : f32
      %12 = vector.broadcast %cst_10 : f32 to vector<306x256xf32>
      %c0_11 = arith.constant 0 : index
      %c0_12 = arith.constant 0 : index
      %13 = vector.load %arg8[%c0_11, %c0_12] : memref<306x256xf32, #tpu.memory_space<vmem>>, vector<306x256xf32>
      tpu.vector_store %arg8[%c0_11, %c0_12], %12 {strides = array<i32>} : memref<306x256xf32, #tpu.memory_space<vmem>>, vector<306x256xf32>,
    } else {
    }
    %c0 = arith.constant 0 : index
    %c0_1 = arith.constant 0 : index
    %3 = vector.load %arg8[%c0, %c0_1] : memref<306x256xf32, #tpu.memory_space<vmem>>, vector<306x256xf32>
    %c0_2 = arith.constant 0 : index
    %c0_3 = arith.constant 0 : index
    %4 = vector.load %arg3[%c0_2, %c0_3] : memref<306x256xbf16, #tpu.memory_space<vmem>>, vector<306x256xbf16>
    %c0_4 = arith.constant 0 : index
    %c0_5 = arith.constant 0 : index
    %5 = vector.load %arg4[%c0_4, %c0_5] : memref<256x256xbf16, #tpu.memory_space<vmem>>, vector<256x256xbf16>
    %cst = arith.constant dense<0.000000e+00> : vector<306x256xf32>
    %6 = tpu.matmul %4, %5, %cst {dimension_numbers = #tpu.dot_dimension_numbers<[1], [0], [0], [1], [0, 0, 1, 1], [], []>} : vector<306x256xbf16>, vector<256x256xbf16>, vector<306x256xf32> -> vector<306x256xf32>
    %7 = arith.addf %3, %6 : vector<306x256xf32>
    %c0_6 = arith.constant 0 : index
    %c0_7 = arith.constant 0 : index
    %8 = vector.load %arg8[%c0_6, %c0_7] : memref<306x256xf32, #tpu.memory_space<vmem>>, vector<306x256xf32>
    tpu.vector_store %arg8[%c0_6, %c0_7], %7 {strides = array<i32>} : memref<306x256xf32, #tpu.memory_space<vmem>>, vector<306x256xf32>,
    %c0_i32_8 = arith.constant 0 : i32
    %9 = arith.cmpi eq, %arg2, %c0_i32_8 : i32
    %10 = arith.extui %9 : i1 to i32
    %c0_i32_9 = arith.constant 0 : i32
    %11 = arith.cmpi ne, %10, %c0_i32_9 : i32
    scf.if %11 {
      %c0_10 = arith.constant 0 : index
      %c0_11 = arith.constant 0 : index
      %12 = vector.load %arg8[%c0_10, %c0_11] : memref<306x256xf32, #tpu.memory_space<vmem>>, vector<306x256xf32>
      %c0_12 = arith.constant 0 : index
      %c0_13 = arith.constant 0 : index
      %13 = vector.load %arg5[%c0_12, %c0_13] : memref<1x256xf32, #tpu.memory_space<vmem>>, vector<1x256xf32>
      %14 = vector.broadcast %13 : vector<1x256xf32> to vector<306x256xf32>
      %15 = arith.addf %12, %14 : vector<306x256xf32>
      %c0_14 = arith.constant 0 : index
      %c0_15 = arith.constant 0 : index
      %16 = vector.load %arg6[%c0_14, %c0_15] : memref<306x256xf32, #tpu.memory_space<vmem>>, vector<306x256xf32>
      %17 = arith.addf %15, %16 : vector<306x256xf32>
      %c0_16 = arith.constant 0 : index
      %c0_17 = arith.constant 0 : index
      %18 = vector.load %arg7[%c0_16, %c0_17] : memref<306x256xf32, #tpu.memory_space<vmem>>, vector<306x256xf32>
      tpu.vector_store %arg7[%c0_16, %c0_17], %17 {strides = array<i32>} : memref<306x256xf32, #tpu.memory_space<vmem>>, vector<306x256xf32>,
    } else {
    }
    return
  }
  func.func @transform_0(%arg0: i32, %arg1: i32, %arg2: i32) -> (i32, i32) {
    %c0_i32 = arith.constant 0 : i32
    return %arg0, %arg2 : i32, i32
  }
  func.func @transform_1(%arg0: i32, %arg1: i32, %arg2: i32) -> (i32, i32) {
    %c0_i32 = arith.constant 0 : i32
    return %arg2, %arg1 : i32, i32
  }
  func.func @transform_2(%arg0: i32, %arg1: i32, %arg2: i32) -> (i32, i32) {
    %c0_i32 = arith.constant 0 : i32
    %c0_i32_0 = arith.constant 0 : i32
    return %c0_i32, %arg1 : i32, i32
  }
  func.func @transform_3(%arg0: i32, %arg1: i32, %arg2: i32) -> (i32, i32) {
    %c0_i32 = arith.constant 0 : i32
    return %arg0, %arg1 : i32, i32
  }
  func.func @transform_4(%arg0: i32, %arg1: i32, %arg2: i32) -> (i32, i32) {
    %c0_i32 = arith.constant 0 : i32
    return %arg0, %arg1 : i32, i32
  }
}

module attributes {stable_mosaic.version = 11 : i64} {
  func.func @kernel(%arg0: i32, %arg1: i32, %arg2: i32, %arg3: memref<306x256xbf16, #tpu.memory_space<vmem>>, %arg4: memref<256x512xbf16, #tpu.memory_space<vmem>>, %arg5: memref<1x512xf32, #tpu.memory_space<vmem>>, %arg6: memref<306x512xf32, #tpu.memory_space<vmem>>, %arg7: memref<306x512xf32, #tpu.memory_space<vmem>>) attributes {dimension_semantics = [#tpu.dimension_semantics<parallel>, #tpu.dimension_semantics<parallel>, #tpu.dimension_semantics<arbitrary>], iteration_bounds = array<i64: 1, 2, 1>, scalar_prefetch = 0 : i64, scratch_operands = 1 : i64, tpu.core_type = #tpu.core_type<tc>, window_params = [{transform_indices = @transform_0, window_bounds = array<i64: 306, 256>}, {transform_indices = @transform_1, window_bounds = array<i64: 256, 512>}, {transform_indices = @transform_2, window_bounds = array<i64: 1, 512>}, {transform_indices = @transform_3, window_bounds = array<i64: 306, 512>}]} {
    %c0_i32 = arith.constant 0 : i32
    %0 = arith.cmpi eq, %arg2, %c0_i32 : i32
    %1 = arith.extui %0 : i1 to i32
    %c0_i32_0 = arith.constant 0 : i32
    %2 = arith.cmpi ne, %1, %c0_i32_0 : i32
    scf.if %2 {
      %cst_10 = arith.constant 0.000000e+00 : f32
      %12 = vector.broadcast %cst_10 : f32 to vector<306x512xf32>
      %c0_11 = arith.constant 0 : index
      %c0_12 = arith.constant 0 : index
      %13 = vector.load %arg7[%c0_11, %c0_12] : memref<306x512xf32, #tpu.memory_space<vmem>>, vector<306x512xf32>
      tpu.vector_store %arg7[%c0_11, %c0_12], %12 {strides = array<i32>} : memref<306x512xf32, #tpu.memory_space<vmem>>, vector<306x512xf32>,
    } else {
    }
    %c0 = arith.constant 0 : index
    %c0_1 = arith.constant 0 : index
    %3 = vector.load %arg7[%c0, %c0_1] : memref<306x512xf32, #tpu.memory_space<vmem>>, vector<306x512xf32>
    %c0_2 = arith.constant 0 : index
    %c0_3 = arith.constant 0 : index
    %4 = vector.load %arg3[%c0_2, %c0_3] : memref<306x256xbf16, #tpu.memory_space<vmem>>, vector<306x256xbf16>
    %c0_4 = arith.constant 0 : index
    %c0_5 = arith.constant 0 : index
    %5 = vector.load %arg4[%c0_4, %c0_5] : memref<256x512xbf16, #tpu.memory_space<vmem>>, vector<256x512xbf16>
    %cst = arith.constant dense<0.000000e+00> : vector<306x512xf32>
    %6 = tpu.matmul %4, %5, %cst {dimension_numbers = #tpu.dot_dimension_numbers<[1], [0], [0], [1], [0, 0, 1, 1], [], []>} : vector<306x256xbf16>, vector<256x512xbf16>, vector<306x512xf32> -> vector<306x512xf32>
    %7 = arith.addf %3, %6 : vector<306x512xf32>
    %c0_6 = arith.constant 0 : index
    %c0_7 = arith.constant 0 : index
    %8 = vector.load %arg7[%c0_6, %c0_7] : memref<306x512xf32, #tpu.memory_space<vmem>>, vector<306x512xf32>
    tpu.vector_store %arg7[%c0_6, %c0_7], %7 {strides = array<i32>} : memref<306x512xf32, #tpu.memory_space<vmem>>, vector<306x512xf32>,
    %c0_i32_8 = arith.constant 0 : i32
    %9 = arith.cmpi eq, %arg2, %c0_i32_8 : i32
    %10 = arith.extui %9 : i1 to i32
    %c0_i32_9 = arith.constant 0 : i32
    %11 = arith.cmpi ne, %10, %c0_i32_9 : i32
    scf.if %11 {
      %c0_10 = arith.constant 0 : index
      %c0_11 = arith.constant 0 : index
      %12 = vector.load %arg7[%c0_10, %c0_11] : memref<306x512xf32, #tpu.memory_space<vmem>>, vector<306x512xf32>
      %c0_12 = arith.constant 0 : index
      %c0_13 = arith.constant 0 : index
      %13 = vector.load %arg5[%c0_12, %c0_13] : memref<1x512xf32, #tpu.memory_space<vmem>>, vector<1x512xf32>
      %14 = vector.broadcast %13 : vector<1x512xf32> to vector<306x512xf32>
      %15 = arith.addf %12, %14 : vector<306x512xf32>
      %c0_14 = arith.constant 0 : index
      %c0_15 = arith.constant 0 : index
      %16 = vector.load %arg6[%c0_14, %c0_15] : memref<306x512xf32, #tpu.memory_space<vmem>>, vector<306x512xf32>
      tpu.vector_store %arg6[%c0_14, %c0_15], %15 {strides = array<i32>} : memref<306x512xf32, #tpu.memory_space<vmem>>, vector<306x512xf32>,
    } else {
    }
    return
  }
  func.func @transform_0(%arg0: i32, %arg1: i32, %arg2: i32) -> (i32, i32) {
    %c0_i32 = arith.constant 0 : i32
    return %arg0, %arg2 : i32, i32
  }
  func.func @transform_1(%arg0: i32, %arg1: i32, %arg2: i32) -> (i32, i32) {
    %c0_i32 = arith.constant 0 : i32
    return %arg2, %arg1 : i32, i32
  }
  func.func @transform_2(%arg0: i32, %arg1: i32, %arg2: i32) -> (i32, i32) {
    %c0_i32 = arith.constant 0 : i32
    %c0_i32_0 = arith.constant 0 : i32
    return %c0_i32, %arg1 : i32, i32
  }
  func.func @transform_3(%arg0: i32, %arg1: i32, %arg2: i32) -> (i32, i32) {
    %c0_i32 = arith.constant 0 : i32
    return %arg0, %arg1 : i32, i32
  }
}

module attributes {stable_mosaic.version = 11 : i64} {
  func.func @kernel(%arg0: i32, %arg1: i32, %arg2: i32, %arg3: memref<306x512xbf16, #tpu.memory_space<vmem>>, %arg4: memref<512x256xbf16, #tpu.memory_space<vmem>>, %arg5: memref<1x256xf32, #tpu.memory_space<vmem>>, %arg6: memref<306x256xf32, #tpu.memory_space<vmem>>, %arg7: memref<306x256xf32, #tpu.memory_space<vmem>>, %arg8: memref<306x256xf32, #tpu.memory_space<vmem>>) attributes {dimension_semantics = [#tpu.dimension_semantics<parallel>, #tpu.dimension_semantics<parallel>, #tpu.dimension_semantics<arbitrary>], iteration_bounds = array<i64: 1, 1, 2>, scalar_prefetch = 0 : i64, scratch_operands = 1 : i64, tpu.core_type = #tpu.core_type<tc>, window_params = [{transform_indices = @transform_0, window_bounds = array<i64: 306, 512>}, {transform_indices = @transform_1, window_bounds = array<i64: 512, 256>}, {transform_indices = @transform_2, window_bounds = array<i64: 1, 256>}, {transform_indices = @transform_3, window_bounds = array<i64: 306, 256>}, {transform_indices = @transform_4, window_bounds = array<i64: 306, 256>}]} {
    %c0_i32 = arith.constant 0 : i32
    %0 = arith.cmpi eq, %arg2, %c0_i32 : i32
    %1 = arith.extui %0 : i1 to i32
    %c0_i32_0 = arith.constant 0 : i32
    %2 = arith.cmpi ne, %1, %c0_i32_0 : i32
    scf.if %2 {
      %cst_9 = arith.constant 0.000000e+00 : f32
      %12 = vector.broadcast %cst_9 : f32 to vector<306x256xf32>
      %c0_10 = arith.constant 0 : index
      %c0_11 = arith.constant 0 : index
      %13 = vector.load %arg8[%c0_10, %c0_11] : memref<306x256xf32, #tpu.memory_space<vmem>>, vector<306x256xf32>
      tpu.vector_store %arg8[%c0_10, %c0_11], %12 {strides = array<i32>} : memref<306x256xf32, #tpu.memory_space<vmem>>, vector<306x256xf32>,
    } else {
    }
    %c0 = arith.constant 0 : index
    %c0_1 = arith.constant 0 : index
    %3 = vector.load %arg8[%c0, %c0_1] : memref<306x256xf32, #tpu.memory_space<vmem>>, vector<306x256xf32>
    %c0_2 = arith.constant 0 : index
    %c0_3 = arith.constant 0 : index
    %4 = vector.load %arg3[%c0_2, %c0_3] : memref<306x512xbf16, #tpu.memory_space<vmem>>, vector<306x512xbf16>
    %c0_4 = arith.constant 0 : index
    %c0_5 = arith.constant 0 : index
    %5 = vector.load %arg4[%c0_4, %c0_5] : memref<512x256xbf16, #tpu.memory_space<vmem>>, vector<512x256xbf16>
    %cst = arith.constant dense<0.000000e+00> : vector<306x256xf32>
    %6 = tpu.matmul %4, %5, %cst {dimension_numbers = #tpu.dot_dimension_numbers<[1], [0], [0], [1], [0, 0, 1, 1], [], []>} : vector<306x512xbf16>, vector<512x256xbf16>, vector<306x256xf32> -> vector<306x256xf32>
    %7 = arith.addf %3, %6 : vector<306x256xf32>
    %c0_6 = arith.constant 0 : index
    %c0_7 = arith.constant 0 : index
    %8 = vector.load %arg8[%c0_6, %c0_7] : memref<306x256xf32, #tpu.memory_space<vmem>>, vector<306x256xf32>
    tpu.vector_store %arg8[%c0_6, %c0_7], %7 {strides = array<i32>} : memref<306x256xf32, #tpu.memory_space<vmem>>, vector<306x256xf32>,
    %c1_i32 = arith.constant 1 : i32
    %9 = arith.cmpi eq, %arg2, %c1_i32 : i32
    %10 = arith.extui %9 : i1 to i32
    %c0_i32_8 = arith.constant 0 : i32
    %11 = arith.cmpi ne, %10, %c0_i32_8 : i32
    scf.if %11 {
      %c0_9 = arith.constant 0 : index
      %c0_10 = arith.constant 0 : index
      %12 = vector.load %arg8[%c0_9, %c0_10] : memref<306x256xf32, #tpu.memory_space<vmem>>, vector<306x256xf32>
      %c0_11 = arith.constant 0 : index
      %c0_12 = arith.constant 0 : index
      %13 = vector.load %arg5[%c0_11, %c0_12] : memref<1x256xf32, #tpu.memory_space<vmem>>, vector<1x256xf32>
      %14 = vector.broadcast %13 : vector<1x256xf32> to vector<306x256xf32>
      %15 = arith.addf %12, %14 : vector<306x256xf32>
      %c0_13 = arith.constant 0 : index
      %c0_14 = arith.constant 0 : index
      %16 = vector.load %arg6[%c0_13, %c0_14] : memref<306x256xf32, #tpu.memory_space<vmem>>, vector<306x256xf32>
      %17 = arith.addf %15, %16 : vector<306x256xf32>
      %c0_15 = arith.constant 0 : index
      %c0_16 = arith.constant 0 : index
      %18 = vector.load %arg7[%c0_15, %c0_16] : memref<306x256xf32, #tpu.memory_space<vmem>>, vector<306x256xf32>
      tpu.vector_store %arg7[%c0_15, %c0_16], %17 {strides = array<i32>} : memref<306x256xf32, #tpu.memory_space<vmem>>, vector<306x256xf32>,
    } else {
    }
    return
  }
  func.func @transform_0(%arg0: i32, %arg1: i32, %arg2: i32) -> (i32, i32) {
    %c0_i32 = arith.constant 0 : i32
    return %arg0, %arg2 : i32, i32
  }
  func.func @transform_1(%arg0: i32, %arg1: i32, %arg2: i32) -> (i32, i32) {
    %c0_i32 = arith.constant 0 : i32
    return %arg2, %arg1 : i32, i32
  }
  func.func @transform_2(%arg0: i32, %arg1: i32, %arg2: i32) -> (i32, i32) {
    %c0_i32 = arith.constant 0 : i32
    %c0_i32_0 = arith.constant 0 : i32
    return %c0_i32, %arg1 : i32, i32
  }
  func.func @transform_3(%arg0: i32, %arg1: i32, %arg2: i32) -> (i32, i32) {
    %c0_i32 = arith.constant 0 : i32
    return %arg0, %arg1 : i32, i32
  }
  func.func @transform_4(%arg0: i32, %arg1: i32, %arg2: i32) -> (i32, i32) {
    %c0_i32 = arith.constant 0 : i32
    return %arg0, %arg1 : i32, i32
  }
}

</mosaic_0001>

<llo_original>
// kernel: model_forward.7
$region0: #{model_forward.7}
  #allocation0 [shape = 'u32[]', space=smem, size = 0x4, offset = 0x4, fixed_abs, tag = 'smem constant byte address 0x4 - core index']
  #allocation1 [shape = 'u32[144,128]{1,0:T(1,128)}', space=vmem, size = 0x12000, scoped, tag = 'internal scratch']
  #allocation2 [shape = 'f32[144,256]{1,0:T(8,128)}', space=vmem, size = 0x24000, scoped, tag = 'scratch operand']
  %s0 = inlined_call_operand.vmem [shape: bf16[144,128], index: 0, kind: input, shape index: {}]
  %s1 = inlined_call_operand.vmem [shape: bf16[128,256], index: 1, kind: input, shape index: {}]
  %s2 = inlined_call_operand.vmem [shape: f32[1,256], index: 2, kind: input, shape index: {}]
  %s3 = inlined_call_operand.vmem [shape: f32[144,256], index: 3, kind: output, shape index: {}]
  %s4 = sld [smem:[#allocation0]]
  $region30: #{model_forward.7} parent=0
    _
  %s6 = ssub.s32 1, %s4
  %s7 = scalar_select 0, %s6, %s4
  // Predicated region
  $region2: #{model_forward.7} parent=0 // pred_check
    _
  $region3: #{model_forward.7} parent=0 // pred_check_branch
    %9 = sbr.rel (0) target = $region5
  $region4: #{model_forward.7} parent=0 // pred_region
    _
  $region5: #{model_forward.7} parent=0 // pred_fallthru
    _
  // Predicated region
  $region6: #{model_forward.7} parent=0 // pred_check
    _
  $region7: #{model_forward.7} parent=0 // pred_check_branch
    %11 = sbr.rel (0) target = $region9
  $region8: #{model_forward.7} parent=0 // pred_region
    _
  $region9: #{model_forward.7} parent=0 // pred_fallthru
    _
  // Predicated region
  $region10: #{model_forward.7} parent=0 // pred_check
    _
  $region11: #{model_forward.7} parent=0 // pred_check_branch
    %13 = sbr.rel (0) target = $region13
  $region12: #{model_forward.7} parent=0 // pred_region
    _
  $region13: #{model_forward.7} parent=0 // pred_fallthru
    _
  %p15 = scmp.eq.s32.totalorder 0, 0
  // Predicated region
  $region14: #{model_forward.7} parent=0 // pred_check
    %p16 = pneg %p15
  $region15: #{model_forward.7} parent=0 // pred_check_branch
    %18 = sbr.rel (%p16) target = $region17
  $region16: #{model_forward.7} parent=0 // pred_region
    %19 = vst [vmem:[#allocation2] sm:$0xff] 0.0
    %20 = vst [vmem:[#allocation2 + $0x8] sm:$0xff] 0.0
    %21 = vst [vmem:[#allocation2 + $0x10] sm:$0xff] 0.0
    %22 = vst [vmem:[#allocation2 + $0x18] sm:$0xff] 0.0
    %23 = vst [vmem:[#allocation2 + $0x20] sm:$0xff] 0.0
    %24 = vst [vmem:[#allocation2 + $0x28] sm:$0xff] 0.0
    %25 = vst [vmem:[#allocation2 + $0x30] sm:$0xff] 0.0
    %26 = vst [vmem:[#allocation2 + $0x38] sm:$0xff] 0.0
    %27 = vst [vmem:[#allocation2 + $0x40] sm:$0xff] 0.0
    %28 = vst [vmem:[#allocation2 + $0x48] sm:$0xff] 0.0
    %29 = vst [vmem:[#allocation2 + $0x50] sm:$0xff] 0.0
    %30 = vst [vmem:[#allocation2 + $0x58] sm:$0xff] 0.0
    %31 = vst [vmem:[#allocation2 + $0x60] sm:$0xff] 0.0
    %32 = vst [vmem:[#allocation2 + $0x68] sm:$0xff] 0.0
    %33 = vst [vmem:[#allocation2 + $0x70] sm:$0xff] 0.0
    %34 = vst [vmem:[#allocation2 + $0x78] sm:$0xff] 0.0
    %35 = vst [vmem:[#allocation2 + $0x80] sm:$0xff] 0.0
    %36 = vst [vmem:[#allocation2 + $0x88] sm:$0xff] 0.0
    %37 = vst [vmem:[#allocation2 + $0x90] sm:$0xff] 0.0
    %38 = vst [vmem:[#allocation2 + $0x98] sm:$0xff] 0.0
    %39 = vst [vmem:[#allocation2 + $0xa0] sm:$0xff] 0.0
    %40 = vst [vmem:[#allocation2 + $0xa8] sm:$0xff] 0.0
    %41 = vst [vmem:[#allocation2 + $0xb0] sm:$0xff] 0.0
    %42 = vst [vmem:[#allocation2 + $0xb8] sm:$0xff] 0.0
    %43 = vst [vmem:[#allocation2 + $0xc0] sm:$0xff] 0.0
    %44 = vst [vmem:[#allocation2 + $0xc8] sm:$0xff] 0.0
    %45 = vst [vmem:[#allocation2 + $0xd0] sm:$0xff] 0.0
    %46 = vst [vmem:[#allocation2 + $0xd8] sm:$0xff] 0.0
    %47 = vst [vmem:[#allocation2 + $0xe0] sm:$0xff] 0.0
    %48 = vst [vmem:[#allocation2 + $0xe8] sm:$0xff] 0.0
    %49 = vst [vmem:[#allocation2 + $0xf0] sm:$0xff] 0.0
    %50 = vst [vmem:[#allocation2 + $0xf8] sm:$0xff] 0.0
    %51 = vst [vmem:[#allocation2 + $0x100] sm:$0xff] 0.0
    %52 = vst [vmem:[#allocation2 + $0x108] sm:$0xff] 0.0
    %53 = vst [vmem:[#allocation2 + $0x110] sm:$0xff] 0.0
    %54 = vst [vmem:[#allocation2 + $0x118] sm:$0xff] 0.0
  $region17: #{model_forward.7} parent=0 // pred_fallthru
    _
  %v55 = vld [vmem:[#allocation2] sm:$0xff]
  %v56 = vld [vmem:[#allocation2 + $0x8] sm:$0xff]
  %v57 = vld [vmem:[#allocation2 + $0x10] sm:$0xff]
  %v58 = vld [vmem:[#allocation2 + $0x18] sm:$0xff]
  %v59 = vld [vmem:[#allocation2 + $0x20] sm:$0xff]
  %v60 = vld [vmem:[#allocation2 + $0x28] sm:$0xff]
  %v61 = vld [vmem:[#allocation2 + $0x30] sm:$0xff]
  %v62 = vld [vmem:[#allocation2 + $0x38] sm:$0xff]
  %v63 = vld [vmem:[#allocation2 + $0x40] sm:$0xff]
  %v64 = vld [vmem:[#allocation2 + $0x48] sm:$0xff]
  %v65 = vld [vmem:[#allocation2 + $0x50] sm:$0xff]
  %v66 = vld [vmem:[#allocation2 + $0x58] sm:$0xff]
  %v67 = vld [vmem:[#allocation2 + $0x60] sm:$0xff]
  %v68 = vld [vmem:[#allocation2 + $0x68] sm:$0xff]
  %v69 = vld [vmem:[#allocation2 + $0x70] sm:$0xff]
  %v70 = vld [vmem:[#allocation2 + $0x78] sm:$0xff]
  %v71 = vld [vmem:[#allocation2 + $0x80] sm:$0xff]
  %v72 = vld [vmem:[#allocation2 + $0x88] sm:$0xff]
  %v73 = vld [vmem:[#allocation2 + $0x90] sm:$0xff]
  %v74 = vld [vmem:[#allocation2 + $0x98] sm:$0xff]
  %v75 = vld [vmem:[#allocation2 + $0xa0] sm:$0xff]
  %v76 = vld [vmem:[#allocation2 + $0xa8] sm:$0xff]
  %v77 = vld [vmem:[#allocation2 + $0xb0] sm:$0xff]
  %v78 = vld [vmem:[#allocation2 + $0xb8] sm:$0xff]
  %v79 = vld [vmem:[#allocation2 + $0xc0] sm:$0xff]
  %v80 = vld [vmem:[#allocation2 + $0xc8] sm:$0xff]
  %v81 = vld [vmem:[#allocation2 + $0xd0] sm:$0xff]
  %v82 = vld [vmem:[#allocation2 + $0xd8] sm:$0xff]
  %v83 = vld [vmem:[#allocation2 + $0xe0] sm:$0xff]
  %v84 = vld [vmem:[#allocation2 + $0xe8] sm:$0xff]
  %v85 = vld [vmem:[#allocation2 + $0xf0] sm:$0xff]
  %v86 = vld [vmem:[#allocation2 + $0xf8] sm:$0xff]
  %v87 = vld [vmem:[#allocation2 + $0x100] sm:$0xff]
  %v88 = vld [vmem:[#allocation2 + $0x108] sm:$0xff]
  %v89 = vld [vmem:[#allocation2 + $0x110] sm:$0xff]
  %v90 = vld [vmem:[#allocation2 + $0x118] sm:$0xff]
  %v91 = vld [vmem:[%s0] sm:$0xf]
  %v92 = vld [vmem:[%s0 + $0x4] sm:$0xf]
  %v93 = vld [vmem:[%s0 + $0x8] sm:$0xf]
  %v94 = vld [vmem:[%s0 + $0xc] sm:$0xf]
  %v95 = vld [vmem:[%s0 + $0x10] sm:$0xf]
  %v96 = vld [vmem:[%s0 + $0x14] sm:$0xf]
  %v97 = vld [vmem:[%s0 + $0x18] sm:$0xf]
  %v98 = vld [vmem:[%s0 + $0x1c] sm:$0xf]
  %v99 = vld [vmem:[%s0 + $0x20] sm:$0xf]
  %v100 = vld [vmem:[%s0 + $0x24] sm:$0xf]
  %v101 = vld [vmem:[%s0 + $0x28] sm:$0xf]
  %v102 = vld [vmem:[%s0 + $0x2c] sm:$0xf]
  %v103 = vld [vmem:[%s0 + $0x30] sm:$0xf]
  %v104 = vld [vmem:[%s0 + $0x34] sm:$0xf]
  %v105 = vld [vmem:[%s0 + $0x38] sm:$0xf]
  %v106 = vld [vmem:[%s0 + $0x3c] sm:$0xf]
  %v107 = vld [vmem:[%s0 + $0x40] sm:$0xf]
  %v108 = vld [vmem:[%s0 + $0x44] sm:$0xf]
  %v109 = vld [vmem:[%s1] sm:$0xff]
  %v110 = vld [vmem:[%s1 + $0x8] sm:$0xff]
  %v111 = vld [vmem:[%s1 + $0x10] sm:$0xff]
  %v112 = vld [vmem:[%s1 + $0x18] sm:$0xff]
  %v113 = vld [vmem:[%s1 + $0x20] sm:$0xff]
  %v114 = vld [vmem:[%s1 + $0x28] sm:$0xff]
  %v115 = vld [vmem:[%s1 + $0x30] sm:$0xff]
  %v116 = vld [vmem:[%s1 + $0x38] sm:$0xff]
  %v117 = vld [vmem:[%s1 + $0x40] sm:$0xff]
  %v118 = vld [vmem:[%s1 + $0x48] sm:$0xff]
  %v119 = vld [vmem:[%s1 + $0x50] sm:$0xff]
  %v120 = vld [vmem:[%s1 + $0x58] sm:$0xff]
  %v121 = vld [vmem:[%s1 + $0x60] sm:$0xff]
  %v122 = vld [vmem:[%s1 + $0x68] sm:$0xff]
  %v123 = vld [vmem:[%s1 + $0x70] sm:$0xff]
  %v124 = vld [vmem:[%s1 + $0x78] sm:$0xff]
  %v143 = vunpack.c.l.b16 %v91
  %v144 = vunpack.c.l.b16 %v92
  %v145 = vunpack.c.l.b16 %v93
  %v146 = vunpack.c.l.b16 %v94
  %v147 = vunpack.c.l.b16 %v95
  %v148 = vunpack.c.l.b16 %v96
  %v149 = vunpack.c.l.b16 %v97
  %v150 = vunpack.c.l.b16 %v98
  %v151 = vunpack.c.l.b16 %v99
  %v152 = vunpack.c.l.b16 %v100
  %v153 = vunpack.c.l.b16 %v101
  %v154 = vunpack.c.l.b16 %v102
  %v155 = vunpack.c.l.b16 %v103
  %v156 = vunpack.c.l.b16 %v104
  %v157 = vunpack.c.l.b16 %v105
  %v158 = vunpack.c.l.b16 %v106
  %v159 = vunpack.c.l.b16 %v107
  %v160 = vunpack.c.l.b16 %v108
  %v161 = vpack.c.b16 %v144, %v143
  %v162 = vpack.c.b16 %v146, %v145
  %v163 = vpack.c.b16 %v148, %v147
  %v164 = vpack.c.b16 %v150, %v149
  %v165 = vpack.c.b16 %v152, %v151
  %v166 = vpack.c.b16 %v154, %v153
  %v167 = vpack.c.b16 %v156, %v155
  %v168 = vpack.c.b16 %v158, %v157
  %v169 = vpack.c.b16 %v160, %v159
  %v195 = vunpack.c.l.b16 %v109
  %v196 = vunpack.c.h.b16 %v109
  %v197 = vunpack.c.l.b16 %v110
  %v198 = vunpack.c.h.b16 %v110
  %v199 = vunpack.c.l.b16 %v111
  %v200 = vunpack.c.h.b16 %v111
  %v201 = vunpack.c.l.b16 %v112
  %v202 = vunpack.c.h.b16 %v112
  %v203 = vunpack.c.l.b16 %v113
  %v204 = vunpack.c.h.b16 %v113
  %v205 = vunpack.c.l.b16 %v114
  %v206 = vunpack.c.h.b16 %v114
  %v207 = vunpack.c.l.b16 %v115
  %v208 = vunpack.c.h.b16 %v115
  %v209 = vunpack.c.l.b16 %v116
  %v210 = vunpack.c.h.b16 %v116
  %v211 = vunpack.c.l.b16 %v117
  %v212 = vunpack.c.h.b16 %v117
  %v213 = vunpack.c.l.b16 %v118
  %v214 = vunpack.c.h.b16 %v118
  %v215 = vunpack.c.l.b16 %v119
  %v216 = vunpack.c.h.b16 %v119
  %v217 = vunpack.c.l.b16 %v120
  %v218 = vunpack.c.h.b16 %v120
  %v219 = vunpack.c.l.b16 %v121
  %v220 = vunpack.c.h.b16 %v121
  %v221 = vunpack.c.l.b16 %v122
  %v222 = vunpack.c.h.b16 %v122
  %v223 = vunpack.c.l.b16 %v123
  %v224 = vunpack.c.h.b16 %v123
  %v225 = vunpack.c.l.b16 %v124
  %v226 = vunpack.c.h.b16 %v124
  %v227 = vpack.c.b16 %v197, %v195
  %v228 = vpack.c.b16 %v198, %v196
  %v229 = vpack.c.b16 %v201, %v199
  %v230 = vpack.c.b16 %v202, %v200
  %v231 = vpack.c.b16 %v205, %v203
  %v232 = vpack.c.b16 %v206, %v204
  %v233 = vpack.c.b16 %v209, %v207
  %v234 = vpack.c.b16 %v210, %v208
  %v235 = vpack.c.b16 %v213, %v211
  %v236 = vpack.c.b16 %v214, %v212
  %v237 = vpack.c.b16 %v217, %v215
  %v238 = vpack.c.b16 %v218, %v216
  %v239 = vpack.c.b16 %v221, %v219
  %v240 = vpack.c.b16 %v222, %v220
  %v241 = vpack.c.b16 %v225, %v223
  %v242 = vpack.c.b16 %v226, %v224
  %259 = vmatprep.subr.bf16.mxu0 %v228
  %260 = vmatpush1.bf16.msra.mxu0 %v227
  %261 = vmatprep.subr.bf16.mxu0 %v230
  %262 = vmatpush1.bf16.msra.mxu0 %v229
  %263 = vmatprep.subr.bf16.mxu0 %v232
  %264 = vmatpush1.bf16.msra.mxu0 %v231
  %265 = vmatprep.subr.bf16.mxu0 %v234
  %266 = vmatpush1.bf16.msra.mxu0 %v233
  %267 = vmatprep.subr.bf16.mxu0 %v236
  %268 = vmatpush1.bf16.msra.mxu0 %v235
  %269 = vmatprep.subr.bf16.mxu0 %v238
  %270 = vmatpush1.bf16.msra.mxu0 %v237
  %271 = vmatprep.subr.bf16.mxu0 %v240
  %272 = vmatpush1.bf16.msra.mxu0 %v239
  %273 = vmatprep.subr.bf16.mxu0 %v242
  %274 = vmatpush1.bf16.msra.mxu0 %v241
  %275 = vmatprep.subr.bf16.mxu0 0
  %276 = vmatpush1.bf16.msra.mxu0 0
  %277 = vmatprep.subr.bf16.mxu0 0
  %278 = vmatpush1.bf16.msra.mxu0 0
  %279 = vmatprep.subr.bf16.mxu0 0
  %280 = vmatpush1.bf16.msra.mxu0 0
  %281 = vmatprep.subr.bf16.mxu0 0
  %282 = vmatpush1.bf16.msra.mxu0 0
  %283 = vmatprep.subr.bf16.mxu0 0
  %284 = vmatpush1.bf16.msra.mxu0 0
  %285 = vmatprep.subr.bf16.mxu0 0
  %286 = vmatpush1.bf16.msra.mxu0 0
  %287 = vmatprep.subr.bf16.mxu0 0
  %288 = vmatpush1.bf16.msra.mxu0 0
  %289 = vmatprep.subr.bf16.mxu0 0
  %290 = vmatpush1.bf16.msra.mxu0 0
  %291 = vmatprep.mubr.bf16.mxu0 0
  %292 = vmatmul.mubr.bf16.gmra.mrb[0].mxu0 %v161
  %v293 = vpop.f32.mrb[0].mxu0
  %v294 = vadd.f32 0.0, %v293
  %v295 = vpop.f32.mrb[0].mxu0
  %v296 = vadd.f32 0.0, %v295
  %v297 = vpop.f32.mrb[0].mxu0
  %v298 = vadd.f32 0.0, %v297
  %v299 = vpop.f32.mrb[0].mxu0
  %v300 = vadd.f32 0.0, %v299
  %301 = vmatprep.mubr.bf16.mxu0 0
  %302 = vmatmul.mubr.bf16.gmra.mrb[0].mxu0 %v162
  %v303 = vpop.f32.mrb[0].mxu0
  %v304 = vadd.f32 0.0, %v303
  %v305 = vpop.f32.mrb[0].mxu0
  %v306 = vadd.f32 0.0, %v305
  %v307 = vpop.f32.mrb[0].mxu0
  %v308 = vadd.f32 0.0, %v307
  %v309 = vpop.f32.mrb[0].mxu0
  %v310 = vadd.f32 0.0, %v309
  %311 = vmatprep.mubr.bf16.mxu0 0
  %312 = vmatmul.mubr.bf16.gmra.mrb[0].mxu0 %v163
  %v313 = vpop.f32.mrb[0].mxu0
  %v314 = vadd.f32 0.0, %v313
  %v315 = vpop.f32.mrb[0].mxu0
  %v316 = vadd.f32 0.0, %v315
  %v317 = vpop.f32.mrb[0].mxu0
  %v318 = vadd.f32 0.0, %v317
  %v319 = vpop.f32.mrb[0].mxu0
  %v320 = vadd.f32 0.0, %v319
  %321 = vmatprep.mubr.bf16.mxu0 0
  %322 = vmatmul.mubr.bf16.gmra.mrb[0].mxu0 %v164
  %v323 = vpop.f32.mrb[0].mxu0
  %v324 = vadd.f32 0.0, %v323
  %v325 = vpop.f32.mrb[0].mxu0
  %v326 = vadd.f32 0.0, %v325
  %v327 = vpop.f32.mrb[0].mxu0
  %v328 = vadd.f32 0.0, %v327
  %v329 = vpop.f32.mrb[0].mxu0
  %v330 = vadd.f32 0.0, %v329
  %331 = vmatprep.mubr.bf16.mxu0 0
  %332 = vmatmul.mubr.bf16.gmra.mrb[0].mxu0 %v165
  %v333 = vpop.f32.mrb[0].mxu0
  %v334 = vadd.f32 0.0, %v333
  %v335 = vpop.f32.mrb[0].mxu0
  %v336 = vadd.f32 0.0, %v335
  %v337 = vpop.f32.mrb[0].mxu0
  %v338 = vadd.f32 0.0, %v337
  %v339 = vpop.f32.mrb[0].mxu0
  %v340 = vadd.f32 0.0, %v339
  %341 = vmatprep.mubr.bf16.mxu0 0
  %342 = vmatmul.mubr.bf16.gmra.mrb[0].mxu0 %v166
  %v343 = vpop.f32.mrb[0].mxu0
  %v344 = vadd.f32 0.0, %v343
  %v345 = vpop.f32.mrb[0].mxu0
  %v346 = vadd.f32 0.0, %v345
  %v347 = vpop.f32.mrb[0].mxu0
  %v348 = vadd.f32 0.0, %v347
  %v349 = vpop.f32.mrb[0].mxu0
  %v350 = vadd.f32 0.0, %v349
  %351 = vmatprep.mubr.bf16.mxu0 0
  %352 = vmatmul.mubr.bf16.gmra.mrb[0].mxu0 %v167
  %v353 = vpop.f32.mrb[0].mxu0
  %v354 = vadd.f32 0.0, %v353
  %v355 = vpop.f32.mrb[0].mxu0
  %v356 = vadd.f32 0.0, %v355
  %v357 = vpop.f32.mrb[0].mxu0
  %v358 = vadd.f32 0.0, %v357
  %v359 = vpop.f32.mrb[0].mxu0
  %v360 = vadd.f32 0.0, %v359
  %361 = vmatprep.mubr.bf16.mxu0 0
  %362 = vmatmul.mubr.bf16.gmra.mrb[0].mxu0 %v168
  %v363 = vpop.f32.mrb[0].mxu0
  %v364 = vadd.f32 0.0, %v363
  %v365 = vpop.f32.mrb[0].mxu0
  %v366 = vadd.f32 0.0, %v365
  %v367 = vpop.f32.mrb[0].mxu0
  %v368 = vadd.f32 0.0, %v367
  %v369 = vpop.f32.mrb[0].mxu0
  %v370 = vadd.f32 0.0, %v369
  %371 = vmatprep.mubr.bf16.mxu0 0
  %372 = vmatmul.mubr.bf16.gmra.mrb[0].mxu0 %v169
  %v373 = vpop.f32.mrb[0].mxu0
  %v374 = vadd.f32 0.0, %v373
  %v375 = vpop.f32.mrb[0].mxu0
  %v376 = vadd.f32 0.0, %v375
  %v377 = vpop.f32.mrb[0].mxu0
  %v378 = vadd.f32 0.0, %v377
  %v379 = vpop.f32.mrb[0].mxu0
  %v380 = vadd.f32 0.0, %v379
  %381 = vdwg.mxu0
  %v382 = vadd.f32 %v55, %v294
  %v383 = vadd.f32 %v56, %v296
  %v384 = vadd.f32 %v57, %v298
  %v385 = vadd.f32 %v58, %v300
  %v386 = vadd.f32 %v59, %v304
  %v387 = vadd.f32 %v60, %v306
  %v388 = vadd.f32 %v61, %v308
  %v389 = vadd.f32 %v62, %v310
  %v390 = vadd.f32 %v63, %v314
  %v391 = vadd.f32 %v64, %v316
  %v392 = vadd.f32 %v65, %v318
  %v393 = vadd.f32 %v66, %v320
  %v394 = vadd.f32 %v67, %v324
  %v395 = vadd.f32 %v68, %v326
  %v396 = vadd.f32 %v69, %v328
  %v397 = vadd.f32 %v70, %v330
  %v398 = vadd.f32 %v71, %v334
  %v399 = vadd.f32 %v72, %v336
  %v400 = vadd.f32 %v73, %v338
  %v401 = vadd.f32 %v74, %v340
  %v402 = vadd.f32 %v75, %v344
  %v403 = vadd.f32 %v76, %v346
  %v404 = vadd.f32 %v77, %v348
  %v405 = vadd.f32 %v78, %v350
  %v406 = vadd.f32 %v79, %v354
  %v407 = vadd.f32 %v80, %v356
  %v408 = vadd.f32 %v81, %v358
  %v409 = vadd.f32 %v82, %v360
  %v410 = vadd.f32 %v83, %v364
  %v411 = vadd.f32 %v84, %v366
  %v412 = vadd.f32 %v85, %v368
  %v413 = vadd.f32 %v86, %v370
  %v414 = vadd.f32 %v87, %v374
  %v415 = vadd.f32 %v88, %v376
  %v416 = vadd.f32 %v89, %v378
  %v417 = vadd.f32 %v90, %v380
  %418 = vst [vmem:[#allocation2] sm:$0xff] %v382
  %419 = vst [vmem:[#allocation2 + $0x8] sm:$0xff] %v383
  %420 = vst [vmem:[#allocation2 + $0x10] sm:$0xff] %v384
  %421 = vst [vmem:[#allocation2 + $0x18] sm:$0xff] %v385
  %422 = vst [vmem:[#allocation2 + $0x20] sm:$0xff] %v386
  %423 = vst [vmem:[#allocation2 + $0x28] sm:$0xff] %v387
  %424 = vst [vmem:[#allocation2 + $0x30] sm:$0xff] %v388
  %425 = vst [vmem:[#allocation2 + $0x38] sm:$0xff] %v389
  %426 = vst [vmem:[#allocation2 + $0x40] sm:$0xff] %v390
  %427 = vst [vmem:[#allocation2 + $0x48] sm:$0xff] %v391
  %428 = vst [vmem:[#allocation2 + $0x50] sm:$0xff] %v392
  %429 = vst [vmem:[#allocation2 + $0x58] sm:$0xff] %v393
  %430 = vst [vmem:[#allocation2 + $0x60] sm:$0xff] %v394
  %431 = vst [vmem:[#allocation2 + $0x68] sm:$0xff] %v395
  %432 = vst [vmem:[#allocation2 + $0x70] sm:$0xff] %v396
  %433 = vst [vmem:[#allocation2 + $0x78] sm:$0xff] %v397
  %434 = vst [vmem:[#allocation2 + $0x80] sm:$0xff] %v398
  %435 = vst [vmem:[#allocation2 + $0x88] sm:$0xff] %v399
  %436 = vst [vmem:[#allocation2 + $0x90] sm:$0xff] %v400
  %437 = vst [vmem:[#allocation2 + $0x98] sm:$0xff] %v401
  %438 = vst [vmem:[#allocation2 + $0xa0] sm:$0xff] %v402
  %439 = vst [vmem:[#allocation2 + $0xa8] sm:$0xff] %v403
  %440 = vst [vmem:[#allocation2 + $0xb0] sm:$0xff] %v404
  %441 = vst [vmem:[#allocation2 + $0xb8] sm:$0xff] %v405
  %442 = vst [vmem:[#allocation2 + $0xc0] sm:$0xff] %v406
  %443 = vst [vmem:[#allocation2 + $0xc8] sm:$0xff] %v407
  %444 = vst [vmem:[#allocation2 + $0xd0] sm:$0xff] %v408
  %445 = vst [vmem:[#allocation2 + $0xd8] sm:$0xff] %v409
  %446 = vst [vmem:[#allocation2 + $0xe0] sm:$0xff] %v410
  %447 = vst [vmem:[#allocation2 + $0xe8] sm:$0xff] %v411
  %448 = vst [vmem:[#allocation2 + $0xf0] sm:$0xff] %v412
  %449 = vst [vmem:[#allocation2 + $0xf8] sm:$0xff] %v413
  %450 = vst [vmem:[#allocation2 + $0x100] sm:$0xff] %v414
  %451 = vst [vmem:[#allocation2 + $0x108] sm:$0xff] %v415
  %452 = vst [vmem:[#allocation2 + $0x110] sm:$0xff] %v416
  %453 = vst [vmem:[#allocation2 + $0x118] sm:$0xff] %v417
  // Predicated region
  $region18: #{model_forward.7} parent=0 // pred_check
    %p454 = pneg %p15
  $region19: #{model_forward.7} parent=0 // pred_check_branch
    %456 = sbr.rel (%p454) target = $region21
  $region20: #{model_forward.7} parent=0 // pred_region
    %v457 = vld [vmem:[#allocation2] sm:$0xff]
    %v458 = vld [vmem:[#allocation2 + $0x8] sm:$0xff]
    %v459 = vld [vmem:[#allocation2 + $0x10] sm:$0xff]
    %v460 = vld [vmem:[#allocation2 + $0x18] sm:$0xff]
    %v461 = vld [vmem:[#allocation2 + $0x20] sm:$0xff]
    %v462 = vld [vmem:[#allocation2 + $0x28] sm:$0xff]
    %v463 = vld [vmem:[#allocation2 + $0x30] sm:$0xff]
    %v464 = vld [vmem:[#allocation2 + $0x38] sm:$0xff]
    %v465 = vld [vmem:[#allocation2 + $0x40] sm:$0xff]
    %v466 = vld [vmem:[#allocation2 + $0x48] sm:$0xff]
    %v467 = vld [vmem:[#allocation2 + $0x50] sm:$0xff]
    %v468 = vld [vmem:[#allocation2 + $0x58] sm:$0xff]
    %v469 = vld [vmem:[#allocation2 + $0x60] sm:$0xff]
    %v470 = vld [vmem:[#allocation2 + $0x68] sm:$0xff]
    %v471 = vld [vmem:[#allocation2 + $0x70] sm:$0xff]
    %v472 = vld [vmem:[#allocation2 + $0x78] sm:$0xff]
    %v473 = vld [vmem:[#allocation2 + $0x80] sm:$0xff]
    %v474 = vld [vmem:[#allocation2 + $0x88] sm:$0xff]
    %v475 = vld [vmem:[#allocation2 + $0x90] sm:$0xff]
    %v476 = vld [vmem:[#allocation2 + $0x98] sm:$0xff]
    %v477 = vld [vmem:[#allocation2 + $0xa0] sm:$0xff]
    %v478 = vld [vmem:[#allocation2 + $0xa8] sm:$0xff]
    %v479 = vld [vmem:[#allocation2 + $0xb0] sm:$0xff]
    %v480 = vld [vmem:[#allocation2 + $0xb8] sm:$0xff]
    %v481 = vld [vmem:[#allocation2 + $0xc0] sm:$0xff]
    %v482 = vld [vmem:[#allocation2 + $0xc8] sm:$0xff]
    %v483 = vld [vmem:[#allocation2 + $0xd0] sm:$0xff]
    %v484 = vld [vmem:[#allocation2 + $0xd8] sm:$0xff]
    %v485 = vld [vmem:[#allocation2 + $0xe0] sm:$0xff]
    %v486 = vld [vmem:[#allocation2 + $0xe8] sm:$0xff]
    %v487 = vld [vmem:[#allocation2 + $0xf0] sm:$0xff]
    %v488 = vld [vmem:[#allocation2 + $0xf8] sm:$0xff]
    %v489 = vld [vmem:[#allocation2 + $0x100] sm:$0xff]
    %v490 = vld [vmem:[#allocation2 + $0x108] sm:$0xff]
    %v491 = vld [vmem:[#allocation2 + $0x110] sm:$0xff]
    %v492 = vld [vmem:[#allocation2 + $0x118] sm:$0xff]
    %v493 = vld [vmem:[%s2] sm:$0x3]
    %v495 = vlaneseq
    %v496 = vshrl.u32 %v495, 7
    %v497 = vsub.s32 0, %v496
    %v498 = vrot.slane %v493, %v497
    %v499 = vlaneseq
    %v500 = vshrl.u32 %v499, 7
    %v501 = vsub.s32 1, %v500
    %v502 = vrot.slane %v493, %v501
    %v505 = vadd.f32 %v457, %v498
    %v506 = vadd.f32 %v458, %v502
    %v507 = vadd.f32 %v459, %v498
    %v508 = vadd.f32 %v460, %v502
    %v509 = vadd.f32 %v461, %v498
    %v510 = vadd.f32 %v462, %v502
    %v511 = vadd.f32 %v463, %v498
    %v512 = vadd.f32 %v464, %v502
    %v513 = vadd.f32 %v465, %v498
    %v514 = vadd.f32 %v466, %v502
    %v515 = vadd.f32 %v467, %v498
    %v516 = vadd.f32 %v468, %v502
    %v517 = vadd.f32 %v469, %v498
    %v518 = vadd.f32 %v470, %v502
    %v519 = vadd.f32 %v471, %v498
    %v520 = vadd.f32 %v472, %v502
    %v521 = vadd.f32 %v473, %v498
    %v522 = vadd.f32 %v474, %v502
    %v523 = vadd.f32 %v475, %v498
    %v524 = vadd.f32 %v476, %v502
    %v525 = vadd.f32 %v477, %v498
    %v526 = vadd.f32 %v478, %v502
    %v527 = vadd.f32 %v479, %v498
    %v528 = vadd.f32 %v480, %v502
    %v529 = vadd.f32 %v481, %v498
    %v530 = vadd.f32 %v482, %v502
    %v531 = vadd.f32 %v483, %v498
    %v532 = vadd.f32 %v484, %v502
    %v533 = vadd.f32 %v485, %v498
    %v534 = vadd.f32 %v486, %v502
    %v535 = vadd.f32 %v487, %v498
    %v536 = vadd.f32 %v488, %v502
    %v537 = vadd.f32 %v489, %v498
    %v538 = vadd.f32 %v490, %v502
    %v539 = vadd.f32 %v491, %v498
    %v540 = vadd.f32 %v492, %v502
    %541 = vst [vmem:[%s3] sm:$0xff] %v505
    %542 = vst [vmem:[%s3 + $0x8] sm:$0xff] %v506
    %543 = vst [vmem:[%s3 + $0x10] sm:$0xff] %v507
    %544 = vst [vmem:[%s3 + $0x18] sm:$0xff] %v508
    %545 = vst [vmem:[%s3 + $0x20] sm:$0xff] %v509
    %546 = vst [vmem:[%s3 + $0x28] sm:$0xff] %v510
    %547 = vst [vmem:[%s3 + $0x30] sm:$0xff] %v511
    %548 = vst [vmem:[%s3 + $0x38] sm:$0xff] %v512
    %549 = vst [vmem:[%s3 + $0x40] sm:$0xff] %v513
    %550 = vst [vmem:[%s3 + $0x48] sm:$0xff] %v514
    %551 = vst [vmem:[%s3 + $0x50] sm:$0xff] %v515
    %552 = vst [vmem:[%s3 + $0x58] sm:$0xff] %v516
    %553 = vst [vmem:[%s3 + $0x60] sm:$0xff] %v517
    %554 = vst [vmem:[%s3 + $0x68] sm:$0xff] %v518
    %555 = vst [vmem:[%s3 + $0x70] sm:$0xff] %v519
    %556 = vst [vmem:[%s3 + $0x78] sm:$0xff] %v520
    %557 = vst [vmem:[%s3 + $0x80] sm:$0xff] %v521
    %558 = vst [vmem:[%s3 + $0x88] sm:$0xff] %v522
    %559 = vst [vmem:[%s3 + $0x90] sm:$0xff] %v523
    %560 = vst [vmem:[%s3 + $0x98] sm:$0xff] %v524
    %561 = vst [vmem:[%s3 + $0xa0] sm:$0xff] %v525
    %562 = vst [vmem:[%s3 + $0xa8] sm:$0xff] %v526
    %563 = vst [vmem:[%s3 + $0xb0] sm:$0xff] %v527
    %564 = vst [vmem:[%s3 + $0xb8] sm:$0xff] %v528
    %565 = vst [vmem:[%s3 + $0xc0] sm:$0xff] %v529
    %566 = vst [vmem:[%s3 + $0xc8] sm:$0xff] %v530
    %567 = vst [vmem:[%s3 + $0xd0] sm:$0xff] %v531
    %568 = vst [vmem:[%s3 + $0xd8] sm:$0xff] %v532
    %569 = vst [vmem:[%s3 + $0xe0] sm:$0xff] %v533
    %570 = vst [vmem:[%s3 + $0xe8] sm:$0xff] %v534
    %571 = vst [vmem:[%s3 + $0xf0] sm:$0xff] %v535
    %572 = vst [vmem:[%s3 + $0xf8] sm:$0xff] %v536
    %573 = vst [vmem:[%s3 + $0x100] sm:$0xff] %v537
    %574 = vst [vmem:[%s3 + $0x108] sm:$0xff] %v538
    %575 = vst [vmem:[%s3 + $0x110] sm:$0xff] %v539
    %576 = vst [vmem:[%s3 + $0x118] sm:$0xff] %v540
  $region21: #{model_forward.7} parent=0 // pred_fallthru
    _
  // Predicated region
  $region22: #{model_forward.7} parent=0 // pred_check
    _
  $region23: #{model_forward.7} parent=0 // pred_check_branch
    %578 = sbr.rel (0) target = $region25
  $region24: #{model_forward.7} parent=0 // pred_region
    _
  $region25: #{model_forward.7} parent=0 // pred_fallthru
    _
  // Predicated region
  $region26: #{model_forward.7} parent=0 // pred_check
    _
  $region27: #{model_forward.7} parent=0 // pred_check_branch
    %580 = sbr.rel (0) target = $region29
  $region28: #{model_forward.7} parent=0 // pred_region
    _
  $region29: #{model_forward.7} parent=0 // pred_fallthru
    _

// kernel: model_forward.8
$region0: #{model_forward.8}
  #allocation0 [shape = 'u32[]', space=smem, size = 0x4, offset = 0x4, fixed_abs, tag = 'smem constant byte address 0x4 - core index']
  #allocation1 [shape = 'u32[144,128]{1,0:T(1,128)}', space=vmem, size = 0x12000, scoped, tag = 'internal scratch']
  #allocation2 [shape = 'f32[306,256]{1,0:T(8,128)}', space=vmem, size = 0x4e000, scoped, tag = 'scratch operand']
  %s0 = inlined_call_operand.vmem [shape: bf16[306,256], index: 0, kind: input, shape index: {}]
  %s1 = inlined_call_operand.vmem [shape: bf16[256,768], index: 1, kind: input, shape index: {}]
  %s2 = inlined_call_operand.vmem [shape: f32[306,768], index: 2, kind: output, shape index: {}]
  %s3 = sld [smem:[#allocation0]]
  $region106: #{model_forward.8} parent=0
    _
  %s5 = ssub.s32 1, %s3
  %s6 = scalar_select 0, %s5, %s3
  $region1: #{model_forward.8} parent=0
    #allocation3 [shape = 'u8[262144]{0}', space=vmem, size = 0x40000, scoped, tag = 'input window, operand 1']
    #allocation4 [shape = 'u8[638976]{0}', space=vmem, size = 0x9c000, scoped, tag = 'output window, operand 0']
    loop: start=0, step=1, limit=5
    $region2: #{model_forward.8} parent=1 // loop_pre_header
      _
    $region3: #{model_forward.8} parent=1 // loop_header
      %s8 = sphi 0, %s12
      %p9 = scmp.ge.s32.totalorder %s8, 5
      %s15 = sphi 0, %s34
      %s16 = sphi 0, %s30
      %s17 = sphi 0, %s26
      %s18 = sphi 0, %s15
      %s19 = sphi 0, %s16
      %s20 = sphi 0, %s17
      %s21 = sphi 0, %s18
      %s22 = sphi 0, %s19
      %s23 = sphi 0, %s20
      %s39 = sphi 0, %s41
      %s42 = sphi 0, %s39
      %s43 = sphi 0, %s42
      %s59 = sphi 0, %s43
      %s67 = sphi 0, %s69
      %s70 = sphi 0, %s67
      %s71 = sphi 0, %s70
      %s87 = sphi 0, %s71
      %s95 = sphi 0, %s97
      %s98 = sphi 0, %s95
      %s99 = sphi 0, %s98
      %s115 = sphi 0, %s99
    $region4: #{model_forward.8} parent=1 // loop_header_branch
      %11 = sbr.rel (%p9) target = $region8
    $region5: #{model_forward.8} parent=1 // loop_body
      %s13 = ssub.s32 %s8, 1
      %s14 = ssub.s32 %s8, 2
      %s24 = sadd.s32 1, %s17
      %p25 = scmp.ge.s32.totalorder %s24, 1
      %s26 = scalar_select %p25, 0, %s24
      %s27 = sadd.s32 1, %s16
      %s28 = scalar_select %p25, %s27, %s16
      %p29 = scmp.ge.s32.totalorder %s28, 3
      %s30 = scalar_select %p29, 0, %s28
      %s31 = sadd.s32 1, %s15
      %s32 = scalar_select %p29, %s31, %s15
      %p33 = scmp.ge.s32.totalorder %s32, 1
      %s34 = scalar_select %p33, 0, %s32
      %s35 = ssub.s32 %s15, %s34
      %s36 = ssub.s32 %s17, %s26
      %s37 = sor.u32 %s35, %s36
      %p38 = scmp.eq.s32.totalorder %s37, 0
      %s40 = sadd.s32 %s39, 1
      %s41 = scalar_select %p38, %s39, %s40
      %p44 = pneg %p38
      %p45 = scmp.eq.s32.totalorder %s8, 2
      %p46 = por %p44, %p45
      %p47 = scmp.ne.s32.totalorder %s39, %s42
      %p48 = scmp.eq.s32.totalorder %s8, 0
      %p49 = por %p47, %p48
      %p50 = scmp.ne.s32.totalorder %s39, %s42
      %p51 = scmp.eq.s32.totalorder %s13, 2
      %p52 = por %p50, %p51
      %p53 = scmp.ne.s32.totalorder %s42, %s43
      %p54 = scmp.eq.s32.totalorder %s13, 0
      %p55 = por %p53, %p54
      %p56 = scmp.ne.s32.totalorder %s42, %s43
      %p57 = scmp.eq.s32.totalorder %s14, 2
      %p58 = por %p56, %p57
      %p60 = scmp.ne.s32.totalorder %s43, %s59
      %p61 = scmp.eq.s32.totalorder %s14, 0
      %p62 = por %p60, %p61
      %s63 = ssub.s32 %s17, %s26
      %s64 = ssub.s32 %s16, %s30
      %s65 = sor.u32 %s63, %s64
      %p66 = scmp.eq.s32.totalorder %s65, 0
      %s68 = sadd.s32 %s67, 1
      %s69 = scalar_select %p66, %s67, %s68
      %p72 = pneg %p66
      %p73 = scmp.eq.s32.totalorder %s8, 2
      %p74 = por %p72, %p73
      %p75 = scmp.ne.s32.totalorder %s67, %s70
      %p76 = scmp.eq.s32.totalorder %s8, 0
      %p77 = por %p75, %p76
      %p78 = scmp.ne.s32.totalorder %s67, %s70
      %p79 = scmp.eq.s32.totalorder %s13, 2
      %p80 = por %p78, %p79
      %p81 = scmp.ne.s32.totalorder %s70, %s71
      %p82 = scmp.eq.s32.totalorder %s13, 0
      %p83 = por %p81, %p82
      %p84 = scmp.ne.s32.totalorder %s70, %s71
      %p85 = scmp.eq.s32.totalorder %s14, 2
      %p86 = por %p84, %p85
      %p88 = scmp.ne.s32.totalorder %s71, %s87
      %p89 = scmp.eq.s32.totalorder %s14, 0
      %p90 = por %p88, %p89
      %s91 = ssub.s32 %s15, %s34
      %s92 = ssub.s32 %s16, %s30
      %s93 = sor.u32 %s91, %s92
      %p94 = scmp.eq.s32.totalorder %s93, 0
      %s96 = sadd.s32 %s95, 1
      %s97 = scalar_select %p94, %s95, %s96
      %p100 = pneg %p94
      %p101 = scmp.eq.s32.totalorder %s8, 2
      %p102 = por %p100, %p101
      %p103 = scmp.ne.s32.totalorder %s95, %s98
      %p104 = scmp.eq.s32.totalorder %s8, 0
      %p105 = por %p103, %p104
      %p106 = scmp.ne.s32.totalorder %s95, %s98
      %p107 = scmp.eq.s32.totalorder %s13, 2
      %p108 = por %p106, %p107
      %p109 = scmp.ne.s32.totalorder %s98, %s99
      %p110 = scmp.eq.s32.totalorder %s13, 0
      %p111 = por %p109, %p110
      %p112 = scmp.ne.s32.totalorder %s98, %s99
      %p113 = scmp.eq.s32.totalorder %s14, 2
      %p114 = por %p112, %p113
      %p116 = scmp.ne.s32.totalorder %s99, %s115
      %p117 = scmp.eq.s32.totalorder %s14, 0
      %p118 = por %p116, %p117
      %p119 = scmp.le.s32.totalorder 1, %s8
      %p120 = scmp.lt.s32.totalorder %s8, 4
      %p121 = pnand %p119, %p120
      %p122 = pneg %p121
      // Predicated region
      $region9: #{model_forward.8} parent=5 // pred_check
        _
      $region10: #{model_forward.8} parent=5 // pred_check_branch
        %124 = sbr.rel (%p121) target = $region12
      $region11: #{model_forward.8} parent=5 // pred_region
        %s125 = ssub.s32 %s8, 1
        // Predicated region
        $region13: #{model_forward.8} parent=11 // pred_check
          %p126 = pneg %p55
        $region14: #{model_forward.8} parent=11 // pred_check_branch
          %128 = sbr.rel (%p126) target = $region16
        $region15: #{model_forward.8} parent=11 // pred_region
          %s129 = smul.u32 39, %s18
          %s130 = smul.u32 2, %s20
          %p131 = scmp.lt.s32.totalorder %s129, 38
          %s132 = scalar_select %p131, %s129, 38
          %p133 = scmp.lt.s32.totalorder %s130, 1
          %s134 = scalar_select %p133, %s130, 1
          %s135 = smul.addr %s132, 2
          %s136 = sadd.s32 %s134, %s135
          %s137 = smul.addr %s136, 4
          %s138 = scalar_lea.vmem %s0, %s137
          %s139 = smul.u32 39, %s18
          %s140 = smul.u32 2, %s20
        $region16: #{model_forward.8} parent=11 // pred_fallthru
          _
      $region12: #{model_forward.8} parent=5 // pred_fallthru
        _
      %p141 = scmp.lt.s32.totalorder %s8, 3
      // Predicated region
      $region17: #{model_forward.8} parent=5 // pred_check
        %p142 = pneg %p141
      $region18: #{model_forward.8} parent=5 // pred_check_branch
        %144 = sbr.rel (%p142) target = $region20
      $region19: #{model_forward.8} parent=5 // pred_region
        // Predicated region
        $region21: #{model_forward.8} parent=19 // pred_check
          %p145 = pneg %p77
        $region22: #{model_forward.8} parent=19 // pred_check_branch
          %147 = sbr.rel (%p145) target = $region24
        $region23: #{model_forward.8} parent=19 // pred_region
          %s148 = sand.u32 %s67, 1
          %s149 = sand.u32 %s67, 1
          %s150 = smul.addr %s149, 256
          %s151 = scalar_lea.vmem [#allocation3], %s150
          %s152 = smul.u32 32, %s17
          %s153 = smul.u32 2, %s16
          %s154 = smul.addr %s152, 6
          %s155 = sadd.s32 %s153, %s154
          %s156 = smul.addr %s155, 4
          %s157 = scalar_lea.vmem %s1, %s156
          // Predicated region
          $region25: #{model_forward.8} parent=23 // pred_check
            _
          $region26: #{model_forward.8} parent=23 // pred_check_branch
            %159 = sbr.rel (0) target = $region28
          $region27: #{model_forward.8} parent=23 // pred_region
            // Predicated region
            $region29: #{model_forward.8} parent=27 // pred_check
              _
            $region30: #{model_forward.8} parent=27 // pred_check_branch
              %161 = sbr.rel (0) target = $region32
            $region31: #{model_forward.8} parent=27 // pred_region
              // Predicated region
              $region44: #{model_forward.8} parent=31 // pred_check
                _
              $region45: #{model_forward.8} parent=31 // pred_check_branch
                %238 = sbr.rel (0) target = $region47
              $region46: #{model_forward.8} parent=31 // pred_region
                loop: start=0, step=1, limit=1
                $region48: #{model_forward.8} parent=46 // loop_pre_header
                  _
                $region49: #{model_forward.8} parent=46 // loop_header
                  %s240 = sphi 0, %s244
                  %p241 = scmp.ge.s32.totalorder %s240, 1
                  %s245 = sphi %s157, %s157
                  %s246 = sphi %s151, %s151
                $region50: #{model_forward.8} parent=46 // loop_header_branch
                  %243 = sbr.rel (%p241) target = $region54
                $region51: #{model_forward.8} parent=46 // loop_body
                  %v247 = vld [vmem:[%s245] sm:$0xff]
                  %248 = vst [vmem:[%s246] sm:$0xff] %v247
                  %v249 = vld [vmem:[%s245 + $0x18] sm:$0xff]
                  %250 = vst [vmem:[%s246 + $0x8] sm:$0xff] %v249
                  %v251 = vld [vmem:[%s245 + $0x30] sm:$0xff]
                  %252 = vst [vmem:[%s246 + $0x10] sm:$0xff] %v251
                  %v253 = vld [vmem:[%s245 + $0x48] sm:$0xff]
                  %254 = vst [vmem:[%s246 + $0x18] sm:$0xff] %v253
                  %v255 = vld [vmem:[%s245 + $0x60] sm:$0xff]
                  %256 = vst [vmem:[%s246 + $0x20] sm:$0xff] %v255
                  %v257 = vld [vmem:[%s245 + $0x78] sm:$0xff]
                  %258 = vst [vmem:[%s246 + $0x28] sm:$0xff] %v257
                  %v259 = vld [vmem:[%s245 + $0x90] sm:$0xff]
                  %260 = vst [vmem:[%s246 + $0x30] sm:$0xff] %v259
                  %v261 = vld [vmem:[%s245 + $0xa8] sm:$0xff]
                  %262 = vst [vmem:[%s246 + $0x38] sm:$0xff] %v261
                  %v263 = vld [vmem:[%s245 + $0xc0] sm:$0xff]
                  %264 = vst [vmem:[%s246 + $0x40] sm:$0xff] %v263
                  %v265 = vld [vmem:[%s245 + $0xd8] sm:$0xff]
                  %266 = vst [vmem:[%s246 + $0x48] sm:$0xff] %v265
                  %v267 = vld [vmem:[%s245 + $0xf0] sm:$0xff]
                  %268 = vst [vmem:[%s246 + $0x50] sm:$0xff] %v267
                  %v269 = vld [vmem:[%s245 + $0x108] sm:$0xff]
                  %270 = vst [vmem:[%s246 + $0x58] sm:$0xff] %v269
                  %v271 = vld [vmem:[%s245 + $0x120] sm:$0xff]
                  %272 = vst [vmem:[%s246 + $0x60] sm:$0xff] %v271
                  %v273 = vld [vmem:[%s245 + $0x138] sm:$0xff]
                  %274 = vst [vmem:[%s246 + $0x68] sm:$0xff] %v273
                  %v275 = vld [vmem:[%s245 + $0x150] sm:$0xff]
                  %276 = vst [vmem:[%s246 + $0x70] sm:$0xff] %v275
                  %v277 = vld [vmem:[%s245 + $0x168] sm:$0xff]
                  %278 = vst [vmem:[%s246 + $0x78] sm:$0xff] %v277
                  %v279 = vld [vmem:[%s245 + $0x180] sm:$0xff]
                  %280 = vst [vmem:[%s246 + $0x80] sm:$0xff] %v279
                  %v281 = vld [vmem:[%s245 + $0x198] sm:$0xff]
                  %282 = vst [vmem:[%s246 + $0x88] sm:$0xff] %v281
                  %v283 = vld [vmem:[%s245 + $0x1b0] sm:$0xff]
                  %284 = vst [vmem:[%s246 + $0x90] sm:$0xff] %v283
                  %v285 = vld [vmem:[%s245 + $0x1c8] sm:$0xff]
                  %286 = vst [vmem:[%s246 + $0x98] sm:$0xff] %v285
                  %v287 = vld [vmem:[%s245 + $0x1e0] sm:$0xff]
                  %288 = vst [vmem:[%s246 + $0xa0] sm:$0xff] %v287
                  %v289 = vld [vmem:[%s245 + $0x1f8] sm:$0xff]
                  %290 = vst [vmem:[%s246 + $0xa8] sm:$0xff] %v289
                  %v291 = vld [vmem:[%s245 + $0x210] sm:$0xff]
                  %292 = vst [vmem:[%s246 + $0xb0] sm:$0xff] %v291
                  %v293 = vld [vmem:[%s245 + $0x228] sm:$0xff]
                  %294 = vst [vmem:[%s246 + $0xb8] sm:$0xff] %v293
                  %v295 = vld [vmem:[%s245 + $0x240] sm:$0xff]
                  %296 = vst [vmem:[%s246 + $0xc0] sm:$0xff] %v295
                  %v297 = vld [vmem:[%s245 + $0x258] sm:$0xff]
                  %298 = vst [vmem:[%s246 + $0xc8] sm:$0xff] %v297
                  %v299 = vld [vmem:[%s245 + $0x270] sm:$0xff]
                  %300 = vst [vmem:[%s246 + $0xd0] sm:$0xff] %v299
                  %v301 = vld [vmem:[%s245 + $0x288] sm:$0xff]
                  %302 = vst [vmem:[%s246 + $0xd8] sm:$0xff] %v301
                  %v303 = vld [vmem:[%s245 + $0x2a0] sm:$0xff]
                  %304 = vst [vmem:[%s246 + $0xe0] sm:$0xff] %v303
                  %v305 = vld [vmem:[%s245 + $0x2b8] sm:$0xff]
                  %306 = vst [vmem:[%s246 + $0xe8] sm:$0xff] %v305
                  %v307 = vld [vmem:[%s245 + $0x2d0] sm:$0xff]
                  %308 = vst [vmem:[%s246 + $0xf0] sm:$0xff] %v307
                  %v309 = vld [vmem:[%s245 + $0x2e8] sm:$0xff]
                  %310 = vst [vmem:[%s246 + $0xf8] sm:$0xff] %v309
                $region52: #{model_forward.8} parent=46 // loop_footer
                  %s244 = sadd.s32 1, %s240
                $region53: #{model_forward.8} parent=46 // loop_footer_branch
                  %239 = sbr.rel target = $region49
                $region54: #{model_forward.8} parent=46 // loop_exit
                  _
              $region47: #{model_forward.8} parent=31 // pred_fallthru
                _
              // Predicated region
              $region55: #{model_forward.8} parent=31 // pred_check
                _
              $region56: #{model_forward.8} parent=31 // pred_check_branch
                %312 = sbr.rel target = $region58
              $region57: #{model_forward.8} parent=31 // pred_region
                _
              $region58: #{model_forward.8} parent=31 // pred_fallthru
                _
            $region32: #{model_forward.8} parent=27 // pred_fallthru
              _
            // Predicated region
            $region33: #{model_forward.8} parent=27 // pred_check
              _
            $region34: #{model_forward.8} parent=27 // pred_check_branch
              %163 = sbr.rel target = $region36
            $region35: #{model_forward.8} parent=27 // pred_region
              loop: start=0, step=1, limit=1
              $region37: #{model_forward.8} parent=35 // loop_pre_header
                _
              $region38: #{model_forward.8} parent=35 // loop_header
                %s166 = sphi 0, %s170
                %p167 = scmp.ge.s32.totalorder %s166, 1
                %s171 = sphi %s157, %s157
                %s172 = sphi %s151, %s151
              $region39: #{model_forward.8} parent=35 // loop_header_branch
                %169 = sbr.rel (%p167) target = $region43
              $region40: #{model_forward.8} parent=35 // loop_body
                %v173 = vld [vmem:[%s171] sm:$0xff]
                %174 = vst [vmem:[%s172] sm:$0xff] %v173
                %v175 = vld [vmem:[%s171 + $0x18] sm:$0xff]
                %176 = vst [vmem:[%s172 + $0x8] sm:$0xff] %v175
                %v177 = vld [vmem:[%s171 + $0x30] sm:$0xff]
                %178 = vst [vmem:[%s172 + $0x10] sm:$0xff] %v177
                %v179 = vld [vmem:[%s171 + $0x48] sm:$0xff]
                %180 = vst [vmem:[%s172 + $0x18] sm:$0xff] %v179
                %v181 = vld [vmem:[%s171 + $0x60] sm:$0xff]
                %182 = vst [vmem:[%s172 + $0x20] sm:$0xff] %v181
                %v183 = vld [vmem:[%s171 + $0x78] sm:$0xff]
                %184 = vst [vmem:[%s172 + $0x28] sm:$0xff] %v183
                %v185 = vld [vmem:[%s171 + $0x90] sm:$0xff]
                %186 = vst [vmem:[%s172 + $0x30] sm:$0xff] %v185
                %v187 = vld [vmem:[%s171 + $0xa8] sm:$0xff]
                %188 = vst [vmem:[%s172 + $0x38] sm:$0xff] %v187
                %v189 = vld [vmem:[%s171 + $0xc0] sm:$0xff]
                %190 = vst [vmem:[%s172 + $0x40] sm:$0xff] %v189
                %v191 = vld [vmem:[%s171 + $0xd8] sm:$0xff]
                %192 = vst [vmem:[%s172 + $0x48] sm:$0xff] %v191
                %v193 = vld [vmem:[%s171 + $0xf0] sm:$0xff]
                %194 = vst [vmem:[%s172 + $0x50] sm:$0xff] %v193
                %v195 = vld [vmem:[%s171 + $0x108] sm:$0xff]
                %196 = vst [vmem:[%s172 + $0x58] sm:$0xff] %v195
                %v197 = vld [vmem:[%s171 + $0x120] sm:$0xff]
                %198 = vst [vmem:[%s172 + $0x60] sm:$0xff] %v197
                %v199 = vld [vmem:[%s171 + $0x138] sm:$0xff]
                %200 = vst [vmem:[%s172 + $0x68] sm:$0xff] %v199
                %v201 = vld [vmem:[%s171 + $0x150] sm:$0xff]
                %202 = vst [vmem:[%s172 + $0x70] sm:$0xff] %v201
                %v203 = vld [vmem:[%s171 + $0x168] sm:$0xff]
                %204 = vst [vmem:[%s172 + $0x78] sm:$0xff] %v203
                %v205 = vld [vmem:[%s171 + $0x180] sm:$0xff]
                %206 = vst [vmem:[%s172 + $0x80] sm:$0xff] %v205
                %v207 = vld [vmem:[%s171 + $0x198] sm:$0xff]
                %208 = vst [vmem:[%s172 + $0x88] sm:$0xff] %v207
                %v209 = vld [vmem:[%s171 + $0x1b0] sm:$0xff]
                %210 = vst [vmem:[%s172 + $0x90] sm:$0xff] %v209
                %v211 = vld [vmem:[%s171 + $0x1c8] sm:$0xff]
                %212 = vst [vmem:[%s172 + $0x98] sm:$0xff] %v211
                %v213 = vld [vmem:[%s171 + $0x1e0] sm:$0xff]
                %214 = vst [vmem:[%s172 + $0xa0] sm:$0xff] %v213
                %v215 = vld [vmem:[%s171 + $0x1f8] sm:$0xff]
                %216 = vst [vmem:[%s172 + $0xa8] sm:$0xff] %v215
                %v217 = vld [vmem:[%s171 + $0x210] sm:$0xff]
                %218 = vst [vmem:[%s172 + $0xb0] sm:$0xff] %v217
                %v219 = vld [vmem:[%s171 + $0x228] sm:$0xff]
                %220 = vst [vmem:[%s172 + $0xb8] sm:$0xff] %v219
                %v221 = vld [vmem:[%s171 + $0x240] sm:$0xff]
                %222 = vst [vmem:[%s172 + $0xc0] sm:$0xff] %v221
                %v223 = vld [vmem:[%s171 + $0x258] sm:$0xff]
                %224 = vst [vmem:[%s172 + $0xc8] sm:$0xff] %v223
                %v225 = vld [vmem:[%s171 + $0x270] sm:$0xff]
                %226 = vst [vmem:[%s172 + $0xd0] sm:$0xff] %v225
                %v227 = vld [vmem:[%s171 + $0x288] sm:$0xff]
                %228 = vst [vmem:[%s172 + $0xd8] sm:$0xff] %v227
                %v229 = vld [vmem:[%s171 + $0x2a0] sm:$0xff]
                %230 = vst [vmem:[%s172 + $0xe0] sm:$0xff] %v229
                %v231 = vld [vmem:[%s171 + $0x2b8] sm:$0xff]
                %232 = vst [vmem:[%s172 + $0xe8] sm:$0xff] %v231
                %v233 = vld [vmem:[%s171 + $0x2d0] sm:$0xff]
                %234 = vst [vmem:[%s172 + $0xf0] sm:$0xff] %v233
                %v235 = vld [vmem:[%s171 + $0x2e8] sm:$0xff]
                %236 = vst [vmem:[%s172 + $0xf8] sm:$0xff] %v235
              $region41: #{model_forward.8} parent=35 // loop_footer
                %s170 = sadd.s32 1, %s166
              $region42: #{model_forward.8} parent=35 // loop_footer_branch
                %165 = sbr.rel target = $region38
              $region43: #{model_forward.8} parent=35 // loop_exit
                _
            $region36: #{model_forward.8} parent=27 // pred_fallthru
              _
          $region28: #{model_forward.8} parent=23 // pred_fallthru
            _
          %313 = vnop
        $region24: #{model_forward.8} parent=19 // pred_fallthru
          _
      $region20: #{model_forward.8} parent=5 // pred_fallthru
        _
      %p314 = scmp.le.s32.totalorder 1, %s8
      %p315 = scmp.lt.s32.totalorder %s8, 4
      %p316 = pnand %p314, %p315
      %p317 = pneg %p316
      // Predicated region
      $region59: #{model_forward.8} parent=5 // pred_check
        _
      $region60: #{model_forward.8} parent=5 // pred_check_branch
        %319 = sbr.rel (%p316) target = $region62
      $region61: #{model_forward.8} parent=5 // pred_region
        %s320 = ssub.s32 %s8, 1
        %s321 = sand.u32 %s70, 1
        %s322 = sand.u32 %s70, 1
        %s323 = smul.addr %s322, 256
        %s324 = scalar_lea.vmem [#allocation3], %s323
        // Predicated region
        $region63: #{model_forward.8} parent=61 // pred_check
          %p325 = pneg %p83
        $region64: #{model_forward.8} parent=61 // pred_check_branch
          %327 = sbr.rel (%p325) target = $region66
        $region65: #{model_forward.8} parent=61 // pred_region
          _
        $region66: #{model_forward.8} parent=61 // pred_fallthru
          _
        %s328 = smul.u32 39, %s18
        %s329 = smul.u32 2, %s20
        %p330 = scmp.lt.s32.totalorder %s328, 38
        %s331 = scalar_select %p330, %s328, 38
        %p332 = scmp.lt.s32.totalorder %s329, 1
        %s333 = scalar_select %p332, %s329, 1
        %s334 = smul.addr %s331, 2
        %s335 = sadd.s32 %s333, %s334
        %s336 = smul.addr %s335, 4
        %s337 = scalar_lea.vmem %s0, %s336
        %p338 = pneg %p55
        %p339 = pneg %p52
        %s340 = sand.u32 %s70, 1
        %s341 = sand.u32 %s70, 1
        %s342 = smul.addr %s341, 256
        %s343 = scalar_lea.vmem [#allocation3], %s342
        %p344 = pneg %p83
        %p345 = pneg %p80
        %p346 = pneg %p111
        %p347 = pneg %p108
        %s348 = sand.u32 %s98, 1
        %s349 = sand.u32 %s98, 1
        %s350 = smul.addr %s349, 624
        %s351 = scalar_lea.vmem [#allocation4], %s350
        %s352 = smul.u32 39, %s18
        %s353 = smul.u32 2, %s20
        %p354 = scmp.lt.s32.totalorder %s352, 38
        %s355 = scalar_select %p354, %s352, 38
        %p356 = scmp.lt.s32.totalorder %s353, 1
        %s357 = scalar_select %p356, %s353, 1
        %s358 = smul.addr %s355, 2
        %s359 = sadd.s32 %s357, %s358
        %s360 = smul.addr %s359, 4
        %s361 = scalar_lea.vmem %s0, %s360
        %s362 = smul.u32 39, %s18
        %s363 = smul.u32 2, %s20
        %s364 = smul.u32 32, %s20
        %s365 = smul.u32 2, %s19
        %s366 = smul.u32 39, %s18
        %s367 = smul.u32 2, %s19
        %p368 = scmp.eq.s32.totalorder %s20, 0
        // Predicated region
        $region67: #{model_forward.8} parent=61 // pred_check
          %p369 = pneg %p368
        $region68: #{model_forward.8} parent=61 // pred_check_branch
          %371 = sbr.rel (%p369) target = $region70
        $region69: #{model_forward.8} parent=61 // pred_region
          %372 = vst [vmem:[#allocation2] sm:$0xff] 0.0
          %373 = vst [vmem:[#allocation2 + $0x8] sm:$0xff] 0.0
          %374 = vst [vmem:[#allocation2 + $0x10] sm:$0xff] 0.0
          %375 = vst [vmem:[#allocation2 + $0x18] sm:$0xff] 0.0
          %376 = vst [vmem:[#allocation2 + $0x20] sm:$0xff] 0.0
          %377 = vst [vmem:[#allocation2 + $0x28] sm:$0xff] 0.0
          %378 = vst [vmem:[#allocation2 + $0x30] sm:$0xff] 0.0
          %379 = vst [vmem:[#allocation2 + $0x38] sm:$0xff] 0.0
          %380 = vst [vmem:[#allocation2 + $0x40] sm:$0xff] 0.0
          %381 = vst [vmem:[#allocation2 + $0x48] sm:$0xff] 0.0
          %382 = vst [vmem:[#allocation2 + $0x50] sm:$0xff] 0.0
          %383 = vst [vmem:[#allocation2 + $0x58] sm:$0xff] 0.0
          %384 = vst [vmem:[#allocation2 + $0x60] sm:$0xff] 0.0
          %385 = vst [vmem:[#allocation2 + $0x68] sm:$0xff] 0.0
          %386 = vst [vmem:[#allocation2 + $0x70] sm:$0xff] 0.0
          %387 = vst [vmem:[#allocation2 + $0x78] sm:$0xff] 0.0
          %388 = vst [vmem:[#allocation2 + $0x80] sm:$0xff] 0.0
          %389 = vst [vmem:[#allocation2 + $0x88] sm:$0xff] 0.0
          %390 = vst [vmem:[#allocation2 + $0x90] sm:$0xff] 0.0
          %391 = vst [vmem:[#allocation2 + $0x98] sm:$0xff] 0.0
          %392 = vst [vmem:[#allocation2 + $0xa0] sm:$0xff] 0.0
          %393 = vst [vmem:[#allocation2 + $0xa8] sm:$0xff] 0.0
          %394 = vst [vmem:[#allocation2 + $0xb0] sm:$0xff] 0.0
          %395 = vst [vmem:[#allocation2 + $0xb8] sm:$0xff] 0.0
          %396 = vst [vmem:[#allocation2 + $0xc0] sm:$0xff] 0.0
          %397 = vst [vmem:[#allocation2 + $0xc8] sm:$0xff] 0.0
          %398 = vst [vmem:[#allocation2 + $0xd0] sm:$0xff] 0.0
          %399 = vst [vmem:[#allocation2 + $0xd8] sm:$0xff] 0.0
          %400 = vst [vmem:[#allocation2 + $0xe0] sm:$0xff] 0.0
          %401 = vst [vmem:[#allocation2 + $0xe8] sm:$0xff] 0.0
          %402 = vst [vmem:[#allocation2 + $0xf0] sm:$0xff] 0.0
          %403 = vst [vmem:[#allocation2 + $0xf8] sm:$0xff] 0.0
          %404 = vst [vmem:[#allocation2 + $0x100] sm:$0xff] 0.0
          %405 = vst [vmem:[#allocation2 + $0x108] sm:$0xff] 0.0
          %406 = vst [vmem:[#allocation2 + $0x110] sm:$0xff] 0.0
          %407 = vst [vmem:[#allocation2 + $0x118] sm:$0xff] 0.0
          %408 = vst [vmem:[#allocation2 + $0x120] sm:$0xff] 0.0
          %409 = vst [vmem:[#allocation2 + $0x128] sm:$0xff] 0.0
          %410 = vst [vmem:[#allocation2 + $0x130] sm:$0xff] 0.0
          %411 = vst [vmem:[#allocation2 + $0x138] sm:$0xff] 0.0
          %412 = vst [vmem:[#allocation2 + $0x140] sm:$0xff] 0.0
          %413 = vst [vmem:[#allocation2 + $0x148] sm:$0xff] 0.0
          %414 = vst [vmem:[#allocation2 + $0x150] sm:$0xff] 0.0
          %415 = vst [vmem:[#allocation2 + $0x158] sm:$0xff] 0.0
          %416 = vst [vmem:[#allocation2 + $0x160] sm:$0xff] 0.0
          %417 = vst [vmem:[#allocation2 + $0x168] sm:$0xff] 0.0
          %418 = vst [vmem:[#allocation2 + $0x170] sm:$0xff] 0.0
          %419 = vst [vmem:[#allocation2 + $0x178] sm:$0xff] 0.0
          %420 = vst [vmem:[#allocation2 + $0x180] sm:$0xff] 0.0
          %421 = vst [vmem:[#allocation2 + $0x188] sm:$0xff] 0.0
          %422 = vst [vmem:[#allocation2 + $0x190] sm:$0xff] 0.0
          %423 = vst [vmem:[#allocation2 + $0x198] sm:$0xff] 0.0
          %424 = vst [vmem:[#allocation2 + $0x1a0] sm:$0xff] 0.0
          %425 = vst [vmem:[#allocation2 + $0x1a8] sm:$0xff] 0.0
          %426 = vst [vmem:[#allocation2 + $0x1b0] sm:$0xff] 0.0
          %427 = vst [vmem:[#allocation2 + $0x1b8] sm:$0xff] 0.0
          %428 = vst [vmem:[#allocation2 + $0x1c0] sm:$0xff] 0.0
          %429 = vst [vmem:[#allocation2 + $0x1c8] sm:$0xff] 0.0
          %430 = vst [vmem:[#allocation2 + $0x1d0] sm:$0xff] 0.0
          %431 = vst [vmem:[#allocation2 + $0x1d8] sm:$0xff] 0.0
          %432 = vst [vmem:[#allocation2 + $0x1e0] sm:$0xff] 0.0
          %433 = vst [vmem:[#allocation2 + $0x1e8] sm:$0xff] 0.0
          %434 = vst [vmem:[#allocation2 + $0x1f0] sm:$0xff] 0.0
          %435 = vst [vmem:[#allocation2 + $0x1f8] sm:$0xff] 0.0
          %436 = vst [vmem:[#allocation2 + $0x200] sm:$0xff] 0.0
          %437 = vst [vmem:[#allocation2 + $0x208] sm:$0xff] 0.0
          %438 = vst [vmem:[#allocation2 + $0x210] sm:$0xff] 0.0
          %439 = vst [vmem:[#allocation2 + $0x218] sm:$0xff] 0.0
          %440 = vst [vmem:[#allocation2 + $0x220] sm:$0xff] 0.0
          %441 = vst [vmem:[#allocation2 + $0x228] sm:$0xff] 0.0
          %442 = vst [vmem:[#allocation2 + $0x230] sm:$0xff] 0.0
          %443 = vst [vmem:[#allocation2 + $0x238] sm:$0xff] 0.0
          %444 = vst [vmem:[#allocation2 + $0x240] sm:$0xff] 0.0
          %445 = vst [vmem:[#allocation2 + $0x248] sm:$0xff] 0.0
          %446 = vst [vmem:[#allocation2 + $0x250] sm:$0xff] 0.0
          %447 = vst [vmem:[#allocation2 + $0x258] sm:$0xff] 0.0
          %448 = vst [vmem:[#allocation2 + $0x260] sm:$0x3] 0.0
          %449 = vst [vmem:[#allocation2 + $0x268] sm:$0x3] 0.0
        $region70: #{model_forward.8} parent=61 // pred_fallthru
          _
        %v450 = vld [vmem:[#allocation2] sm:$0xff]
        %v451 = vld [vmem:[#allocation2 + $0x8] sm:$0xff]
        %v452 = vld [vmem:[#allocation2 + $0x10] sm:$0xff]
        %v453 = vld [vmem:[#allocation2 + $0x18] sm:$0xff]
        %v454 = vld [vmem:[#allocation2 + $0x20] sm:$0xff]
        %v455 = vld [vmem:[#allocation2 + $0x28] sm:$0xff]
        %v456 = vld [vmem:[#allocation2 + $0x30] sm:$0xff]
        %v457 = vld [vmem:[#allocation2 + $0x38] sm:$0xff]
        %v458 = vld [vmem:[#allocation2 + $0x40] sm:$0xff]
        %v459 = vld [vmem:[#allocation2 + $0x48] sm:$0xff]
        %v460 = vld [vmem:[#allocation2 + $0x50] sm:$0xff]
        %v461 = vld [vmem:[#allocation2 + $0x58] sm:$0xff]
        %v462 = vld [vmem:[#allocation2 + $0x60] sm:$0xff]
        %v463 = vld [vmem:[#allocation2 + $0x68] sm:$0xff]
        %v464 = vld [vmem:[#allocation2 + $0x70] sm:$0xff]
        %v465 = vld [vmem:[#allocation2 + $0x78] sm:$0xff]
        %v466 = vld [vmem:[#allocation2 + $0x80] sm:$0xff]
        %v467 = vld [vmem:[#allocation2 + $0x88] sm:$0xff]
        %v468 = vld [vmem:[#allocation2 + $0x90] sm:$0xff]
        %v469 = vld [vmem:[#allocation2 + $0x98] sm:$0xff]
        %v470 = vld [vmem:[#allocation2 + $0xa0] sm:$0xff]
        %v471 = vld [vmem:[#allocation2 + $0xa8] sm:$0xff]
        %v472 = vld [vmem:[#allocation2 + $0xb0] sm:$0xff]
        %v473 = vld [vmem:[#allocation2 + $0xb8] sm:$0xff]
        %v474 = vld [vmem:[#allocation2 + $0xc0] sm:$0xff]
        %v475 = vld [vmem:[#allocation2 + $0xc8] sm:$0xff]
        %v476 = vld [vmem:[#allocation2 + $0xd0] sm:$0xff]
        %v477 = vld [vmem:[#allocation2 + $0xd8] sm:$0xff]
        %v478 = vld [vmem:[#allocation2 + $0xe0] sm:$0xff]
        %v479 = vld [vmem:[#allocation2 + $0xe8] sm:$0xff]
        %v480 = vld [vmem:[#allocation2 + $0xf0] sm:$0xff]
        %v481 = vld [vmem:[#allocation2 + $0xf8] sm:$0xff]
        %v482 = vld [vmem:[#allocation2 + $0x100] sm:$0xff]
        %v483 = vld [vmem:[#allocation2 + $0x108] sm:$0xff]
        %v484 = vld [vmem:[#allocation2 + $0x110] sm:$0xff]
        %v485 = vld [vmem:[#allocation2 + $0x118] sm:$0xff]
        %v486 = vld [vmem:[#allocation2 + $0x120] sm:$0xff]
        %v487 = vld [vmem:[#allocation2 + $0x128] sm:$0xff]
        %v488 = vld [vmem:[#allocation2 + $0x130] sm:$0xff]
        %v489 = vld [vmem:[#allocation2 + $0x138] sm:$0xff]
        %v490 = vld [vmem:[#allocation2 + $0x140] sm:$0xff]
        %v491 = vld [vmem:[#allocation2 + $0x148] sm:$0xff]
        %v492 = vld [vmem:[#allocation2 + $0x150] sm:$0xff]
        %v493 = vld [vmem:[#allocation2 + $0x158] sm:$0xff]
        %v494 = vld [vmem:[#allocation2 + $0x160] sm:$0xff]
        %v495 = vld [vmem:[#allocation2 + $0x168] sm:$0xff]
        %v496 = vld [vmem:[#allocation2 + $0x170] sm:$0xff]
        %v497 = vld [vmem:[#allocation2 + $0x178] sm:$0xff]
        %v498 = vld [vmem:[#allocation2 + $0x180] sm:$0xff]
        %v499 = vld [vmem:[#allocation2 + $0x188] sm:$0xff]
        %v500 = vld [vmem:[#allocation2 + $0x190] sm:$0xff]
        %v501 = vld [vmem:[#allocation2 + $0x198] sm:$0xff]
        %v502 = vld [vmem:[#allocation2 + $0x1a0] sm:$0xff]
        %v503 = vld [vmem:[#allocation2 + $0x1a8] sm:$0xff]
        %v504 = vld [vmem:[#allocation2 + $0x1b0] sm:$0xff]
        %v505 = vld [vmem:[#allocation2 + $0x1b8] sm:$0xff]
        %v506 = vld [vmem:[#allocation2 + $0x1c0] sm:$0xff]
        %v507 = vld [vmem:[#allocation2 + $0x1c8] sm:$0xff]
        %v508 = vld [vmem:[#allocation2 + $0x1d0] sm:$0xff]
        %v509 = vld [vmem:[#allocation2 + $0x1d8] sm:$0xff]
        %v510 = vld [vmem:[#allocation2 + $0x1e0] sm:$0xff]
        %v511 = vld [vmem:[#allocation2 + $0x1e8] sm:$0xff]
        %v512 = vld [vmem:[#allocation2 + $0x1f0] sm:$0xff]
        %v513 = vld [vmem:[#allocation2 + $0x1f8] sm:$0xff]
        %v514 = vld [vmem:[#allocation2 + $0x200] sm:$0xff]
        %v515 = vld [vmem:[#allocation2 + $0x208] sm:$0xff]
        %v516 = vld [vmem:[#allocation2 + $0x210] sm:$0xff]
        %v517 = vld [vmem:[#allocation2 + $0x218] sm:$0xff]
        %v518 = vld [vmem:[#allocation2 + $0x220] sm:$0xff]
        %v519 = vld [vmem:[#allocation2 + $0x228] sm:$0xff]
        %v520 = vld [vmem:[#allocation2 + $0x230] sm:$0xff]
        %v521 = vld [vmem:[#allocation2 + $0x238] sm:$0xff]
        %v522 = vld [vmem:[#allocation2 + $0x240] sm:$0xff]
        %v523 = vld [vmem:[#allocation2 + $0x248] sm:$0xff]
        %v524 = vld [vmem:[#allocation2 + $0x250] sm:$0xff]
        %v525 = vld [vmem:[#allocation2 + $0x258] sm:$0xff]
        %v526 = vld [vmem:[#allocation2 + $0x260] sm:$0x3]
        %v527 = vld [vmem:[#allocation2 + $0x268] sm:$0x3]
        %v528 = vld [vmem:[%s361] sm:$0xff]
        %v529 = vld [vmem:[%s361 + $0x8] sm:$0xff]
        %v530 = vld [vmem:[%s361 + $0x10] sm:$0xff]
        %v531 = vld [vmem:[%s361 + $0x18] sm:$0xff]
        %v532 = vld [vmem:[%s361 + $0x20] sm:$0xff]
        %v533 = vld [vmem:[%s361 + $0x28] sm:$0xff]
        %v534 = vld [vmem:[%s361 + $0x30] sm:$0xff]
        %v535 = vld [vmem:[%s361 + $0x38] sm:$0xff]
        %v536 = vld [vmem:[%s361 + $0x40] sm:$0xff]
        %v537 = vld [vmem:[%s361 + $0x48] sm:$0xff]
        %v538 = vld [vmem:[%s361 + $0x50] sm:$0xff]
        %v539 = vld [vmem:[%s361 + $0x58] sm:$0xff]
        %v540 = vld [vmem:[%s361 + $0x60] sm:$0xff]
        %v541 = vld [vmem:[%s361 + $0x68] sm:$0xff]
        %v542 = vld [vmem:[%s361 + $0x70] sm:$0xff]
        %v543 = vld [vmem:[%s361 + $0x78] sm:$0xff]
        %v544 = vld [vmem:[%s361 + $0x80] sm:$0xff]
        %v545 = vld [vmem:[%s361 + $0x88] sm:$0xff]
        %v546 = vld [vmem:[%s361 + $0x90] sm:$0xff]
        %v547 = vld [vmem:[%s361 + $0x98] sm:$0xff]
        %v548 = vld [vmem:[%s361 + $0xa0] sm:$0xff]
        %v549 = vld [vmem:[%s361 + $0xa8] sm:$0xff]
        %v550 = vld [vmem:[%s361 + $0xb0] sm:$0xff]
        %v551 = vld [vmem:[%s361 + $0xb8] sm:$0xff]
        %v552 = vld [vmem:[%s361 + $0xc0] sm:$0xff]
        %v553 = vld [vmem:[%s361 + $0xc8] sm:$0xff]
        %v554 = vld [vmem:[%s361 + $0xd0] sm:$0xff]
        %v555 = vld [vmem:[%s361 + $0xd8] sm:$0xff]
        %v556 = vld [vmem:[%s361 + $0xe0] sm:$0xff]
        %v557 = vld [vmem:[%s361 + $0xe8] sm:$0xff]
        %v558 = vld [vmem:[%s361 + $0xf0] sm:$0xff]
        %v559 = vld [vmem:[%s361 + $0xf8] sm:$0xff]
        %v560 = vld [vmem:[%s361 + $0x100] sm:$0xff]
        %v561 = vld [vmem:[%s361 + $0x108] sm:$0xff]
        %v562 = vld [vmem:[%s361 + $0x110] sm:$0xff]
        %v563 = vld [vmem:[%s361 + $0x118] sm:$0xff]
        %v564 = vld [vmem:[%s361 + $0x120] sm:$0xff]
        %v565 = vld [vmem:[%s361 + $0x128] sm:$0xff]
        %v566 = vld [vmem:[%s361 + $0x130] sm:$0x11]
        %v567 = vld [vmem:[%s324] sm:$0xff]
        %v568 = vld [vmem:[%s324 + $0x8] sm:$0xff]
        %v569 = vld [vmem:[%s324 + $0x10] sm:$0xff]
        %v570 = vld [vmem:[%s324 + $0x18] sm:$0xff]
        %v571 = vld [vmem:[%s324 + $0x20] sm:$0xff]
        %v572 = vld [vmem:[%s324 + $0x28] sm:$0xff]
        %v573 = vld [vmem:[%s324 + $0x30] sm:$0xff]
        %v574 = vld [vmem:[%s324 + $0x38] sm:$0xff]
        %v575 = vld [vmem:[%s324 + $0x40] sm:$0xff]
        %v576 = vld [vmem:[%s324 + $0x48] sm:$0xff]
        %v577 = vld [vmem:[%s324 + $0x50] sm:$0xff]
        %v578 = vld [vmem:[%s324 + $0x58] sm:$0xff]
        %v579 = vld [vmem:[%s324 + $0x60] sm:$0xff]
        %v580 = vld [vmem:[%s324 + $0x68] sm:$0xff]
        %v581 = vld [vmem:[%s324 + $0x70] sm:$0xff]
        %v582 = vld [vmem:[%s324 + $0x78] sm:$0xff]
        %v583 = vld [vmem:[%s324 + $0x80] sm:$0xff]
        %v584 = vld [vmem:[%s324 + $0x88] sm:$0xff]
        %v585 = vld [vmem:[%s324 + $0x90] sm:$0xff]
        %v586 = vld [vmem:[%s324 + $0x98] sm:$0xff]
        %v587 = vld [vmem:[%s324 + $0xa0] sm:$0xff]
        %v588 = vld [vmem:[%s324 + $0xa8] sm:$0xff]
        %v589 = vld [vmem:[%s324 + $0xb0] sm:$0xff]
        %v590 = vld [vmem:[%s324 + $0xb8] sm:$0xff]
        %v591 = vld [vmem:[%s324 + $0xc0] sm:$0xff]
        %v592 = vld [vmem:[%s324 + $0xc8] sm:$0xff]
        %v593 = vld [vmem:[%s324 + $0xd0] sm:$0xff]
        %v594 = vld [vmem:[%s324 + $0xd8] sm:$0xff]
        %v595 = vld [vmem:[%s324 + $0xe0] sm:$0xff]
        %v596 = vld [vmem:[%s324 + $0xe8] sm:$0xff]
        %v597 = vld [vmem:[%s324 + $0xf0] sm:$0xff]
        %v598 = vld [vmem:[%s324 + $0xf8] sm:$0xff]
        %v638 = vunpack.c.l.b16 %v528
        %v639 = vunpack.c.h.b16 %v528
        %v640 = vunpack.c.l.b16 %v529
        %v641 = vunpack.c.h.b16 %v529
        %v642 = vunpack.c.l.b16 %v530
        %v643 = vunpack.c.h.b16 %v530
        %v644 = vunpack.c.l.b16 %v531
        %v645 = vunpack.c.h.b16 %v531
        %v646 = vunpack.c.l.b16 %v532
        %v647 = vunpack.c.h.b16 %v532
        %v648 = vunpack.c.l.b16 %v533
        %v649 = vunpack.c.h.b16 %v533
        %v650 = vunpack.c.l.b16 %v534
        %v651 = vunpack.c.h.b16 %v534
        %v652 = vunpack.c.l.b16 %v535
        %v653 = vunpack.c.h.b16 %v535
        %v654 = vunpack.c.l.b16 %v536
        %v655 = vunpack.c.h.b16 %v536
        %v656 = vunpack.c.l.b16 %v537
        %v657 = vunpack.c.h.b16 %v537
        %v658 = vunpack.c.l.b16 %v538
        %v659 = vunpack.c.h.b16 %v538
        %v660 = vunpack.c.l.b16 %v539
        %v661 = vunpack.c.h.b16 %v539
        %v662 = vunpack.c.l.b16 %v540
        %v663 = vunpack.c.h.b16 %v540
        %v664 = vunpack.c.l.b16 %v541
        %v665 = vunpack.c.h.b16 %v541
        %v666 = vunpack.c.l.b16 %v542
        %v667 = vunpack.c.h.b16 %v542
        %v668 = vunpack.c.l.b16 %v543
        %v669 = vunpack.c.h.b16 %v543
        %v670 = vunpack.c.l.b16 %v544
        %v671 = vunpack.c.h.b16 %v544
        %v672 = vunpack.c.l.b16 %v545
        %v673 = vunpack.c.h.b16 %v545
        %v674 = vunpack.c.l.b16 %v546
        %v675 = vunpack.c.h.b16 %v546
        %v676 = vunpack.c.l.b16 %v547
        %v677 = vunpack.c.h.b16 %v547
        %v678 = vunpack.c.l.b16 %v548
        %v679 = vunpack.c.h.b16 %v548
        %v680 = vunpack.c.l.b16 %v549
        %v681 = vunpack.c.h.b16 %v549
        %v682 = vunpack.c.l.b16 %v550
        %v683 = vunpack.c.h.b16 %v550
        %v684 = vunpack.c.l.b16 %v551
        %v685 = vunpack.c.h.b16 %v551
        %v686 = vunpack.c.l.b16 %v552
        %v687 = vunpack.c.h.b16 %v552
        %v688 = vunpack.c.l.b16 %v553
        %v689 = vunpack.c.h.b16 %v553
        %v690 = vunpack.c.l.b16 %v554
        %v691 = vunpack.c.h.b16 %v554
        %v692 = vunpack.c.l.b16 %v555
        %v693 = vunpack.c.h.b16 %v555
        %v694 = vunpack.c.l.b16 %v556
        %v695 = vunpack.c.h.b16 %v556
        %v696 = vunpack.c.l.b16 %v557
        %v697 = vunpack.c.h.b16 %v557
        %v698 = vunpack.c.l.b16 %v558
        %v699 = vunpack.c.h.b16 %v558
        %v700 = vunpack.c.l.b16 %v559
        %v701 = vunpack.c.h.b16 %v559
        %v702 = vunpack.c.l.b16 %v560
        %v703 = vunpack.c.h.b16 %v560
        %v704 = vunpack.c.l.b16 %v561
        %v705 = vunpack.c.h.b16 %v561
        %v706 = vunpack.c.l.b16 %v562
        %v707 = vunpack.c.h.b16 %v562
        %v708 = vunpack.c.l.b16 %v563
        %v709 = vunpack.c.h.b16 %v563
        %v710 = vunpack.c.l.b16 %v564
        %v711 = vunpack.c.h.b16 %v564
        %v712 = vunpack.c.l.b16 %v565
        %v713 = vunpack.c.h.b16 %v565
        %v714 = vunpack.c.l.b16 %v566
        %v715 = vunpack.c.h.b16 %v566
        %v716 = vpack.c.b16 %v640, %v638
        %v717 = vpack.c.b16 %v641, %v639
        %v718 = vpack.c.b16 %v644, %v642
        %v719 = vpack.c.b16 %v645, %v643
        %v720 = vpack.c.b16 %v648, %v646
        %v721 = vpack.c.b16 %v649, %v647
        %v722 = vpack.c.b16 %v652, %v650
        %v723 = vpack.c.b16 %v653, %v651
        %v724 = vpack.c.b16 %v656, %v654
        %v725 = vpack.c.b16 %v657, %v655
        %v726 = vpack.c.b16 %v660, %v658
        %v727 = vpack.c.b16 %v661, %v659
        %v728 = vpack.c.b16 %v664, %v662
        %v729 = vpack.c.b16 %v665, %v663
        %v730 = vpack.c.b16 %v668, %v666
        %v731 = vpack.c.b16 %v669, %v667
        %v732 = vpack.c.b16 %v672, %v670
        %v733 = vpack.c.b16 %v673, %v671
        %v734 = vpack.c.b16 %v676, %v674
        %v735 = vpack.c.b16 %v677, %v675
        %v736 = vpack.c.b16 %v680, %v678
        %v737 = vpack.c.b16 %v681, %v679
        %v738 = vpack.c.b16 %v684, %v682
        %v739 = vpack.c.b16 %v685, %v683
        %v740 = vpack.c.b16 %v688, %v686
        %v741 = vpack.c.b16 %v689, %v687
        %v742 = vpack.c.b16 %v692, %v690
        %v743 = vpack.c.b16 %v693, %v691
        %v744 = vpack.c.b16 %v696, %v694
        %v745 = vpack.c.b16 %v697, %v695
        %v746 = vpack.c.b16 %v700, %v698
        %v747 = vpack.c.b16 %v701, %v699
        %v748 = vpack.c.b16 %v704, %v702
        %v749 = vpack.c.b16 %v705, %v703
        %v750 = vpack.c.b16 %v708, %v706
        %v751 = vpack.c.b16 %v709, %v707
        %v752 = vpack.c.b16 %v712, %v710
        %v753 = vpack.c.b16 %v713, %v711
        %v754 = vpack.c.b16 %v714, %v714
        %v755 = vpack.c.b16 %v715, %v715
        %v828 = vunpack.c.l.b16 %v567
        %v829 = vunpack.c.h.b16 %v567
        %v830 = vunpack.c.l.b16 %v568
        %v831 = vunpack.c.h.b16 %v568
        %v832 = vunpack.c.l.b16 %v569
        %v833 = vunpack.c.h.b16 %v569
        %v834 = vunpack.c.l.b16 %v570
        %v835 = vunpack.c.h.b16 %v570
        %v836 = vunpack.c.l.b16 %v571
        %v837 = vunpack.c.h.b16 %v571
        %v838 = vunpack.c.l.b16 %v572
        %v839 = vunpack.c.h.b16 %v572
        %v840 = vunpack.c.l.b16 %v573
        %v841 = vunpack.c.h.b16 %v573
        %v842 = vunpack.c.l.b16 %v574
        %v843 = vunpack.c.h.b16 %v574
        %v844 = vunpack.c.l.b16 %v575
        %v845 = vunpack.c.h.b16 %v575
        %v846 = vunpack.c.l.b16 %v576
        %v847 = vunpack.c.h.b16 %v576
        %v848 = vunpack.c.l.b16 %v577
        %v849 = vunpack.c.h.b16 %v577
        %v850 = vunpack.c.l.b16 %v578
        %v851 = vunpack.c.h.b16 %v578
        %v852 = vunpack.c.l.b16 %v579
        %v853 = vunpack.c.h.b16 %v579
        %v854 = vunpack.c.l.b16 %v580
        %v855 = vunpack.c.h.b16 %v580
        %v856 = vunpack.c.l.b16 %v581
        %v857 = vunpack.c.h.b16 %v581
        %v858 = vunpack.c.l.b16 %v582
        %v859 = vunpack.c.h.b16 %v582
        %v860 = vunpack.c.l.b16 %v583
        %v861 = vunpack.c.h.b16 %v583
        %v862 = vunpack.c.l.b16 %v584
        %v863 = vunpack.c.h.b16 %v584
        %v864 = vunpack.c.l.b16 %v585
        %v865 = vunpack.c.h.b16 %v585
        %v866 = vunpack.c.l.b16 %v586
        %v867 = vunpack.c.h.b16 %v586
        %v868 = vunpack.c.l.b16 %v587
        %v869 = vunpack.c.h.b16 %v587
        %v870 = vunpack.c.l.b16 %v588
        %v871 = vunpack.c.h.b16 %v588
        %v872 = vunpack.c.l.b16 %v589
        %v873 = vunpack.c.h.b16 %v589
        %v874 = vunpack.c.l.b16 %v590
        %v875 = vunpack.c.h.b16 %v590
        %v876 = vunpack.c.l.b16 %v591
        %v877 = vunpack.c.h.b16 %v591
        %v878 = vunpack.c.l.b16 %v592
        %v879 = vunpack.c.h.b16 %v592
        %v880 = vunpack.c.l.b16 %v593
        %v881 = vunpack.c.h.b16 %v593
        %v882 = vunpack.c.l.b16 %v594
        %v883 = vunpack.c.h.b16 %v594
        %v884 = vunpack.c.l.b16 %v595
        %v885 = vunpack.c.h.b16 %v595
        %v886 = vunpack.c.l.b16 %v596
        %v887 = vunpack.c.h.b16 %v596
        %v888 = vunpack.c.l.b16 %v597
        %v889 = vunpack.c.h.b16 %v597
        %v890 = vunpack.c.l.b16 %v598
        %v891 = vunpack.c.h.b16 %v598
        %v892 = vpack.c.b16 %v830, %v828
        %v893 = vpack.c.b16 %v831, %v829
        %v894 = vpack.c.b16 %v834, %v832
        %v895 = vpack.c.b16 %v835, %v833
        %v896 = vpack.c.b16 %v838, %v836
        %v897 = vpack.c.b16 %v839, %v837
        %v898 = vpack.c.b16 %v842, %v840
        %v899 = vpack.c.b16 %v843, %v841
        %v900 = vpack.c.b16 %v846, %v844
        %v901 = vpack.c.b16 %v847, %v845
        %v902 = vpack.c.b16 %v850, %v848
        %v903 = vpack.c.b16 %v851, %v849
        %v904 = vpack.c.b16 %v854, %v852
        %v905 = vpack.c.b16 %v855, %v853
        %v906 = vpack.c.b16 %v858, %v856
        %v907 = vpack.c.b16 %v859, %v857
        %v908 = vpack.c.b16 %v862, %v860
        %v909 = vpack.c.b16 %v863, %v861
        %v910 = vpack.c.b16 %v866, %v864
        %v911 = vpack.c.b16 %v867, %v865
        %v912 = vpack.c.b16 %v870, %v868
        %v913 = vpack.c.b16 %v871, %v869
        %v914 = vpack.c.b16 %v874, %v872
        %v915 = vpack.c.b16 %v875, %v873
        %v916 = vpack.c.b16 %v878, %v876
        %v917 = vpack.c.b16 %v879, %v877
        %v918 = vpack.c.b16 %v882, %v880
        %v919 = vpack.c.b16 %v883, %v881
        %v920 = vpack.c.b16 %v886, %v884
        %v921 = vpack.c.b16 %v887, %v885
        %v922 = vpack.c.b16 %v890, %v888
        %v923 = vpack.c.b16 %v891, %v889
        %956 = vmatprep.subr.bf16.mxu0 %v893
        %957 = vmatpush1.bf16.msra.mxu0 %v892
        %958 = vmatprep.subr.bf16.mxu0 %v895
        %959 = vmatpush1.bf16.msra.mxu0 %v894
        %960 = vmatprep.subr.bf16.mxu0 %v897
        %961 = vmatpush1.bf16.msra.mxu0 %v896
        %962 = vmatprep.subr.bf16.mxu0 %v899
        %963 = vmatpush1.bf16.msra.mxu0 %v898
        %964 = vmatprep.subr.bf16.mxu0 %v901
        %965 = vmatpush1.bf16.msra.mxu0 %v900
        %966 = vmatprep.subr.bf16.mxu0 %v903
        %967 = vmatpush1.bf16.msra.mxu0 %v902
        %968 = vmatprep.subr.bf16.mxu0 %v905
        %969 = vmatpush1.bf16.msra.mxu0 %v904
        %970 = vmatprep.subr.bf16.mxu0 %v907
        %971 = vmatpush1.bf16.msra.mxu0 %v906
        %972 = vmatprep.subr.bf16.mxu0 %v909
        %973 = vmatpush1.bf16.msra.mxu0 %v908
        %974 = vmatprep.subr.bf16.mxu0 %v911
        %975 = vmatpush1.bf16.msra.mxu0 %v910
        %976 = vmatprep.subr.bf16.mxu0 %v913
        %977 = vmatpush1.bf16.msra.mxu0 %v912
        %978 = vmatprep.subr.bf16.mxu0 %v915
        %979 = vmatpush1.bf16.msra.mxu0 %v914
        %980 = vmatprep.subr.bf16.mxu0 %v917
        %981 = vmatpush1.bf16.msra.mxu0 %v916
        %982 = vmatprep.subr.bf16.mxu0 %v919
        %983 = vmatpush1.bf16.msra.mxu0 %v918
        %984 = vmatprep.subr.bf16.mxu0 %v921
        %985 = vmatpush1.bf16.msra.mxu0 %v920
        %986 = vmatprep.subr.bf16.mxu0 %v923
        %987 = vmatpush1.bf16.msra.mxu0 %v922
        %988 = vmatprep.mubr.bf16.mxu0 %v717
        %989 = vmatmul.mubr.bf16.gmra.mrb[0].mxu0 %v716
        %v990 = vpop.f32.mrb[0].mxu0
        %v991 = vadd.f32 0.0, %v990
        %v992 = vpop.f32.mrb[0].mxu0
        %v993 = vadd.f32 0.0, %v992
        %v994 = vpop.f32.mrb[0].mxu0
        %v995 = vadd.f32 0.0, %v994
        %v996 = vpop.f32.mrb[0].mxu0
        %v997 = vadd.f32 0.0, %v996
        %998 = vmatprep.mubr.bf16.mxu0 %v719
        %999 = vmatmul.mubr.bf16.gmra.mrb[0].mxu0 %v718
        %v1000 = vpop.f32.mrb[0].mxu0
        %v1001 = vadd.f32 0.0, %v1000
        %v1002 = vpop.f32.mrb[0].mxu0
        %v1003 = vadd.f32 0.0, %v1002
        %v1004 = vpop.f32.mrb[0].mxu0
        %v1005 = vadd.f32 0.0, %v1004
        %v1006 = vpop.f32.mrb[0].mxu0
        %v1007 = vadd.f32 0.0, %v1006
        %1008 = vmatprep.mubr.bf16.mxu0 %v721
        %1009 = vmatmul.mubr.bf16.gmra.mrb[0].mxu0 %v720
        %v1010 = vpop.f32.mrb[0].mxu0
        %v1011 = vadd.f32 0.0, %v1010
        %v1012 = vpop.f32.mrb[0].mxu0
        %v1013 = vadd.f32 0.0, %v1012
        %v1014 = vpop.f32.mrb[0].mxu0
        %v1015 = vadd.f32 0.0, %v1014
        %v1016 = vpop.f32.mrb[0].mxu0
        %v1017 = vadd.f32 0.0, %v1016
        %1018 = vmatprep.mubr.bf16.mxu0 %v723
        %1019 = vmatmul.mubr.bf16.gmra.mrb[0].mxu0 %v722
        %v1020 = vpop.f32.mrb[0].mxu0
        %v1021 = vadd.f32 0.0, %v1020
        %v1022 = vpop.f32.mrb[0].mxu0
        %v1023 = vadd.f32 0.0, %v1022
        %v1024 = vpop.f32.mrb[0].mxu0
        %v1025 = vadd.f32 0.0, %v1024
        %v1026 = vpop.f32.mrb[0].mxu0
        %v1027 = vadd.f32 0.0, %v1026
        %1028 = vmatprep.mubr.bf16.mxu0 %v725
        %1029 = vmatmul.mubr.bf16.gmra.mrb[0].mxu0 %v724
        %v1030 = vpop.f32.mrb[0].mxu0
        %v1031 = vadd.f32 0.0, %v1030
        %v1032 = vpop.f32.mrb[0].mxu0
        %v1033 = vadd.f32 0.0, %v1032
        %v1034 = vpop.f32.mrb[0].mxu0
        %v1035 = vadd.f32 0.0, %v1034
        %v1036 = vpop.f32.mrb[0].mxu0
        %v1037 = vadd.f32 0.0, %v1036
        %1038 = vmatprep.mubr.bf16.mxu0 %v727
        %1039 = vmatmul.mubr.bf16.gmra.mrb[0].mxu0 %v726
        %v1040 = vpop.f32.mrb[0].mxu0
        %v1041 = vadd.f32 0.0, %v1040
        %v1042 = vpop.f32.mrb[0].mxu0
        %v1043 = vadd.f32 0.0, %v1042
        %v1044 = vpop.f32.mrb[0].mxu0
        %v1045 = vadd.f32 0.0, %v1044
        %v1046 = vpop.f32.mrb[0].mxu0
        %v1047 = vadd.f32 0.0, %v1046
        %1048 = vmatprep.mubr.bf16.mxu0 %v729
        %1049 = vmatmul.mubr.bf16.gmra.mrb[0].mxu0 %v728
        %v1050 = vpop.f32.mrb[0].mxu0
        %v1051 = vadd.f32 0.0, %v1050
        %v1052 = vpop.f32.mrb[0].mxu0
        %v1053 = vadd.f32 0.0, %v1052
        %v1054 = vpop.f32.mrb[0].mxu0
        %v1055 = vadd.f32 0.0, %v1054
        %v1056 = vpop.f32.mrb[0].mxu0
        %v1057 = vadd.f32 0.0, %v1056
        %1058 = vmatprep.mubr.bf16.mxu0 %v731
        %1059 = vmatmul.mubr.bf16.gmra.mrb[0].mxu0 %v730
        %v1060 = vpop.f32.mrb[0].mxu0
        %v1061 = vadd.f32 0.0, %v1060
        %v1062 = vpop.f32.mrb[0].mxu0
        %v1063 = vadd.f32 0.0, %v1062
        %v1064 = vpop.f32.mrb[0].mxu0
        %v1065 = vadd.f32 0.0, %v1064
        %v1066 = vpop.f32.mrb[0].mxu0
        %v1067 = vadd.f32 0.0, %v1066
        %1068 = vmatprep.mubr.bf16.mxu0 %v733
        %1069 = vmatmul.mubr.bf16.gmra.mrb[0].mxu0 %v732
        %v1070 = vpop.f32.mrb[0].mxu0
        %v1071 = vadd.f32 0.0, %v1070
        %v1072 = vpop.f32.mrb[0].mxu0
        %v1073 = vadd.f32 0.0, %v1072
        %v1074 = vpop.f32.mrb[0].mxu0
        %v1075 = vadd.f32 0.0, %v1074
        %v1076 = vpop.f32.mrb[0].mxu0
        %v1077 = vadd.f32 0.0, %v1076
        %1078 = vmatprep.mubr.bf16.mxu0 %v735
        %1079 = vmatmul.mubr.bf16.gmra.mrb[0].mxu0 %v734
        %v1080 = vpop.f32.mrb[0].mxu0
        %v1081 = vadd.f32 0.0, %v1080
        %v1082 = vpop.f32.mrb[0].mxu0
        %v1083 = vadd.f32 0.0, %v1082
        %v1084 = vpop.f32.mrb[0].mxu0
        %v1085 = vadd.f32 0.0, %v1084
        %v1086 = vpop.f32.mrb[0].mxu0
        %v1087 = vadd.f32 0.0, %v1086
        %1088 = vmatprep.mubr.bf16.mxu0 %v737
        %1089 = vmatmul.mubr.bf16.gmra.mrb[0].mxu0 %v736
        %v1090 = vpop.f32.mrb[0].mxu0
        %v1091 = vadd.f32 0.0, %v1090
        %v1092 = vpop.f32.mrb[0].mxu0
        %v1093 = vadd.f32 0.0, %v1092
        %v1094 = vpop.f32.mrb[0].mxu0
        %v1095 = vadd.f32 0.0, %v1094
        %v1096 = vpop.f32.mrb[0].mxu0
        %v1097 = vadd.f32 0.0, %v1096
        %1098 = vmatprep.mubr.bf16.mxu0 %v739
        %1099 = vmatmul.mubr.bf16.gmra.mrb[0].mxu0 %v738
        %v1100 = vpop.f32.mrb[0].mxu0
        %v1101 = vadd.f32 0.0, %v1100
        %v1102 = vpop.f32.mrb[0].mxu0
        %v1103 = vadd.f32 0.0, %v1102
        %v1104 = vpop.f32.mrb[0].mxu0
        %v1105 = vadd.f32 0.0, %v1104
        %v1106 = vpop.f32.mrb[0].mxu0
        %v1107 = vadd.f32 0.0, %v1106
        %1108 = vmatprep.mubr.bf16.mxu0 %v741
        %1109 = vmatmul.mubr.bf16.gmra.mrb[0].mxu0 %v740
        %v1110 = vpop.f32.mrb[0].mxu0
        %v1111 = vadd.f32 0.0, %v1110
        %v1112 = vpop.f32.mrb[0].mxu0
        %v1113 = vadd.f32 0.0, %v1112
        %v1114 = vpop.f32.mrb[0].mxu0
        %v1115 = vadd.f32 0.0, %v1114
        %v1116 = vpop.f32.mrb[0].mxu0
        %v1117 = vadd.f32 0.0, %v1116
        %1118 = vmatprep.mubr.bf16.mxu0 %v743
        %1119 = vmatmul.mubr.bf16.gmra.mrb[0].mxu0 %v742
        %v1120 = vpop.f32.mrb[0].mxu0
        %v1121 = vadd.f32 0.0, %v1120
        %v1122 = vpop.f32.mrb[0].mxu0
        %v1123 = vadd.f32 0.0, %v1122
        %v1124 = vpop.f32.mrb[0].mxu0
        %v1125 = vadd.f32 0.0, %v1124
        %v1126 = vpop.f32.mrb[0].mxu0
        %v1127 = vadd.f32 0.0, %v1126
        %1128 = vmatprep.mubr.bf16.mxu0 %v745
        %1129 = vmatmul.mubr.bf16.gmra.mrb[0].mxu0 %v744
        %v1130 = vpop.f32.mrb[0].mxu0
        %v1131 = vadd.f32 0.0, %v1130
        %v1132 = vpop.f32.mrb[0].mxu0
        %v1133 = vadd.f32 0.0, %v1132
        %v1134 = vpop.f32.mrb[0].mxu0
        %v1135 = vadd.f32 0.0, %v1134
        %v1136 = vpop.f32.mrb[0].mxu0
        %v1137 = vadd.f32 0.0, %v1136
        %1138 = vmatprep.mubr.bf16.mxu0 %v747
        %1139 = vmatmul.mubr.bf16.gmra.mrb[0].mxu0 %v746
        %v1140 = vpop.f32.mrb[0].mxu0
        %v1141 = vadd.f32 0.0, %v1140
        %v1142 = vpop.f32.mrb[0].mxu0
        %v1143 = vadd.f32 0.0, %v1142
        %v1144 = vpop.f32.mrb[0].mxu0
        %v1145 = vadd.f32 0.0, %v1144
        %v1146 = vpop.f32.mrb[0].mxu0
        %v1147 = vadd.f32 0.0, %v1146
        %1148 = vmatprep.mubr.bf16.mxu0 %v749
        %1149 = vmatmul.mubr.bf16.gmra.mrb[0].mxu0 %v748
        %v1150 = vpop.f32.mrb[0].mxu0
        %v1151 = vadd.f32 0.0, %v1150
        %v1152 = vpop.f32.mrb[0].mxu0
        %v1153 = vadd.f32 0.0, %v1152
        %v1154 = vpop.f32.mrb[0].mxu0
        %v1155 = vadd.f32 0.0, %v1154
        %v1156 = vpop.f32.mrb[0].mxu0
        %v1157 = vadd.f32 0.0, %v1156
        %1158 = vmatprep.mubr.bf16.mxu0 %v751
        %1159 = vmatmul.mubr.bf16.gmra.mrb[0].mxu0 %v750
        %v1160 = vpop.f32.mrb[0].mxu0
        %v1161 = vadd.f32 0.0, %v1160
        %v1162 = vpop.f32.mrb[0].mxu0
        %v1163 = vadd.f32 0.0, %v1162
        %v1164 = vpop.f32.mrb[0].mxu0
        %v1165 = vadd.f32 0.0, %v1164
        %v1166 = vpop.f32.mrb[0].mxu0
        %v1167 = vadd.f32 0.0, %v1166
        %1168 = vmatprep.mubr.bf16.mxu0 %v753
        %1169 = vmatmul.mubr.bf16.gmra.mrb[0].mxu0 %v752
        %v1170 = vpop.f32.mrb[0].mxu0
        %v1171 = vadd.f32 0.0, %v1170
        %v1172 = vpop.f32.mrb[0].mxu0
        %v1173 = vadd.f32 0.0, %v1172
        %v1174 = vpop.f32.mrb[0].mxu0
        %v1175 = vadd.f32 0.0, %v1174
        %v1176 = vpop.f32.mrb[0].mxu0
        %v1177 = vadd.f32 0.0, %v1176
        %1178 = vmatprep.mubr.bf16.mxu0 %v755
        %1179 = vmatmul.mubr.bf16.gmra.mrb[0].mxu0 %v754
        %v1180 = vpop.f32.mrb[0].mxu0
        %v1181 = vadd.f32 0.0, %v1180
        %v1182 = vpop.f32.mrb[0].mxu0
        %v1183 = vadd.f32 0.0, %v1182
        %v1184 = vpop.f32.mrb[0].mxu0
        %v1185 = vpop.f32.mrb[0].mxu0
        %1186 = vdwg.mxu0
        %v1187 = vadd.f32 %v450, %v991
        %v1188 = vadd.f32 %v451, %v993
        %v1189 = vadd.f32 %v452, %v995
        %v1190 = vadd.f32 %v453, %v997
        %v1191 = vadd.f32 %v454, %v1001
        %v1192 = vadd.f32 %v455, %v1003
        %v1193 = vadd.f32 %v456, %v1005
        %v1194 = vadd.f32 %v457, %v1007
        %v1195 = vadd.f32 %v458, %v1011
        %v1196 = vadd.f32 %v459, %v1013
        %v1197 = vadd.f32 %v460, %v1015
        %v1198 = vadd.f32 %v461, %v1017
        %v1199 = vadd.f32 %v462, %v1021
        %v1200 = vadd.f32 %v463, %v1023
        %v1201 = vadd.f32 %v464, %v1025
        %v1202 = vadd.f32 %v465, %v1027
        %v1203 = vadd.f32 %v466, %v1031
        %v1204 = vadd.f32 %v467, %v1033
        %v1205 = vadd.f32 %v468, %v1035
        %v1206 = vadd.f32 %v469, %v1037
        %v1207 = vadd.f32 %v470, %v1041
        %v1208 = vadd.f32 %v471, %v1043
        %v1209 = vadd.f32 %v472, %v1045
        %v1210 = vadd.f32 %v473, %v1047
        %v1211 = vadd.f32 %v474, %v1051
        %v1212 = vadd.f32 %v475, %v1053
        %v1213 = vadd.f32 %v476, %v1055
        %v1214 = vadd.f32 %v477, %v1057
        %v1215 = vadd.f32 %v478, %v1061
        %v1216 = vadd.f32 %v479, %v1063
        %v1217 = vadd.f32 %v480, %v1065
        %v1218 = vadd.f32 %v481, %v1067
        %v1219 = vadd.f32 %v482, %v1071
        %v1220 = vadd.f32 %v483, %v1073
        %v1221 = vadd.f32 %v484, %v1075
        %v1222 = vadd.f32 %v485, %v1077
        %v1223 = vadd.f32 %v486, %v1081
        %v1224 = vadd.f32 %v487, %v1083
        %v1225 = vadd.f32 %v488, %v1085
        %v1226 = vadd.f32 %v489, %v1087
        %v1227 = vadd.f32 %v490, %v1091
        %v1228 = vadd.f32 %v491, %v1093
        %v1229 = vadd.f32 %v492, %v1095
        %v1230 = vadd.f32 %v493, %v1097
        %v1231 = vadd.f32 %v494, %v1101
        %v1232 = vadd.f32 %v495, %v1103
        %v1233 = vadd.f32 %v496, %v1105
        %v1234 = vadd.f32 %v497, %v1107
        %v1235 = vadd.f32 %v498, %v1111
        %v1236 = vadd.f32 %v499, %v1113
        %v1237 = vadd.f32 %v500, %v1115
        %v1238 = vadd.f32 %v501, %v1117
        %v1239 = vadd.f32 %v502, %v1121
        %v1240 = vadd.f32 %v503, %v1123
        %v1241 = vadd.f32 %v504, %v1125
        %v1242 = vadd.f32 %v505, %v1127
        %v1243 = vadd.f32 %v506, %v1131
        %v1244 = vadd.f32 %v507, %v1133
        %v1245 = vadd.f32 %v508, %v1135
        %v1246 = vadd.f32 %v509, %v1137
        %v1247 = vadd.f32 %v510, %v1141
        %v1248 = vadd.f32 %v511, %v1143
        %v1249 = vadd.f32 %v512, %v1145
        %v1250 = vadd.f32 %v513, %v1147
        %v1251 = vadd.f32 %v514, %v1151
        %v1252 = vadd.f32 %v515, %v1153
        %v1253 = vadd.f32 %v516, %v1155
        %v1254 = vadd.f32 %v517, %v1157
        %v1255 = vadd.f32 %v518, %v1161
        %v1256 = vadd.f32 %v519, %v1163
        %v1257 = vadd.f32 %v520, %v1165
        %v1258 = vadd.f32 %v521, %v1167
        %v1259 = vadd.f32 %v522, %v1171
        %v1260 = vadd.f32 %v523, %v1173
        %v1261 = vadd.f32 %v524, %v1175
        %v1262 = vadd.f32 %v525, %v1177
        %v1263 = vadd.f32 %v526, %v1181
        %v1264 = vadd.f32 %v527, %v1183
        %1265 = vst [vmem:[#allocation2] sm:$0xff] %v1187
        %1266 = vst [vmem:[#allocation2 + $0x8] sm:$0xff] %v1188
        %1267 = vst [vmem:[#allocation2 + $0x10] sm:$0xff] %v1189
        %1268 = vst [vmem:[#allocation2 + $0x18] sm:$0xff] %v1190
        %1269 = vst [vmem:[#allocation2 + $0x20] sm:$0xff] %v1191
        %1270 = vst [vmem:[#allocation2 + $0x28] sm:$0xff] %v1192
        %1271 = vst [vmem:[#allocation2 + $0x30] sm:$0xff] %v1193
        %1272 = vst [vmem:[#allocation2 + $0x38] sm:$0xff] %v1194
        %1273 = vst [vmem:[#allocation2 + $0x40] sm:$0xff] %v1195
        %1274 = vst [vmem:[#allocation2 + $0x48] sm:$0xff] %v1196
        %1275 = vst [vmem:[#allocation2 + $0x50] sm:$0xff] %v1197
        %1276 = vst [vmem:[#allocation2 + $0x58] sm:$0xff] %v1198
        %1277 = vst [vmem:[#allocation2 + $0x60] sm:$0xff] %v1199
        %1278 = vst [vmem:[#allocation2 + $0x68] sm:$0xff] %v1200
        %1279 = vst [vmem:[#allocation2 + $0x70] sm:$0xff] %v1201
        %1280 = vst [vmem:[#allocation2 + $0x78] sm:$0xff] %v1202
        %1281 = vst [vmem:[#allocation2 + $0x80] sm:$0xff] %v1203
        %1282 = vst [vmem:[#allocation2 + $0x88] sm:$0xff] %v1204
        %1283 = vst [vmem:[#allocation2 + $0x90] sm:$0xff] %v1205
        %1284 = vst [vmem:[#allocation2 + $0x98] sm:$0xff] %v1206
        %1285 = vst [vmem:[#allocation2 + $0xa0] sm:$0xff] %v1207
        %1286 = vst [vmem:[#allocation2 + $0xa8] sm:$0xff] %v1208
        %1287 = vst [vmem:[#allocation2 + $0xb0] sm:$0xff] %v1209
        %1288 = vst [vmem:[#allocation2 + $0xb8] sm:$0xff] %v1210
        %1289 = vst [vmem:[#allocation2 + $0xc0] sm:$0xff] %v1211
        %1290 = vst [vmem:[#allocation2 + $0xc8] sm:$0xff] %v1212
        %1291 = vst [vmem:[#allocation2 + $0xd0] sm:$0xff] %v1213
        %1292 = vst [vmem:[#allocation2 + $0xd8] sm:$0xff] %v1214
        %1293 = vst [vmem:[#allocation2 + $0xe0] sm:$0xff] %v1215
        %1294 = vst [vmem:[#allocation2 + $0xe8] sm:$0xff] %v1216
        %1295 = vst [vmem:[#allocation2 + $0xf0] sm:$0xff] %v1217
        %1296 = vst [vmem:[#allocation2 + $0xf8] sm:$0xff] %v1218
        %1297 = vst [vmem:[#allocation2 + $0x100] sm:$0xff] %v1219
        %1298 = vst [vmem:[#allocation2 + $0x108] sm:$0xff] %v1220
        %1299 = vst [vmem:[#allocation2 + $0x110] sm:$0xff] %v1221
        %1300 = vst [vmem:[#allocation2 + $0x118] sm:$0xff] %v1222
        %1301 = vst [vmem:[#allocation2 + $0x120] sm:$0xff] %v1223
        %1302 = vst [vmem:[#allocation2 + $0x128] sm:$0xff] %v1224
        %1303 = vst [vmem:[#allocation2 + $0x130] sm:$0xff] %v1225
        %1304 = vst [vmem:[#allocation2 + $0x138] sm:$0xff] %v1226
        %1305 = vst [vmem:[#allocation2 + $0x140] sm:$0xff] %v1227
        %1306 = vst [vmem:[#allocation2 + $0x148] sm:$0xff] %v1228
        %1307 = vst [vmem:[#allocation2 + $0x150] sm:$0xff] %v1229
        %1308 = vst [vmem:[#allocation2 + $0x158] sm:$0xff] %v1230
        %1309 = vst [vmem:[#allocation2 + $0x160] sm:$0xff] %v1231
        %1310 = vst [vmem:[#allocation2 + $0x168] sm:$0xff] %v1232
        %1311 = vst [vmem:[#allocation2 + $0x170] sm:$0xff] %v1233
        %1312 = vst [vmem:[#allocation2 + $0x178] sm:$0xff] %v1234
        %1313 = vst [vmem:[#allocation2 + $0x180] sm:$0xff] %v1235
        %1314 = vst [vmem:[#allocation2 + $0x188] sm:$0xff] %v1236
        %1315 = vst [vmem:[#allocation2 + $0x190] sm:$0xff] %v1237
        %1316 = vst [vmem:[#allocation2 + $0x198] sm:$0xff] %v1238
        %1317 = vst [vmem:[#allocation2 + $0x1a0] sm:$0xff] %v1239
        %1318 = vst [vmem:[#allocation2 + $0x1a8] sm:$0xff] %v1240
        %1319 = vst [vmem:[#allocation2 + $0x1b0] sm:$0xff] %v1241
        %1320 = vst [vmem:[#allocation2 + $0x1b8] sm:$0xff] %v1242
        %1321 = vst [vmem:[#allocation2 + $0x1c0] sm:$0xff] %v1243
        %1322 = vst [vmem:[#allocation2 + $0x1c8] sm:$0xff] %v1244
        %1323 = vst [vmem:[#allocation2 + $0x1d0] sm:$0xff] %v1245
        %1324 = vst [vmem:[#allocation2 + $0x1d8] sm:$0xff] %v1246
        %1325 = vst [vmem:[#allocation2 + $0x1e0] sm:$0xff] %v1247
        %1326 = vst [vmem:[#allocation2 + $0x1e8] sm:$0xff] %v1248
        %1327 = vst [vmem:[#allocation2 + $0x1f0] sm:$0xff] %v1249
        %1328 = vst [vmem:[#allocation2 + $0x1f8] sm:$0xff] %v1250
        %1329 = vst [vmem:[#allocation2 + $0x200] sm:$0xff] %v1251
        %1330 = vst [vmem:[#allocation2 + $0x208] sm:$0xff] %v1252
        %1331 = vst [vmem:[#allocation2 + $0x210] sm:$0xff] %v1253
        %1332 = vst [vmem:[#allocation2 + $0x218] sm:$0xff] %v1254
        %1333 = vst [vmem:[#allocation2 + $0x220] sm:$0xff] %v1255
        %1334 = vst [vmem:[#allocation2 + $0x228] sm:$0xff] %v1256
        %1335 = vst [vmem:[#allocation2 + $0x230] sm:$0xff] %v1257
        %1336 = vst [vmem:[#allocation2 + $0x238] sm:$0xff] %v1258
        %1337 = vst [vmem:[#allocation2 + $0x240] sm:$0xff] %v1259
        %1338 = vst [vmem:[#allocation2 + $0x248] sm:$0xff] %v1260
        %1339 = vst [vmem:[#allocation2 + $0x250] sm:$0xff] %v1261
        %1340 = vst [vmem:[#allocation2 + $0x258] sm:$0xff] %v1262
        %1341 = vst [vmem:[#allocation2 + $0x260] sm:$0x3] %v1263
        %1342 = vst [vmem:[#allocation2 + $0x268] sm:$0x3] %v1264
        // Predicated region
        $region71: #{model_forward.8} parent=61 // pred_check
          %p1343 = pneg %p368
        $region72: #{model_forward.8} parent=61 // pred_check_branch
          %1345 = sbr.rel (%p1343) target = $region74
        $region73: #{model_forward.8} parent=61 // pred_region
          %v1346 = vld [vmem:[#allocation2] sm:$0xff]
          %v1347 = vld [vmem:[#allocation2 + $0x8] sm:$0xff]
          %v1348 = vld [vmem:[#allocation2 + $0x10] sm:$0xff]
          %v1349 = vld [vmem:[#allocation2 + $0x18] sm:$0xff]
          %v1350 = vld [vmem:[#allocation2 + $0x20] sm:$0xff]
          %v1351 = vld [vmem:[#allocation2 + $0x28] sm:$0xff]
          %v1352 = vld [vmem:[#allocation2 + $0x30] sm:$0xff]
          %v1353 = vld [vmem:[#allocation2 + $0x38] sm:$0xff]
          %v1354 = vld [vmem:[#allocation2 + $0x40] sm:$0xff]
          %v1355 = vld [vmem:[#allocation2 + $0x48] sm:$0xff]
          %v1356 = vld [vmem:[#allocation2 + $0x50] sm:$0xff]
          %v1357 = vld [vmem:[#allocation2 + $0x58] sm:$0xff]
          %v1358 = vld [vmem:[#allocation2 + $0x60] sm:$0xff]
          %v1359 = vld [vmem:[#allocation2 + $0x68] sm:$0xff]
          %v1360 = vld [vmem:[#allocation2 + $0x70] sm:$0xff]
          %v1361 = vld [vmem:[#allocation2 + $0x78] sm:$0xff]
          %v1362 = vld [vmem:[#allocation2 + $0x80] sm:$0xff]
          %v1363 = vld [vmem:[#allocation2 + $0x88] sm:$0xff]
          %v1364 = vld [vmem:[#allocation2 + $0x90] sm:$0xff]
          %v1365 = vld [vmem:[#allocation2 + $0x98] sm:$0xff]
          %v1366 = vld [vmem:[#allocation2 + $0xa0] sm:$0xff]
          %v1367 = vld [vmem:[#allocation2 + $0xa8] sm:$0xff]
          %v1368 = vld [vmem:[#allocation2 + $0xb0] sm:$0xff]
          %v1369 = vld [vmem:[#allocation2 + $0xb8] sm:$0xff]
          %v1370 = vld [vmem:[#allocation2 + $0xc0] sm:$0xff]
          %v1371 = vld [vmem:[#allocation2 + $0xc8] sm:$0xff]
          %v1372 = vld [vmem:[#allocation2 + $0xd0] sm:$0xff]
          %v1373 = vld [vmem:[#allocation2 + $0xd8] sm:$0xff]
          %v1374 = vld [vmem:[#allocation2 + $0xe0] sm:$0xff]
          %v1375 = vld [vmem:[#allocation2 + $0xe8] sm:$0xff]
          %v1376 = vld [vmem:[#allocation2 + $0xf0] sm:$0xff]
          %v1377 = vld [vmem:[#allocation2 + $0xf8] sm:$0xff]
          %v1378 = vld [vmem:[#allocation2 + $0x100] sm:$0xff]
          %v1379 = vld [vmem:[#allocation2 + $0x108] sm:$0xff]
          %v1380 = vld [vmem:[#allocation2 + $0x110] sm:$0xff]
          %v1381 = vld [vmem:[#allocation2 + $0x118] sm:$0xff]
          %v1382 = vld [vmem:[#allocation2 + $0x120] sm:$0xff]
          %v1383 = vld [vmem:[#allocation2 + $0x128] sm:$0xff]
          %v1384 = vld [vmem:[#allocation2 + $0x130] sm:$0xff]
          %v1385 = vld [vmem:[#allocation2 + $0x138] sm:$0xff]
          %v1386 = vld [vmem:[#allocation2 + $0x140] sm:$0xff]
          %v1387 = vld [vmem:[#allocation2 + $0x148] sm:$0xff]
          %v1388 = vld [vmem:[#allocation2 + $0x150] sm:$0xff]
          %v1389 = vld [vmem:[#allocation2 + $0x158] sm:$0xff]
          %v1390 = vld [vmem:[#allocation2 + $0x160] sm:$0xff]
          %v1391 = vld [vmem:[#allocation2 + $0x168] sm:$0xff]
          %v1392 = vld [vmem:[#allocation2 + $0x170] sm:$0xff]
          %v1393 = vld [vmem:[#allocation2 + $0x178] sm:$0xff]
          %v1394 = vld [vmem:[#allocation2 + $0x180] sm:$0xff]
          %v1395 = vld [vmem:[#allocation2 + $0x188] sm:$0xff]
          %v1396 = vld [vmem:[#allocation2 + $0x190] sm:$0xff]
          %v1397 = vld [vmem:[#allocation2 + $0x198] sm:$0xff]
          %v1398 = vld [vmem:[#allocation2 + $0x1a0] sm:$0xff]
          %v1399 = vld [vmem:[#allocation2 + $0x1a8] sm:$0xff]
          %v1400 = vld [vmem:[#allocation2 + $0x1b0] sm:$0xff]
          %v1401 = vld [vmem:[#allocation2 + $0x1b8] sm:$0xff]
          %v1402 = vld [vmem:[#allocation2 + $0x1c0] sm:$0xff]
          %v1403 = vld [vmem:[#allocation2 + $0x1c8] sm:$0xff]
          %v1404 = vld [vmem:[#allocation2 + $0x1d0] sm:$0xff]
          %v1405 = vld [vmem:[#allocation2 + $0x1d8] sm:$0xff]
          %v1406 = vld [vmem:[#allocation2 + $0x1e0] sm:$0xff]
          %v1407 = vld [vmem:[#allocation2 + $0x1e8] sm:$0xff]
          %v1408 = vld [vmem:[#allocation2 + $0x1f0] sm:$0xff]
          %v1409 = vld [vmem:[#allocation2 + $0x1f8] sm:$0xff]
          %v1410 = vld [vmem:[#allocation2 + $0x200] sm:$0xff]
          %v1411 = vld [vmem:[#allocation2 + $0x208] sm:$0xff]
          %v1412 = vld [vmem:[#allocation2 + $0x210] sm:$0xff]
          %v1413 = vld [vmem:[#allocation2 + $0x218] sm:$0xff]
          %v1414 = vld [vmem:[#allocation2 + $0x220] sm:$0xff]
          %v1415 = vld [vmem:[#allocation2 + $0x228] sm:$0xff]
          %v1416 = vld [vmem:[#allocation2 + $0x230] sm:$0xff]
          %v1417 = vld [vmem:[#allocation2 + $0x238] sm:$0xff]
          %v1418 = vld [vmem:[#allocation2 + $0x240] sm:$0xff]
          %v1419 = vld [vmem:[#allocation2 + $0x248] sm:$0xff]
          %v1420 = vld [vmem:[#allocation2 + $0x250] sm:$0xff]
          %v1421 = vld [vmem:[#allocation2 + $0x258] sm:$0xff]
          %v1422 = vld [vmem:[#allocation2 + $0x260] sm:$0x3]
          %v1423 = vld [vmem:[#allocation2 + $0x268] sm:$0x3]
          %1424 = vst [vmem:[%s351] sm:$0xff] %v1346
          %1425 = vst [vmem:[%s351 + $0x8] sm:$0xff] %v1347
          %1426 = vst [vmem:[%s351 + $0x10] sm:$0xff] %v1348
          %1427 = vst [vmem:[%s351 + $0x18] sm:$0xff] %v1349
          %1428 = vst [vmem:[%s351 + $0x20] sm:$0xff] %v1350
          %1429 = vst [vmem:[%s351 + $0x28] sm:$0xff] %v1351
          %1430 = vst [vmem:[%s351 + $0x30] sm:$0xff] %v1352
          %1431 = vst [vmem:[%s351 + $0x38] sm:$0xff] %v1353
          %1432 = vst [vmem:[%s351 + $0x40] sm:$0xff] %v1354
          %1433 = vst [vmem:[%s351 + $0x48] sm:$0xff] %v1355
          %1434 = vst [vmem:[%s351 + $0x50] sm:$0xff] %v1356
          %1435 = vst [vmem:[%s351 + $0x58] sm:$0xff] %v1357
          %1436 = vst [vmem:[%s351 + $0x60] sm:$0xff] %v1358
          %1437 = vst [vmem:[%s351 + $0x68] sm:$0xff] %v1359
          %1438 = vst [vmem:[%s351 + $0x70] sm:$0xff] %v1360
          %1439 = vst [vmem:[%s351 + $0x78] sm:$0xff] %v1361
          %1440 = vst [vmem:[%s351 + $0x80] sm:$0xff] %v1362
          %1441 = vst [vmem:[%s351 + $0x88] sm:$0xff] %v1363
          %1442 = vst [vmem:[%s351 + $0x90] sm:$0xff] %v1364
          %1443 = vst [vmem:[%s351 + $0x98] sm:$0xff] %v1365
          %1444 = vst [vmem:[%s351 + $0xa0] sm:$0xff] %v1366
          %1445 = vst [vmem:[%s351 + $0xa8] sm:$0xff] %v1367
          %1446 = vst [vmem:[%s351 + $0xb0] sm:$0xff] %v1368
          %1447 = vst [vmem:[%s351 + $0xb8] sm:$0xff] %v1369
          %1448 = vst [vmem:[%s351 + $0xc0] sm:$0xff] %v1370
          %1449 = vst [vmem:[%s351 + $0xc8] sm:$0xff] %v1371
          %1450 = vst [vmem:[%s351 + $0xd0] sm:$0xff] %v1372
          %1451 = vst [vmem:[%s351 + $0xd8] sm:$0xff] %v1373
          %1452 = vst [vmem:[%s351 + $0xe0] sm:$0xff] %v1374
          %1453 = vst [vmem:[%s351 + $0xe8] sm:$0xff] %v1375
          %1454 = vst [vmem:[%s351 + $0xf0] sm:$0xff] %v1376
          %1455 = vst [vmem:[%s351 + $0xf8] sm:$0xff] %v1377
          %1456 = vst [vmem:[%s351 + $0x100] sm:$0xff] %v1378
          %1457 = vst [vmem:[%s351 + $0x108] sm:$0xff] %v1379
          %1458 = vst [vmem:[%s351 + $0x110] sm:$0xff] %v1380
          %1459 = vst [vmem:[%s351 + $0x118] sm:$0xff] %v1381
          %1460 = vst [vmem:[%s351 + $0x120] sm:$0xff] %v1382
          %1461 = vst [vmem:[%s351 + $0x128] sm:$0xff] %v1383
          %1462 = vst [vmem:[%s351 + $0x130] sm:$0xff] %v1384
          %1463 = vst [vmem:[%s351 + $0x138] sm:$0xff] %v1385
          %1464 = vst [vmem:[%s351 + $0x140] sm:$0xff] %v1386
          %1465 = vst [vmem:[%s351 + $0x148] sm:$0xff] %v1387
          %1466 = vst [vmem:[%s351 + $0x150] sm:$0xff] %v1388
          %1467 = vst [vmem:[%s351 + $0x158] sm:$0xff] %v1389
          %1468 = vst [vmem:[%s351 + $0x160] sm:$0xff] %v1390
          %1469 = vst [vmem:[%s351 + $0x168] sm:$0xff] %v1391
          %1470 = vst [vmem:[%s351 + $0x170] sm:$0xff] %v1392
          %1471 = vst [vmem:[%s351 + $0x178] sm:$0xff] %v1393
          %1472 = vst [vmem:[%s351 + $0x180] sm:$0xff] %v1394
          %1473 = vst [vmem:[%s351 + $0x188] sm:$0xff] %v1395
          %1474 = vst [vmem:[%s351 + $0x190] sm:$0xff] %v1396
          %1475 = vst [vmem:[%s351 + $0x198] sm:$0xff] %v1397
          %1476 = vst [vmem:[%s351 + $0x1a0] sm:$0xff] %v1398
          %1477 = vst [vmem:[%s351 + $0x1a8] sm:$0xff] %v1399
          %1478 = vst [vmem:[%s351 + $0x1b0] sm:$0xff] %v1400
          %1479 = vst [vmem:[%s351 + $0x1b8] sm:$0xff] %v1401
          %1480 = vst [vmem:[%s351 + $0x1c0] sm:$0xff] %v1402
          %1481 = vst [vmem:[%s351 + $0x1c8] sm:$0xff] %v1403
          %1482 = vst [vmem:[%s351 + $0x1d0] sm:$0xff] %v1404
          %1483 = vst [vmem:[%s351 + $0x1d8] sm:$0xff] %v1405
          %1484 = vst [vmem:[%s351 + $0x1e0] sm:$0xff] %v1406
          %1485 = vst [vmem:[%s351 + $0x1e8] sm:$0xff] %v1407
          %1486 = vst [vmem:[%s351 + $0x1f0] sm:$0xff] %v1408
          %1487 = vst [vmem:[%s351 + $0x1f8] sm:$0xff] %v1409
          %1488 = vst [vmem:[%s351 + $0x200] sm:$0xff] %v1410
          %1489 = vst [vmem:[%s351 + $0x208] sm:$0xff] %v1411
          %1490 = vst [vmem:[%s351 + $0x210] sm:$0xff] %v1412
          %1491 = vst [vmem:[%s351 + $0x218] sm:$0xff] %v1413
          %1492 = vst [vmem:[%s351 + $0x220] sm:$0xff] %v1414
          %1493 = vst [vmem:[%s351 + $0x228] sm:$0xff] %v1415
          %1494 = vst [vmem:[%s351 + $0x230] sm:$0xff] %v1416
          %1495 = vst [vmem:[%s351 + $0x238] sm:$0xff] %v1417
          %1496 = vst [vmem:[%s351 + $0x240] sm:$0xff] %v1418
          %1497 = vst [vmem:[%s351 + $0x248] sm:$0xff] %v1419
          %1498 = vst [vmem:[%s351 + $0x250] sm:$0xff] %v1420
          %1499 = vst [vmem:[%s351 + $0x258] sm:$0xff] %v1421
          %1500 = vst [vmem:[%s351 + $0x260] sm:$0x3] %v1422
          %1501 = vst [vmem:[%s351 + $0x268] sm:$0x3] %v1423
        $region74: #{model_forward.8} parent=61 // pred_fallthru
          _
        %s1502 = sand.u32 %s98, 1
        %s1503 = sand.u32 %s98, 1
        %s1504 = smul.addr %s1503, 624
        %s1505 = scalar_lea.vmem [#allocation4], %s1504
        // Predicated region
        $region75: #{model_forward.8} parent=61 // pred_check
          %p1506 = pneg %p108
        $region76: #{model_forward.8} parent=61 // pred_check_branch
          %1508 = sbr.rel (%p1506) target = $region78
        $region77: #{model_forward.8} parent=61 // pred_region
          %s1509 = smul.u32 39, %s18
          %s1510 = smul.u32 2, %s19
          %s1511 = smul.addr %s1509, 6
          %s1512 = sadd.s32 %s1510, %s1511
          %s1513 = smul.addr %s1512, 8
          %s1514 = scalar_lea.vmem %s2, %s1513
          // Predicated region
          $region79: #{model_forward.8} parent=77 // pred_check
            _
          $region80: #{model_forward.8} parent=77 // pred_check_branch
            %1516 = sbr.rel (0) target = $region82
          $region81: #{model_forward.8} parent=77 // pred_region
            // Predicated region
            $region83: #{model_forward.8} parent=81 // pred_check
              _
            $region84: #{model_forward.8} parent=81 // pred_check_branch
              %1518 = sbr.rel (0) target = $region86
            $region85: #{model_forward.8} parent=81 // pred_region
              loop: start=0, step=1, limit=1
              $region87: #{model_forward.8} parent=85 // loop_pre_header
                _
              $region88: #{model_forward.8} parent=85 // loop_header
                %s1520 = sphi 0, %s1524
                %p1521 = scmp.ge.s32.totalorder %s1520, 1
                %s1525 = sphi %s1505, %s1505
                %s1526 = sphi %s1514, %s1514
              $region89: #{model_forward.8} parent=85 // loop_header_branch
                %1523 = sbr.rel (%p1521) target = $region93
              $region90: #{model_forward.8} parent=85 // loop_body
                %v1527 = vld [vmem:[%s1525] sm:$0xff]
                %1528 = vst [vmem:[%s1526] sm:$0xff] %v1527
                %v1529 = vld [vmem:[%s1525 + $0x8] sm:$0xff]
                %1530 = vst [vmem:[%s1526 + $0x8] sm:$0xff] %v1529
                %v1531 = vld [vmem:[%s1525 + $0x10] sm:$0xff]
                %1532 = vst [vmem:[%s1526 + $0x30] sm:$0xff] %v1531
                %v1533 = vld [vmem:[%s1525 + $0x18] sm:$0xff]
                %1534 = vst [vmem:[%s1526 + $0x38] sm:$0xff] %v1533
                %v1535 = vld [vmem:[%s1525 + $0x20] sm:$0xff]
                %1536 = vst [vmem:[%s1526 + $0x60] sm:$0xff] %v1535
                %v1537 = vld [vmem:[%s1525 + $0x28] sm:$0xff]
                %1538 = vst [vmem:[%s1526 + $0x68] sm:$0xff] %v1537
                %v1539 = vld [vmem:[%s1525 + $0x30] sm:$0xff]
                %1540 = vst [vmem:[%s1526 + $0x90] sm:$0xff] %v1539
                %v1541 = vld [vmem:[%s1525 + $0x38] sm:$0xff]
                %1542 = vst [vmem:[%s1526 + $0x98] sm:$0xff] %v1541
                %v1543 = vld [vmem:[%s1525 + $0x40] sm:$0xff]
                %1544 = vst [vmem:[%s1526 + $0xc0] sm:$0xff] %v1543
                %v1545 = vld [vmem:[%s1525 + $0x48] sm:$0xff]
                %1546 = vst [vmem:[%s1526 + $0xc8] sm:$0xff] %v1545
                %v1547 = vld [vmem:[%s1525 + $0x50] sm:$0xff]
                %1548 = vst [vmem:[%s1526 + $0xf0] sm:$0xff] %v1547
                %v1549 = vld [vmem:[%s1525 + $0x58] sm:$0xff]
                %1550 = vst [vmem:[%s1526 + $0xf8] sm:$0xff] %v1549
                %v1551 = vld [vmem:[%s1525 + $0x60] sm:$0xff]
                %1552 = vst [vmem:[%s1526 + $0x120] sm:$0xff] %v1551
                %v1553 = vld [vmem:[%s1525 + $0x68] sm:$0xff]
                %1554 = vst [vmem:[%s1526 + $0x128] sm:$0xff] %v1553
                %v1555 = vld [vmem:[%s1525 + $0x70] sm:$0xff]
                %1556 = vst [vmem:[%s1526 + $0x150] sm:$0xff] %v1555
                %v1557 = vld [vmem:[%s1525 + $0x78] sm:$0xff]
                %1558 = vst [vmem:[%s1526 + $0x158] sm:$0xff] %v1557
                %v1559 = vld [vmem:[%s1525 + $0x80] sm:$0xff]
                %1560 = vst [vmem:[%s1526 + $0x180] sm:$0xff] %v1559
                %v1561 = vld [vmem:[%s1525 + $0x88] sm:$0xff]
                %1562 = vst [vmem:[%s1526 + $0x188] sm:$0xff] %v1561
                %v1563 = vld [vmem:[%s1525 + $0x90] sm:$0xff]
                %1564 = vst [vmem:[%s1526 + $0x1b0] sm:$0xff] %v1563
                %v1565 = vld [vmem:[%s1525 + $0x98] sm:$0xff]
                %1566 = vst [vmem:[%s1526 + $0x1b8] sm:$0xff] %v1565
                %v1567 = vld [vmem:[%s1525 + $0xa0] sm:$0xff]
                %1568 = vst [vmem:[%s1526 + $0x1e0] sm:$0xff] %v1567
                %v1569 = vld [vmem:[%s1525 + $0xa8] sm:$0xff]
                %1570 = vst [vmem:[%s1526 + $0x1e8] sm:$0xff] %v1569
                %v1571 = vld [vmem:[%s1525 + $0xb0] sm:$0xff]
                %1572 = vst [vmem:[%s1526 + $0x210] sm:$0xff] %v1571
                %v1573 = vld [vmem:[%s1525 + $0xb8] sm:$0xff]
                %1574 = vst [vmem:[%s1526 + $0x218] sm:$0xff] %v1573
                %v1575 = vld [vmem:[%s1525 + $0xc0] sm:$0xff]
                %1576 = vst [vmem:[%s1526 + $0x240] sm:$0xff] %v1575
                %v1577 = vld [vmem:[%s1525 + $0xc8] sm:$0xff]
                %1578 = vst [vmem:[%s1526 + $0x248] sm:$0xff] %v1577
                %v1579 = vld [vmem:[%s1525 + $0xd0] sm:$0xff]
                %1580 = vst [vmem:[%s1526 + $0x270] sm:$0xff] %v1579
                %v1581 = vld [vmem:[%s1525 + $0xd8] sm:$0xff]
                %1582 = vst [vmem:[%s1526 + $0x278] sm:$0xff] %v1581
                %v1583 = vld [vmem:[%s1525 + $0xe0] sm:$0xff]
                %1584 = vst [vmem:[%s1526 + $0x2a0] sm:$0xff] %v1583
                %v1585 = vld [vmem:[%s1525 + $0xe8] sm:$0xff]
                %1586 = vst [vmem:[%s1526 + $0x2a8] sm:$0xff] %v1585
                %v1587 = vld [vmem:[%s1525 + $0xf0] sm:$0xff]
                %1588 = vst [vmem:[%s1526 + $0x2d0] sm:$0xff] %v1587
                %v1589 = vld [vmem:[%s1525 + $0xf8] sm:$0xff]
                %1590 = vst [vmem:[%s1526 + $0x2d8] sm:$0xff] %v1589
                %v1591 = vld [vmem:[%s1525 + $0x100] sm:$0xff]
                %1592 = vst [vmem:[%s1526 + $0x300] sm:$0xff] %v1591
                %v1593 = vld [vmem:[%s1525 + $0x108] sm:$0xff]
                %1594 = vst [vmem:[%s1526 + $0x308] sm:$0xff] %v1593
                %v1595 = vld [vmem:[%s1525 + $0x110] sm:$0xff]
                %1596 = vst [vmem:[%s1526 + $0x330] sm:$0xff] %v1595
                %v1597 = vld [vmem:[%s1525 + $0x118] sm:$0xff]
                %1598 = vst [vmem:[%s1526 + $0x338] sm:$0xff] %v1597
                %v1599 = vld [vmem:[%s1525 + $0x120] sm:$0xff]
                %1600 = vst [vmem:[%s1526 + $0x360] sm:$0xff] %v1599
                %v1601 = vld [vmem:[%s1525 + $0x128] sm:$0xff]
                %1602 = vst [vmem:[%s1526 + $0x368] sm:$0xff] %v1601
                %v1603 = vld [vmem:[%s1525 + $0x130] sm:$0xff]
                %1604 = vst [vmem:[%s1526 + $0x390] sm:$0xff] %v1603
                %v1605 = vld [vmem:[%s1525 + $0x138] sm:$0xff]
                %1606 = vst [vmem:[%s1526 + $0x398] sm:$0xff] %v1605
                %v1607 = vld [vmem:[%s1525 + $0x140] sm:$0xff]
                %1608 = vst [vmem:[%s1526 + $0x3c0] sm:$0xff] %v1607
                %v1609 = vld [vmem:[%s1525 + $0x148] sm:$0xff]
                %1610 = vst [vmem:[%s1526 + $0x3c8] sm:$0xff] %v1609
                %v1611 = vld [vmem:[%s1525 + $0x150] sm:$0xff]
                %1612 = vst [vmem:[%s1526 + $0x3f0] sm:$0xff] %v1611
                %v1613 = vld [vmem:[%s1525 + $0x158] sm:$0xff]
                %1614 = vst [vmem:[%s1526 + $0x3f8] sm:$0xff] %v1613
                %v1615 = vld [vmem:[%s1525 + $0x160] sm:$0xff]
                %1616 = vst [vmem:[%s1526 + $0x420] sm:$0xff] %v1615
                %v1617 = vld [vmem:[%s1525 + $0x168] sm:$0xff]
                %1618 = vst [vmem:[%s1526 + $0x428] sm:$0xff] %v1617
                %v1619 = vld [vmem:[%s1525 + $0x170] sm:$0xff]
                %1620 = vst [vmem:[%s1526 + $0x450] sm:$0xff] %v1619
                %v1621 = vld [vmem:[%s1525 + $0x178] sm:$0xff]
                %1622 = vst [vmem:[%s1526 + $0x458] sm:$0xff] %v1621
                %v1623 = vld [vmem:[%s1525 + $0x180] sm:$0xff]
                %1624 = vst [vmem:[%s1526 + $0x480] sm:$0xff] %v1623
                %v1625 = vld [vmem:[%s1525 + $0x188] sm:$0xff]
                %1626 = vst [vmem:[%s1526 + $0x488] sm:$0xff] %v1625
                %v1627 = vld [vmem:[%s1525 + $0x190] sm:$0xff]
                %1628 = vst [vmem:[%s1526 + $0x4b0] sm:$0xff] %v1627
                %v1629 = vld [vmem:[%s1525 + $0x198] sm:$0xff]
                %1630 = vst [vmem:[%s1526 + $0x4b8] sm:$0xff] %v1629
                %v1631 = vld [vmem:[%s1525 + $0x1a0] sm:$0xff]
                %1632 = vst [vmem:[%s1526 + $0x4e0] sm:$0xff] %v1631
                %v1633 = vld [vmem:[%s1525 + $0x1a8] sm:$0xff]
                %1634 = vst [vmem:[%s1526 + $0x4e8] sm:$0xff] %v1633
                %v1635 = vld [vmem:[%s1525 + $0x1b0] sm:$0xff]
                %1636 = vst [vmem:[%s1526 + $0x510] sm:$0xff] %v1635
                %v1637 = vld [vmem:[%s1525 + $0x1b8] sm:$0xff]
                %1638 = vst [vmem:[%s1526 + $0x518] sm:$0xff] %v1637
                %v1639 = vld [vmem:[%s1525 + $0x1c0] sm:$0xff]
                %1640 = vst [vmem:[%s1526 + $0x540] sm:$0xff] %v1639
                %v1641 = vld [vmem:[%s1525 + $0x1c8] sm:$0xff]
                %1642 = vst [vmem:[%s1526 + $0x548] sm:$0xff] %v1641
                %v1643 = vld [vmem:[%s1525 + $0x1d0] sm:$0xff]
                %1644 = vst [vmem:[%s1526 + $0x570] sm:$0xff] %v1643
                %v1645 = vld [vmem:[%s1525 + $0x1d8] sm:$0xff]
                %1646 = vst [vmem:[%s1526 + $0x578] sm:$0xff] %v1645
                %v1647 = vld [vmem:[%s1525 + $0x1e0] sm:$0xff]
                %1648 = vst [vmem:[%s1526 + $0x5a0] sm:$0xff] %v1647
                %v1649 = vld [vmem:[%s1525 + $0x1e8] sm:$0xff]
                %1650 = vst [vmem:[%s1526 + $0x5a8] sm:$0xff] %v1649
                %v1651 = vld [vmem:[%s1525 + $0x1f0] sm:$0xff]
                %1652 = vst [vmem:[%s1526 + $0x5d0] sm:$0xff] %v1651
                %v1653 = vld [vmem:[%s1525 + $0x1f8] sm:$0xff]
                %1654 = vst [vmem:[%s1526 + $0x5d8] sm:$0xff] %v1653
                %v1655 = vld [vmem:[%s1525 + $0x200] sm:$0xff]
                %1656 = vst [vmem:[%s1526 + $0x600] sm:$0xff] %v1655
                %v1657 = vld [vmem:[%s1525 + $0x208] sm:$0xff]
                %1658 = vst [vmem:[%s1526 + $0x608] sm:$0xff] %v1657
                %v1659 = vld [vmem:[%s1525 + $0x210] sm:$0xff]
                %1660 = vst [vmem:[%s1526 + $0x630] sm:$0xff] %v1659
                %v1661 = vld [vmem:[%s1525 + $0x218] sm:$0xff]
                %1662 = vst [vmem:[%s1526 + $0x638] sm:$0xff] %v1661
                %v1663 = vld [vmem:[%s1525 + $0x220] sm:$0xff]
                %1664 = vst [vmem:[%s1526 + $0x660] sm:$0xff] %v1663
                %v1665 = vld [vmem:[%s1525 + $0x228] sm:$0xff]
                %1666 = vst [vmem:[%s1526 + $0x668] sm:$0xff] %v1665
                %v1667 = vld [vmem:[%s1525 + $0x230] sm:$0xff]
                %1668 = vst [vmem:[%s1526 + $0x690] sm:$0xff] %v1667
                %v1669 = vld [vmem:[%s1525 + $0x238] sm:$0xff]
                %1670 = vst [vmem:[%s1526 + $0x698] sm:$0xff] %v1669
                %v1671 = vld [vmem:[%s1525 + $0x240] sm:$0xff]
                %1672 = vst [vmem:[%s1526 + $0x6c0] sm:$0xff] %v1671
                %v1673 = vld [vmem:[%s1525 + $0x248] sm:$0xff]
                %1674 = vst [vmem:[%s1526 + $0x6c8] sm:$0xff] %v1673
                %v1675 = vld [vmem:[%s1525 + $0x250] sm:$0xff]
                %1676 = vst [vmem:[%s1526 + $0x6f0] sm:$0xff] %v1675
                %v1677 = vld [vmem:[%s1525 + $0x258] sm:$0xff]
                %1678 = vst [vmem:[%s1526 + $0x6f8] sm:$0xff] %v1677
                %v1679 = vld [vmem:[%s1525 + $0x260] sm:$0xff]
                %1680 = vst [vmem:[%s1526 + $0x720] sm:$0xff] %v1679
                %v1681 = vld [vmem:[%s1525 + $0x268] sm:$0xff]
                %1682 = vst [vmem:[%s1526 + $0x728] sm:$0xff] %v1681
              $region91: #{model_forward.8} parent=85 // loop_footer
                %s1524 = sadd.s32 1, %s1520
              $region92: #{model_forward.8} parent=85 // loop_footer_branch
                %1519 = sbr.rel target = $region88
              $region93: #{model_forward.8} parent=85 // loop_exit
                _
            $region86: #{model_forward.8} parent=81 // pred_fallthru
              _
            // Predicated region
            $region94: #{model_forward.8} parent=81 // pred_check
              _
            $region95: #{model_forward.8} parent=81 // pred_check_branch
              %1684 = sbr.rel target = $region97
            $region96: #{model_forward.8} parent=81 // pred_region
              _
            $region97: #{model_forward.8} parent=81 // pred_fallthru
              _
          $region82: #{model_forward.8} parent=77 // pred_fallthru
            _
          %1685 = vnop
        $region78: #{model_forward.8} parent=61 // pred_fallthru
          _
      $region62: #{model_forward.8} parent=5 // pred_fallthru
        _
      %p1686 = scmp.le.s32.totalorder 2, %s8
      // Predicated region
      $region98: #{model_forward.8} parent=5 // pred_check
        %p1687 = pneg %p1686
      $region99: #{model_forward.8} parent=5 // pred_check_branch
        %1689 = sbr.rel (%p1687) target = $region101
      $region100: #{model_forward.8} parent=5 // pred_region
        %s1690 = ssub.s32 %s8, 2
        // Predicated region
        $region102: #{model_forward.8} parent=100 // pred_check
          %p1691 = pneg %p114
        $region103: #{model_forward.8} parent=100 // pred_check_branch
          %1693 = sbr.rel (%p1691) target = $region105
        $region104: #{model_forward.8} parent=100 // pred_region
          %s1694 = sand.u32 %s99, 1
          %s1695 = sand.u32 %s99, 1
          %s1696 = smul.addr %s1695, 624
          %s1697 = scalar_lea.vmem [#allocation4], %s1696
        $region105: #{model_forward.8} parent=100 // pred_fallthru
          _
      $region101: #{model_forward.8} parent=5 // pred_fallthru
        _
    $region6: #{model_forward.8} parent=1 // loop_footer
      %s12 = sadd.s32 1, %s8
    $region7: #{model_forward.8} parent=1 // loop_footer_branch
      %7 = sbr.rel target = $region3
    $region8: #{model_forward.8} parent=1 // loop_exit
      _

// kernel: model_forward.9
$region0: #{model_forward.9}
  #allocation0 [shape = 'u32[]', space=smem, size = 0x4, offset = 0x4, fixed_abs, tag = 'smem constant byte address 0x4 - core index']
  #allocation1 [shape = 'u32[144,128]{1,0:T(1,128)}', space=vmem, size = 0x12000, scoped, tag = 'internal scratch']
  #allocation2 [shape = 'f32[306,256]{1,0:T(8,128)}', space=vmem, size = 0x4e000, scoped, tag = 'scratch operand']
  %s0 = inlined_call_operand.vmem [shape: bf16[306,256], index: 0, kind: input, shape index: {}]
  %s1 = inlined_call_operand.vmem [shape: bf16[256,256], index: 1, kind: input, shape index: {}]
  %s2 = inlined_call_operand.vmem [shape: f32[1,256], index: 2, kind: input, shape index: {}]
  %s3 = inlined_call_operand.vmem [shape: f32[306,256], index: 3, kind: input, shape index: {}]
  %s4 = inlined_call_operand.vmem [shape: f32[306,256], index: 4, kind: output, shape index: {}]
  %s5 = sld [smem:[#allocation0]]
  $region34: #{model_forward.9} parent=0
    _
  %s7 = ssub.s32 1, %s5
  %s8 = scalar_select 0, %s7, %s5
  // Predicated region
  $region2: #{model_forward.9} parent=0 // pred_check
    _
  $region3: #{model_forward.9} parent=0 // pred_check_branch
    %10 = sbr.rel (0) target = $region5
  $region4: #{model_forward.9} parent=0 // pred_region
    _
  $region5: #{model_forward.9} parent=0 // pred_fallthru
    _
  // Predicated region
  $region6: #{model_forward.9} parent=0 // pred_check
    _
  $region7: #{model_forward.9} parent=0 // pred_check_branch
    %12 = sbr.rel (0) target = $region9
  $region8: #{model_forward.9} parent=0 // pred_region
    _
  $region9: #{model_forward.9} parent=0 // pred_fallthru
    _
  // Predicated region
  $region10: #{model_forward.9} parent=0 // pred_check
    _
  $region11: #{model_forward.9} parent=0 // pred_check_branch
    %14 = sbr.rel (0) target = $region13
  $region12: #{model_forward.9} parent=0 // pred_region
    _
  $region13: #{model_forward.9} parent=0 // pred_fallthru
    _
  // Predicated region
  $region14: #{model_forward.9} parent=0 // pred_check
    _
  $region15: #{model_forward.9} parent=0 // pred_check_branch
    %16 = sbr.rel (0) target = $region17
  $region16: #{model_forward.9} parent=0 // pred_region
    _
  $region17: #{model_forward.9} parent=0 // pred_fallthru
    _
  %p17 = scmp.eq.s32.totalorder 0, 0
  // Predicated region
  $region18: #{model_forward.9} parent=0 // pred_check
    %p18 = pneg %p17
  $region19: #{model_forward.9} parent=0 // pred_check_branch
    %20 = sbr.rel (%p18) target = $region21
  $region20: #{model_forward.9} parent=0 // pred_region
    %21 = vst [vmem:[#allocation2] sm:$0xff] 0.0
    %22 = vst [vmem:[#allocation2 + $0x8] sm:$0xff] 0.0
    %23 = vst [vmem:[#allocation2 + $0x10] sm:$0xff] 0.0
    %24 = vst [vmem:[#allocation2 + $0x18] sm:$0xff] 0.0
    %25 = vst [vmem:[#allocation2 + $0x20] sm:$0xff] 0.0
    %26 = vst [vmem:[#allocation2 + $0x28] sm:$0xff] 0.0
    %27 = vst [vmem:[#allocation2 + $0x30] sm:$0xff] 0.0
    %28 = vst [vmem:[#allocation2 + $0x38] sm:$0xff] 0.0
    %29 = vst [vmem:[#allocation2 + $0x40] sm:$0xff] 0.0
    %30 = vst [vmem:[#allocation2 + $0x48] sm:$0xff] 0.0
    %31 = vst [vmem:[#allocation2 + $0x50] sm:$0xff] 0.0
    %32 = vst [vmem:[#allocation2 + $0x58] sm:$0xff] 0.0
    %33 = vst [vmem:[#allocation2 + $0x60] sm:$0xff] 0.0
    %34 = vst [vmem:[#allocation2 + $0x68] sm:$0xff] 0.0
    %35 = vst [vmem:[#allocation2 + $0x70] sm:$0xff] 0.0
    %36 = vst [vmem:[#allocation2 + $0x78] sm:$0xff] 0.0
    %37 = vst [vmem:[#allocation2 + $0x80] sm:$0xff] 0.0
    %38 = vst [vmem:[#allocation2 + $0x88] sm:$0xff] 0.0
    %39 = vst [vmem:[#allocation2 + $0x90] sm:$0xff] 0.0
    %40 = vst [vmem:[#allocation2 + $0x98] sm:$0xff] 0.0
    %41 = vst [vmem:[#allocation2 + $0xa0] sm:$0xff] 0.0
    %42 = vst [vmem:[#allocation2 + $0xa8] sm:$0xff] 0.0
    %43 = vst [vmem:[#allocation2 + $0xb0] sm:$0xff] 0.0
    %44 = vst [vmem:[#allocation2 + $0xb8] sm:$0xff] 0.0
    %45 = vst [vmem:[#allocation2 + $0xc0] sm:$0xff] 0.0
    %46 = vst [vmem:[#allocation2 + $0xc8] sm:$0xff] 0.0
    %47 = vst [vmem:[#allocation2 + $0xd0] sm:$0xff] 0.0
    %48 = vst [vmem:[#allocation2 + $0xd8] sm:$0xff] 0.0
    %49 = vst [vmem:[#allocation2 + $0xe0] sm:$0xff] 0.0
    %50 = vst [vmem:[#allocation2 + $0xe8] sm:$0xff] 0.0
    %51 = vst [vmem:[#allocation2 + $0xf0] sm:$0xff] 0.0
    %52 = vst [vmem:[#allocation2 + $0xf8] sm:$0xff] 0.0
    %53 = vst [vmem:[#allocation2 + $0x100] sm:$0xff] 0.0
    %54 = vst [vmem:[#allocation2 + $0x108] sm:$0xff] 0.0
    %55 = vst [vmem:[#allocation2 + $0x110] sm:$0xff] 0.0
    %56 = vst [vmem:[#allocation2 + $0x118] sm:$0xff] 0.0
    %57 = vst [vmem:[#allocation2 + $0x120] sm:$0xff] 0.0
    %58 = vst [vmem:[#allocation2 + $0x128] sm:$0xff] 0.0
    %59 = vst [vmem:[#allocation2 + $0x130] sm:$0xff] 0.0
    %60 = vst [vmem:[#allocation2 + $0x138] sm:$0xff] 0.0
    %61 = vst [vmem:[#allocation2 + $0x140] sm:$0xff] 0.0
    %62 = vst [vmem:[#allocation2 + $0x148] sm:$0xff] 0.0
    %63 = vst [vmem:[#allocation2 + $0x150] sm:$0xff] 0.0
    %64 = vst [vmem:[#allocation2 + $0x158] sm:$0xff] 0.0
    %65 = vst [vmem:[#allocation2 + $0x160] sm:$0xff] 0.0
    %66 = vst [vmem:[#allocation2 + $0x168] sm:$0xff] 0.0
    %67 = vst [vmem:[#allocation2 + $0x170] sm:$0xff] 0.0
    %68 = vst [vmem:[#allocation2 + $0x178] sm:$0xff] 0.0
    %69 = vst [vmem:[#allocation2 + $0x180] sm:$0xff] 0.0
    %70 = vst [vmem:[#allocation2 + $0x188] sm:$0xff] 0.0
    %71 = vst [vmem:[#allocation2 + $0x190] sm:$0xff] 0.0
    %72 = vst [vmem:[#allocation2 + $0x198] sm:$0xff] 0.0
    %73 = vst [vmem:[#allocation2 + $0x1a0] sm:$0xff] 0.0
    %74 = vst [vmem:[#allocation2 + $0x1a8] sm:$0xff] 0.0
    %75 = vst [vmem:[#allocation2 + $0x1b0] sm:$0xff] 0.0
    %76 = vst [vmem:[#allocation2 + $0x1b8] sm:$0xff] 0.0
    %77 = vst [vmem:[#allocation2 + $0x1c0] sm:$0xff] 0.0
    %78 = vst [vmem:[#allocation2 + $0x1c8] sm:$0xff] 0.0
    %79 = vst [vmem:[#allocation2 + $0x1d0] sm:$0xff] 0.0
    %80 = vst [vmem:[#allocation2 + $0x1d8] sm:$0xff] 0.0
    %81 = vst [vmem:[#allocation2 + $0x1e0] sm:$0xff] 0.0
    %82 = vst [vmem:[#allocation2 + $0x1e8] sm:$0xff] 0.0
    %83 = vst [vmem:[#allocation2 + $0x1f0] sm:$0xff] 0.0
    %84 = vst [vmem:[#allocation2 + $0x1f8] sm:$0xff] 0.0
    %85 = vst [vmem:[#allocation2 + $0x200] sm:$0xff] 0.0
    %86 = vst [vmem:[#allocation2 + $0x208] sm:$0xff] 0.0
    %87 = vst [vmem:[#allocation2 + $0x210] sm:$0xff] 0.0
    %88 = vst [vmem:[#allocation2 + $0x218] sm:$0xff] 0.0
    %89 = vst [vmem:[#allocation2 + $0x220] sm:$0xff] 0.0
    %90 = vst [vmem:[#allocation2 + $0x228] sm:$0xff] 0.0
    %91 = vst [vmem:[#allocation2 + $0x230] sm:$0xff] 0.0
    %92 = vst [vmem:[#allocation2 + $0x238] sm:$0xff] 0.0
    %93 = vst [vmem:[#allocation2 + $0x240] sm:$0xff] 0.0
    %94 = vst [vmem:[#allocation2 + $0x248] sm:$0xff] 0.0
    %95 = vst [vmem:[#allocation2 + $0x250] sm:$0xff] 0.0
    %96 = vst [vmem:[#allocation2 + $0x258] sm:$0xff] 0.0
    %97 = vst [vmem:[#allocation2 + $0x260] sm:$0x3] 0.0
    %98 = vst [vmem:[#allocation2 + $0x268] sm:$0x3] 0.0
  $region21: #{model_forward.9} parent=0 // pred_fallthru
    _
  %v99 = vld [vmem:[#allocation2] sm:$0xff]
  %v100 = vld [vmem:[#allocation2 + $0x8] sm:$0xff]
  %v101 = vld [vmem:[#allocation2 + $0x10] sm:$0xff]
  %v102 = vld [vmem:[#allocation2 + $0x18] sm:$0xff]
  %v103 = vld [vmem:[#allocation2 + $0x20] sm:$0xff]
  %v104 = vld [vmem:[#allocation2 + $0x28] sm:$0xff]
  %v105 = vld [vmem:[#allocation2 + $0x30] sm:$0xff]
  %v106 = vld [vmem:[#allocation2 + $0x38] sm:$0xff]
  %v107 = vld [vmem:[#allocation2 + $0x40] sm:$0xff]
  %v108 = vld [vmem:[#allocation2 + $0x48] sm:$0xff]
  %v109 = vld [vmem:[#allocation2 + $0x50] sm:$0xff]
  %v110 = vld [vmem:[#allocation2 + $0x58] sm:$0xff]
  %v111 = vld [vmem:[#allocation2 + $0x60] sm:$0xff]
  %v112 = vld [vmem:[#allocation2 + $0x68] sm:$0xff]
  %v113 = vld [vmem:[#allocation2 + $0x70] sm:$0xff]
  %v114 = vld [vmem:[#allocation2 + $0x78] sm:$0xff]
  %v115 = vld [vmem:[#allocation2 + $0x80] sm:$0xff]
  %v116 = vld [vmem:[#allocation2 + $0x88] sm:$0xff]
  %v117 = vld [vmem:[#allocation2 + $0x90] sm:$0xff]
  %v118 = vld [vmem:[#allocation2 + $0x98] sm:$0xff]
  %v119 = vld [vmem:[#allocation2 + $0xa0] sm:$0xff]
  %v120 = vld [vmem:[#allocation2 + $0xa8] sm:$0xff]
  %v121 = vld [vmem:[#allocation2 + $0xb0] sm:$0xff]
  %v122 = vld [vmem:[#allocation2 + $0xb8] sm:$0xff]
  %v123 = vld [vmem:[#allocation2 + $0xc0] sm:$0xff]
  %v124 = vld [vmem:[#allocation2 + $0xc8] sm:$0xff]
  %v125 = vld [vmem:[#allocation2 + $0xd0] sm:$0xff]
  %v126 = vld [vmem:[#allocation2 + $0xd8] sm:$0xff]
  %v127 = vld [vmem:[#allocation2 + $0xe0] sm:$0xff]
  %v128 = vld [vmem:[#allocation2 + $0xe8] sm:$0xff]
  %v129 = vld [vmem:[#allocation2 + $0xf0] sm:$0xff]
  %v130 = vld [vmem:[#allocation2 + $0xf8] sm:$0xff]
  %v131 = vld [vmem:[#allocation2 + $0x100] sm:$0xff]
  %v132 = vld [vmem:[#allocation2 + $0x108] sm:$0xff]
  %v133 = vld [vmem:[#allocation2 + $0x110] sm:$0xff]
  %v134 = vld [vmem:[#allocation2 + $0x118] sm:$0xff]
  %v135 = vld [vmem:[#allocation2 + $0x120] sm:$0xff]
  %v136 = vld [vmem:[#allocation2 + $0x128] sm:$0xff]
  %v137 = vld [vmem:[#allocation2 + $0x130] sm:$0xff]
  %v138 = vld [vmem:[#allocation2 + $0x138] sm:$0xff]
  %v139 = vld [vmem:[#allocation2 + $0x140] sm:$0xff]
  %v140 = vld [vmem:[#allocation2 + $0x148] sm:$0xff]
  %v141 = vld [vmem:[#allocation2 + $0x150] sm:$0xff]
  %v142 = vld [vmem:[#allocation2 + $0x158] sm:$0xff]
  %v143 = vld [vmem:[#allocation2 + $0x160] sm:$0xff]
  %v144 = vld [vmem:[#allocation2 + $0x168] sm:$0xff]
  %v145 = vld [vmem:[#allocation2 + $0x170] sm:$0xff]
  %v146 = vld [vmem:[#allocation2 + $0x178] sm:$0xff]
  %v147 = vld [vmem:[#allocation2 + $0x180] sm:$0xff]
  %v148 = vld [vmem:[#allocation2 + $0x188] sm:$0xff]
  %v149 = vld [vmem:[#allocation2 + $0x190] sm:$0xff]
  %v150 = vld [vmem:[#allocation2 + $0x198] sm:$0xff]
  %v151 = vld [vmem:[#allocation2 + $0x1a0] sm:$0xff]
  %v152 = vld [vmem:[#allocation2 + $0x1a8] sm:$0xff]
  %v153 = vld [vmem:[#allocation2 + $0x1b0] sm:$0xff]
  %v154 = vld [vmem:[#allocation2 + $0x1b8] sm:$0xff]
  %v155 = vld [vmem:[#allocation2 + $0x1c0] sm:$0xff]
  %v156 = vld [vmem:[#allocation2 + $0x1c8] sm:$0xff]
  %v157 = vld [vmem:[#allocation2 + $0x1d0] sm:$0xff]
  %v158 = vld [vmem:[#allocation2 + $0x1d8] sm:$0xff]
  %v159 = vld [vmem:[#allocation2 + $0x1e0] sm:$0xff]
  %v160 = vld [vmem:[#allocation2 + $0x1e8] sm:$0xff]
  %v161 = vld [vmem:[#allocation2 + $0x1f0] sm:$0xff]
  %v162 = vld [vmem:[#allocation2 + $0x1f8] sm:$0xff]
  %v163 = vld [vmem:[#allocation2 + $0x200] sm:$0xff]
  %v164 = vld [vmem:[#allocation2 + $0x208] sm:$0xff]
  %v165 = vld [vmem:[#allocation2 + $0x210] sm:$0xff]
  %v166 = vld [vmem:[#allocation2 + $0x218] sm:$0xff]
  %v167 = vld [vmem:[#allocation2 + $0x220] sm:$0xff]
  %v168 = vld [vmem:[#allocation2 + $0x228] sm:$0xff]
  %v169 = vld [vmem:[#allocation2 + $0x230] sm:$0xff]
  %v170 = vld [vmem:[#allocation2 + $0x238] sm:$0xff]
  %v171 = vld [vmem:[#allocation2 + $0x240] sm:$0xff]
  %v172 = vld [vmem:[#allocation2 + $0x248] sm:$0xff]
  %v173 = vld [vmem:[#allocation2 + $0x250] sm:$0xff]
  %v174 = vld [vmem:[#allocation2 + $0x258] sm:$0xff]
  %v175 = vld [vmem:[#allocation2 + $0x260] sm:$0x3]
  %v176 = vld [vmem:[#allocation2 + $0x268] sm:$0x3]
  %v177 = vld [vmem:[%s0] sm:$0xff]
  %v178 = vld [vmem:[%s0 + $0x8] sm:$0xff]
  %v179 = vld [vmem:[%s0 + $0x10] sm:$0xff]
  %v180 = vld [vmem:[%s0 + $0x18] sm:$0xff]
  %v181 = vld [vmem:[%s0 + $0x20] sm:$0xff]
  %v182 = vld [vmem:[%s0 + $0x28] sm:$0xff]
  %v183 = vld [vmem:[%s0 + $0x30] sm:$0xff]
  %v184 = vld [vmem:[%s0 + $0x38] sm:$0xff]
  %v185 = vld [vmem:[%s0 + $0x40] sm:$0xff]
  %v186 = vld [vmem:[%s0 + $0x48] sm:$0xff]
  %v187 = vld [vmem:[%s0 + $0x50] sm:$0xff]
  %v188 = vld [vmem:[%s0 + $0x58] sm:$0xff]
  %v189 = vld [vmem:[%s0 + $0x60] sm:$0xff]
  %v190 = vld [vmem:[%s0 + $0x68] sm:$0xff]
  %v191 = vld [vmem:[%s0 + $0x70] sm:$0xff]
  %v192 = vld [vmem:[%s0 + $0x78] sm:$0xff]
  %v193 = vld [vmem:[%s0 + $0x80] sm:$0xff]
  %v194 = vld [vmem:[%s0 + $0x88] sm:$0xff]
  %v195 = vld [vmem:[%s0 + $0x90] sm:$0xff]
  %v196 = vld [vmem:[%s0 + $0x98] sm:$0xff]
  %v197 = vld [vmem:[%s0 + $0xa0] sm:$0xff]
  %v198 = vld [vmem:[%s0 + $0xa8] sm:$0xff]
  %v199 = vld [vmem:[%s0 + $0xb0] sm:$0xff]
  %v200 = vld [vmem:[%s0 + $0xb8] sm:$0xff]
  %v201 = vld [vmem:[%s0 + $0xc0] sm:$0xff]
  %v202 = vld [vmem:[%s0 + $0xc8] sm:$0xff]
  %v203 = vld [vmem:[%s0 + $0xd0] sm:$0xff]
  %v204 = vld [vmem:[%s0 + $0xd8] sm:$0xff]
  %v205 = vld [vmem:[%s0 + $0xe0] sm:$0xff]
  %v206 = vld [vmem:[%s0 + $0xe8] sm:$0xff]
  %v207 = vld [vmem:[%s0 + $0xf0] sm:$0xff]
  %v208 = vld [vmem:[%s0 + $0xf8] sm:$0xff]
  %v209 = vld [vmem:[%s0 + $0x100] sm:$0xff]
  %v210 = vld [vmem:[%s0 + $0x108] sm:$0xff]
  %v211 = vld [vmem:[%s0 + $0x110] sm:$0xff]
  %v212 = vld [vmem:[%s0 + $0x118] sm:$0xff]
  %v213 = vld [vmem:[%s0 + $0x120] sm:$0xff]
  %v214 = vld [vmem:[%s0 + $0x128] sm:$0xff]
  %v215 = vld [vmem:[%s0 + $0x130] sm:$0x11]
  %v216 = vld [vmem:[%s1] sm:$0xff]
  %v217 = vld [vmem:[%s1 + $0x8] sm:$0xff]
  %v218 = vld [vmem:[%s1 + $0x10] sm:$0xff]
  %v219 = vld [vmem:[%s1 + $0x18] sm:$0xff]
  %v220 = vld [vmem:[%s1 + $0x20] sm:$0xff]
  %v221 = vld [vmem:[%s1 + $0x28] sm:$0xff]
  %v222 = vld [vmem:[%s1 + $0x30] sm:$0xff]
  %v223 = vld [vmem:[%s1 + $0x38] sm:$0xff]
  %v224 = vld [vmem:[%s1 + $0x40] sm:$0xff]
  %v225 = vld [vmem:[%s1 + $0x48] sm:$0xff]
  %v226 = vld [vmem:[%s1 + $0x50] sm:$0xff]
  %v227 = vld [vmem:[%s1 + $0x58] sm:$0xff]
  %v228 = vld [vmem:[%s1 + $0x60] sm:$0xff]
  %v229 = vld [vmem:[%s1 + $0x68] sm:$0xff]
  %v230 = vld [vmem:[%s1 + $0x70] sm:$0xff]
  %v231 = vld [vmem:[%s1 + $0x78] sm:$0xff]
  %v232 = vld [vmem:[%s1 + $0x80] sm:$0xff]
  %v233 = vld [vmem:[%s1 + $0x88] sm:$0xff]
  %v234 = vld [vmem:[%s1 + $0x90] sm:$0xff]
  %v235 = vld [vmem:[%s1 + $0x98] sm:$0xff]
  %v236 = vld [vmem:[%s1 + $0xa0] sm:$0xff]
  %v237 = vld [vmem:[%s1 + $0xa8] sm:$0xff]
  %v238 = vld [vmem:[%s1 + $0xb0] sm:$0xff]
  %v239 = vld [vmem:[%s1 + $0xb8] sm:$0xff]
  %v240 = vld [vmem:[%s1 + $0xc0] sm:$0xff]
  %v241 = vld [vmem:[%s1 + $0xc8] sm:$0xff]
  %v242 = vld [vmem:[%s1 + $0xd0] sm:$0xff]
  %v243 = vld [vmem:[%s1 + $0xd8] sm:$0xff]
  %v244 = vld [vmem:[%s1 + $0xe0] sm:$0xff]
  %v245 = vld [vmem:[%s1 + $0xe8] sm:$0xff]
  %v246 = vld [vmem:[%s1 + $0xf0] sm:$0xff]
  %v247 = vld [vmem:[%s1 + $0xf8] sm:$0xff]
  %v287 = vunpack.c.l.b16 %v177
  %v288 = vunpack.c.h.b16 %v177
  %v289 = vunpack.c.l.b16 %v178
  %v290 = vunpack.c.h.b16 %v178
  %v291 = vunpack.c.l.b16 %v179
  %v292 = vunpack.c.h.b16 %v179
  %v293 = vunpack.c.l.b16 %v180
  %v294 = vunpack.c.h.b16 %v180
  %v295 = vunpack.c.l.b16 %v181
  %v296 = vunpack.c.h.b16 %v181
  %v297 = vunpack.c.l.b16 %v182
  %v298 = vunpack.c.h.b16 %v182
  %v299 = vunpack.c.l.b16 %v183
  %v300 = vunpack.c.h.b16 %v183
  %v301 = vunpack.c.l.b16 %v184
  %v302 = vunpack.c.h.b16 %v184
  %v303 = vunpack.c.l.b16 %v185
  %v304 = vunpack.c.h.b16 %v185
  %v305 = vunpack.c.l.b16 %v186
  %v306 = vunpack.c.h.b16 %v186
  %v307 = vunpack.c.l.b16 %v187
  %v308 = vunpack.c.h.b16 %v187
  %v309 = vunpack.c.l.b16 %v188
  %v310 = vunpack.c.h.b16 %v188
  %v311 = vunpack.c.l.b16 %v189
  %v312 = vunpack.c.h.b16 %v189
  %v313 = vunpack.c.l.b16 %v190
  %v314 = vunpack.c.h.b16 %v190
  %v315 = vunpack.c.l.b16 %v191
  %v316 = vunpack.c.h.b16 %v191
  %v317 = vunpack.c.l.b16 %v192
  %v318 = vunpack.c.h.b16 %v192
  %v319 = vunpack.c.l.b16 %v193
  %v320 = vunpack.c.h.b16 %v193
  %v321 = vunpack.c.l.b16 %v194
  %v322 = vunpack.c.h.b16 %v194
  %v323 = vunpack.c.l.b16 %v195
  %v324 = vunpack.c.h.b16 %v195
  %v325 = vunpack.c.l.b16 %v196
  %v326 = vunpack.c.h.b16 %v196
  %v327 = vunpack.c.l.b16 %v197
  %v328 = vunpack.c.h.b16 %v197
  %v329 = vunpack.c.l.b16 %v198
  %v330 = vunpack.c.h.b16 %v198
  %v331 = vunpack.c.l.b16 %v199
  %v332 = vunpack.c.h.b16 %v199
  %v333 = vunpack.c.l.b16 %v200
  %v334 = vunpack.c.h.b16 %v200
  %v335 = vunpack.c.l.b16 %v201
  %v336 = vunpack.c.h.b16 %v201
  %v337 = vunpack.c.l.b16 %v202
  %v338 = vunpack.c.h.b16 %v202
  %v339 = vunpack.c.l.b16 %v203
  %v340 = vunpack.c.h.b16 %v203
  %v341 = vunpack.c.l.b16 %v204
  %v342 = vunpack.c.h.b16 %v204
  %v343 = vunpack.c.l.b16 %v205
  %v344 = vunpack.c.h.b16 %v205
  %v345 = vunpack.c.l.b16 %v206
  %v346 = vunpack.c.h.b16 %v206
  %v347 = vunpack.c.l.b16 %v207
  %v348 = vunpack.c.h.b16 %v207
  %v349 = vunpack.c.l.b16 %v208
  %v350 = vunpack.c.h.b16 %v208
  %v351 = vunpack.c.l.b16 %v209
  %v352 = vunpack.c.h.b16 %v209
  %v353 = vunpack.c.l.b16 %v210
  %v354 = vunpack.c.h.b16 %v210
  %v355 = vunpack.c.l.b16 %v211
  %v356 = vunpack.c.h.b16 %v211
  %v357 = vunpack.c.l.b16 %v212
  %v358 = vunpack.c.h.b16 %v212
  %v359 = vunpack.c.l.b16 %v213
  %v360 = vunpack.c.h.b16 %v213
  %v361 = vunpack.c.l.b16 %v214
  %v362 = vunpack.c.h.b16 %v214
  %v363 = vunpack.c.l.b16 %v215
  %v364 = vunpack.c.h.b16 %v215
  %v365 = vpack.c.b16 %v289, %v287
  %v366 = vpack.c.b16 %v290, %v288
  %v367 = vpack.c.b16 %v293, %v291
  %v368 = vpack.c.b16 %v294, %v292
  %v369 = vpack.c.b16 %v297, %v295
  %v370 = vpack.c.b16 %v298, %v296
  %v371 = vpack.c.b16 %v301, %v299
  %v372 = vpack.c.b16 %v302, %v300
  %v373 = vpack.c.b16 %v305, %v303
  %v374 = vpack.c.b16 %v306, %v304
  %v375 = vpack.c.b16 %v309, %v307
  %v376 = vpack.c.b16 %v310, %v308
  %v377 = vpack.c.b16 %v313, %v311
  %v378 = vpack.c.b16 %v314, %v312
  %v379 = vpack.c.b16 %v317, %v315
  %v380 = vpack.c.b16 %v318, %v316
  %v381 = vpack.c.b16 %v321, %v319
  %v382 = vpack.c.b16 %v322, %v320
  %v383 = vpack.c.b16 %v325, %v323
  %v384 = vpack.c.b16 %v326, %v324
  %v385 = vpack.c.b16 %v329, %v327
  %v386 = vpack.c.b16 %v330, %v328
  %v387 = vpack.c.b16 %v333, %v331
  %v388 = vpack.c.b16 %v334, %v332
  %v389 = vpack.c.b16 %v337, %v335
  %v390 = vpack.c.b16 %v338, %v336
  %v391 = vpack.c.b16 %v341, %v339
  %v392 = vpack.c.b16 %v342, %v340
  %v393 = vpack.c.b16 %v345, %v343
  %v394 = vpack.c.b16 %v346, %v344
  %v395 = vpack.c.b16 %v349, %v347
  %v396 = vpack.c.b16 %v350, %v348
  %v397 = vpack.c.b16 %v353, %v351
  %v398 = vpack.c.b16 %v354, %v352
  %v399 = vpack.c.b16 %v357, %v355
  %v400 = vpack.c.b16 %v358, %v356
  %v401 = vpack.c.b16 %v361, %v359
  %v402 = vpack.c.b16 %v362, %v360
  %v403 = vpack.c.b16 %v363, %v363
  %v404 = vpack.c.b16 %v364, %v364
  %v477 = vunpack.c.l.b16 %v216
  %v478 = vunpack.c.h.b16 %v216
  %v479 = vunpack.c.l.b16 %v217
  %v480 = vunpack.c.h.b16 %v217
  %v481 = vunpack.c.l.b16 %v218
  %v482 = vunpack.c.h.b16 %v218
  %v483 = vunpack.c.l.b16 %v219
  %v484 = vunpack.c.h.b16 %v219
  %v485 = vunpack.c.l.b16 %v220
  %v486 = vunpack.c.h.b16 %v220
  %v487 = vunpack.c.l.b16 %v221
  %v488 = vunpack.c.h.b16 %v221
  %v489 = vunpack.c.l.b16 %v222
  %v490 = vunpack.c.h.b16 %v222
  %v491 = vunpack.c.l.b16 %v223
  %v492 = vunpack.c.h.b16 %v223
  %v493 = vunpack.c.l.b16 %v224
  %v494 = vunpack.c.h.b16 %v224
  %v495 = vunpack.c.l.b16 %v225
  %v496 = vunpack.c.h.b16 %v225
  %v497 = vunpack.c.l.b16 %v226
  %v498 = vunpack.c.h.b16 %v226
  %v499 = vunpack.c.l.b16 %v227
  %v500 = vunpack.c.h.b16 %v227
  %v501 = vunpack.c.l.b16 %v228
  %v502 = vunpack.c.h.b16 %v228
  %v503 = vunpack.c.l.b16 %v229
  %v504 = vunpack.c.h.b16 %v229
  %v505 = vunpack.c.l.b16 %v230
  %v506 = vunpack.c.h.b16 %v230
  %v507 = vunpack.c.l.b16 %v231
  %v508 = vunpack.c.h.b16 %v231
  %v509 = vunpack.c.l.b16 %v232
  %v510 = vunpack.c.h.b16 %v232
  %v511 = vunpack.c.l.b16 %v233
  %v512 = vunpack.c.h.b16 %v233
  %v513 = vunpack.c.l.b16 %v234
  %v514 = vunpack.c.h.b16 %v234
  %v515 = vunpack.c.l.b16 %v235
  %v516 = vunpack.c.h.b16 %v235
  %v517 = vunpack.c.l.b16 %v236
  %v518 = vunpack.c.h.b16 %v236
  %v519 = vunpack.c.l.b16 %v237
  %v520 = vunpack.c.h.b16 %v237
  %v521 = vunpack.c.l.b16 %v238
  %v522 = vunpack.c.h.b16 %v238
  %v523 = vunpack.c.l.b16 %v239
  %v524 = vunpack.c.h.b16 %v239
  %v525 = vunpack.c.l.b16 %v240
  %v526 = vunpack.c.h.b16 %v240
  %v527 = vunpack.c.l.b16 %v241
  %v528 = vunpack.c.h.b16 %v241
  %v529 = vunpack.c.l.b16 %v242
  %v530 = vunpack.c.h.b16 %v242
  %v531 = vunpack.c.l.b16 %v243
  %v532 = vunpack.c.h.b16 %v243
  %v533 = vunpack.c.l.b16 %v244
  %v534 = vunpack.c.h.b16 %v244
  %v535 = vunpack.c.l.b16 %v245
  %v536 = vunpack.c.h.b16 %v245
  %v537 = vunpack.c.l.b16 %v246
  %v538 = vunpack.c.h.b16 %v246
  %v539 = vunpack.c.l.b16 %v247
  %v540 = vunpack.c.h.b16 %v247
  %v541 = vpack.c.b16 %v479, %v477
  %v542 = vpack.c.b16 %v480, %v478
  %v543 = vpack.c.b16 %v483, %v481
  %v544 = vpack.c.b16 %v484, %v482
  %v545 = vpack.c.b16 %v487, %v485
  %v546 = vpack.c.b16 %v488, %v486
  %v547 = vpack.c.b16 %v491, %v489
  %v548 = vpack.c.b16 %v492, %v490
  %v549 = vpack.c.b16 %v495, %v493
  %v550 = vpack.c.b16 %v496, %v494
  %v551 = vpack.c.b16 %v499, %v497
  %v552 = vpack.c.b16 %v500, %v498
  %v553 = vpack.c.b16 %v503, %v501
  %v554 = vpack.c.b16 %v504, %v502
  %v555 = vpack.c.b16 %v507, %v505
  %v556 = vpack.c.b16 %v508, %v506
  %v557 = vpack.c.b16 %v511, %v509
  %v558 = vpack.c.b16 %v512, %v510
  %v559 = vpack.c.b16 %v515, %v513
  %v560 = vpack.c.b16 %v516, %v514
  %v561 = vpack.c.b16 %v519, %v517
  %v562 = vpack.c.b16 %v520, %v518
  %v563 = vpack.c.b16 %v523, %v521
  %v564 = vpack.c.b16 %v524, %v522
  %v565 = vpack.c.b16 %v527, %v525
  %v566 = vpack.c.b16 %v528, %v526
  %v567 = vpack.c.b16 %v531, %v529
  %v568 = vpack.c.b16 %v532, %v530
  %v569 = vpack.c.b16 %v535, %v533
  %v570 = vpack.c.b16 %v536, %v534
  %v571 = vpack.c.b16 %v539, %v537
  %v572 = vpack.c.b16 %v540, %v538
  %605 = vmatprep.subr.bf16.mxu0 %v542
  %606 = vmatpush1.bf16.msra.mxu0 %v541
  %607 = vmatprep.subr.bf16.mxu0 %v544
  %608 = vmatpush1.bf16.msra.mxu0 %v543
  %609 = vmatprep.subr.bf16.mxu0 %v546
  %610 = vmatpush1.bf16.msra.mxu0 %v545
  %611 = vmatprep.subr.bf16.mxu0 %v548
  %612 = vmatpush1.bf16.msra.mxu0 %v547
  %613 = vmatprep.subr.bf16.mxu0 %v550
  %614 = vmatpush1.bf16.msra.mxu0 %v549
  %615 = vmatprep.subr.bf16.mxu0 %v552
  %616 = vmatpush1.bf16.msra.mxu0 %v551
  %617 = vmatprep.subr.bf16.mxu0 %v554
  %618 = vmatpush1.bf16.msra.mxu0 %v553
  %619 = vmatprep.subr.bf16.mxu0 %v556
  %620 = vmatpush1.bf16.msra.mxu0 %v555
  %621 = vmatprep.subr.bf16.mxu0 %v558
  %622 = vmatpush1.bf16.msra.mxu0 %v557
  %623 = vmatprep.subr.bf16.mxu0 %v560
  %624 = vmatpush1.bf16.msra.mxu0 %v559
  %625 = vmatprep.subr.bf16.mxu0 %v562
  %626 = vmatpush1.bf16.msra.mxu0 %v561
  %627 = vmatprep.subr.bf16.mxu0 %v564
  %628 = vmatpush1.bf16.msra.mxu0 %v563
  %629 = vmatprep.subr.bf16.mxu0 %v566
  %630 = vmatpush1.bf16.msra.mxu0 %v565
  %631 = vmatprep.subr.bf16.mxu0 %v568
  %632 = vmatpush1.bf16.msra.mxu0 %v567
  %633 = vmatprep.subr.bf16.mxu0 %v570
  %634 = vmatpush1.bf16.msra.mxu0 %v569
  %635 = vmatprep.subr.bf16.mxu0 %v572
  %636 = vmatpush1.bf16.msra.mxu0 %v571
  %637 = vmatprep.mubr.bf16.mxu0 %v366
  %638 = vmatmul.mubr.bf16.gmra.mrb[0].mxu0 %v365
  %v639 = vpop.f32.mrb[0].mxu0
  %v640 = vadd.f32 0.0, %v639
  %v641 = vpop.f32.mrb[0].mxu0
  %v642 = vadd.f32 0.0, %v641
  %v643 = vpop.f32.mrb[0].mxu0
  %v644 = vadd.f32 0.0, %v643
  %v645 = vpop.f32.mrb[0].mxu0
  %v646 = vadd.f32 0.0, %v645
  %647 = vmatprep.mubr.bf16.mxu0 %v368
  %648 = vmatmul.mubr.bf16.gmra.mrb[0].mxu0 %v367
  %v649 = vpop.f32.mrb[0].mxu0
  %v650 = vadd.f32 0.0, %v649
  %v651 = vpop.f32.mrb[0].mxu0
  %v652 = vadd.f32 0.0, %v651
  %v653 = vpop.f32.mrb[0].mxu0
  %v654 = vadd.f32 0.0, %v653
  %v655 = vpop.f32.mrb[0].mxu0
  %v656 = vadd.f32 0.0, %v655
  %657 = vmatprep.mubr.bf16.mxu0 %v370
  %658 = vmatmul.mubr.bf16.gmra.mrb[0].mxu0 %v369
  %v659 = vpop.f32.mrb[0].mxu0
  %v660 = vadd.f32 0.0, %v659
  %v661 = vpop.f32.mrb[0].mxu0
  %v662 = vadd.f32 0.0, %v661
  %v663 = vpop.f32.mrb[0].mxu0
  %v664 = vadd.f32 0.0, %v663
  %v665 = vpop.f32.mrb[0].mxu0
  %v666 = vadd.f32 0.0, %v665
  %667 = vmatprep.mubr.bf16.mxu0 %v372
  %668 = vmatmul.mubr.bf16.gmra.mrb[0].mxu0 %v371
  %v669 = vpop.f32.mrb[0].mxu0
  %v670 = vadd.f32 0.0, %v669
  %v671 = vpop.f32.mrb[0].mxu0
  %v672 = vadd.f32 0.0, %v671
  %v673 = vpop.f32.mrb[0].mxu0
  %v674 = vadd.f32 0.0, %v673
  %v675 = vpop.f32.mrb[0].mxu0
  %v676 = vadd.f32 0.0, %v675
  %677 = vmatprep.mubr.bf16.mxu0 %v374
  %678 = vmatmul.mubr.bf16.gmra.mrb[0].mxu0 %v373
  %v679 = vpop.f32.mrb[0].mxu0
  %v680 = vadd.f32 0.0, %v679
  %v681 = vpop.f32.mrb[0].mxu0
  %v682 = vadd.f32 0.0, %v681
  %v683 = vpop.f32.mrb[0].mxu0
  %v684 = vadd.f32 0.0, %v683
  %v685 = vpop.f32.mrb[0].mxu0
  %v686 = vadd.f32 0.0, %v685
  %687 = vmatprep.mubr.bf16.mxu0 %v376
  %688 = vmatmul.mubr.bf16.gmra.mrb[0].mxu0 %v375
  %v689 = vpop.f32.mrb[0].mxu0
  %v690 = vadd.f32 0.0, %v689
  %v691 = vpop.f32.mrb[0].mxu0
  %v692 = vadd.f32 0.0, %v691
  %v693 = vpop.f32.mrb[0].mxu0
  %v694 = vadd.f32 0.0, %v693
  %v695 = vpop.f32.mrb[0].mxu0
  %v696 = vadd.f32 0.0, %v695
  %697 = vmatprep.mubr.bf16.mxu0 %v378
  %698 = vmatmul.mubr.bf16.gmra.mrb[0].mxu0 %v377
  %v699 = vpop.f32.mrb[0].mxu0
  %v700 = vadd.f32 0.0, %v699
  %v701 = vpop.f32.mrb[0].mxu0
  %v702 = vadd.f32 0.0, %v701
  %v703 = vpop.f32.mrb[0].mxu0
  %v704 = vadd.f32 0.0, %v703
  %v705 = vpop.f32.mrb[0].mxu0
  %v706 = vadd.f32 0.0, %v705
  %707 = vmatprep.mubr.bf16.mxu0 %v380
  %708 = vmatmul.mubr.bf16.gmra.mrb[0].mxu0 %v379
  %v709 = vpop.f32.mrb[0].mxu0
  %v710 = vadd.f32 0.0, %v709
  %v711 = vpop.f32.mrb[0].mxu0
  %v712 = vadd.f32 0.0, %v711
  %v713 = vpop.f32.mrb[0].mxu0
  %v714 = vadd.f32 0.0, %v713
  %v715 = vpop.f32.mrb[0].mxu0
  %v716 = vadd.f32 0.0, %v715
  %717 = vmatprep.mubr.bf16.mxu0 %v382
  %718 = vmatmul.mubr.bf16.gmra.mrb[0].mxu0 %v381
  %v719 = vpop.f32.mrb[0].mxu0
  %v720 = vadd.f32 0.0, %v719
  %v721 = vpop.f32.mrb[0].mxu0
  %v722 = vadd.f32 0.0, %v721
  %v723 = vpop.f32.mrb[0].mxu0
  %v724 = vadd.f32 0.0, %v723
  %v725 = vpop.f32.mrb[0].mxu0
  %v726 = vadd.f32 0.0, %v725
  %727 = vmatprep.mubr.bf16.mxu0 %v384
  %728 = vmatmul.mubr.bf16.gmra.mrb[0].mxu0 %v383
  %v729 = vpop.f32.mrb[0].mxu0
  %v730 = vadd.f32 0.0, %v729
  %v731 = vpop.f32.mrb[0].mxu0
  %v732 = vadd.f32 0.0, %v731
  %v733 = vpop.f32.mrb[0].mxu0
  %v734 = vadd.f32 0.0, %v733
  %v735 = vpop.f32.mrb[0].mxu0
  %v736 = vadd.f32 0.0, %v735
  %737 = vmatprep.mubr.bf16.mxu0 %v386
  %738 = vmatmul.mubr.bf16.gmra.mrb[0].mxu0 %v385
  %v739 = vpop.f32.mrb[0].mxu0
  %v740 = vadd.f32 0.0, %v739
  %v741 = vpop.f32.mrb[0].mxu0
  %v742 = vadd.f32 0.0, %v741
  %v743 = vpop.f32.mrb[0].mxu0
  %v744 = vadd.f32 0.0, %v743
  %v745 = vpop.f32.mrb[0].mxu0
  %v746 = vadd.f32 0.0, %v745
  %747 = vmatprep.mubr.bf16.mxu0 %v388
  %748 = vmatmul.mubr.bf16.gmra.mrb[0].mxu0 %v387
  %v749 = vpop.f32.mrb[0].mxu0
  %v750 = vadd.f32 0.0, %v749
  %v751 = vpop.f32.mrb[0].mxu0
  %v752 = vadd.f32 0.0, %v751
  %v753 = vpop.f32.mrb[0].mxu0
  %v754 = vadd.f32 0.0, %v753
  %v755 = vpop.f32.mrb[0].mxu0
  %v756 = vadd.f32 0.0, %v755
  %757 = vmatprep.mubr.bf16.mxu0 %v390
  %758 = vmatmul.mubr.bf16.gmra.mrb[0].mxu0 %v389
  %v759 = vpop.f32.mrb[0].mxu0
  %v760 = vadd.f32 0.0, %v759
  %v761 = vpop.f32.mrb[0].mxu0
  %v762 = vadd.f32 0.0, %v761
  %v763 = vpop.f32.mrb[0].mxu0
  %v764 = vadd.f32 0.0, %v763
  %v765 = vpop.f32.mrb[0].mxu0
  %v766 = vadd.f32 0.0, %v765
  %767 = vmatprep.mubr.bf16.mxu0 %v392
  %768 = vmatmul.mubr.bf16.gmra.mrb[0].mxu0 %v391
  %v769 = vpop.f32.mrb[0].mxu0
  %v770 = vadd.f32 0.0, %v769
  %v771 = vpop.f32.mrb[0].mxu0
  %v772 = vadd.f32 0.0, %v771
  %v773 = vpop.f32.mrb[0].mxu0
  %v774 = vadd.f32 0.0, %v773
  %v775 = vpop.f32.mrb[0].mxu0
  %v776 = vadd.f32 0.0, %v775
  %777 = vmatprep.mubr.bf16.mxu0 %v394
  %778 = vmatmul.mubr.bf16.gmra.mrb[0].mxu0 %v393
  %v779 = vpop.f32.mrb[0].mxu0
  %v780 = vadd.f32 0.0, %v779
  %v781 = vpop.f32.mrb[0].mxu0
  %v782 = vadd.f32 0.0, %v781
  %v783 = vpop.f32.mrb[0].mxu0
  %v784 = vadd.f32 0.0, %v783
  %v785 = vpop.f32.mrb[0].mxu0
  %v786 = vadd.f32 0.0, %v785
  %787 = vmatprep.mubr.bf16.mxu0 %v396
  %788 = vmatmul.mubr.bf16.gmra.mrb[0].mxu0 %v395
  %v789 = vpop.f32.mrb[0].mxu0
  %v790 = vadd.f32 0.0, %v789
  %v791 = vpop.f32.mrb[0].mxu0
  %v792 = vadd.f32 0.0, %v791
  %v793 = vpop.f32.mrb[0].mxu0
  %v794 = vadd.f32 0.0, %v793
  %v795 = vpop.f32.mrb[0].mxu0
  %v796 = vadd.f32 0.0, %v795
  %797 = vmatprep.mubr.bf16.mxu0 %v398
  %798 = vmatmul.mubr.bf16.gmra.mrb[0].mxu0 %v397
  %v799 = vpop.f32.mrb[0].mxu0
  %v800 = vadd.f32 0.0, %v799
  %v801 = vpop.f32.mrb[0].mxu0
  %v802 = vadd.f32 0.0, %v801
  %v803 = vpop.f32.mrb[0].mxu0
  %v804 = vadd.f32 0.0, %v803
  %v805 = vpop.f32.mrb[0].mxu0
  %v806 = vadd.f32 0.0, %v805
  %807 = vmatprep.mubr.bf16.mxu0 %v400
  %808 = vmatmul.mubr.bf16.gmra.mrb[0].mxu0 %v399
  %v809 = vpop.f32.mrb[0].mxu0
  %v810 = vadd.f32 0.0, %v809
  %v811 = vpop.f32.mrb[0].mxu0
  %v812 = vadd.f32 0.0, %v811
  %v813 = vpop.f32.mrb[0].mxu0
  %v814 = vadd.f32 0.0, %v813
  %v815 = vpop.f32.mrb[0].mxu0
  %v816 = vadd.f32 0.0, %v815
  %817 = vmatprep.mubr.bf16.mxu0 %v402
  %818 = vmatmul.mubr.bf16.gmra.mrb[0].mxu0 %v401
  %v819 = vpop.f32.mrb[0].mxu0
  %v820 = vadd.f32 0.0, %v819
  %v821 = vpop.f32.mrb[0].mxu0
  %v822 = vadd.f32 0.0, %v821
  %v823 = vpop.f32.mrb[0].mxu0
  %v824 = vadd.f32 0.0, %v823
  %v825 = vpop.f32.mrb[0].mxu0
  %v826 = vadd.f32 0.0, %v825
  %827 = vmatprep.mubr.bf16.mxu0 %v404
  %828 = vmatmul.mubr.bf16.gmra.mrb[0].mxu0 %v403
  %v829 = vpop.f32.mrb[0].mxu0
  %v830 = vadd.f32 0.0, %v829
  %v831 = vpop.f32.mrb[0].mxu0
  %v832 = vadd.f32 0.0, %v831
  %v833 = vpop.f32.mrb[0].mxu0
  %v834 = vpop.f32.mrb[0].mxu0
  %835 = vdwg.mxu0
  %v836 = vadd.f32 %v99, %v640
  %v837 = vadd.f32 %v100, %v642
  %v838 = vadd.f32 %v101, %v644
  %v839 = vadd.f32 %v102, %v646
  %v840 = vadd.f32 %v103, %v650
  %v841 = vadd.f32 %v104, %v652
  %v842 = vadd.f32 %v105, %v654
  %v843 = vadd.f32 %v106, %v656
  %v844 = vadd.f32 %v107, %v660
  %v845 = vadd.f32 %v108, %v662
  %v846 = vadd.f32 %v109, %v664
  %v847 = vadd.f32 %v110, %v666
  %v848 = vadd.f32 %v111, %v670
  %v849 = vadd.f32 %v112, %v672
  %v850 = vadd.f32 %v113, %v674
  %v851 = vadd.f32 %v114, %v676
  %v852 = vadd.f32 %v115, %v680
  %v853 = vadd.f32 %v116, %v682
  %v854 = vadd.f32 %v117, %v684
  %v855 = vadd.f32 %v118, %v686
  %v856 = vadd.f32 %v119, %v690
  %v857 = vadd.f32 %v120, %v692
  %v858 = vadd.f32 %v121, %v694
  %v859 = vadd.f32 %v122, %v696
  %v860 = vadd.f32 %v123, %v700
  %v861 = vadd.f32 %v124, %v702
  %v862 = vadd.f32 %v125, %v704
  %v863 = vadd.f32 %v126, %v706
  %v864 = vadd.f32 %v127, %v710
  %v865 = vadd.f32 %v128, %v712
  %v866 = vadd.f32 %v129, %v714
  %v867 = vadd.f32 %v130, %v716
  %v868 = vadd.f32 %v131, %v720
  %v869 = vadd.f32 %v132, %v722
  %v870 = vadd.f32 %v133, %v724
  %v871 = vadd.f32 %v134, %v726
  %v872 = vadd.f32 %v135, %v730
  %v873 = vadd.f32 %v136, %v732
  %v874 = vadd.f32 %v137, %v734
  %v875 = vadd.f32 %v138, %v736
  %v876 = vadd.f32 %v139, %v740
  %v877 = vadd.f32 %v140, %v742
  %v878 = vadd.f32 %v141, %v744
  %v879 = vadd.f32 %v142, %v746
  %v880 = vadd.f32 %v143, %v750
  %v881 = vadd.f32 %v144, %v752
  %v882 = vadd.f32 %v145, %v754
  %v883 = vadd.f32 %v146, %v756
  %v884 = vadd.f32 %v147, %v760
  %v885 = vadd.f32 %v148, %v762
  %v886 = vadd.f32 %v149, %v764
  %v887 = vadd.f32 %v150, %v766
  %v888 = vadd.f32 %v151, %v770
  %v889 = vadd.f32 %v152, %v772
  %v890 = vadd.f32 %v153, %v774
  %v891 = vadd.f32 %v154, %v776
  %v892 = vadd.f32 %v155, %v780
  %v893 = vadd.f32 %v156, %v782
  %v894 = vadd.f32 %v157, %v784
  %v895 = vadd.f32 %v158, %v786
  %v896 = vadd.f32 %v159, %v790
  %v897 = vadd.f32 %v160, %v792
  %v898 = vadd.f32 %v161, %v794
  %v899 = vadd.f32 %v162, %v796
  %v900 = vadd.f32 %v163, %v800
  %v901 = vadd.f32 %v164, %v802
  %v902 = vadd.f32 %v165, %v804
  %v903 = vadd.f32 %v166, %v806
  %v904 = vadd.f32 %v167, %v810
  %v905 = vadd.f32 %v168, %v812
  %v906 = vadd.f32 %v169, %v814
  %v907 = vadd.f32 %v170, %v816
  %v908 = vadd.f32 %v171, %v820
  %v909 = vadd.f32 %v172, %v822
  %v910 = vadd.f32 %v173, %v824
  %v911 = vadd.f32 %v174, %v826
  %v912 = vadd.f32 %v175, %v830
  %v913 = vadd.f32 %v176, %v832
  %914 = vst [vmem:[#allocation2] sm:$0xff] %v836
  %915 = vst [vmem:[#allocation2 + $0x8] sm:$0xff] %v837
  %916 = vst [vmem:[#allocation2 + $0x10] sm:$0xff] %v838
  %917 = vst [vmem:[#allocation2 + $0x18] sm:$0xff] %v839
  %918 = vst [vmem:[#allocation2 + $0x20] sm:$0xff] %v840
  %919 = vst [vmem:[#allocation2 + $0x28] sm:$0xff] %v841
  %920 = vst [vmem:[#allocation2 + $0x30] sm:$0xff] %v842
  %921 = vst [vmem:[#allocation2 + $0x38] sm:$0xff] %v843
  %922 = vst [vmem:[#allocation2 + $0x40] sm:$0xff] %v844
  %923 = vst [vmem:[#allocation2 + $0x48] sm:$0xff] %v845
  %924 = vst [vmem:[#allocation2 + $0x50] sm:$0xff] %v846
  %925 = vst [vmem:[#allocation2 + $0x58] sm:$0xff] %v847
  %926 = vst [vmem:[#allocation2 + $0x60] sm:$0xff] %v848
  %927 = vst [vmem:[#allocation2 + $0x68] sm:$0xff] %v849
  %928 = vst [vmem:[#allocation2 + $0x70] sm:$0xff] %v850
  %929 = vst [vmem:[#allocation2 + $0x78] sm:$0xff] %v851
  %930 = vst [vmem:[#allocation2 + $0x80] sm:$0xff] %v852
  %931 = vst [vmem:[#allocation2 + $0x88] sm:$0xff] %v853
  %932 = vst [vmem:[#allocation2 + $0x90] sm:$0xff] %v854
  %933 = vst [vmem:[#allocation2 + $0x98] sm:$0xff] %v855
  %934 = vst [vmem:[#allocation2 + $0xa0] sm:$0xff] %v856
  %935 = vst [vmem:[#allocation2 + $0xa8] sm:$0xff] %v857
  %936 = vst [vmem:[#allocation2 + $0xb0] sm:$0xff] %v858
  %937 = vst [vmem:[#allocation2 + $0xb8] sm:$0xff] %v859
  %938 = vst [vmem:[#allocation2 + $0xc0] sm:$0xff] %v860
  %939 = vst [vmem:[#allocation2 + $0xc8] sm:$0xff] %v861
  %940 = vst [vmem:[#allocation2 + $0xd0] sm:$0xff] %v862
  %941 = vst [vmem:[#allocation2 + $0xd8] sm:$0xff] %v863
  %942 = vst [vmem:[#allocation2 + $0xe0] sm:$0xff] %v864
  %943 = vst [vmem:[#allocation2 + $0xe8] sm:$0xff] %v865
  %944 = vst [vmem:[#allocation2 + $0xf0] sm:$0xff] %v866
  %945 = vst [vmem:[#allocation2 + $0xf8] sm:$0xff] %v867
  %946 = vst [vmem:[#allocation2 + $0x100] sm:$0xff] %v868
  %947 = vst [vmem:[#allocation2 + $0x108] sm:$0xff] %v869
  %948 = vst [vmem:[#allocation2 + $0x110] sm:$0xff] %v870
  %949 = vst [vmem:[#allocation2 + $0x118] sm:$0xff] %v871
  %950 = vst [vmem:[#allocation2 + $0x120] sm:$0xff] %v872
  %951 = vst [vmem:[#allocation2 + $0x128] sm:$0xff] %v873
  %952 = vst [vmem:[#allocation2 + $0x130] sm:$0xff] %v874
  %953 = vst [vmem:[#allocation2 + $0x138] sm:$0xff] %v875
  %954 = vst [vmem:[#allocation2 + $0x140] sm:$0xff] %v876
  %955 = vst [vmem:[#allocation2 + $0x148] sm:$0xff] %v877
  %956 = vst [vmem:[#allocation2 + $0x150] sm:$0xff] %v878
  %957 = vst [vmem:[#allocation2 + $0x158] sm:$0xff] %v879
  %958 = vst [vmem:[#allocation2 + $0x160] sm:$0xff] %v880
  %959 = vst [vmem:[#allocation2 + $0x168] sm:$0xff] %v881
  %960 = vst [vmem:[#allocation2 + $0x170] sm:$0xff] %v882
  %961 = vst [vmem:[#allocation2 + $0x178] sm:$0xff] %v883
  %962 = vst [vmem:[#allocation2 + $0x180] sm:$0xff] %v884
  %963 = vst [vmem:[#allocation2 + $0x188] sm:$0xff] %v885
  %964 = vst [vmem:[#allocation2 + $0x190] sm:$0xff] %v886
  %965 = vst [vmem:[#allocation2 + $0x198] sm:$0xff] %v887
  %966 = vst [vmem:[#allocation2 + $0x1a0] sm:$0xff] %v888
  %967 = vst [vmem:[#allocation2 + $0x1a8] sm:$0xff] %v889
  %968 = vst [vmem:[#allocation2 + $0x1b0] sm:$0xff] %v890
  %969 = vst [vmem:[#allocation2 + $0x1b8] sm:$0xff] %v891
  %970 = vst [vmem:[#allocation2 + $0x1c0] sm:$0xff] %v892
  %971 = vst [vmem:[#allocation2 + $0x1c8] sm:$0xff] %v893
  %972 = vst [vmem:[#allocation2 + $0x1d0] sm:$0xff] %v894
  %973 = vst [vmem:[#allocation2 + $0x1d8] sm:$0xff] %v895
  %974 = vst [vmem:[#allocation2 + $0x1e0] sm:$0xff] %v896
  %975 = vst [vmem:[#allocation2 + $0x1e8] sm:$0xff] %v897
  %976 = vst [vmem:[#allocation2 + $0x1f0] sm:$0xff] %v898
  %977 = vst [vmem:[#allocation2 + $0x1f8] sm:$0xff] %v899
  %978 = vst [vmem:[#allocation2 + $0x200] sm:$0xff] %v900
  %979 = vst [vmem:[#allocation2 + $0x208] sm:$0xff] %v901
  %980 = vst [vmem:[#allocation2 + $0x210] sm:$0xff] %v902
  %981 = vst [vmem:[#allocation2 + $0x218] sm:$0xff] %v903
  %982 = vst [vmem:[#allocation2 + $0x220] sm:$0xff] %v904
  %983 = vst [vmem:[#allocation2 + $0x228] sm:$0xff] %v905
  %984 = vst [vmem:[#allocation2 + $0x230] sm:$0xff] %v906
  %985 = vst [vmem:[#allocation2 + $0x238] sm:$0xff] %v907
  %986 = vst [vmem:[#allocation2 + $0x240] sm:$0xff] %v908
  %987 = vst [vmem:[#allocation2 + $0x248] sm:$0xff] %v909
  %988 = vst [vmem:[#allocation2 + $0x250] sm:$0xff] %v910
  %989 = vst [vmem:[#allocation2 + $0x258] sm:$0xff] %v911
  %990 = vst [vmem:[#allocation2 + $0x260] sm:$0x3] %v912
  %991 = vst [vmem:[#allocation2 + $0x268] sm:$0x3] %v913
  // Predicated region
  $region22: #{model_forward.9} parent=0 // pred_check
    %p992 = pneg %p17
  $region23: #{model_forward.9} parent=0 // pred_check_branch
    %994 = sbr.rel (%p992) target = $region25
  $region24: #{model_forward.9} parent=0 // pred_region
    %v995 = vld [vmem:[#allocation2] sm:$0xff]
    %v996 = vld [vmem:[#allocation2 + $0x8] sm:$0xff]
    %v997 = vld [vmem:[#allocation2 + $0x10] sm:$0xff]
    %v998 = vld [vmem:[#allocation2 + $0x18] sm:$0xff]
    %v999 = vld [vmem:[#allocation2 + $0x20] sm:$0xff]
    %v1000 = vld [vmem:[#allocation2 + $0x28] sm:$0xff]
    %v1001 = vld [vmem:[#allocation2 + $0x30] sm:$0xff]
    %v1002 = vld [vmem:[#allocation2 + $0x38] sm:$0xff]
    %v1003 = vld [vmem:[#allocation2 + $0x40] sm:$0xff]
    %v1004 = vld [vmem:[#allocation2 + $0x48] sm:$0xff]
    %v1005 = vld [vmem:[#allocation2 + $0x50] sm:$0xff]
    %v1006 = vld [vmem:[#allocation2 + $0x58] sm:$0xff]
    %v1007 = vld [vmem:[#allocation2 + $0x60] sm:$0xff]
    %v1008 = vld [vmem:[#allocation2 + $0x68] sm:$0xff]
    %v1009 = vld [vmem:[#allocation2 + $0x70] sm:$0xff]
    %v1010 = vld [vmem:[#allocation2 + $0x78] sm:$0xff]
    %v1011 = vld [vmem:[#allocation2 + $0x80] sm:$0xff]
    %v1012 = vld [vmem:[#allocation2 + $0x88] sm:$0xff]
    %v1013 = vld [vmem:[#allocation2 + $0x90] sm:$0xff]
    %v1014 = vld [vmem:[#allocation2 + $0x98] sm:$0xff]
    %v1015 = vld [vmem:[#allocation2 + $0xa0] sm:$0xff]
    %v1016 = vld [vmem:[#allocation2 + $0xa8] sm:$0xff]
    %v1017 = vld [vmem:[#allocation2 + $0xb0] sm:$0xff]
    %v1018 = vld [vmem:[#allocation2 + $0xb8] sm:$0xff]
    %v1019 = vld [vmem:[#allocation2 + $0xc0] sm:$0xff]
    %v1020 = vld [vmem:[#allocation2 + $0xc8] sm:$0xff]
    %v1021 = vld [vmem:[#allocation2 + $0xd0] sm:$0xff]
    %v1022 = vld [vmem:[#allocation2 + $0xd8] sm:$0xff]
    %v1023 = vld [vmem:[#allocation2 + $0xe0] sm:$0xff]
    %v1024 = vld [vmem:[#allocation2 + $0xe8] sm:$0xff]
    %v1025 = vld [vmem:[#allocation2 + $0xf0] sm:$0xff]
    %v1026 = vld [vmem:[#allocation2 + $0xf8] sm:$0xff]
    %v1027 = vld [vmem:[#allocation2 + $0x100] sm:$0xff]
    %v1028 = vld [vmem:[#allocation2 + $0x108] sm:$0xff]
    %v1029 = vld [vmem:[#allocation2 + $0x110] sm:$0xff]
    %v1030 = vld [vmem:[#allocation2 + $0x118] sm:$0xff]
    %v1031 = vld [vmem:[#allocation2 + $0x120] sm:$0xff]
    %v1032 = vld [vmem:[#allocation2 + $0x128] sm:$0xff]
    %v1033 = vld [vmem:[#allocation2 + $0x130] sm:$0xff]
    %v1034 = vld [vmem:[#allocation2 + $0x138] sm:$0xff]
    %v1035 = vld [vmem:[#allocation2 + $0x140] sm:$0xff]
    %v1036 = vld [vmem:[#allocation2 + $0x148] sm:$0xff]
    %v1037 = vld [vmem:[#allocation2 + $0x150] sm:$0xff]
    %v1038 = vld [vmem:[#allocation2 + $0x158] sm:$0xff]
    %v1039 = vld [vmem:[#allocation2 + $0x160] sm:$0xff]
    %v1040 = vld [vmem:[#allocation2 + $0x168] sm:$0xff]
    %v1041 = vld [vmem:[#allocation2 + $0x170] sm:$0xff]
    %v1042 = vld [vmem:[#allocation2 + $0x178] sm:$0xff]
    %v1043 = vld [vmem:[#allocation2 + $0x180] sm:$0xff]
    %v1044 = vld [vmem:[#allocation2 + $0x188] sm:$0xff]
    %v1045 = vld [vmem:[#allocation2 + $0x190] sm:$0xff]
    %v1046 = vld [vmem:[#allocation2 + $0x198] sm:$0xff]
    %v1047 = vld [vmem:[#allocation2 + $0x1a0] sm:$0xff]
    %v1048 = vld [vmem:[#allocation2 + $0x1a8] sm:$0xff]
    %v1049 = vld [vmem:[#allocation2 + $0x1b0] sm:$0xff]
    %v1050 = vld [vmem:[#allocation2 + $0x1b8] sm:$0xff]
    %v1051 = vld [vmem:[#allocation2 + $0x1c0] sm:$0xff]
    %v1052 = vld [vmem:[#allocation2 + $0x1c8] sm:$0xff]
    %v1053 = vld [vmem:[#allocation2 + $0x1d0] sm:$0xff]
    %v1054 = vld [vmem:[#allocation2 + $0x1d8] sm:$0xff]
    %v1055 = vld [vmem:[#allocation2 + $0x1e0] sm:$0xff]
    %v1056 = vld [vmem:[#allocation2 + $0x1e8] sm:$0xff]
    %v1057 = vld [vmem:[#allocation2 + $0x1f0] sm:$0xff]
    %v1058 = vld [vmem:[#allocation2 + $0x1f8] sm:$0xff]
    %v1059 = vld [vmem:[#allocation2 + $0x200] sm:$0xff]
    %v1060 = vld [vmem:[#allocation2 + $0x208] sm:$0xff]
    %v1061 = vld [vmem:[#allocation2 + $0x210] sm:$0xff]
    %v1062 = vld [vmem:[#allocation2 + $0x218] sm:$0xff]
    %v1063 = vld [vmem:[#allocation2 + $0x220] sm:$0xff]
    %v1064 = vld [vmem:[#allocation2 + $0x228] sm:$0xff]
    %v1065 = vld [vmem:[#allocation2 + $0x230] sm:$0xff]
    %v1066 = vld [vmem:[#allocation2 + $0x238] sm:$0xff]
    %v1067 = vld [vmem:[#allocation2 + $0x240] sm:$0xff]
    %v1068 = vld [vmem:[#allocation2 + $0x248] sm:$0xff]
    %v1069 = vld [vmem:[#allocation2 + $0x250] sm:$0xff]
    %v1070 = vld [vmem:[#allocation2 + $0x258] sm:$0xff]
    %v1071 = vld [vmem:[#allocation2 + $0x260] sm:$0x3]
    %v1072 = vld [vmem:[#allocation2 + $0x268] sm:$0x3]
    %v1073 = vld [vmem:[%s2] sm:$0x3]
    %v1075 = vlaneseq
    %v1076 = vshrl.u32 %v1075, 7
    %v1077 = vsub.s32 0, %v1076
    %v1078 = vrot.slane %v1073, %v1077
    %v1079 = vlaneseq
    %v1080 = vshrl.u32 %v1079, 7
    %v1081 = vsub.s32 1, %v1080
    %v1082 = vrot.slane %v1073, %v1081
    %v1085 = vadd.f32 %v995, %v1078
    %v1086 = vadd.f32 %v996, %v1082
    %v1087 = vadd.f32 %v997, %v1078
    %v1088 = vadd.f32 %v998, %v1082
    %v1089 = vadd.f32 %v999, %v1078
    %v1090 = vadd.f32 %v1000, %v1082
    %v1091 = vadd.f32 %v1001, %v1078
    %v1092 = vadd.f32 %v1002, %v1082
    %v1093 = vadd.f32 %v1003, %v1078
    %v1094 = vadd.f32 %v1004, %v1082
    %v1095 = vadd.f32 %v1005, %v1078
    %v1096 = vadd.f32 %v1006, %v1082
    %v1097 = vadd.f32 %v1007, %v1078
    %v1098 = vadd.f32 %v1008, %v1082
    %v1099 = vadd.f32 %v1009, %v1078
    %v1100 = vadd.f32 %v1010, %v1082
    %v1101 = vadd.f32 %v1011, %v1078
    %v1102 = vadd.f32 %v1012, %v1082
    %v1103 = vadd.f32 %v1013, %v1078
    %v1104 = vadd.f32 %v1014, %v1082
    %v1105 = vadd.f32 %v1015, %v1078
    %v1106 = vadd.f32 %v1016, %v1082
    %v1107 = vadd.f32 %v1017, %v1078
    %v1108 = vadd.f32 %v1018, %v1082
    %v1109 = vadd.f32 %v1019, %v1078
    %v1110 = vadd.f32 %v1020, %v1082
    %v1111 = vadd.f32 %v1021, %v1078
    %v1112 = vadd.f32 %v1022, %v1082
    %v1113 = vadd.f32 %v1023, %v1078
    %v1114 = vadd.f32 %v1024, %v1082
    %v1115 = vadd.f32 %v1025, %v1078
    %v1116 = vadd.f32 %v1026, %v1082
    %v1117 = vadd.f32 %v1027, %v1078
    %v1118 = vadd.f32 %v1028, %v1082
    %v1119 = vadd.f32 %v1029, %v1078
    %v1120 = vadd.f32 %v1030, %v1082
    %v1121 = vadd.f32 %v1031, %v1078
    %v1122 = vadd.f32 %v1032, %v1082
    %v1123 = vadd.f32 %v1033, %v1078
    %v1124 = vadd.f32 %v1034, %v1082
    %v1125 = vadd.f32 %v1035, %v1078
    %v1126 = vadd.f32 %v1036, %v1082
    %v1127 = vadd.f32 %v1037, %v1078
    %v1128 = vadd.f32 %v1038, %v1082
    %v1129 = vadd.f32 %v1039, %v1078
    %v1130 = vadd.f32 %v1040, %v1082
    %v1131 = vadd.f32 %v1041, %v1078
    %v1132 = vadd.f32 %v1042, %v1082
    %v1133 = vadd.f32 %v1043, %v1078
    %v1134 = vadd.f32 %v1044, %v1082
    %v1135 = vadd.f32 %v1045, %v1078
    %v1136 = vadd.f32 %v1046, %v1082
    %v1137 = vadd.f32 %v1047, %v1078
    %v1138 = vadd.f32 %v1048, %v1082
    %v1139 = vadd.f32 %v1049, %v1078
    %v1140 = vadd.f32 %v1050, %v1082
    %v1141 = vadd.f32 %v1051, %v1078
    %v1142 = vadd.f32 %v1052, %v1082
    %v1143 = vadd.f32 %v1053, %v1078
    %v1144 = vadd.f32 %v1054, %v1082
    %v1145 = vadd.f32 %v1055, %v1078
    %v1146 = vadd.f32 %v1056, %v1082
    %v1147 = vadd.f32 %v1057, %v1078
    %v1148 = vadd.f32 %v1058, %v1082
    %v1149 = vadd.f32 %v1059, %v1078
    %v1150 = vadd.f32 %v1060, %v1082
    %v1151 = vadd.f32 %v1061, %v1078
    %v1152 = vadd.f32 %v1062, %v1082
    %v1153 = vadd.f32 %v1063, %v1078
    %v1154 = vadd.f32 %v1064, %v1082
    %v1155 = vadd.f32 %v1065, %v1078
    %v1156 = vadd.f32 %v1066, %v1082
    %v1157 = vadd.f32 %v1067, %v1078
    %v1158 = vadd.f32 %v1068, %v1082
    %v1159 = vadd.f32 %v1069, %v1078
    %v1160 = vadd.f32 %v1070, %v1082
    %v1161 = vadd.f32 %v1071, %v1078
    %v1162 = vadd.f32 %v1072, %v1082
    %v1163 = vld [vmem:[%s3] sm:$0xff]
    %v1164 = vld [vmem:[%s3 + $0x8] sm:$0xff]
    %v1165 = vld [vmem:[%s3 + $0x10] sm:$0xff]
    %v1166 = vld [vmem:[%s3 + $0x18] sm:$0xff]
    %v1167 = vld [vmem:[%s3 + $0x20] sm:$0xff]
    %v1168 = vld [vmem:[%s3 + $0x28] sm:$0xff]
    %v1169 = vld [vmem:[%s3 + $0x30] sm:$0xff]
    %v1170 = vld [vmem:[%s3 + $0x38] sm:$0xff]
    %v1171 = vld [vmem:[%s3 + $0x40] sm:$0xff]
    %v1172 = vld [vmem:[%s3 + $0x48] sm:$0xff]
    %v1173 = vld [vmem:[%s3 + $0x50] sm:$0xff]
    %v1174 = vld [vmem:[%s3 + $0x58] sm:$0xff]
    %v1175 = vld [vmem:[%s3 + $0x60] sm:$0xff]
    %v1176 = vld [vmem:[%s3 + $0x68] sm:$0xff]
    %v1177 = vld [vmem:[%s3 + $0x70] sm:$0xff]
    %v1178 = vld [vmem:[%s3 + $0x78] sm:$0xff]
    %v1179 = vld [vmem:[%s3 + $0x80] sm:$0xff]
    %v1180 = vld [vmem:[%s3 + $0x88] sm:$0xff]
    %v1181 = vld [vmem:[%s3 + $0x90] sm:$0xff]
    %v1182 = vld [vmem:[%s3 + $0x98] sm:$0xff]
    %v1183 = vld [vmem:[%s3 + $0xa0] sm:$0xff]
    %v1184 = vld [vmem:[%s3 + $0xa8] sm:$0xff]
    %v1185 = vld [vmem:[%s3 + $0xb0] sm:$0xff]
    %v1186 = vld [vmem:[%s3 + $0xb8] sm:$0xff]
    %v1187 = vld [vmem:[%s3 + $0xc0] sm:$0xff]
    %v1188 = vld [vmem:[%s3 + $0xc8] sm:$0xff]
    %v1189 = vld [vmem:[%s3 + $0xd0] sm:$0xff]
    %v1190 = vld [vmem:[%s3 + $0xd8] sm:$0xff]
    %v1191 = vld [vmem:[%s3 + $0xe0] sm:$0xff]
    %v1192 = vld [vmem:[%s3 + $0xe8] sm:$0xff]
    %v1193 = vld [vmem:[%s3 + $0xf0] sm:$0xff]
    %v1194 = vld [vmem:[%s3 + $0xf8] sm:$0xff]
    %v1195 = vld [vmem:[%s3 + $0x100] sm:$0xff]
    %v1196 = vld [vmem:[%s3 + $0x108] sm:$0xff]
    %v1197 = vld [vmem:[%s3 + $0x110] sm:$0xff]
    %v1198 = vld [vmem:[%s3 + $0x118] sm:$0xff]
    %v1199 = vld [vmem:[%s3 + $0x120] sm:$0xff]
    %v1200 = vld [vmem:[%s3 + $0x128] sm:$0xff]
    %v1201 = vld [vmem:[%s3 + $0x130] sm:$0xff]
    %v1202 = vld [vmem:[%s3 + $0x138] sm:$0xff]
    %v1203 = vld [vmem:[%s3 + $0x140] sm:$0xff]
    %v1204 = vld [vmem:[%s3 + $0x148] sm:$0xff]
    %v1205 = vld [vmem:[%s3 + $0x150] sm:$0xff]
    %v1206 = vld [vmem:[%s3 + $0x158] sm:$0xff]
    %v1207 = vld [vmem:[%s3 + $0x160] sm:$0xff]
    %v1208 = vld [vmem:[%s3 + $0x168] sm:$0xff]
    %v1209 = vld [vmem:[%s3 + $0x170] sm:$0xff]
    %v1210 = vld [vmem:[%s3 + $0x178] sm:$0xff]
    %v1211 = vld [vmem:[%s3 + $0x180] sm:$0xff]
    %v1212 = vld [vmem:[%s3 + $0x188] sm:$0xff]
    %v1213 = vld [vmem:[%s3 + $0x190] sm:$0xff]
    %v1214 = vld [vmem:[%s3 + $0x198] sm:$0xff]
    %v1215 = vld [vmem:[%s3 + $0x1a0] sm:$0xff]
    %v1216 = vld [vmem:[%s3 + $0x1a8] sm:$0xff]
    %v1217 = vld [vmem:[%s3 + $0x1b0] sm:$0xff]
    %v1218 = vld [vmem:[%s3 + $0x1b8] sm:$0xff]
    %v1219 = vld [vmem:[%s3 + $0x1c0] sm:$0xff]
    %v1220 = vld [vmem:[%s3 + $0x1c8] sm:$0xff]
    %v1221 = vld [vmem:[%s3 + $0x1d0] sm:$0xff]
    %v1222 = vld [vmem:[%s3 + $0x1d8] sm:$0xff]
    %v1223 = vld [vmem:[%s3 + $0x1e0] sm:$0xff]
    %v1224 = vld [vmem:[%s3 + $0x1e8] sm:$0xff]
    %v1225 = vld [vmem:[%s3 + $0x1f0] sm:$0xff]
    %v1226 = vld [vmem:[%s3 + $0x1f8] sm:$0xff]
    %v1227 = vld [vmem:[%s3 + $0x200] sm:$0xff]
    %v1228 = vld [vmem:[%s3 + $0x208] sm:$0xff]
    %v1229 = vld [vmem:[%s3 + $0x210] sm:$0xff]
    %v1230 = vld [vmem:[%s3 + $0x218] sm:$0xff]
    %v1231 = vld [vmem:[%s3 + $0x220] sm:$0xff]
    %v1232 = vld [vmem:[%s3 + $0x228] sm:$0xff]
    %v1233 = vld [vmem:[%s3 + $0x230] sm:$0xff]
    %v1234 = vld [vmem:[%s3 + $0x238] sm:$0xff]
    %v1235 = vld [vmem:[%s3 + $0x240] sm:$0xff]
    %v1236 = vld [vmem:[%s3 + $0x248] sm:$0xff]
    %v1237 = vld [vmem:[%s3 + $0x250] sm:$0xff]
    %v1238 = vld [vmem:[%s3 + $0x258] sm:$0xff]
    %v1239 = vld [vmem:[%s3 + $0x260] sm:$0x3]
    %v1240 = vld [vmem:[%s3 + $0x268] sm:$0x3]
    %v1241 = vadd.f32 %v1085, %v1163
    %v1242 = vadd.f32 %v1086, %v1164
    %v1243 = vadd.f32 %v1087, %v1165
    %v1244 = vadd.f32 %v1088, %v1166
    %v1245 = vadd.f32 %v1089, %v1167
    %v1246 = vadd.f32 %v1090, %v1168
    %v1247 = vadd.f32 %v1091, %v1169
    %v1248 = vadd.f32 %v1092, %v1170
    %v1249 = vadd.f32 %v1093, %v1171
    %v1250 = vadd.f32 %v1094, %v1172
    %v1251 = vadd.f32 %v1095, %v1173
    %v1252 = vadd.f32 %v1096, %v1174
    %v1253 = vadd.f32 %v1097, %v1175
    %v1254 = vadd.f32 %v1098, %v1176
    %v1255 = vadd.f32 %v1099, %v1177
    %v1256 = vadd.f32 %v1100, %v1178
    %v1257 = vadd.f32 %v1101, %v1179
    %v1258 = vadd.f32 %v1102, %v1180
    %v1259 = vadd.f32 %v1103, %v1181
    %v1260 = vadd.f32 %v1104, %v1182
    %v1261 = vadd.f32 %v1105, %v1183
    %v1262 = vadd.f32 %v1106, %v1184
    %v1263 = vadd.f32 %v1107, %v1185
    %v1264 = vadd.f32 %v1108, %v1186
    %v1265 = vadd.f32 %v1109, %v1187
    %v1266 = vadd.f32 %v1110, %v1188
    %v1267 = vadd.f32 %v1111, %v1189
    %v1268 = vadd.f32 %v1112, %v1190
    %v1269 = vadd.f32 %v1113, %v1191
    %v1270 = vadd.f32 %v1114, %v1192
    %v1271 = vadd.f32 %v1115, %v1193
    %v1272 = vadd.f32 %v1116, %v1194
    %v1273 = vadd.f32 %v1117, %v1195
    %v1274 = vadd.f32 %v1118, %v1196
    %v1275 = vadd.f32 %v1119, %v1197
    %v1276 = vadd.f32 %v1120, %v1198
    %v1277 = vadd.f32 %v1121, %v1199
    %v1278 = vadd.f32 %v1122, %v1200
    %v1279 = vadd.f32 %v1123, %v1201
    %v1280 = vadd.f32 %v1124, %v1202
    %v1281 = vadd.f32 %v1125, %v1203
    %v1282 = vadd.f32 %v1126, %v1204
    %v1283 = vadd.f32 %v1127, %v1205
    %v1284 = vadd.f32 %v1128, %v1206
    %v1285 = vadd.f32 %v1129, %v1207
    %v1286 = vadd.f32 %v1130, %v1208
    %v1287 = vadd.f32 %v1131, %v1209
    %v1288 = vadd.f32 %v1132, %v1210
    %v1289 = vadd.f32 %v1133, %v1211
    %v1290 = vadd.f32 %v1134, %v1212
    %v1291 = vadd.f32 %v1135, %v1213
    %v1292 = vadd.f32 %v1136, %v1214
    %v1293 = vadd.f32 %v1137, %v1215
    %v1294 = vadd.f32 %v1138, %v1216
    %v1295 = vadd.f32 %v1139, %v1217
    %v1296 = vadd.f32 %v1140, %v1218
    %v1297 = vadd.f32 %v1141, %v1219
    %v1298 = vadd.f32 %v1142, %v1220
    %v1299 = vadd.f32 %v1143, %v1221
    %v1300 = vadd.f32 %v1144, %v1222
    %v1301 = vadd.f32 %v1145, %v1223
    %v1302 = vadd.f32 %v1146, %v1224
    %v1303 = vadd.f32 %v1147, %v1225
    %v1304 = vadd.f32 %v1148, %v1226
    %v1305 = vadd.f32 %v1149, %v1227
    %v1306 = vadd.f32 %v1150, %v1228
    %v1307 = vadd.f32 %v1151, %v1229
    %v1308 = vadd.f32 %v1152, %v1230
    %v1309 = vadd.f32 %v1153, %v1231
    %v1310 = vadd.f32 %v1154, %v1232
    %v1311 = vadd.f32 %v1155, %v1233
    %v1312 = vadd.f32 %v1156, %v1234
    %v1313 = vadd.f32 %v1157, %v1235
    %v1314 = vadd.f32 %v1158, %v1236
    %v1315 = vadd.f32 %v1159, %v1237
    %v1316 = vadd.f32 %v1160, %v1238
    %v1317 = vadd.f32 %v1161, %v1239
    %v1318 = vadd.f32 %v1162, %v1240
    %1319 = vst [vmem:[%s4] sm:$0xff] %v1241
    %1320 = vst [vmem:[%s4 + $0x8] sm:$0xff] %v1242
    %1321 = vst [vmem:[%s4 + $0x10] sm:$0xff] %v1243
    %1322 = vst [vmem:[%s4 + $0x18] sm:$0xff] %v1244
    %1323 = vst [vmem:[%s4 + $0x20] sm:$0xff] %v1245
    %1324 = vst [vmem:[%s4 + $0x28] sm:$0xff] %v1246
    %1325 = vst [vmem:[%s4 + $0x30] sm:$0xff] %v1247
    %1326 = vst [vmem:[%s4 + $0x38] sm:$0xff] %v1248
    %1327 = vst [vmem:[%s4 + $0x40] sm:$0xff] %v1249
    %1328 = vst [vmem:[%s4 + $0x48] sm:$0xff] %v1250
    %1329 = vst [vmem:[%s4 + $0x50] sm:$0xff] %v1251
    %1330 = vst [vmem:[%s4 + $0x58] sm:$0xff] %v1252
    %1331 = vst [vmem:[%s4 + $0x60] sm:$0xff] %v1253
    %1332 = vst [vmem:[%s4 + $0x68] sm:$0xff] %v1254
    %1333 = vst [vmem:[%s4 + $0x70] sm:$0xff] %v1255
    %1334 = vst [vmem:[%s4 + $0x78] sm:$0xff] %v1256
    %1335 = vst [vmem:[%s4 + $0x80] sm:$0xff] %v1257
    %1336 = vst [vmem:[%s4 + $0x88] sm:$0xff] %v1258
    %1337 = vst [vmem:[%s4 + $0x90] sm:$0xff] %v1259
    %1338 = vst [vmem:[%s4 + $0x98] sm:$0xff] %v1260
    %1339 = vst [vmem:[%s4 + $0xa0] sm:$0xff] %v1261
    %1340 = vst [vmem:[%s4 + $0xa8] sm:$0xff] %v1262
    %1341 = vst [vmem:[%s4 + $0xb0] sm:$0xff] %v1263
    %1342 = vst [vmem:[%s4 + $0xb8] sm:$0xff] %v1264
    %1343 = vst [vmem:[%s4 + $0xc0] sm:$0xff] %v1265
    %1344 = vst [vmem:[%s4 + $0xc8] sm:$0xff] %v1266
    %1345 = vst [vmem:[%s4 + $0xd0] sm:$0xff] %v1267
    %1346 = vst [vmem:[%s4 + $0xd8] sm:$0xff] %v1268
    %1347 = vst [vmem:[%s4 + $0xe0] sm:$0xff] %v1269
    %1348 = vst [vmem:[%s4 + $0xe8] sm:$0xff] %v1270
    %1349 = vst [vmem:[%s4 + $0xf0] sm:$0xff] %v1271
    %1350 = vst [vmem:[%s4 + $0xf8] sm:$0xff] %v1272
    %1351 = vst [vmem:[%s4 + $0x100] sm:$0xff] %v1273
    %1352 = vst [vmem:[%s4 + $0x108] sm:$0xff] %v1274
    %1353 = vst [vmem:[%s4 + $0x110] sm:$0xff] %v1275
    %1354 = vst [vmem:[%s4 + $0x118] sm:$0xff] %v1276
    %1355 = vst [vmem:[%s4 + $0x120] sm:$0xff] %v1277
    %1356 = vst [vmem:[%s4 + $0x128] sm:$0xff] %v1278
    %1357 = vst [vmem:[%s4 + $0x130] sm:$0xff] %v1279
    %1358 = vst [vmem:[%s4 + $0x138] sm:$0xff] %v1280
    %1359 = vst [vmem:[%s4 + $0x140] sm:$0xff] %v1281
    %1360 = vst [vmem:[%s4 + $0x148] sm:$0xff] %v1282
    %1361 = vst [vmem:[%s4 + $0x150] sm:$0xff] %v1283
    %1362 = vst [vmem:[%s4 + $0x158] sm:$0xff] %v1284
    %1363 = vst [vmem:[%s4 + $0x160] sm:$0xff] %v1285
    %1364 = vst [vmem:[%s4 + $0x168] sm:$0xff] %v1286
    %1365 = vst [vmem:[%s4 + $0x170] sm:$0xff] %v1287
    %1366 = vst [vmem:[%s4 + $0x178] sm:$0xff] %v1288
    %1367 = vst [vmem:[%s4 + $0x180] sm:$0xff] %v1289
    %1368 = vst [vmem:[%s4 + $0x188] sm:$0xff] %v1290
    %1369 = vst [vmem:[%s4 + $0x190] sm:$0xff] %v1291
    %1370 = vst [vmem:[%s4 + $0x198] sm:$0xff] %v1292
    %1371 = vst [vmem:[%s4 + $0x1a0] sm:$0xff] %v1293
    %1372 = vst [vmem:[%s4 + $0x1a8] sm:$0xff] %v1294
    %1373 = vst [vmem:[%s4 + $0x1b0] sm:$0xff] %v1295
    %1374 = vst [vmem:[%s4 + $0x1b8] sm:$0xff] %v1296
    %1375 = vst [vmem:[%s4 + $0x1c0] sm:$0xff] %v1297
    %1376 = vst [vmem:[%s4 + $0x1c8] sm:$0xff] %v1298
    %1377 = vst [vmem:[%s4 + $0x1d0] sm:$0xff] %v1299
    %1378 = vst [vmem:[%s4 + $0x1d8] sm:$0xff] %v1300
    %1379 = vst [vmem:[%s4 + $0x1e0] sm:$0xff] %v1301
    %1380 = vst [vmem:[%s4 + $0x1e8] sm:$0xff] %v1302
    %1381 = vst [vmem:[%s4 + $0x1f0] sm:$0xff] %v1303
    %1382 = vst [vmem:[%s4 + $0x1f8] sm:$0xff] %v1304
    %1383 = vst [vmem:[%s4 + $0x200] sm:$0xff] %v1305
    %1384 = vst [vmem:[%s4 + $0x208] sm:$0xff] %v1306
    %1385 = vst [vmem:[%s4 + $0x210] sm:$0xff] %v1307
    %1386 = vst [vmem:[%s4 + $0x218] sm:$0xff] %v1308
    %1387 = vst [vmem:[%s4 + $0x220] sm:$0xff] %v1309
    %1388 = vst [vmem:[%s4 + $0x228] sm:$0xff] %v1310
    %1389 = vst [vmem:[%s4 + $0x230] sm:$0xff] %v1311
    %1390 = vst [vmem:[%s4 + $0x238] sm:$0xff] %v1312
    %1391 = vst [vmem:[%s4 + $0x240] sm:$0xff] %v1313
    %1392 = vst [vmem:[%s4 + $0x248] sm:$0xff] %v1314
    %1393 = vst [vmem:[%s4 + $0x250] sm:$0xff] %v1315
    %1394 = vst [vmem:[%s4 + $0x258] sm:$0xff] %v1316
    %1395 = vst [vmem:[%s4 + $0x260] sm:$0x3] %v1317
    %1396 = vst [vmem:[%s4 + $0x268] sm:$0x3] %v1318
  $region25: #{model_forward.9} parent=0 // pred_fallthru
    _
  // Predicated region
  $region26: #{model_forward.9} parent=0 // pred_check
    _
  $region27: #{model_forward.9} parent=0 // pred_check_branch
    %1398 = sbr.rel (0) target = $region29
  $region28: #{model_forward.9} parent=0 // pred_region
    _
  $region29: #{model_forward.9} parent=0 // pred_fallthru
    _
  // Predicated region
  $region30: #{model_forward.9} parent=0 // pred_check
    _
  $region31: #{model_forward.9} parent=0 // pred_check_branch
    %1400 = sbr.rel (0) target = $region33
  $region32: #{model_forward.9} parent=0 // pred_region
    _
  $region33: #{model_forward.9} parent=0 // pred_fallthru
    _

// kernel: model_forward.10
$region0: #{model_forward.10}
  #allocation0 [shape = 'u32[]', space=smem, size = 0x4, offset = 0x4, fixed_abs, tag = 'smem constant byte address 0x4 - core index']
  #allocation1 [shape = 'u32[144,128]{1,0:T(1,128)}', space=vmem, size = 0x12000, scoped, tag = 'internal scratch']
  #allocation2 [shape = 'f32[306,512]{1,0:T(8,128)}', space=vmem, size = 0x9c000, scoped, tag = 'scratch operand']
  %s0 = inlined_call_operand.vmem [shape: bf16[306,256], index: 0, kind: input, shape index: {}]
  %s1 = inlined_call_operand.vmem [shape: bf16[256,1024], index: 1, kind: input, shape index: {}]
  %s2 = inlined_call_operand.vmem [shape: f32[1,1024], index: 2, kind: input, shape index: {}]
  %s3 = inlined_call_operand.vmem [shape: f32[306,1024], index: 3, kind: output, shape index: {}]
  %s4 = sld [smem:[#allocation0]]
  $region95: #{model_forward.10} parent=0
    _
  %s6 = ssub.s32 1, %s4
  %s7 = scalar_select 0, %s6, %s4
  $region1: #{model_forward.10} parent=0
    #allocation3 [shape = 'u8[524288]{0}', space=vmem, size = 0x80000, scoped, tag = 'input window, operand 1']
    #allocation4 [shape = 'u8[1277952]{0}', space=vmem, size = 0x138000, scoped, tag = 'output window, operand 0']
    loop: start=0, step=1, limit=4
    $region2: #{model_forward.10} parent=1 // loop_pre_header
      _
    $region3: #{model_forward.10} parent=1 // loop_header
      %s9 = sphi 0, %s13
      %p10 = scmp.ge.s32.totalorder %s9, 4
      %s16 = sphi 0, %s35
      %s17 = sphi 0, %s31
      %s18 = sphi 0, %s27
      %s19 = sphi 0, %s16
      %s20 = sphi 0, %s17
      %s21 = sphi 0, %s18
      %s22 = sphi 0, %s19
      %s23 = sphi 0, %s20
      %s24 = sphi 0, %s21
      %s40 = sphi 0, %s42
      %s43 = sphi 0, %s40
      %s44 = sphi 0, %s43
      %s60 = sphi 0, %s44
      %s68 = sphi 0, %s70
      %s71 = sphi 0, %s68
      %s72 = sphi 0, %s71
      %s88 = sphi 0, %s72
      %s94 = sphi 0, %s96
      %s97 = sphi 0, %s94
      %s98 = sphi 0, %s97
      %s114 = sphi 0, %s98
      %s122 = sphi 0, %s124
      %s125 = sphi 0, %s122
      %s126 = sphi 0, %s125
      %s142 = sphi 0, %s126
    $region4: #{model_forward.10} parent=1 // loop_header_branch
      %12 = sbr.rel (%p10) target = $region8
    $region5: #{model_forward.10} parent=1 // loop_body
      %s14 = ssub.s32 %s9, 1
      %s15 = ssub.s32 %s9, 2
      %s25 = sadd.s32 1, %s18
      %p26 = scmp.ge.s32.totalorder %s25, 1
      %s27 = scalar_select %p26, 0, %s25
      %s28 = sadd.s32 1, %s17
      %s29 = scalar_select %p26, %s28, %s17
      %p30 = scmp.ge.s32.totalorder %s29, 2
      %s31 = scalar_select %p30, 0, %s29
      %s32 = sadd.s32 1, %s16
      %s33 = scalar_select %p30, %s32, %s16
      %p34 = scmp.ge.s32.totalorder %s33, 1
      %s35 = scalar_select %p34, 0, %s33
      %s36 = ssub.s32 %s16, %s35
      %s37 = ssub.s32 %s18, %s27
      %s38 = sor.u32 %s36, %s37
      %p39 = scmp.eq.s32.totalorder %s38, 0
      %s41 = sadd.s32 %s40, 1
      %s42 = scalar_select %p39, %s40, %s41
      %p45 = pneg %p39
      %p46 = scmp.eq.s32.totalorder %s9, 1
      %p47 = por %p45, %p46
      %p48 = scmp.ne.s32.totalorder %s40, %s43
      %p49 = scmp.eq.s32.totalorder %s9, 0
      %p50 = por %p48, %p49
      %p51 = scmp.ne.s32.totalorder %s40, %s43
      %p52 = scmp.eq.s32.totalorder %s14, 1
      %p53 = por %p51, %p52
      %p54 = scmp.ne.s32.totalorder %s43, %s44
      %p55 = scmp.eq.s32.totalorder %s14, 0
      %p56 = por %p54, %p55
      %p57 = scmp.ne.s32.totalorder %s43, %s44
      %p58 = scmp.eq.s32.totalorder %s15, 1
      %p59 = por %p57, %p58
      %p61 = scmp.ne.s32.totalorder %s44, %s60
      %p62 = scmp.eq.s32.totalorder %s15, 0
      %p63 = por %p61, %p62
      %s64 = ssub.s32 %s18, %s27
      %s65 = ssub.s32 %s17, %s31
      %s66 = sor.u32 %s64, %s65
      %p67 = scmp.eq.s32.totalorder %s66, 0
      %s69 = sadd.s32 %s68, 1
      %s70 = scalar_select %p67, %s68, %s69
      %p73 = pneg %p67
      %p74 = scmp.eq.s32.totalorder %s9, 1
      %p75 = por %p73, %p74
      %p76 = scmp.ne.s32.totalorder %s68, %s71
      %p77 = scmp.eq.s32.totalorder %s9, 0
      %p78 = por %p76, %p77
      %p79 = scmp.ne.s32.totalorder %s68, %s71
      %p80 = scmp.eq.s32.totalorder %s14, 1
      %p81 = por %p79, %p80
      %p82 = scmp.ne.s32.totalorder %s71, %s72
      %p83 = scmp.eq.s32.totalorder %s14, 0
      %p84 = por %p82, %p83
      %p85 = scmp.ne.s32.totalorder %s71, %s72
      %p86 = scmp.eq.s32.totalorder %s15, 1
      %p87 = por %p85, %p86
      %p89 = scmp.ne.s32.totalorder %s72, %s88
      %p90 = scmp.eq.s32.totalorder %s15, 0
      %p91 = por %p89, %p90
      %s92 = ssub.s32 %s17, %s31
      %p93 = scmp.eq.s32.totalorder %s92, 0
      %s95 = sadd.s32 %s94, 1
      %s96 = scalar_select %p93, %s94, %s95
      %p99 = pneg %p93
      %p100 = scmp.eq.s32.totalorder %s9, 1
      %p101 = por %p99, %p100
      %p102 = scmp.ne.s32.totalorder %s94, %s97
      %p103 = scmp.eq.s32.totalorder %s9, 0
      %p104 = por %p102, %p103
      %p105 = scmp.ne.s32.totalorder %s94, %s97
      %p106 = scmp.eq.s32.totalorder %s14, 1
      %p107 = por %p105, %p106
      %p108 = scmp.ne.s32.totalorder %s97, %s98
      %p109 = scmp.eq.s32.totalorder %s14, 0
      %p110 = por %p108, %p109
      %p111 = scmp.ne.s32.totalorder %s97, %s98
      %p112 = scmp.eq.s32.totalorder %s15, 1
      %p113 = por %p111, %p112
      %p115 = scmp.ne.s32.totalorder %s98, %s114
      %p116 = scmp.eq.s32.totalorder %s15, 0
      %p117 = por %p115, %p116
      %s118 = ssub.s32 %s16, %s35
      %s119 = ssub.s32 %s17, %s31
      %s120 = sor.u32 %s118, %s119
      %p121 = scmp.eq.s32.totalorder %s120, 0
      %s123 = sadd.s32 %s122, 1
      %s124 = scalar_select %p121, %s122, %s123
      %p127 = pneg %p121
      %p128 = scmp.eq.s32.totalorder %s9, 1
      %p129 = por %p127, %p128
      %p130 = scmp.ne.s32.totalorder %s122, %s125
      %p131 = scmp.eq.s32.totalorder %s9, 0
      %p132 = por %p130, %p131
      %p133 = scmp.ne.s32.totalorder %s122, %s125
      %p134 = scmp.eq.s32.totalorder %s14, 1
      %p135 = por %p133, %p134
      %p136 = scmp.ne.s32.totalorder %s125, %s126
      %p137 = scmp.eq.s32.totalorder %s14, 0
      %p138 = por %p136, %p137
      %p139 = scmp.ne.s32.totalorder %s125, %s126
      %p140 = scmp.eq.s32.totalorder %s15, 1
      %p141 = por %p139, %p140
      %p143 = scmp.ne.s32.totalorder %s126, %s142
      %p144 = scmp.eq.s32.totalorder %s15, 0
      %p145 = por %p143, %p144
      %p146 = scmp.le.s32.totalorder 1, %s9
      %p147 = scmp.lt.s32.totalorder %s9, 3
      %p148 = pnand %p146, %p147
      %p149 = pneg %p148
      // Predicated region
      $region9: #{model_forward.10} parent=5 // pred_check
        _
      $region10: #{model_forward.10} parent=5 // pred_check_branch
        %151 = sbr.rel (%p148) target = $region12
      $region11: #{model_forward.10} parent=5 // pred_region
        %s152 = ssub.s32 %s9, 1
        // Predicated region
        $region13: #{model_forward.10} parent=11 // pred_check
          %p153 = pneg %p56
        $region14: #{model_forward.10} parent=11 // pred_check_branch
          %155 = sbr.rel (%p153) target = $region16
        $region15: #{model_forward.10} parent=11 // pred_region
          %s156 = smul.u32 39, %s19
          %s157 = smul.u32 2, %s21
          %p158 = scmp.lt.s32.totalorder %s156, 38
          %s159 = scalar_select %p158, %s156, 38
          %p160 = scmp.lt.s32.totalorder %s157, 1
          %s161 = scalar_select %p160, %s157, 1
          %s162 = smul.addr %s159, 2
          %s163 = sadd.s32 %s161, %s162
          %s164 = smul.addr %s163, 4
          %s165 = scalar_lea.vmem %s0, %s164
          %s166 = smul.u32 39, %s19
          %s167 = smul.u32 2, %s21
        $region16: #{model_forward.10} parent=11 // pred_fallthru
          _
      $region12: #{model_forward.10} parent=5 // pred_fallthru
        _
      %p168 = scmp.lt.s32.totalorder %s9, 2
      // Predicated region
      $region17: #{model_forward.10} parent=5 // pred_check
        %p169 = pneg %p168
      $region18: #{model_forward.10} parent=5 // pred_check_branch
        %171 = sbr.rel (%p169) target = $region20
      $region19: #{model_forward.10} parent=5 // pred_region
        // Predicated region
        $region21: #{model_forward.10} parent=19 // pred_check
          %p172 = pneg %p78
        $region22: #{model_forward.10} parent=19 // pred_check_branch
          %174 = sbr.rel (%p172) target = $region24
        $region23: #{model_forward.10} parent=19 // pred_region
          %s175 = sand.u32 %s68, 1
          %s176 = sand.u32 %s68, 1
          %s177 = smul.addr %s176, 512
          %s178 = scalar_lea.vmem [#allocation3], %s177
          %s179 = smul.u32 32, %s18
          %s180 = smul.u32 4, %s17
          %s181 = smul.addr %s179, 8
          %s182 = sadd.s32 %s180, %s181
          %s183 = smul.addr %s182, 4
          %s184 = scalar_lea.vmem %s1, %s183
          // Predicated region
          $region25: #{model_forward.10} parent=23 // pred_check
            _
          $region26: #{model_forward.10} parent=23 // pred_check_branch
            %186 = sbr.rel (0) target = $region28
          $region27: #{model_forward.10} parent=23 // pred_region
            // Predicated region
            $region29: #{model_forward.10} parent=27 // pred_check
              _
            $region30: #{model_forward.10} parent=27 // pred_check_branch
              %188 = sbr.rel (0) target = $region32
            $region31: #{model_forward.10} parent=27 // pred_region
              loop: start=0, step=1, limit=1
              $region33: #{model_forward.10} parent=31 // loop_pre_header
                _
              $region34: #{model_forward.10} parent=31 // loop_header
                %s190 = sphi 0, %s194
                %p191 = scmp.ge.s32.totalorder %s190, 1
                %s195 = sphi %s184, %s184
                %s196 = sphi %s178, %s178
              $region35: #{model_forward.10} parent=31 // loop_header_branch
                %193 = sbr.rel (%p191) target = $region39
              $region36: #{model_forward.10} parent=31 // loop_body
                %v197 = vld [vmem:[%s195] sm:$0xff]
                %198 = vst [vmem:[%s196] sm:$0xff] %v197
                %v199 = vld [vmem:[%s195 + $0x8] sm:$0xff]
                %200 = vst [vmem:[%s196 + $0x8] sm:$0xff] %v199
                %v201 = vld [vmem:[%s195 + $0x20] sm:$0xff]
                %202 = vst [vmem:[%s196 + $0x10] sm:$0xff] %v201
                %v203 = vld [vmem:[%s195 + $0x28] sm:$0xff]
                %204 = vst [vmem:[%s196 + $0x18] sm:$0xff] %v203
                %v205 = vld [vmem:[%s195 + $0x40] sm:$0xff]
                %206 = vst [vmem:[%s196 + $0x20] sm:$0xff] %v205
                %v207 = vld [vmem:[%s195 + $0x48] sm:$0xff]
                %208 = vst [vmem:[%s196 + $0x28] sm:$0xff] %v207
                %v209 = vld [vmem:[%s195 + $0x60] sm:$0xff]
                %210 = vst [vmem:[%s196 + $0x30] sm:$0xff] %v209
                %v211 = vld [vmem:[%s195 + $0x68] sm:$0xff]
                %212 = vst [vmem:[%s196 + $0x38] sm:$0xff] %v211
                %v213 = vld [vmem:[%s195 + $0x80] sm:$0xff]
                %214 = vst [vmem:[%s196 + $0x40] sm:$0xff] %v213
                %v215 = vld [vmem:[%s195 + $0x88] sm:$0xff]
                %216 = vst [vmem:[%s196 + $0x48] sm:$0xff] %v215
                %v217 = vld [vmem:[%s195 + $0xa0] sm:$0xff]
                %218 = vst [vmem:[%s196 + $0x50] sm:$0xff] %v217
                %v219 = vld [vmem:[%s195 + $0xa8] sm:$0xff]
                %220 = vst [vmem:[%s196 + $0x58] sm:$0xff] %v219
                %v221 = vld [vmem:[%s195 + $0xc0] sm:$0xff]
                %222 = vst [vmem:[%s196 + $0x60] sm:$0xff] %v221
                %v223 = vld [vmem:[%s195 + $0xc8] sm:$0xff]
                %224 = vst [vmem:[%s196 + $0x68] sm:$0xff] %v223
                %v225 = vld [vmem:[%s195 + $0xe0] sm:$0xff]
                %226 = vst [vmem:[%s196 + $0x70] sm:$0xff] %v225
                %v227 = vld [vmem:[%s195 + $0xe8] sm:$0xff]
                %228 = vst [vmem:[%s196 + $0x78] sm:$0xff] %v227
                %v229 = vld [vmem:[%s195 + $0x100] sm:$0xff]
                %230 = vst [vmem:[%s196 + $0x80] sm:$0xff] %v229
                %v231 = vld [vmem:[%s195 + $0x108] sm:$0xff]
                %232 = vst [vmem:[%s196 + $0x88] sm:$0xff] %v231
                %v233 = vld [vmem:[%s195 + $0x120] sm:$0xff]
                %234 = vst [vmem:[%s196 + $0x90] sm:$0xff] %v233
                %v235 = vld [vmem:[%s195 + $0x128] sm:$0xff]
                %236 = vst [vmem:[%s196 + $0x98] sm:$0xff] %v235
                %v237 = vld [vmem:[%s195 + $0x140] sm:$0xff]
                %238 = vst [vmem:[%s196 + $0xa0] sm:$0xff] %v237
                %v239 = vld [vmem:[%s195 + $0x148] sm:$0xff]
                %240 = vst [vmem:[%s196 + $0xa8] sm:$0xff] %v239
                %v241 = vld [vmem:[%s195 + $0x160] sm:$0xff]
                %242 = vst [vmem:[%s196 + $0xb0] sm:$0xff] %v241
                %v243 = vld [vmem:[%s195 + $0x168] sm:$0xff]
                %244 = vst [vmem:[%s196 + $0xb8] sm:$0xff] %v243
                %v245 = vld [vmem:[%s195 + $0x180] sm:$0xff]
                %246 = vst [vmem:[%s196 + $0xc0] sm:$0xff] %v245
                %v247 = vld [vmem:[%s195 + $0x188] sm:$0xff]
                %248 = vst [vmem:[%s196 + $0xc8] sm:$0xff] %v247
                %v249 = vld [vmem:[%s195 + $0x1a0] sm:$0xff]
                %250 = vst [vmem:[%s196 + $0xd0] sm:$0xff] %v249
                %v251 = vld [vmem:[%s195 + $0x1a8] sm:$0xff]
                %252 = vst [vmem:[%s196 + $0xd8] sm:$0xff] %v251
                %v253 = vld [vmem:[%s195 + $0x1c0] sm:$0xff]
                %254 = vst [vmem:[%s196 + $0xe0] sm:$0xff] %v253
                %v255 = vld [vmem:[%s195 + $0x1c8] sm:$0xff]
                %256 = vst [vmem:[%s196 + $0xe8] sm:$0xff] %v255
                %v257 = vld [vmem:[%s195 + $0x1e0] sm:$0xff]
                %258 = vst [vmem:[%s196 + $0xf0] sm:$0xff] %v257
                %v259 = vld [vmem:[%s195 + $0x1e8] sm:$0xff]
                %260 = vst [vmem:[%s196 + $0xf8] sm:$0xff] %v259
                %v261 = vld [vmem:[%s195 + $0x200] sm:$0xff]
                %262 = vst [vmem:[%s196 + $0x100] sm:$0xff] %v261
                %v263 = vld [vmem:[%s195 + $0x208] sm:$0xff]
                %264 = vst [vmem:[%s196 + $0x108] sm:$0xff] %v263
                %v265 = vld [vmem:[%s195 + $0x220] sm:$0xff]
                %266 = vst [vmem:[%s196 + $0x110] sm:$0xff] %v265
                %v267 = vld [vmem:[%s195 + $0x228] sm:$0xff]
                %268 = vst [vmem:[%s196 + $0x118] sm:$0xff] %v267
                %v269 = vld [vmem:[%s195 + $0x240] sm:$0xff]
                %270 = vst [vmem:[%s196 + $0x120] sm:$0xff] %v269
                %v271 = vld [vmem:[%s195 + $0x248] sm:$0xff]
                %272 = vst [vmem:[%s196 + $0x128] sm:$0xff] %v271
                %v273 = vld [vmem:[%s195 + $0x260] sm:$0xff]
                %274 = vst [vmem:[%s196 + $0x130] sm:$0xff] %v273
                %v275 = vld [vmem:[%s195 + $0x268] sm:$0xff]
                %276 = vst [vmem:[%s196 + $0x138] sm:$0xff] %v275
                %v277 = vld [vmem:[%s195 + $0x280] sm:$0xff]
                %278 = vst [vmem:[%s196 + $0x140] sm:$0xff] %v277
                %v279 = vld [vmem:[%s195 + $0x288] sm:$0xff]
                %280 = vst [vmem:[%s196 + $0x148] sm:$0xff] %v279
                %v281 = vld [vmem:[%s195 + $0x2a0] sm:$0xff]
                %282 = vst [vmem:[%s196 + $0x150] sm:$0xff] %v281
                %v283 = vld [vmem:[%s195 + $0x2a8] sm:$0xff]
                %284 = vst [vmem:[%s196 + $0x158] sm:$0xff] %v283
                %v285 = vld [vmem:[%s195 + $0x2c0] sm:$0xff]
                %286 = vst [vmem:[%s196 + $0x160] sm:$0xff] %v285
                %v287 = vld [vmem:[%s195 + $0x2c8] sm:$0xff]
                %288 = vst [vmem:[%s196 + $0x168] sm:$0xff] %v287
                %v289 = vld [vmem:[%s195 + $0x2e0] sm:$0xff]
                %290 = vst [vmem:[%s196 + $0x170] sm:$0xff] %v289
                %v291 = vld [vmem:[%s195 + $0x2e8] sm:$0xff]
                %292 = vst [vmem:[%s196 + $0x178] sm:$0xff] %v291
                %v293 = vld [vmem:[%s195 + $0x300] sm:$0xff]
                %294 = vst [vmem:[%s196 + $0x180] sm:$0xff] %v293
                %v295 = vld [vmem:[%s195 + $0x308] sm:$0xff]
                %296 = vst [vmem:[%s196 + $0x188] sm:$0xff] %v295
                %v297 = vld [vmem:[%s195 + $0x320] sm:$0xff]
                %298 = vst [vmem:[%s196 + $0x190] sm:$0xff] %v297
                %v299 = vld [vmem:[%s195 + $0x328] sm:$0xff]
                %300 = vst [vmem:[%s196 + $0x198] sm:$0xff] %v299
                %v301 = vld [vmem:[%s195 + $0x340] sm:$0xff]
                %302 = vst [vmem:[%s196 + $0x1a0] sm:$0xff] %v301
                %v303 = vld [vmem:[%s195 + $0x348] sm:$0xff]
                %304 = vst [vmem:[%s196 + $0x1a8] sm:$0xff] %v303
                %v305 = vld [vmem:[%s195 + $0x360] sm:$0xff]
                %306 = vst [vmem:[%s196 + $0x1b0] sm:$0xff] %v305
                %v307 = vld [vmem:[%s195 + $0x368] sm:$0xff]
                %308 = vst [vmem:[%s196 + $0x1b8] sm:$0xff] %v307
                %v309 = vld [vmem:[%s195 + $0x380] sm:$0xff]
                %310 = vst [vmem:[%s196 + $0x1c0] sm:$0xff] %v309
                %v311 = vld [vmem:[%s195 + $0x388] sm:$0xff]
                %312 = vst [vmem:[%s196 + $0x1c8] sm:$0xff] %v311
                %v313 = vld [vmem:[%s195 + $0x3a0] sm:$0xff]
                %314 = vst [vmem:[%s196 + $0x1d0] sm:$0xff] %v313
                %v315 = vld [vmem:[%s195 + $0x3a8] sm:$0xff]
                %316 = vst [vmem:[%s196 + $0x1d8] sm:$0xff] %v315
                %v317 = vld [vmem:[%s195 + $0x3c0] sm:$0xff]
                %318 = vst [vmem:[%s196 + $0x1e0] sm:$0xff] %v317
                %v319 = vld [vmem:[%s195 + $0x3c8] sm:$0xff]
                %320 = vst [vmem:[%s196 + $0x1e8] sm:$0xff] %v319
                %v321 = vld [vmem:[%s195 + $0x3e0] sm:$0xff]
                %322 = vst [vmem:[%s196 + $0x1f0] sm:$0xff] %v321
                %v323 = vld [vmem:[%s195 + $0x3e8] sm:$0xff]
                %324 = vst [vmem:[%s196 + $0x1f8] sm:$0xff] %v323
              $region37: #{model_forward.10} parent=31 // loop_footer
                %s194 = sadd.s32 1, %s190
              $region38: #{model_forward.10} parent=31 // loop_footer_branch
                %189 = sbr.rel target = $region34
              $region39: #{model_forward.10} parent=31 // loop_exit
                _
            $region32: #{model_forward.10} parent=27 // pred_fallthru
              _
            // Predicated region
            $region40: #{model_forward.10} parent=27 // pred_check
              _
            $region41: #{model_forward.10} parent=27 // pred_check_branch
              %326 = sbr.rel target = $region43
            $region42: #{model_forward.10} parent=27 // pred_region
              _
            $region43: #{model_forward.10} parent=27 // pred_fallthru
              _
          $region28: #{model_forward.10} parent=23 // pred_fallthru
            _
          %327 = vnop
        $region24: #{model_forward.10} parent=19 // pred_fallthru
          _
        // Predicated region
        $region44: #{model_forward.10} parent=19 // pred_check
          %p328 = pneg %p104
        $region45: #{model_forward.10} parent=19 // pred_check_branch
          %330 = sbr.rel (%p328) target = $region47
        $region46: #{model_forward.10} parent=19 // pred_region
          %s331 = smul.u32 4, %s17
          %p332 = scmp.lt.s32.totalorder %s331, 7
          %s333 = scalar_select %p332, %s331, 7
          %s334 = scalar_lea.vmem %s2, %s333
          %s335 = smul.u32 4, %s17
        $region47: #{model_forward.10} parent=19 // pred_fallthru
          _
      $region20: #{model_forward.10} parent=5 // pred_fallthru
        _
      %p336 = scmp.le.s32.totalorder 1, %s9
      %p337 = scmp.lt.s32.totalorder %s9, 3
      %p338 = pnand %p336, %p337
      %p339 = pneg %p338
      // Predicated region
      $region48: #{model_forward.10} parent=5 // pred_check
        _
      $region49: #{model_forward.10} parent=5 // pred_check_branch
        %341 = sbr.rel (%p338) target = $region51
      $region50: #{model_forward.10} parent=5 // pred_region
        %s342 = ssub.s32 %s9, 1
        %s343 = sand.u32 %s71, 1
        %s344 = sand.u32 %s71, 1
        %s345 = smul.addr %s344, 512
        %s346 = scalar_lea.vmem [#allocation3], %s345
        // Predicated region
        $region52: #{model_forward.10} parent=50 // pred_check
          %p347 = pneg %p84
        $region53: #{model_forward.10} parent=50 // pred_check_branch
          %349 = sbr.rel (%p347) target = $region55
        $region54: #{model_forward.10} parent=50 // pred_region
          _
        $region55: #{model_forward.10} parent=50 // pred_fallthru
          _
        %s350 = smul.u32 39, %s19
        %s351 = smul.u32 2, %s21
        %p352 = scmp.lt.s32.totalorder %s350, 38
        %s353 = scalar_select %p352, %s350, 38
        %p354 = scmp.lt.s32.totalorder %s351, 1
        %s355 = scalar_select %p354, %s351, 1
        %s356 = smul.addr %s353, 2
        %s357 = sadd.s32 %s355, %s356
        %s358 = smul.addr %s357, 4
        %s359 = scalar_lea.vmem %s0, %s358
        %p360 = pneg %p56
        %p361 = pneg %p53
        %s362 = sand.u32 %s71, 1
        %s363 = sand.u32 %s71, 1
        %s364 = smul.addr %s363, 512
        %s365 = scalar_lea.vmem [#allocation3], %s364
        %p366 = pneg %p84
        %p367 = pneg %p81
        %s368 = smul.u32 4, %s20
        %p369 = scmp.lt.s32.totalorder %s368, 7
        %s370 = scalar_select %p369, %s368, 7
        %s371 = scalar_lea.vmem %s2, %s370
        %p372 = pneg %p110
        %p373 = pneg %p107
        %p374 = pneg %p138
        %p375 = pneg %p135
        %s376 = sand.u32 %s125, 1
        %s377 = sand.u32 %s125, 1
        %s378 = smul.addr %s377, 1248
        %s379 = scalar_lea.vmem [#allocation4], %s378
        %s380 = smul.u32 39, %s19
        %s381 = smul.u32 2, %s21
        %p382 = scmp.lt.s32.totalorder %s380, 38
        %s383 = scalar_select %p382, %s380, 38
        %p384 = scmp.lt.s32.totalorder %s381, 1
        %s385 = scalar_select %p384, %s381, 1
        %s386 = smul.addr %s383, 2
        %s387 = sadd.s32 %s385, %s386
        %s388 = smul.addr %s387, 4
        %s389 = scalar_lea.vmem %s0, %s388
        %s390 = smul.u32 39, %s19
        %s391 = smul.u32 2, %s21
        %s392 = smul.u32 32, %s21
        %s393 = smul.u32 4, %s20
        %s394 = smul.u32 4, %s20
        %p395 = scmp.lt.s32.totalorder %s394, 7
        %s396 = scalar_select %p395, %s394, 7
        %s397 = scalar_lea.vmem %s2, %s396
        %s398 = smul.u32 4, %s20
        %s399 = smul.u32 39, %s19
        %s400 = smul.u32 4, %s20
        %p401 = scmp.eq.s32.totalorder %s21, 0
        // Predicated region
        $region56: #{model_forward.10} parent=50 // pred_check
          %p402 = pneg %p401
        $region57: #{model_forward.10} parent=50 // pred_check_branch
          %404 = sbr.rel (%p402) target = $region59
        $region58: #{model_forward.10} parent=50 // pred_region
          %405 = vst [vmem:[#allocation2] sm:$0xff] 0.0
          %406 = vst [vmem:[#allocation2 + $0x8] sm:$0xff] 0.0
          %407 = vst [vmem:[#allocation2 + $0x10] sm:$0xff] 0.0
          %408 = vst [vmem:[#allocation2 + $0x18] sm:$0xff] 0.0
          %409 = vst [vmem:[#allocation2 + $0x20] sm:$0xff] 0.0
          %410 = vst [vmem:[#allocation2 + $0x28] sm:$0xff] 0.0
          %411 = vst [vmem:[#allocation2 + $0x30] sm:$0xff] 0.0
          %412 = vst [vmem:[#allocation2 + $0x38] sm:$0xff] 0.0
          %413 = vst [vmem:[#allocation2 + $0x40] sm:$0xff] 0.0
          %414 = vst [vmem:[#allocation2 + $0x48] sm:$0xff] 0.0
          %415 = vst [vmem:[#allocation2 + $0x50] sm:$0xff] 0.0
          %416 = vst [vmem:[#allocation2 + $0x58] sm:$0xff] 0.0
          %417 = vst [vmem:[#allocation2 + $0x60] sm:$0xff] 0.0
          %418 = vst [vmem:[#allocation2 + $0x68] sm:$0xff] 0.0
          %419 = vst [vmem:[#allocation2 + $0x70] sm:$0xff] 0.0
          %420 = vst [vmem:[#allocation2 + $0x78] sm:$0xff] 0.0
          %421 = vst [vmem:[#allocation2 + $0x80] sm:$0xff] 0.0
          %422 = vst [vmem:[#allocation2 + $0x88] sm:$0xff] 0.0
          %423 = vst [vmem:[#allocation2 + $0x90] sm:$0xff] 0.0
          %424 = vst [vmem:[#allocation2 + $0x98] sm:$0xff] 0.0
          %425 = vst [vmem:[#allocation2 + $0xa0] sm:$0xff] 0.0
          %426 = vst [vmem:[#allocation2 + $0xa8] sm:$0xff] 0.0
          %427 = vst [vmem:[#allocation2 + $0xb0] sm:$0xff] 0.0
          %428 = vst [vmem:[#allocation2 + $0xb8] sm:$0xff] 0.0
          %429 = vst [vmem:[#allocation2 + $0xc0] sm:$0xff] 0.0
          %430 = vst [vmem:[#allocation2 + $0xc8] sm:$0xff] 0.0
          %431 = vst [vmem:[#allocation2 + $0xd0] sm:$0xff] 0.0
          %432 = vst [vmem:[#allocation2 + $0xd8] sm:$0xff] 0.0
          %433 = vst [vmem:[#allocation2 + $0xe0] sm:$0xff] 0.0
          %434 = vst [vmem:[#allocation2 + $0xe8] sm:$0xff] 0.0
          %435 = vst [vmem:[#allocation2 + $0xf0] sm:$0xff] 0.0
          %436 = vst [vmem:[#allocation2 + $0xf8] sm:$0xff] 0.0
          %437 = vst [vmem:[#allocation2 + $0x100] sm:$0xff] 0.0
          %438 = vst [vmem:[#allocation2 + $0x108] sm:$0xff] 0.0
          %439 = vst [vmem:[#allocation2 + $0x110] sm:$0xff] 0.0
          %440 = vst [vmem:[#allocation2 + $0x118] sm:$0xff] 0.0
          %441 = vst [vmem:[#allocation2 + $0x120] sm:$0xff] 0.0
          %442 = vst [vmem:[#allocation2 + $0x128] sm:$0xff] 0.0
          %443 = vst [vmem:[#allocation2 + $0x130] sm:$0xff] 0.0
          %444 = vst [vmem:[#allocation2 + $0x138] sm:$0xff] 0.0
          %445 = vst [vmem:[#allocation2 + $0x140] sm:$0xff] 0.0
          %446 = vst [vmem:[#allocation2 + $0x148] sm:$0xff] 0.0
          %447 = vst [vmem:[#allocation2 + $0x150] sm:$0xff] 0.0
          %448 = vst [vmem:[#allocation2 + $0x158] sm:$0xff] 0.0
          %449 = vst [vmem:[#allocation2 + $0x160] sm:$0xff] 0.0
          %450 = vst [vmem:[#allocation2 + $0x168] sm:$0xff] 0.0
          %451 = vst [vmem:[#allocation2 + $0x170] sm:$0xff] 0.0
          %452 = vst [vmem:[#allocation2 + $0x178] sm:$0xff] 0.0
          %453 = vst [vmem:[#allocation2 + $0x180] sm:$0xff] 0.0
          %454 = vst [vmem:[#allocation2 + $0x188] sm:$0xff] 0.0
          %455 = vst [vmem:[#allocation2 + $0x190] sm:$0xff] 0.0
          %456 = vst [vmem:[#allocation2 + $0x198] sm:$0xff] 0.0
          %457 = vst [vmem:[#allocation2 + $0x1a0] sm:$0xff] 0.0
          %458 = vst [vmem:[#allocation2 + $0x1a8] sm:$0xff] 0.0
          %459 = vst [vmem:[#allocation2 + $0x1b0] sm:$0xff] 0.0
          %460 = vst [vmem:[#allocation2 + $0x1b8] sm:$0xff] 0.0
          %461 = vst [vmem:[#allocation2 + $0x1c0] sm:$0xff] 0.0
          %462 = vst [vmem:[#allocation2 + $0x1c8] sm:$0xff] 0.0
          %463 = vst [vmem:[#allocation2 + $0x1d0] sm:$0xff] 0.0
          %464 = vst [vmem:[#allocation2 + $0x1d8] sm:$0xff] 0.0
          %465 = vst [vmem:[#allocation2 + $0x1e0] sm:$0xff] 0.0
          %466 = vst [vmem:[#allocation2 + $0x1e8] sm:$0xff] 0.0
          %467 = vst [vmem:[#allocation2 + $0x1f0] sm:$0xff] 0.0
          %468 = vst [vmem:[#allocation2 + $0x1f8] sm:$0xff] 0.0
          %469 = vst [vmem:[#allocation2 + $0x200] sm:$0xff] 0.0
          %470 = vst [vmem:[#allocation2 + $0x208] sm:$0xff] 0.0
          %471 = vst [vmem:[#allocation2 + $0x210] sm:$0xff] 0.0
          %472 = vst [vmem:[#allocation2 + $0x218] sm:$0xff] 0.0
          %473 = vst [vmem:[#allocation2 + $0x220] sm:$0xff] 0.0
          %474 = vst [vmem:[#allocation2 + $0x228] sm:$0xff] 0.0
          %475 = vst [vmem:[#allocation2 + $0x230] sm:$0xff] 0.0
          %476 = vst [vmem:[#allocation2 + $0x238] sm:$0xff] 0.0
          %477 = vst [vmem:[#allocation2 + $0x240] sm:$0xff] 0.0
          %478 = vst [vmem:[#allocation2 + $0x248] sm:$0xff] 0.0
          %479 = vst [vmem:[#allocation2 + $0x250] sm:$0xff] 0.0
          %480 = vst [vmem:[#allocation2 + $0x258] sm:$0xff] 0.0
          %481 = vst [vmem:[#allocation2 + $0x260] sm:$0xff] 0.0
          %482 = vst [vmem:[#allocation2 + $0x268] sm:$0xff] 0.0
          %483 = vst [vmem:[#allocation2 + $0x270] sm:$0xff] 0.0
          %484 = vst [vmem:[#allocation2 + $0x278] sm:$0xff] 0.0
          %485 = vst [vmem:[#allocation2 + $0x280] sm:$0xff] 0.0
          %486 = vst [vmem:[#allocation2 + $0x288] sm:$0xff] 0.0
          %487 = vst [vmem:[#allocation2 + $0x290] sm:$0xff] 0.0
          %488 = vst [vmem:[#allocation2 + $0x298] sm:$0xff] 0.0
          %489 = vst [vmem:[#allocation2 + $0x2a0] sm:$0xff] 0.0
          %490 = vst [vmem:[#allocation2 + $0x2a8] sm:$0xff] 0.0
          %491 = vst [vmem:[#allocation2 + $0x2b0] sm:$0xff] 0.0
          %492 = vst [vmem:[#allocation2 + $0x2b8] sm:$0xff] 0.0
          %493 = vst [vmem:[#allocation2 + $0x2c0] sm:$0xff] 0.0
          %494 = vst [vmem:[#allocation2 + $0x2c8] sm:$0xff] 0.0
          %495 = vst [vmem:[#allocation2 + $0x2d0] sm:$0xff] 0.0
          %496 = vst [vmem:[#allocation2 + $0x2d8] sm:$0xff] 0.0
          %497 = vst [vmem:[#allocation2 + $0x2e0] sm:$0xff] 0.0
          %498 = vst [vmem:[#allocation2 + $0x2e8] sm:$0xff] 0.0
          %499 = vst [vmem:[#allocation2 + $0x2f0] sm:$0xff] 0.0
          %500 = vst [vmem:[#allocation2 + $0x2f8] sm:$0xff] 0.0
          %501 = vst [vmem:[#allocation2 + $0x300] sm:$0xff] 0.0
          %502 = vst [vmem:[#allocation2 + $0x308] sm:$0xff] 0.0
          %503 = vst [vmem:[#allocation2 + $0x310] sm:$0xff] 0.0
          %504 = vst [vmem:[#allocation2 + $0x318] sm:$0xff] 0.0
          %505 = vst [vmem:[#allocation2 + $0x320] sm:$0xff] 0.0
          %506 = vst [vmem:[#allocation2 + $0x328] sm:$0xff] 0.0
          %507 = vst [vmem:[#allocation2 + $0x330] sm:$0xff] 0.0
          %508 = vst [vmem:[#allocation2 + $0x338] sm:$0xff] 0.0
          %509 = vst [vmem:[#allocation2 + $0x340] sm:$0xff] 0.0
          %510 = vst [vmem:[#allocation2 + $0x348] sm:$0xff] 0.0
          %511 = vst [vmem:[#allocation2 + $0x350] sm:$0xff] 0.0
          %512 = vst [vmem:[#allocation2 + $0x358] sm:$0xff] 0.0
          %513 = vst [vmem:[#allocation2 + $0x360] sm:$0xff] 0.0
          %514 = vst [vmem:[#allocation2 + $0x368] sm:$0xff] 0.0
          %515 = vst [vmem:[#allocation2 + $0x370] sm:$0xff] 0.0
          %516 = vst [vmem:[#allocation2 + $0x378] sm:$0xff] 0.0
          %517 = vst [vmem:[#allocation2 + $0x380] sm:$0xff] 0.0
          %518 = vst [vmem:[#allocation2 + $0x388] sm:$0xff] 0.0
          %519 = vst [vmem:[#allocation2 + $0x390] sm:$0xff] 0.0
          %520 = vst [vmem:[#allocation2 + $0x398] sm:$0xff] 0.0
          %521 = vst [vmem:[#allocation2 + $0x3a0] sm:$0xff] 0.0
          %522 = vst [vmem:[#allocation2 + $0x3a8] sm:$0xff] 0.0
          %523 = vst [vmem:[#allocation2 + $0x3b0] sm:$0xff] 0.0
          %524 = vst [vmem:[#allocation2 + $0x3b8] sm:$0xff] 0.0
          %525 = vst [vmem:[#allocation2 + $0x3c0] sm:$0xff] 0.0
          %526 = vst [vmem:[#allocation2 + $0x3c8] sm:$0xff] 0.0
          %527 = vst [vmem:[#allocation2 + $0x3d0] sm:$0xff] 0.0
          %528 = vst [vmem:[#allocation2 + $0x3d8] sm:$0xff] 0.0
          %529 = vst [vmem:[#allocation2 + $0x3e0] sm:$0xff] 0.0
          %530 = vst [vmem:[#allocation2 + $0x3e8] sm:$0xff] 0.0
          %531 = vst [vmem:[#allocation2 + $0x3f0] sm:$0xff] 0.0
          %532 = vst [vmem:[#allocation2 + $0x3f8] sm:$0xff] 0.0
          %533 = vst [vmem:[#allocation2 + $0x400] sm:$0xff] 0.0
          %534 = vst [vmem:[#allocation2 + $0x408] sm:$0xff] 0.0
          %535 = vst [vmem:[#allocation2 + $0x410] sm:$0xff] 0.0
          %536 = vst [vmem:[#allocation2 + $0x418] sm:$0xff] 0.0
          %537 = vst [vmem:[#allocation2 + $0x420] sm:$0xff] 0.0
          %538 = vst [vmem:[#allocation2 + $0x428] sm:$0xff] 0.0
          %539 = vst [vmem:[#allocation2 + $0x430] sm:$0xff] 0.0
          %540 = vst [vmem:[#allocation2 + $0x438] sm:$0xff] 0.0
          %541 = vst [vmem:[#allocation2 + $0x440] sm:$0xff] 0.0
          %542 = vst [vmem:[#allocation2 + $0x448] sm:$0xff] 0.0
          %543 = vst [vmem:[#allocation2 + $0x450] sm:$0xff] 0.0
          %544 = vst [vmem:[#allocation2 + $0x458] sm:$0xff] 0.0
          %545 = vst [vmem:[#allocation2 + $0x460] sm:$0xff] 0.0
          %546 = vst [vmem:[#allocation2 + $0x468] sm:$0xff] 0.0
          %547 = vst [vmem:[#allocation2 + $0x470] sm:$0xff] 0.0
          %548 = vst [vmem:[#allocation2 + $0x478] sm:$0xff] 0.0
          %549 = vst [vmem:[#allocation2 + $0x480] sm:$0xff] 0.0
          %550 = vst [vmem:[#allocation2 + $0x488] sm:$0xff] 0.0
          %551 = vst [vmem:[#allocation2 + $0x490] sm:$0xff] 0.0
          %552 = vst [vmem:[#allocation2 + $0x498] sm:$0xff] 0.0
          %553 = vst [vmem:[#allocation2 + $0x4a0] sm:$0xff] 0.0
          %554 = vst [vmem:[#allocation2 + $0x4a8] sm:$0xff] 0.0
          %555 = vst [vmem:[#allocation2 + $0x4b0] sm:$0xff] 0.0
          %556 = vst [vmem:[#allocation2 + $0x4b8] sm:$0xff] 0.0
          %557 = vst [vmem:[#allocation2 + $0x4c0] sm:$0x3] 0.0
          %558 = vst [vmem:[#allocation2 + $0x4c8] sm:$0x3] 0.0
          %559 = vst [vmem:[#allocation2 + $0x4d0] sm:$0x3] 0.0
          %560 = vst [vmem:[#allocation2 + $0x4d8] sm:$0x3] 0.0
        $region59: #{model_forward.10} parent=50 // pred_fallthru
          _
        %v561 = vld [vmem:[#allocation2] sm:$0xff]
        %v562 = vld [vmem:[#allocation2 + $0x8] sm:$0xff]
        %v563 = vld [vmem:[#allocation2 + $0x10] sm:$0xff]
        %v564 = vld [vmem:[#allocation2 + $0x18] sm:$0xff]
        %v565 = vld [vmem:[#allocation2 + $0x20] sm:$0xff]
        %v566 = vld [vmem:[#allocation2 + $0x28] sm:$0xff]
        %v567 = vld [vmem:[#allocation2 + $0x30] sm:$0xff]
        %v568 = vld [vmem:[#allocation2 + $0x38] sm:$0xff]
        %v569 = vld [vmem:[#allocation2 + $0x40] sm:$0xff]
        %v570 = vld [vmem:[#allocation2 + $0x48] sm:$0xff]
        %v571 = vld [vmem:[#allocation2 + $0x50] sm:$0xff]
        %v572 = vld [vmem:[#allocation2 + $0x58] sm:$0xff]
        %v573 = vld [vmem:[#allocation2 + $0x60] sm:$0xff]
        %v574 = vld [vmem:[#allocation2 + $0x68] sm:$0xff]
        %v575 = vld [vmem:[#allocation2 + $0x70] sm:$0xff]
        %v576 = vld [vmem:[#allocation2 + $0x78] sm:$0xff]
        %v577 = vld [vmem:[#allocation2 + $0x80] sm:$0xff]
        %v578 = vld [vmem:[#allocation2 + $0x88] sm:$0xff]
        %v579 = vld [vmem:[#allocation2 + $0x90] sm:$0xff]
        %v580 = vld [vmem:[#allocation2 + $0x98] sm:$0xff]
        %v581 = vld [vmem:[#allocation2 + $0xa0] sm:$0xff]
        %v582 = vld [vmem:[#allocation2 + $0xa8] sm:$0xff]
        %v583 = vld [vmem:[#allocation2 + $0xb0] sm:$0xff]
        %v584 = vld [vmem:[#allocation2 + $0xb8] sm:$0xff]
        %v585 = vld [vmem:[#allocation2 + $0xc0] sm:$0xff]
        %v586 = vld [vmem:[#allocation2 + $0xc8] sm:$0xff]
        %v587 = vld [vmem:[#allocation2 + $0xd0] sm:$0xff]
        %v588 = vld [vmem:[#allocation2 + $0xd8] sm:$0xff]
        %v589 = vld [vmem:[#allocation2 + $0xe0] sm:$0xff]
        %v590 = vld [vmem:[#allocation2 + $0xe8] sm:$0xff]
        %v591 = vld [vmem:[#allocation2 + $0xf0] sm:$0xff]
        %v592 = vld [vmem:[#allocation2 + $0xf8] sm:$0xff]
        %v593 = vld [vmem:[#allocation2 + $0x100] sm:$0xff]
        %v594 = vld [vmem:[#allocation2 + $0x108] sm:$0xff]
        %v595 = vld [vmem:[#allocation2 + $0x110] sm:$0xff]
        %v596 = vld [vmem:[#allocation2 + $0x118] sm:$0xff]
        %v597 = vld [vmem:[#allocation2 + $0x120] sm:$0xff]
        %v598 = vld [vmem:[#allocation2 + $0x128] sm:$0xff]
        %v599 = vld [vmem:[#allocation2 + $0x130] sm:$0xff]
        %v600 = vld [vmem:[#allocation2 + $0x138] sm:$0xff]
        %v601 = vld [vmem:[#allocation2 + $0x140] sm:$0xff]
        %v602 = vld [vmem:[#allocation2 + $0x148] sm:$0xff]
        %v603 = vld [vmem:[#allocation2 + $0x150] sm:$0xff]
        %v604 = vld [vmem:[#allocation2 + $0x158] sm:$0xff]
        %v605 = vld [vmem:[#allocation2 + $0x160] sm:$0xff]
        %v606 = vld [vmem:[#allocation2 + $0x168] sm:$0xff]
        %v607 = vld [vmem:[#allocation2 + $0x170] sm:$0xff]
        %v608 = vld [vmem:[#allocation2 + $0x178] sm:$0xff]
        %v609 = vld [vmem:[#allocation2 + $0x180] sm:$0xff]
        %v610 = vld [vmem:[#allocation2 + $0x188] sm:$0xff]
        %v611 = vld [vmem:[#allocation2 + $0x190] sm:$0xff]
        %v612 = vld [vmem:[#allocation2 + $0x198] sm:$0xff]
        %v613 = vld [vmem:[#allocation2 + $0x1a0] sm:$0xff]
        %v614 = vld [vmem:[#allocation2 + $0x1a8] sm:$0xff]
        %v615 = vld [vmem:[#allocation2 + $0x1b0] sm:$0xff]
        %v616 = vld [vmem:[#allocation2 + $0x1b8] sm:$0xff]
        %v617 = vld [vmem:[#allocation2 + $0x1c0] sm:$0xff]
        %v618 = vld [vmem:[#allocation2 + $0x1c8] sm:$0xff]
        %v619 = vld [vmem:[#allocation2 + $0x1d0] sm:$0xff]
        %v620 = vld [vmem:[#allocation2 + $0x1d8] sm:$0xff]
        %v621 = vld [vmem:[#allocation2 + $0x1e0] sm:$0xff]
        %v622 = vld [vmem:[#allocation2 + $0x1e8] sm:$0xff]
        %v623 = vld [vmem:[#allocation2 + $0x1f0] sm:$0xff]
        %v624 = vld [vmem:[#allocation2 + $0x1f8] sm:$0xff]
        %v625 = vld [vmem:[#allocation2 + $0x200] sm:$0xff]
        %v626 = vld [vmem:[#allocation2 + $0x208] sm:$0xff]
        %v627 = vld [vmem:[#allocation2 + $0x210] sm:$0xff]
        %v628 = vld [vmem:[#allocation2 + $0x218] sm:$0xff]
        %v629 = vld [vmem:[#allocation2 + $0x220] sm:$0xff]
        %v630 = vld [vmem:[#allocation2 + $0x228] sm:$0xff]
        %v631 = vld [vmem:[#allocation2 + $0x230] sm:$0xff]
        %v632 = vld [vmem:[#allocation2 + $0x238] sm:$0xff]
        %v633 = vld [vmem:[#allocation2 + $0x240] sm:$0xff]
        %v634 = vld [vmem:[#allocation2 + $0x248] sm:$0xff]
        %v635 = vld [vmem:[#allocation2 + $0x250] sm:$0xff]
        %v636 = vld [vmem:[#allocation2 + $0x258] sm:$0xff]
        %v637 = vld [vmem:[#allocation2 + $0x260] sm:$0xff]
        %v638 = vld [vmem:[#allocation2 + $0x268] sm:$0xff]
        %v639 = vld [vmem:[#allocation2 + $0x270] sm:$0xff]
        %v640 = vld [vmem:[#allocation2 + $0x278] sm:$0xff]
        %v641 = vld [vmem:[#allocation2 + $0x280] sm:$0xff]
        %v642 = vld [vmem:[#allocation2 + $0x288] sm:$0xff]
        %v643 = vld [vmem:[#allocation2 + $0x290] sm:$0xff]
        %v644 = vld [vmem:[#allocation2 + $0x298] sm:$0xff]
        %v645 = vld [vmem:[#allocation2 + $0x2a0] sm:$0xff]
        %v646 = vld [vmem:[#allocation2 + $0x2a8] sm:$0xff]
        %v647 = vld [vmem:[#allocation2 + $0x2b0] sm:$0xff]
        %v648 = vld [vmem:[#allocation2 + $0x2b8] sm:$0xff]
        %v649 = vld [vmem:[#allocation2 + $0x2c0] sm:$0xff]
        %v650 = vld [vmem:[#allocation2 + $0x2c8] sm:$0xff]
        %v651 = vld [vmem:[#allocation2 + $0x2d0] sm:$0xff]
        %v652 = vld [vmem:[#allocation2 + $0x2d8] sm:$0xff]
        %v653 = vld [vmem:[#allocation2 + $0x2e0] sm:$0xff]
        %v654 = vld [vmem:[#allocation2 + $0x2e8] sm:$0xff]
        %v655 = vld [vmem:[#allocation2 + $0x2f0] sm:$0xff]
        %v656 = vld [vmem:[#allocation2 + $0x2f8] sm:$0xff]
        %v657 = vld [vmem:[#allocation2 + $0x300] sm:$0xff]
        %v658 = vld [vmem:[#allocation2 + $0x308] sm:$0xff]
        %v659 = vld [vmem:[#allocation2 + $0x310] sm:$0xff]
        %v660 = vld [vmem:[#allocation2 + $0x318] sm:$0xff]
        %v661 = vld [vmem:[#allocation2 + $0x320] sm:$0xff]
        %v662 = vld [vmem:[#allocation2 + $0x328] sm:$0xff]
        %v663 = vld [vmem:[#allocation2 + $0x330] sm:$0xff]
        %v664 = vld [vmem:[#allocation2 + $0x338] sm:$0xff]
        %v665 = vld [vmem:[#allocation2 + $0x340] sm:$0xff]
        %v666 = vld [vmem:[#allocation2 + $0x348] sm:$0xff]
        %v667 = vld [vmem:[#allocation2 + $0x350] sm:$0xff]
        %v668 = vld [vmem:[#allocation2 + $0x358] sm:$0xff]
        %v669 = vld [vmem:[#allocation2 + $0x360] sm:$0xff]
        %v670 = vld [vmem:[#allocation2 + $0x368] sm:$0xff]
        %v671 = vld [vmem:[#allocation2 + $0x370] sm:$0xff]
        %v672 = vld [vmem:[#allocation2 + $0x378] sm:$0xff]
        %v673 = vld [vmem:[#allocation2 + $0x380] sm:$0xff]
        %v674 = vld [vmem:[#allocation2 + $0x388] sm:$0xff]
        %v675 = vld [vmem:[#allocation2 + $0x390] sm:$0xff]
        %v676 = vld [vmem:[#allocation2 + $0x398] sm:$0xff]
        %v677 = vld [vmem:[#allocation2 + $0x3a0] sm:$0xff]
        %v678 = vld [vmem:[#allocation2 + $0x3a8] sm:$0xff]
        %v679 = vld [vmem:[#allocation2 + $0x3b0] sm:$0xff]
        %v680 = vld [vmem:[#allocation2 + $0x3b8] sm:$0xff]
        %v681 = vld [vmem:[#allocation2 + $0x3c0] sm:$0xff]
        %v682 = vld [vmem:[#allocation2 + $0x3c8] sm:$0xff]
        %v683 = vld [vmem:[#allocation2 + $0x3d0] sm:$0xff]
        %v684 = vld [vmem:[#allocation2 + $0x3d8] sm:$0xff]
        %v685 = vld [vmem:[#allocation2 + $0x3e0] sm:$0xff]
        %v686 = vld [vmem:[#allocation2 + $0x3e8] sm:$0xff]
        %v687 = vld [vmem:[#allocation2 + $0x3f0] sm:$0xff]
        %v688 = vld [vmem:[#allocation2 + $0x3f8] sm:$0xff]
        %v689 = vld [vmem:[#allocation2 + $0x400] sm:$0xff]
        %v690 = vld [vmem:[#allocation2 + $0x408] sm:$0xff]
        %v691 = vld [vmem:[#allocation2 + $0x410] sm:$0xff]
        %v692 = vld [vmem:[#allocation2 + $0x418] sm:$0xff]
        %v693 = vld [vmem:[#allocation2 + $0x420] sm:$0xff]
        %v694 = vld [vmem:[#allocation2 + $0x428] sm:$0xff]
        %v695 = vld [vmem:[#allocation2 + $0x430] sm:$0xff]
        %v696 = vld [vmem:[#allocation2 + $0x438] sm:$0xff]
        %v697 = vld [vmem:[#allocation2 + $0x440] sm:$0xff]
        %v698 = vld [vmem:[#allocation2 + $0x448] sm:$0xff]
        %v699 = vld [vmem:[#allocation2 + $0x450] sm:$0xff]
        %v700 = vld [vmem:[#allocation2 + $0x458] sm:$0xff]
        %v701 = vld [vmem:[#allocation2 + $0x460] sm:$0xff]
        %v702 = vld [vmem:[#allocation2 + $0x468] sm:$0xff]
        %v703 = vld [vmem:[#allocation2 + $0x470] sm:$0xff]
        %v704 = vld [vmem:[#allocation2 + $0x478] sm:$0xff]
        %v705 = vld [vmem:[#allocation2 + $0x480] sm:$0xff]
        %v706 = vld [vmem:[#allocation2 + $0x488] sm:$0xff]
        %v707 = vld [vmem:[#allocation2 + $0x490] sm:$0xff]
        %v708 = vld [vmem:[#allocation2 + $0x498] sm:$0xff]
        %v709 = vld [vmem:[#allocation2 + $0x4a0] sm:$0xff]
        %v710 = vld [vmem:[#allocation2 + $0x4a8] sm:$0xff]
        %v711 = vld [vmem:[#allocation2 + $0x4b0] sm:$0xff]
        %v712 = vld [vmem:[#allocation2 + $0x4b8] sm:$0xff]
        %v713 = vld [vmem:[#allocation2 + $0x4c0] sm:$0x3]
        %v714 = vld [vmem:[#allocation2 + $0x4c8] sm:$0x3]
        %v715 = vld [vmem:[#allocation2 + $0x4d0] sm:$0x3]
        %v716 = vld [vmem:[#allocation2 + $0x4d8] sm:$0x3]
        %v717 = vld [vmem:[%s389] sm:$0xff]
        %v718 = vld [vmem:[%s389 + $0x8] sm:$0xff]
        %v719 = vld [vmem:[%s389 + $0x10] sm:$0xff]
        %v720 = vld [vmem:[%s389 + $0x18] sm:$0xff]
        %v721 = vld [vmem:[%s389 + $0x20] sm:$0xff]
        %v722 = vld [vmem:[%s389 + $0x28] sm:$0xff]
        %v723 = vld [vmem:[%s389 + $0x30] sm:$0xff]
        %v724 = vld [vmem:[%s389 + $0x38] sm:$0xff]
        %v725 = vld [vmem:[%s389 + $0x40] sm:$0xff]
        %v726 = vld [vmem:[%s389 + $0x48] sm:$0xff]
        %v727 = vld [vmem:[%s389 + $0x50] sm:$0xff]
        %v728 = vld [vmem:[%s389 + $0x58] sm:$0xff]
        %v729 = vld [vmem:[%s389 + $0x60] sm:$0xff]
        %v730 = vld [vmem:[%s389 + $0x68] sm:$0xff]
        %v731 = vld [vmem:[%s389 + $0x70] sm:$0xff]
        %v732 = vld [vmem:[%s389 + $0x78] sm:$0xff]
        %v733 = vld [vmem:[%s389 + $0x80] sm:$0xff]
        %v734 = vld [vmem:[%s389 + $0x88] sm:$0xff]
        %v735 = vld [vmem:[%s389 + $0x90] sm:$0xff]
        %v736 = vld [vmem:[%s389 + $0x98] sm:$0xff]
        %v737 = vld [vmem:[%s389 + $0xa0] sm:$0xff]
        %v738 = vld [vmem:[%s389 + $0xa8] sm:$0xff]
        %v739 = vld [vmem:[%s389 + $0xb0] sm:$0xff]
        %v740 = vld [vmem:[%s389 + $0xb8] sm:$0xff]
        %v741 = vld [vmem:[%s389 + $0xc0] sm:$0xff]
        %v742 = vld [vmem:[%s389 + $0xc8] sm:$0xff]
        %v743 = vld [vmem:[%s389 + $0xd0] sm:$0xff]
        %v744 = vld [vmem:[%s389 + $0xd8] sm:$0xff]
        %v745 = vld [vmem:[%s389 + $0xe0] sm:$0xff]
        %v746 = vld [vmem:[%s389 + $0xe8] sm:$0xff]
        %v747 = vld [vmem:[%s389 + $0xf0] sm:$0xff]
        %v748 = vld [vmem:[%s389 + $0xf8] sm:$0xff]
        %v749 = vld [vmem:[%s389 + $0x100] sm:$0xff]
        %v750 = vld [vmem:[%s389 + $0x108] sm:$0xff]
        %v751 = vld [vmem:[%s389 + $0x110] sm:$0xff]
        %v752 = vld [vmem:[%s389 + $0x118] sm:$0xff]
        %v753 = vld [vmem:[%s389 + $0x120] sm:$0xff]
        %v754 = vld [vmem:[%s389 + $0x128] sm:$0xff]
        %v755 = vld [vmem:[%s389 + $0x130] sm:$0x11]
        %v756 = vld [vmem:[%s346] sm:$0xff]
        %v757 = vld [vmem:[%s346 + $0x8] sm:$0xff]
        %v758 = vld [vmem:[%s346 + $0x10] sm:$0xff]
        %v759 = vld [vmem:[%s346 + $0x18] sm:$0xff]
        %v760 = vld [vmem:[%s346 + $0x20] sm:$0xff]
        %v761 = vld [vmem:[%s346 + $0x28] sm:$0xff]
        %v762 = vld [vmem:[%s346 + $0x30] sm:$0xff]
        %v763 = vld [vmem:[%s346 + $0x38] sm:$0xff]
        %v764 = vld [vmem:[%s346 + $0x40] sm:$0xff]
        %v765 = vld [vmem:[%s346 + $0x48] sm:$0xff]
        %v766 = vld [vmem:[%s346 + $0x50] sm:$0xff]
        %v767 = vld [vmem:[%s346 + $0x58] sm:$0xff]
        %v768 = vld [vmem:[%s346 + $0x60] sm:$0xff]
        %v769 = vld [vmem:[%s346 + $0x68] sm:$0xff]
        %v770 = vld [vmem:[%s346 + $0x70] sm:$0xff]
        %v771 = vld [vmem:[%s346 + $0x78] sm:$0xff]
        %v772 = vld [vmem:[%s346 + $0x80] sm:$0xff]
        %v773 = vld [vmem:[%s346 + $0x88] sm:$0xff]
        %v774 = vld [vmem:[%s346 + $0x90] sm:$0xff]
        %v775 = vld [vmem:[%s346 + $0x98] sm:$0xff]
        %v776 = vld [vmem:[%s346 + $0xa0] sm:$0xff]
        %v777 = vld [vmem:[%s346 + $0xa8] sm:$0xff]
        %v778 = vld [vmem:[%s346 + $0xb0] sm:$0xff]
        %v779 = vld [vmem:[%s346 + $0xb8] sm:$0xff]
        %v780 = vld [vmem:[%s346 + $0xc0] sm:$0xff]
        %v781 = vld [vmem:[%s346 + $0xc8] sm:$0xff]
        %v782 = vld [vmem:[%s346 + $0xd0] sm:$0xff]
        %v783 = vld [vmem:[%s346 + $0xd8] sm:$0xff]
        %v784 = vld [vmem:[%s346 + $0xe0] sm:$0xff]
        %v785 = vld [vmem:[%s346 + $0xe8] sm:$0xff]
        %v786 = vld [vmem:[%s346 + $0xf0] sm:$0xff]
        %v787 = vld [vmem:[%s346 + $0xf8] sm:$0xff]
        %v788 = vld [vmem:[%s346 + $0x100] sm:$0xff]
        %v789 = vld [vmem:[%s346 + $0x108] sm:$0xff]
        %v790 = vld [vmem:[%s346 + $0x110] sm:$0xff]
        %v791 = vld [vmem:[%s346 + $0x118] sm:$0xff]
        %v792 = vld [vmem:[%s346 + $0x120] sm:$0xff]
        %v793 = vld [vmem:[%s346 + $0x128] sm:$0xff]
        %v794 = vld [vmem:[%s346 + $0x130] sm:$0xff]
        %v795 = vld [vmem:[%s346 + $0x138] sm:$0xff]
        %v796 = vld [vmem:[%s346 + $0x140] sm:$0xff]
        %v797 = vld [vmem:[%s346 + $0x148] sm:$0xff]
        %v798 = vld [vmem:[%s346 + $0x150] sm:$0xff]
        %v799 = vld [vmem:[%s346 + $0x158] sm:$0xff]
        %v800 = vld [vmem:[%s346 + $0x160] sm:$0xff]
        %v801 = vld [vmem:[%s346 + $0x168] sm:$0xff]
        %v802 = vld [vmem:[%s346 + $0x170] sm:$0xff]
        %v803 = vld [vmem:[%s346 + $0x178] sm:$0xff]
        %v804 = vld [vmem:[%s346 + $0x180] sm:$0xff]
        %v805 = vld [vmem:[%s346 + $0x188] sm:$0xff]
        %v806 = vld [vmem:[%s346 + $0x190] sm:$0xff]
        %v807 = vld [vmem:[%s346 + $0x198] sm:$0xff]
        %v808 = vld [vmem:[%s346 + $0x1a0] sm:$0xff]
        %v809 = vld [vmem:[%s346 + $0x1a8] sm:$0xff]
        %v810 = vld [vmem:[%s346 + $0x1b0] sm:$0xff]
        %v811 = vld [vmem:[%s346 + $0x1b8] sm:$0xff]
        %v812 = vld [vmem:[%s346 + $0x1c0] sm:$0xff]
        %v813 = vld [vmem:[%s346 + $0x1c8] sm:$0xff]
        %v814 = vld [vmem:[%s346 + $0x1d0] sm:$0xff]
        %v815 = vld [vmem:[%s346 + $0x1d8] sm:$0xff]
        %v816 = vld [vmem:[%s346 + $0x1e0] sm:$0xff]
        %v817 = vld [vmem:[%s346 + $0x1e8] sm:$0xff]
        %v818 = vld [vmem:[%s346 + $0x1f0] sm:$0xff]
        %v819 = vld [vmem:[%s346 + $0x1f8] sm:$0xff]
        %v859 = vunpack.c.l.b16 %v717
        %v860 = vunpack.c.h.b16 %v717
        %v861 = vunpack.c.l.b16 %v718
        %v862 = vunpack.c.h.b16 %v718
        %v863 = vunpack.c.l.b16 %v719
        %v864 = vunpack.c.h.b16 %v719
        %v865 = vunpack.c.l.b16 %v720
        %v866 = vunpack.c.h.b16 %v720
        %v867 = vunpack.c.l.b16 %v721
        %v868 = vunpack.c.h.b16 %v721
        %v869 = vunpack.c.l.b16 %v722
        %v870 = vunpack.c.h.b16 %v722
        %v871 = vunpack.c.l.b16 %v723
        %v872 = vunpack.c.h.b16 %v723
        %v873 = vunpack.c.l.b16 %v724
        %v874 = vunpack.c.h.b16 %v724
        %v875 = vunpack.c.l.b16 %v725
        %v876 = vunpack.c.h.b16 %v725
        %v877 = vunpack.c.l.b16 %v726
        %v878 = vunpack.c.h.b16 %v726
        %v879 = vunpack.c.l.b16 %v727
        %v880 = vunpack.c.h.b16 %v727
        %v881 = vunpack.c.l.b16 %v728
        %v882 = vunpack.c.h.b16 %v728
        %v883 = vunpack.c.l.b16 %v729
        %v884 = vunpack.c.h.b16 %v729
        %v885 = vunpack.c.l.b16 %v730
        %v886 = vunpack.c.h.b16 %v730
        %v887 = vunpack.c.l.b16 %v731
        %v888 = vunpack.c.h.b16 %v731
        %v889 = vunpack.c.l.b16 %v732
        %v890 = vunpack.c.h.b16 %v732
        %v891 = vunpack.c.l.b16 %v733
        %v892 = vunpack.c.h.b16 %v733
        %v893 = vunpack.c.l.b16 %v734
        %v894 = vunpack.c.h.b16 %v734
        %v895 = vunpack.c.l.b16 %v735
        %v896 = vunpack.c.h.b16 %v735
        %v897 = vunpack.c.l.b16 %v736
        %v898 = vunpack.c.h.b16 %v736
        %v899 = vunpack.c.l.b16 %v737
        %v900 = vunpack.c.h.b16 %v737
        %v901 = vunpack.c.l.b16 %v738
        %v902 = vunpack.c.h.b16 %v738
        %v903 = vunpack.c.l.b16 %v739
        %v904 = vunpack.c.h.b16 %v739
        %v905 = vunpack.c.l.b16 %v740
        %v906 = vunpack.c.h.b16 %v740
        %v907 = vunpack.c.l.b16 %v741
        %v908 = vunpack.c.h.b16 %v741
        %v909 = vunpack.c.l.b16 %v742
        %v910 = vunpack.c.h.b16 %v742
        %v911 = vunpack.c.l.b16 %v743
        %v912 = vunpack.c.h.b16 %v743
        %v913 = vunpack.c.l.b16 %v744
        %v914 = vunpack.c.h.b16 %v744
        %v915 = vunpack.c.l.b16 %v745
        %v916 = vunpack.c.h.b16 %v745
        %v917 = vunpack.c.l.b16 %v746
        %v918 = vunpack.c.h.b16 %v746
        %v919 = vunpack.c.l.b16 %v747
        %v920 = vunpack.c.h.b16 %v747
        %v921 = vunpack.c.l.b16 %v748
        %v922 = vunpack.c.h.b16 %v748
        %v923 = vunpack.c.l.b16 %v749
        %v924 = vunpack.c.h.b16 %v749
        %v925 = vunpack.c.l.b16 %v750
        %v926 = vunpack.c.h.b16 %v750
        %v927 = vunpack.c.l.b16 %v751
        %v928 = vunpack.c.h.b16 %v751
        %v929 = vunpack.c.l.b16 %v752
        %v930 = vunpack.c.h.b16 %v752
        %v931 = vunpack.c.l.b16 %v753
        %v932 = vunpack.c.h.b16 %v753
        %v933 = vunpack.c.l.b16 %v754
        %v934 = vunpack.c.h.b16 %v754
        %v935 = vunpack.c.l.b16 %v755
        %v936 = vunpack.c.h.b16 %v755
        %v937 = vpack.c.b16 %v861, %v859
        %v938 = vpack.c.b16 %v862, %v860
        %v939 = vpack.c.b16 %v865, %v863
        %v940 = vpack.c.b16 %v866, %v864
        %v941 = vpack.c.b16 %v869, %v867
        %v942 = vpack.c.b16 %v870, %v868
        %v943 = vpack.c.b16 %v873, %v871
        %v944 = vpack.c.b16 %v874, %v872
        %v945 = vpack.c.b16 %v877, %v875
        %v946 = vpack.c.b16 %v878, %v876
        %v947 = vpack.c.b16 %v881, %v879
        %v948 = vpack.c.b16 %v882, %v880
        %v949 = vpack.c.b16 %v885, %v883
        %v950 = vpack.c.b16 %v886, %v884
        %v951 = vpack.c.b16 %v889, %v887
        %v952 = vpack.c.b16 %v890, %v888
        %v953 = vpack.c.b16 %v893, %v891
        %v954 = vpack.c.b16 %v894, %v892
        %v955 = vpack.c.b16 %v897, %v895
        %v956 = vpack.c.b16 %v898, %v896
        %v957 = vpack.c.b16 %v901, %v899
        %v958 = vpack.c.b16 %v902, %v900
        %v959 = vpack.c.b16 %v905, %v903
        %v960 = vpack.c.b16 %v906, %v904
        %v961 = vpack.c.b16 %v909, %v907
        %v962 = vpack.c.b16 %v910, %v908
        %v963 = vpack.c.b16 %v913, %v911
        %v964 = vpack.c.b16 %v914, %v912
        %v965 = vpack.c.b16 %v917, %v915
        %v966 = vpack.c.b16 %v918, %v916
        %v967 = vpack.c.b16 %v921, %v919
        %v968 = vpack.c.b16 %v922, %v920
        %v969 = vpack.c.b16 %v925, %v923
        %v970 = vpack.c.b16 %v926, %v924
        %v971 = vpack.c.b16 %v929, %v927
        %v972 = vpack.c.b16 %v930, %v928
        %v973 = vpack.c.b16 %v933, %v931
        %v974 = vpack.c.b16 %v934, %v932
        %v975 = vpack.c.b16 %v935, %v935
        %v976 = vpack.c.b16 %v936, %v936
        %v1081 = vunpack.c.l.b16 %v756
        %v1082 = vunpack.c.h.b16 %v756
        %v1083 = vunpack.c.l.b16 %v757
        %v1084 = vunpack.c.h.b16 %v757
        %v1085 = vunpack.c.l.b16 %v758
        %v1086 = vunpack.c.h.b16 %v758
        %v1087 = vunpack.c.l.b16 %v759
        %v1088 = vunpack.c.h.b16 %v759
        %v1089 = vunpack.c.l.b16 %v760
        %v1090 = vunpack.c.h.b16 %v760
        %v1091 = vunpack.c.l.b16 %v761
        %v1092 = vunpack.c.h.b16 %v761
        %v1093 = vunpack.c.l.b16 %v762
        %v1094 = vunpack.c.h.b16 %v762
        %v1095 = vunpack.c.l.b16 %v763
        %v1096 = vunpack.c.h.b16 %v763
        %v1097 = vunpack.c.l.b16 %v764
        %v1098 = vunpack.c.h.b16 %v764
        %v1099 = vunpack.c.l.b16 %v765
        %v1100 = vunpack.c.h.b16 %v765
        %v1101 = vunpack.c.l.b16 %v766
        %v1102 = vunpack.c.h.b16 %v766
        %v1103 = vunpack.c.l.b16 %v767
        %v1104 = vunpack.c.h.b16 %v767
        %v1105 = vunpack.c.l.b16 %v768
        %v1106 = vunpack.c.h.b16 %v768
        %v1107 = vunpack.c.l.b16 %v769
        %v1108 = vunpack.c.h.b16 %v769
        %v1109 = vunpack.c.l.b16 %v770
        %v1110 = vunpack.c.h.b16 %v770
        %v1111 = vunpack.c.l.b16 %v771
        %v1112 = vunpack.c.h.b16 %v771
        %v1113 = vunpack.c.l.b16 %v772
        %v1114 = vunpack.c.h.b16 %v772
        %v1115 = vunpack.c.l.b16 %v773
        %v1116 = vunpack.c.h.b16 %v773
        %v1117 = vunpack.c.l.b16 %v774
        %v1118 = vunpack.c.h.b16 %v774
        %v1119 = vunpack.c.l.b16 %v775
        %v1120 = vunpack.c.h.b16 %v775
        %v1121 = vunpack.c.l.b16 %v776
        %v1122 = vunpack.c.h.b16 %v776
        %v1123 = vunpack.c.l.b16 %v777
        %v1124 = vunpack.c.h.b16 %v777
        %v1125 = vunpack.c.l.b16 %v778
        %v1126 = vunpack.c.h.b16 %v778
        %v1127 = vunpack.c.l.b16 %v779
        %v1128 = vunpack.c.h.b16 %v779
        %v1129 = vunpack.c.l.b16 %v780
        %v1130 = vunpack.c.h.b16 %v780
        %v1131 = vunpack.c.l.b16 %v781
        %v1132 = vunpack.c.h.b16 %v781
        %v1133 = vunpack.c.l.b16 %v782
        %v1134 = vunpack.c.h.b16 %v782
        %v1135 = vunpack.c.l.b16 %v783
        %v1136 = vunpack.c.h.b16 %v783
        %v1137 = vunpack.c.l.b16 %v784
        %v1138 = vunpack.c.h.b16 %v784
        %v1139 = vunpack.c.l.b16 %v785
        %v1140 = vunpack.c.h.b16 %v785
        %v1141 = vunpack.c.l.b16 %v786
        %v1142 = vunpack.c.h.b16 %v786
        %v1143 = vunpack.c.l.b16 %v787
        %v1144 = vunpack.c.h.b16 %v787
        %v1145 = vunpack.c.l.b16 %v788
        %v1146 = vunpack.c.h.b16 %v788
        %v1147 = vunpack.c.l.b16 %v789
        %v1148 = vunpack.c.h.b16 %v789
        %v1149 = vunpack.c.l.b16 %v790
        %v1150 = vunpack.c.h.b16 %v790
        %v1151 = vunpack.c.l.b16 %v791
        %v1152 = vunpack.c.h.b16 %v791
        %v1153 = vunpack.c.l.b16 %v792
        %v1154 = vunpack.c.h.b16 %v792
        %v1155 = vunpack.c.l.b16 %v793
        %v1156 = vunpack.c.h.b16 %v793
        %v1157 = vunpack.c.l.b16 %v794
        %v1158 = vunpack.c.h.b16 %v794
        %v1159 = vunpack.c.l.b16 %v795
        %v1160 = vunpack.c.h.b16 %v795
        %v1161 = vunpack.c.l.b16 %v796
        %v1162 = vunpack.c.h.b16 %v796
        %v1163 = vunpack.c.l.b16 %v797
        %v1164 = vunpack.c.h.b16 %v797
        %v1165 = vunpack.c.l.b16 %v798
        %v1166 = vunpack.c.h.b16 %v798
        %v1167 = vunpack.c.l.b16 %v799
        %v1168 = vunpack.c.h.b16 %v799
        %v1169 = vunpack.c.l.b16 %v800
        %v1170 = vunpack.c.h.b16 %v800
        %v1171 = vunpack.c.l.b16 %v801
        %v1172 = vunpack.c.h.b16 %v801
        %v1173 = vunpack.c.l.b16 %v802
        %v1174 = vunpack.c.h.b16 %v802
        %v1175 = vunpack.c.l.b16 %v803
        %v1176 = vunpack.c.h.b16 %v803
        %v1177 = vunpack.c.l.b16 %v804
        %v1178 = vunpack.c.h.b16 %v804
        %v1179 = vunpack.c.l.b16 %v805
        %v1180 = vunpack.c.h.b16 %v805
        %v1181 = vunpack.c.l.b16 %v806
        %v1182 = vunpack.c.h.b16 %v806
        %v1183 = vunpack.c.l.b16 %v807
        %v1184 = vunpack.c.h.b16 %v807
        %v1185 = vunpack.c.l.b16 %v808
        %v1186 = vunpack.c.h.b16 %v808
        %v1187 = vunpack.c.l.b16 %v809
        %v1188 = vunpack.c.h.b16 %v809
        %v1189 = vunpack.c.l.b16 %v810
        %v1190 = vunpack.c.h.b16 %v810
        %v1191 = vunpack.c.l.b16 %v811
        %v1192 = vunpack.c.h.b16 %v811
        %v1193 = vunpack.c.l.b16 %v812
        %v1194 = vunpack.c.h.b16 %v812
        %v1195 = vunpack.c.l.b16 %v813
        %v1196 = vunpack.c.h.b16 %v813
        %v1197 = vunpack.c.l.b16 %v814
        %v1198 = vunpack.c.h.b16 %v814
        %v1199 = vunpack.c.l.b16 %v815
        %v1200 = vunpack.c.h.b16 %v815
        %v1201 = vunpack.c.l.b16 %v816
        %v1202 = vunpack.c.h.b16 %v816
        %v1203 = vunpack.c.l.b16 %v817
        %v1204 = vunpack.c.h.b16 %v817
        %v1205 = vunpack.c.l.b16 %v818
        %v1206 = vunpack.c.h.b16 %v818
        %v1207 = vunpack.c.l.b16 %v819
        %v1208 = vunpack.c.h.b16 %v819
        %v1209 = vpack.c.b16 %v1085, %v1081
        %v1210 = vpack.c.b16 %v1086, %v1082
        %v1211 = vpack.c.b16 %v1087, %v1083
        %v1212 = vpack.c.b16 %v1088, %v1084
        %v1213 = vpack.c.b16 %v1093, %v1089
        %v1214 = vpack.c.b16 %v1094, %v1090
        %v1215 = vpack.c.b16 %v1095, %v1091
        %v1216 = vpack.c.b16 %v1096, %v1092
        %v1217 = vpack.c.b16 %v1101, %v1097
        %v1218 = vpack.c.b16 %v1102, %v1098
        %v1219 = vpack.c.b16 %v1103, %v1099
        %v1220 = vpack.c.b16 %v1104, %v1100
        %v1221 = vpack.c.b16 %v1109, %v1105
        %v1222 = vpack.c.b16 %v1110, %v1106
        %v1223 = vpack.c.b16 %v1111, %v1107
        %v1224 = vpack.c.b16 %v1112, %v1108
        %v1225 = vpack.c.b16 %v1117, %v1113
        %v1226 = vpack.c.b16 %v1118, %v1114
        %v1227 = vpack.c.b16 %v1119, %v1115
        %v1228 = vpack.c.b16 %v1120, %v1116
        %v1229 = vpack.c.b16 %v1125, %v1121
        %v1230 = vpack.c.b16 %v1126, %v1122
        %v1231 = vpack.c.b16 %v1127, %v1123
        %v1232 = vpack.c.b16 %v1128, %v1124
        %v1233 = vpack.c.b16 %v1133, %v1129
        %v1234 = vpack.c.b16 %v1134, %v1130
        %v1235 = vpack.c.b16 %v1135, %v1131
        %v1236 = vpack.c.b16 %v1136, %v1132
        %v1237 = vpack.c.b16 %v1141, %v1137
        %v1238 = vpack.c.b16 %v1142, %v1138
        %v1239 = vpack.c.b16 %v1143, %v1139
        %v1240 = vpack.c.b16 %v1144, %v1140
        %v1241 = vpack.c.b16 %v1149, %v1145
        %v1242 = vpack.c.b16 %v1150, %v1146
        %v1243 = vpack.c.b16 %v1151, %v1147
        %v1244 = vpack.c.b16 %v1152, %v1148
        %v1245 = vpack.c.b16 %v1157, %v1153
        %v1246 = vpack.c.b16 %v1158, %v1154
        %v1247 = vpack.c.b16 %v1159, %v1155
        %v1248 = vpack.c.b16 %v1160, %v1156
        %v1249 = vpack.c.b16 %v1165, %v1161
        %v1250 = vpack.c.b16 %v1166, %v1162
        %v1251 = vpack.c.b16 %v1167, %v1163
        %v1252 = vpack.c.b16 %v1168, %v1164
        %v1253 = vpack.c.b16 %v1173, %v1169
        %v1254 = vpack.c.b16 %v1174, %v1170
        %v1255 = vpack.c.b16 %v1175, %v1171
        %v1256 = vpack.c.b16 %v1176, %v1172
        %v1257 = vpack.c.b16 %v1181, %v1177
        %v1258 = vpack.c.b16 %v1182, %v1178
        %v1259 = vpack.c.b16 %v1183, %v1179
        %v1260 = vpack.c.b16 %v1184, %v1180
        %v1261 = vpack.c.b16 %v1189, %v1185
        %v1262 = vpack.c.b16 %v1190, %v1186
        %v1263 = vpack.c.b16 %v1191, %v1187
        %v1264 = vpack.c.b16 %v1192, %v1188
        %v1265 = vpack.c.b16 %v1197, %v1193
        %v1266 = vpack.c.b16 %v1198, %v1194
        %v1267 = vpack.c.b16 %v1199, %v1195
        %v1268 = vpack.c.b16 %v1200, %v1196
        %v1269 = vpack.c.b16 %v1205, %v1201
        %v1270 = vpack.c.b16 %v1206, %v1202
        %v1271 = vpack.c.b16 %v1207, %v1203
        %v1272 = vpack.c.b16 %v1208, %v1204
        %1337 = vmatprep.subr.bf16.mxu0 %v1210
        %1338 = vmatpush1.bf16.msra.mxu0 %v1209
        %1339 = vmatprep.subr.bf16.mxu0 %v1214
        %1340 = vmatpush1.bf16.msra.mxu0 %v1213
        %1341 = vmatprep.subr.bf16.mxu0 %v1218
        %1342 = vmatpush1.bf16.msra.mxu0 %v1217
        %1343 = vmatprep.subr.bf16.mxu0 %v1222
        %1344 = vmatpush1.bf16.msra.mxu0 %v1221
        %1345 = vmatprep.subr.bf16.mxu0 %v1226
        %1346 = vmatpush1.bf16.msra.mxu0 %v1225
        %1347 = vmatprep.subr.bf16.mxu0 %v1230
        %1348 = vmatpush1.bf16.msra.mxu0 %v1229
        %1349 = vmatprep.subr.bf16.mxu0 %v1234
        %1350 = vmatpush1.bf16.msra.mxu0 %v1233
        %1351 = vmatprep.subr.bf16.mxu0 %v1238
        %1352 = vmatpush1.bf16.msra.mxu0 %v1237
        %1353 = vmatprep.subr.bf16.mxu0 %v1242
        %1354 = vmatpush1.bf16.msra.mxu0 %v1241
        %1355 = vmatprep.subr.bf16.mxu0 %v1246
        %1356 = vmatpush1.bf16.msra.mxu0 %v1245
        %1357 = vmatprep.subr.bf16.mxu0 %v1250
        %1358 = vmatpush1.bf16.msra.mxu0 %v1249
        %1359 = vmatprep.subr.bf16.mxu0 %v1254
        %1360 = vmatpush1.bf16.msra.mxu0 %v1253
        %1361 = vmatprep.subr.bf16.mxu0 %v1258
        %1362 = vmatpush1.bf16.msra.mxu0 %v1257
        %1363 = vmatprep.subr.bf16.mxu0 %v1262
        %1364 = vmatpush1.bf16.msra.mxu0 %v1261
        %1365 = vmatprep.subr.bf16.mxu0 %v1266
        %1366 = vmatpush1.bf16.msra.mxu0 %v1265
        %1367 = vmatprep.subr.bf16.mxu0 %v1270
        %1368 = vmatpush1.bf16.msra.mxu0 %v1269
        %1369 = vmatprep.mubr.bf16.mxu0 %v938
        %1370 = vmatmul.mubr.bf16.gmra.mrb[0].mxu0 %v937
        %v1371 = vpop.f32.mrb[0].mxu0
        %v1372 = vadd.f32 0.0, %v1371
        %v1373 = vpop.f32.mrb[0].mxu0
        %v1374 = vadd.f32 0.0, %v1373
        %v1375 = vpop.f32.mrb[0].mxu0
        %v1376 = vadd.f32 0.0, %v1375
        %v1377 = vpop.f32.mrb[0].mxu0
        %v1378 = vadd.f32 0.0, %v1377
        %1379 = vmatprep.mubr.bf16.mxu0 %v940
        %1380 = vmatmul.mubr.bf16.gmra.mrb[0].mxu0 %v939
        %v1381 = vpop.f32.mrb[0].mxu0
        %v1382 = vadd.f32 0.0, %v1381
        %v1383 = vpop.f32.mrb[0].mxu0
        %v1384 = vadd.f32 0.0, %v1383
        %v1385 = vpop.f32.mrb[0].mxu0
        %v1386 = vadd.f32 0.0, %v1385
        %v1387 = vpop.f32.mrb[0].mxu0
        %v1388 = vadd.f32 0.0, %v1387
        %1389 = vmatprep.mubr.bf16.mxu0 %v942
        %1390 = vmatmul.mubr.bf16.gmra.mrb[0].mxu0 %v941
        %v1391 = vpop.f32.mrb[0].mxu0
        %v1392 = vadd.f32 0.0, %v1391
        %v1393 = vpop.f32.mrb[0].mxu0
        %v1394 = vadd.f32 0.0, %v1393
        %v1395 = vpop.f32.mrb[0].mxu0
        %v1396 = vadd.f32 0.0, %v1395
        %v1397 = vpop.f32.mrb[0].mxu0
        %v1398 = vadd.f32 0.0, %v1397
        %1399 = vmatprep.mubr.bf16.mxu0 %v944
        %1400 = vmatmul.mubr.bf16.gmra.mrb[0].mxu0 %v943
        %v1401 = vpop.f32.mrb[0].mxu0
        %v1402 = vadd.f32 0.0, %v1401
        %v1403 = vpop.f32.mrb[0].mxu0
        %v1404 = vadd.f32 0.0, %v1403
        %v1405 = vpop.f32.mrb[0].mxu0
        %v1406 = vadd.f32 0.0, %v1405
        %v1407 = vpop.f32.mrb[0].mxu0
        %v1408 = vadd.f32 0.0, %v1407
        %1409 = vmatprep.mubr.bf16.mxu0 %v946
        %1410 = vmatmul.mubr.bf16.gmra.mrb[0].mxu0 %v945
        %v1411 = vpop.f32.mrb[0].mxu0
        %v1412 = vadd.f32 0.0, %v1411
        %v1413 = vpop.f32.mrb[0].mxu0
        %v1414 = vadd.f32 0.0, %v1413
        %v1415 = vpop.f32.mrb[0].mxu0
        %v1416 = vadd.f32 0.0, %v1415
        %v1417 = vpop.f32.mrb[0].mxu0
        %v1418 = vadd.f32 0.0, %v1417
        %1419 = vmatprep.mubr.bf16.mxu0 %v948
        %1420 = vmatmul.mubr.bf16.gmra.mrb[0].mxu0 %v947
        %v1421 = vpop.f32.mrb[0].mxu0
        %v1422 = vadd.f32 0.0, %v1421
        %v1423 = vpop.f32.mrb[0].mxu0
        %v1424 = vadd.f32 0.0, %v1423
        %v1425 = vpop.f32.mrb[0].mxu0
        %v1426 = vadd.f32 0.0, %v1425
        %v1427 = vpop.f32.mrb[0].mxu0
        %v1428 = vadd.f32 0.0, %v1427
        %1429 = vmatprep.mubr.bf16.mxu0 %v950
        %1430 = vmatmul.mubr.bf16.gmra.mrb[0].mxu0 %v949
        %v1431 = vpop.f32.mrb[0].mxu0
        %v1432 = vadd.f32 0.0, %v1431
        %v1433 = vpop.f32.mrb[0].mxu0
        %v1434 = vadd.f32 0.0, %v1433
        %v1435 = vpop.f32.mrb[0].mxu0
        %v1436 = vadd.f32 0.0, %v1435
        %v1437 = vpop.f32.mrb[0].mxu0
        %v1438 = vadd.f32 0.0, %v1437
        %1439 = vmatprep.mubr.bf16.mxu0 %v952
        %1440 = vmatmul.mubr.bf16.gmra.mrb[0].mxu0 %v951
        %v1441 = vpop.f32.mrb[0].mxu0
        %v1442 = vadd.f32 0.0, %v1441
        %v1443 = vpop.f32.mrb[0].mxu0
        %v1444 = vadd.f32 0.0, %v1443
        %v1445 = vpop.f32.mrb[0].mxu0
        %v1446 = vadd.f32 0.0, %v1445
        %v1447 = vpop.f32.mrb[0].mxu0
        %v1448 = vadd.f32 0.0, %v1447
        %1449 = vmatprep.mubr.bf16.mxu0 %v954
        %1450 = vmatmul.mubr.bf16.gmra.mrb[0].mxu0 %v953
        %v1451 = vpop.f32.mrb[0].mxu0
        %v1452 = vadd.f32 0.0, %v1451
        %v1453 = vpop.f32.mrb[0].mxu0
        %v1454 = vadd.f32 0.0, %v1453
        %v1455 = vpop.f32.mrb[0].mxu0
        %v1456 = vadd.f32 0.0, %v1455
        %v1457 = vpop.f32.mrb[0].mxu0
        %v1458 = vadd.f32 0.0, %v1457
        %1459 = vmatprep.mubr.bf16.mxu0 %v956
        %1460 = vmatmul.mubr.bf16.gmra.mrb[0].mxu0 %v955
        %v1461 = vpop.f32.mrb[0].mxu0
        %v1462 = vadd.f32 0.0, %v1461
        %v1463 = vpop.f32.mrb[0].mxu0
        %v1464 = vadd.f32 0.0, %v1463
        %v1465 = vpop.f32.mrb[0].mxu0
        %v1466 = vadd.f32 0.0, %v1465
        %v1467 = vpop.f32.mrb[0].mxu0
        %v1468 = vadd.f32 0.0, %v1467
        %1469 = vmatprep.mubr.bf16.mxu0 %v958
        %1470 = vmatmul.mubr.bf16.gmra.mrb[0].mxu0 %v957
        %v1471 = vpop.f32.mrb[0].mxu0
        %v1472 = vadd.f32 0.0, %v1471
        %v1473 = vpop.f32.mrb[0].mxu0
        %v1474 = vadd.f32 0.0, %v1473
        %v1475 = vpop.f32.mrb[0].mxu0
        %v1476 = vadd.f32 0.0, %v1475
        %v1477 = vpop.f32.mrb[0].mxu0
        %v1478 = vadd.f32 0.0, %v1477
        %1479 = vmatprep.mubr.bf16.mxu0 %v960
        %1480 = vmatmul.mubr.bf16.gmra.mrb[0].mxu0 %v959
        %v1481 = vpop.f32.mrb[0].mxu0
        %v1482 = vadd.f32 0.0, %v1481
        %v1483 = vpop.f32.mrb[0].mxu0
        %v1484 = vadd.f32 0.0, %v1483
        %v1485 = vpop.f32.mrb[0].mxu0
        %v1486 = vadd.f32 0.0, %v1485
        %v1487 = vpop.f32.mrb[0].mxu0
        %v1488 = vadd.f32 0.0, %v1487
        %1489 = vmatprep.mubr.bf16.mxu0 %v962
        %1490 = vmatmul.mubr.bf16.gmra.mrb[0].mxu0 %v961
        %v1491 = vpop.f32.mrb[0].mxu0
        %v1492 = vadd.f32 0.0, %v1491
        %v1493 = vpop.f32.mrb[0].mxu0
        %v1494 = vadd.f32 0.0, %v1493
        %v1495 = vpop.f32.mrb[0].mxu0
        %v1496 = vadd.f32 0.0, %v1495
        %v1497 = vpop.f32.mrb[0].mxu0
        %v1498 = vadd.f32 0.0, %v1497
        %1499 = vmatprep.mubr.bf16.mxu0 %v964
        %1500 = vmatmul.mubr.bf16.gmra.mrb[0].mxu0 %v963
        %v1501 = vpop.f32.mrb[0].mxu0
        %v1502 = vadd.f32 0.0, %v1501
        %v1503 = vpop.f32.mrb[0].mxu0
        %v1504 = vadd.f32 0.0, %v1503
        %v1505 = vpop.f32.mrb[0].mxu0
        %v1506 = vadd.f32 0.0, %v1505
        %v1507 = vpop.f32.mrb[0].mxu0
        %v1508 = vadd.f32 0.0, %v1507
        %1509 = vmatprep.mubr.bf16.mxu0 %v966
        %1510 = vmatmul.mubr.bf16.gmra.mrb[0].mxu0 %v965
        %v1511 = vpop.f32.mrb[0].mxu0
        %v1512 = vadd.f32 0.0, %v1511
        %v1513 = vpop.f32.mrb[0].mxu0
        %v1514 = vadd.f32 0.0, %v1513
        %v1515 = vpop.f32.mrb[0].mxu0
        %v1516 = vadd.f32 0.0, %v1515
        %v1517 = vpop.f32.mrb[0].mxu0
        %v1518 = vadd.f32 0.0, %v1517
        %1519 = vmatprep.mubr.bf16.mxu0 %v968
        %1520 = vmatmul.mubr.bf16.gmra.mrb[0].mxu0 %v967
        %v1521 = vpop.f32.mrb[0].mxu0
        %v1522 = vadd.f32 0.0, %v1521
        %v1523 = vpop.f32.mrb[0].mxu0
        %v1524 = vadd.f32 0.0, %v1523
        %v1525 = vpop.f32.mrb[0].mxu0
        %v1526 = vadd.f32 0.0, %v1525
        %v1527 = vpop.f32.mrb[0].mxu0
        %v1528 = vadd.f32 0.0, %v1527
        %1529 = vmatprep.mubr.bf16.mxu0 %v970
        %1530 = vmatmul.mubr.bf16.gmra.mrb[0].mxu0 %v969
        %v1531 = vpop.f32.mrb[0].mxu0
        %v1532 = vadd.f32 0.0, %v1531
        %v1533 = vpop.f32.mrb[0].mxu0
        %v1534 = vadd.f32 0.0, %v1533
        %v1535 = vpop.f32.mrb[0].mxu0
        %v1536 = vadd.f32 0.0, %v1535
        %v1537 = vpop.f32.mrb[0].mxu0
        %v1538 = vadd.f32 0.0, %v1537
        %1539 = vmatprep.mubr.bf16.mxu0 %v972
        %1540 = vmatmul.mubr.bf16.gmra.mrb[0].mxu0 %v971
        %v1541 = vpop.f32.mrb[0].mxu0
        %v1542 = vadd.f32 0.0, %v1541
        %v1543 = vpop.f32.mrb[0].mxu0
        %v1544 = vadd.f32 0.0, %v1543
        %v1545 = vpop.f32.mrb[0].mxu0
        %v1546 = vadd.f32 0.0, %v1545
        %v1547 = vpop.f32.mrb[0].mxu0
        %v1548 = vadd.f32 0.0, %v1547
        %1549 = vmatprep.mubr.bf16.mxu0 %v974
        %1550 = vmatmul.mubr.bf16.gmra.mrb[0].mxu0 %v973
        %v1551 = vpop.f32.mrb[0].mxu0
        %v1552 = vadd.f32 0.0, %v1551
        %v1553 = vpop.f32.mrb[0].mxu0
        %v1554 = vadd.f32 0.0, %v1553
        %v1555 = vpop.f32.mrb[0].mxu0
        %v1556 = vadd.f32 0.0, %v1555
        %v1557 = vpop.f32.mrb[0].mxu0
        %v1558 = vadd.f32 0.0, %v1557
        %1559 = vmatprep.mubr.bf16.mxu0 %v976
        %1560 = vmatmul.mubr.bf16.gmra.mrb[0].mxu0 %v975
        %v1561 = vpop.f32.mrb[0].mxu0
        %v1562 = vadd.f32 0.0, %v1561
        %v1563 = vpop.f32.mrb[0].mxu0
        %v1564 = vadd.f32 0.0, %v1563
        %v1565 = vpop.f32.mrb[0].mxu0
        %v1566 = vpop.f32.mrb[0].mxu0
        %1567 = vdwg.mxu0
        %1568 = vmatprep.subr.bf16.mxu0 %v1212
        %1569 = vmatpush1.bf16.msra.mxu0 %v1211
        %1570 = vmatprep.subr.bf16.mxu0 %v1216
        %1571 = vmatpush1.bf16.msra.mxu0 %v1215
        %1572 = vmatprep.subr.bf16.mxu0 %v1220
        %1573 = vmatpush1.bf16.msra.mxu0 %v1219
        %1574 = vmatprep.subr.bf16.mxu0 %v1224
        %1575 = vmatpush1.bf16.msra.mxu0 %v1223
        %1576 = vmatprep.subr.bf16.mxu0 %v1228
        %1577 = vmatpush1.bf16.msra.mxu0 %v1227
        %1578 = vmatprep.subr.bf16.mxu0 %v1232
        %1579 = vmatpush1.bf16.msra.mxu0 %v1231
        %1580 = vmatprep.subr.bf16.mxu0 %v1236
        %1581 = vmatpush1.bf16.msra.mxu0 %v1235
        %1582 = vmatprep.subr.bf16.mxu0 %v1240
        %1583 = vmatpush1.bf16.msra.mxu0 %v1239
        %1584 = vmatprep.subr.bf16.mxu0 %v1244
        %1585 = vmatpush1.bf16.msra.mxu0 %v1243
        %1586 = vmatprep.subr.bf16.mxu0 %v1248
        %1587 = vmatpush1.bf16.msra.mxu0 %v1247
        %1588 = vmatprep.subr.bf16.mxu0 %v1252
        %1589 = vmatpush1.bf16.msra.mxu0 %v1251
        %1590 = vmatprep.subr.bf16.mxu0 %v1256
        %1591 = vmatpush1.bf16.msra.mxu0 %v1255
        %1592 = vmatprep.subr.bf16.mxu0 %v1260
        %1593 = vmatpush1.bf16.msra.mxu0 %v1259
        %1594 = vmatprep.subr.bf16.mxu0 %v1264
        %1595 = vmatpush1.bf16.msra.mxu0 %v1263
        %1596 = vmatprep.subr.bf16.mxu0 %v1268
        %1597 = vmatpush1.bf16.msra.mxu0 %v1267
        %1598 = vmatprep.subr.bf16.mxu0 %v1272
        %1599 = vmatpush1.bf16.msra.mxu0 %v1271
        %1600 = vmatprep.mubr.bf16.mxu0 %v938
        %1601 = vmatmul.mubr.bf16.gmra.mrb[0].mxu0 %v937
        %v1602 = vpop.f32.mrb[0].mxu0
        %v1603 = vadd.f32 0.0, %v1602
        %v1604 = vpop.f32.mrb[0].mxu0
        %v1605 = vadd.f32 0.0, %v1604
        %v1606 = vpop.f32.mrb[0].mxu0
        %v1607 = vadd.f32 0.0, %v1606
        %v1608 = vpop.f32.mrb[0].mxu0
        %v1609 = vadd.f32 0.0, %v1608
        %1610 = vmatprep.mubr.bf16.mxu0 %v940
        %1611 = vmatmul.mubr.bf16.gmra.mrb[0].mxu0 %v939
        %v1612 = vpop.f32.mrb[0].mxu0
        %v1613 = vadd.f32 0.0, %v1612
        %v1614 = vpop.f32.mrb[0].mxu0
        %v1615 = vadd.f32 0.0, %v1614
        %v1616 = vpop.f32.mrb[0].mxu0
        %v1617 = vadd.f32 0.0, %v1616
        %v1618 = vpop.f32.mrb[0].mxu0
        %v1619 = vadd.f32 0.0, %v1618
        %1620 = vmatprep.mubr.bf16.mxu0 %v942
        %1621 = vmatmul.mubr.bf16.gmra.mrb[0].mxu0 %v941
        %v1622 = vpop.f32.mrb[0].mxu0
        %v1623 = vadd.f32 0.0, %v1622
        %v1624 = vpop.f32.mrb[0].mxu0
        %v1625 = vadd.f32 0.0, %v1624
        %v1626 = vpop.f32.mrb[0].mxu0
        %v1627 = vadd.f32 0.0, %v1626
        %v1628 = vpop.f32.mrb[0].mxu0
        %v1629 = vadd.f32 0.0, %v1628
        %1630 = vmatprep.mubr.bf16.mxu0 %v944
        %1631 = vmatmul.mubr.bf16.gmra.mrb[0].mxu0 %v943
        %v1632 = vpop.f32.mrb[0].mxu0
        %v1633 = vadd.f32 0.0, %v1632
        %v1634 = vpop.f32.mrb[0].mxu0
        %v1635 = vadd.f32 0.0, %v1634
        %v1636 = vpop.f32.mrb[0].mxu0
        %v1637 = vadd.f32 0.0, %v1636
        %v1638 = vpop.f32.mrb[0].mxu0
        %v1639 = vadd.f32 0.0, %v1638
        %1640 = vmatprep.mubr.bf16.mxu0 %v946
        %1641 = vmatmul.mubr.bf16.gmra.mrb[0].mxu0 %v945
        %v1642 = vpop.f32.mrb[0].mxu0
        %v1643 = vadd.f32 0.0, %v1642
        %v1644 = vpop.f32.mrb[0].mxu0
        %v1645 = vadd.f32 0.0, %v1644
        %v1646 = vpop.f32.mrb[0].mxu0
        %v1647 = vadd.f32 0.0, %v1646
        %v1648 = vpop.f32.mrb[0].mxu0
        %v1649 = vadd.f32 0.0, %v1648
        %1650 = vmatprep.mubr.bf16.mxu0 %v948
        %1651 = vmatmul.mubr.bf16.gmra.mrb[0].mxu0 %v947
        %v1652 = vpop.f32.mrb[0].mxu0
        %v1653 = vadd.f32 0.0, %v1652
        %v1654 = vpop.f32.mrb[0].mxu0
        %v1655 = vadd.f32 0.0, %v1654
        %v1656 = vpop.f32.mrb[0].mxu0
        %v1657 = vadd.f32 0.0, %v1656
        %v1658 = vpop.f32.mrb[0].mxu0
        %v1659 = vadd.f32 0.0, %v1658
        %1660 = vmatprep.mubr.bf16.mxu0 %v950
        %1661 = vmatmul.mubr.bf16.gmra.mrb[0].mxu0 %v949
        %v1662 = vpop.f32.mrb[0].mxu0
        %v1663 = vadd.f32 0.0, %v1662
        %v1664 = vpop.f32.mrb[0].mxu0
        %v1665 = vadd.f32 0.0, %v1664
        %v1666 = vpop.f32.mrb[0].mxu0
        %v1667 = vadd.f32 0.0, %v1666
        %v1668 = vpop.f32.mrb[0].mxu0
        %v1669 = vadd.f32 0.0, %v1668
        %1670 = vmatprep.mubr.bf16.mxu0 %v952
        %1671 = vmatmul.mubr.bf16.gmra.mrb[0].mxu0 %v951
        %v1672 = vpop.f32.mrb[0].mxu0
        %v1673 = vadd.f32 0.0, %v1672
        %v1674 = vpop.f32.mrb[0].mxu0
        %v1675 = vadd.f32 0.0, %v1674
        %v1676 = vpop.f32.mrb[0].mxu0
        %v1677 = vadd.f32 0.0, %v1676
        %v1678 = vpop.f32.mrb[0].mxu0
        %v1679 = vadd.f32 0.0, %v1678
        %1680 = vmatprep.mubr.bf16.mxu0 %v954
        %1681 = vmatmul.mubr.bf16.gmra.mrb[0].mxu0 %v953
        %v1682 = vpop.f32.mrb[0].mxu0
        %v1683 = vadd.f32 0.0, %v1682
        %v1684 = vpop.f32.mrb[0].mxu0
        %v1685 = vadd.f32 0.0, %v1684
        %v1686 = vpop.f32.mrb[0].mxu0
        %v1687 = vadd.f32 0.0, %v1686
        %v1688 = vpop.f32.mrb[0].mxu0
        %v1689 = vadd.f32 0.0, %v1688
        %1690 = vmatprep.mubr.bf16.mxu0 %v956
        %1691 = vmatmul.mubr.bf16.gmra.mrb[0].mxu0 %v955
        %v1692 = vpop.f32.mrb[0].mxu0
        %v1693 = vadd.f32 0.0, %v1692
        %v1694 = vpop.f32.mrb[0].mxu0
        %v1695 = vadd.f32 0.0, %v1694
        %v1696 = vpop.f32.mrb[0].mxu0
        %v1697 = vadd.f32 0.0, %v1696
        %v1698 = vpop.f32.mrb[0].mxu0
        %v1699 = vadd.f32 0.0, %v1698
        %1700 = vmatprep.mubr.bf16.mxu0 %v958
        %1701 = vmatmul.mubr.bf16.gmra.mrb[0].mxu0 %v957
        %v1702 = vpop.f32.mrb[0].mxu0
        %v1703 = vadd.f32 0.0, %v1702
        %v1704 = vpop.f32.mrb[0].mxu0
        %v1705 = vadd.f32 0.0, %v1704
        %v1706 = vpop.f32.mrb[0].mxu0
        %v1707 = vadd.f32 0.0, %v1706
        %v1708 = vpop.f32.mrb[0].mxu0
        %v1709 = vadd.f32 0.0, %v1708
        %1710 = vmatprep.mubr.bf16.mxu0 %v960
        %1711 = vmatmul.mubr.bf16.gmra.mrb[0].mxu0 %v959
        %v1712 = vpop.f32.mrb[0].mxu0
        %v1713 = vadd.f32 0.0, %v1712
        %v1714 = vpop.f32.mrb[0].mxu0
        %v1715 = vadd.f32 0.0, %v1714
        %v1716 = vpop.f32.mrb[0].mxu0
        %v1717 = vadd.f32 0.0, %v1716
        %v1718 = vpop.f32.mrb[0].mxu0
        %v1719 = vadd.f32 0.0, %v1718
        %1720 = vmatprep.mubr.bf16.mxu0 %v962
        %1721 = vmatmul.mubr.bf16.gmra.mrb[0].mxu0 %v961
        %v1722 = vpop.f32.mrb[0].mxu0
        %v1723 = vadd.f32 0.0, %v1722
        %v1724 = vpop.f32.mrb[0].mxu0
        %v1725 = vadd.f32 0.0, %v1724
        %v1726 = vpop.f32.mrb[0].mxu0
        %v1727 = vadd.f32 0.0, %v1726
        %v1728 = vpop.f32.mrb[0].mxu0
        %v1729 = vadd.f32 0.0, %v1728
        %1730 = vmatprep.mubr.bf16.mxu0 %v964
        %1731 = vmatmul.mubr.bf16.gmra.mrb[0].mxu0 %v963
        %v1732 = vpop.f32.mrb[0].mxu0
        %v1733 = vadd.f32 0.0, %v1732
        %v1734 = vpop.f32.mrb[0].mxu0
        %v1735 = vadd.f32 0.0, %v1734
        %v1736 = vpop.f32.mrb[0].mxu0
        %v1737 = vadd.f32 0.0, %v1736
        %v1738 = vpop.f32.mrb[0].mxu0
        %v1739 = vadd.f32 0.0, %v1738
        %1740 = vmatprep.mubr.bf16.mxu0 %v966
        %1741 = vmatmul.mubr.bf16.gmra.mrb[0].mxu0 %v965
        %v1742 = vpop.f32.mrb[0].mxu0
        %v1743 = vadd.f32 0.0, %v1742
        %v1744 = vpop.f32.mrb[0].mxu0
        %v1745 = vadd.f32 0.0, %v1744
        %v1746 = vpop.f32.mrb[0].mxu0
        %v1747 = vadd.f32 0.0, %v1746
        %v1748 = vpop.f32.mrb[0].mxu0
        %v1749 = vadd.f32 0.0, %v1748
        %1750 = vmatprep.mubr.bf16.mxu0 %v968
        %1751 = vmatmul.mubr.bf16.gmra.mrb[0].mxu0 %v967
        %v1752 = vpop.f32.mrb[0].mxu0
        %v1753 = vadd.f32 0.0, %v1752
        %v1754 = vpop.f32.mrb[0].mxu0
        %v1755 = vadd.f32 0.0, %v1754
        %v1756 = vpop.f32.mrb[0].mxu0
        %v1757 = vadd.f32 0.0, %v1756
        %v1758 = vpop.f32.mrb[0].mxu0
        %v1759 = vadd.f32 0.0, %v1758
        %1760 = vmatprep.mubr.bf16.mxu0 %v970
        %1761 = vmatmul.mubr.bf16.gmra.mrb[0].mxu0 %v969
        %v1762 = vpop.f32.mrb[0].mxu0
        %v1763 = vadd.f32 0.0, %v1762
        %v1764 = vpop.f32.mrb[0].mxu0
        %v1765 = vadd.f32 0.0, %v1764
        %v1766 = vpop.f32.mrb[0].mxu0
        %v1767 = vadd.f32 0.0, %v1766
        %v1768 = vpop.f32.mrb[0].mxu0
        %v1769 = vadd.f32 0.0, %v1768
        %1770 = vmatprep.mubr.bf16.mxu0 %v972
        %1771 = vmatmul.mubr.bf16.gmra.mrb[0].mxu0 %v971
        %v1772 = vpop.f32.mrb[0].mxu0
        %v1773 = vadd.f32 0.0, %v1772
        %v1774 = vpop.f32.mrb[0].mxu0
        %v1775 = vadd.f32 0.0, %v1774
        %v1776 = vpop.f32.mrb[0].mxu0
        %v1777 = vadd.f32 0.0, %v1776
        %v1778 = vpop.f32.mrb[0].mxu0
        %v1779 = vadd.f32 0.0, %v1778
        %1780 = vmatprep.mubr.bf16.mxu0 %v974
        %1781 = vmatmul.mubr.bf16.gmra.mrb[0].mxu0 %v973
        %v1782 = vpop.f32.mrb[0].mxu0
        %v1783 = vadd.f32 0.0, %v1782
        %v1784 = vpop.f32.mrb[0].mxu0
        %v1785 = vadd.f32 0.0, %v1784
        %v1786 = vpop.f32.mrb[0].mxu0
        %v1787 = vadd.f32 0.0, %v1786
        %v1788 = vpop.f32.mrb[0].mxu0
        %v1789 = vadd.f32 0.0, %v1788
        %1790 = vmatprep.mubr.bf16.mxu0 %v976
        %1791 = vmatmul.mubr.bf16.gmra.mrb[0].mxu0 %v975
        %v1792 = vpop.f32.mrb[0].mxu0
        %v1793 = vadd.f32 0.0, %v1792
        %v1794 = vpop.f32.mrb[0].mxu0
        %v1795 = vadd.f32 0.0, %v1794
        %v1796 = vpop.f32.mrb[0].mxu0
        %v1797 = vpop.f32.mrb[0].mxu0
        %1798 = vdwg.mxu0
        %v1799 = vadd.f32 %v561, %v1372
        %v1800 = vadd.f32 %v562, %v1374
        %v1801 = vadd.f32 %v563, %v1603
        %v1802 = vadd.f32 %v564, %v1605
        %v1803 = vadd.f32 %v565, %v1376
        %v1804 = vadd.f32 %v566, %v1378
        %v1805 = vadd.f32 %v567, %v1607
        %v1806 = vadd.f32 %v568, %v1609
        %v1807 = vadd.f32 %v569, %v1382
        %v1808 = vadd.f32 %v570, %v1384
        %v1809 = vadd.f32 %v571, %v1613
        %v1810 = vadd.f32 %v572, %v1615
        %v1811 = vadd.f32 %v573, %v1386
        %v1812 = vadd.f32 %v574, %v1388
        %v1813 = vadd.f32 %v575, %v1617
        %v1814 = vadd.f32 %v576, %v1619
        %v1815 = vadd.f32 %v577, %v1392
        %v1816 = vadd.f32 %v578, %v1394
        %v1817 = vadd.f32 %v579, %v1623
        %v1818 = vadd.f32 %v580, %v1625
        %v1819 = vadd.f32 %v581, %v1396
        %v1820 = vadd.f32 %v582, %v1398
        %v1821 = vadd.f32 %v583, %v1627
        %v1822 = vadd.f32 %v584, %v1629
        %v1823 = vadd.f32 %v585, %v1402
        %v1824 = vadd.f32 %v586, %v1404
        %v1825 = vadd.f32 %v587, %v1633
        %v1826 = vadd.f32 %v588, %v1635
        %v1827 = vadd.f32 %v589, %v1406
        %v1828 = vadd.f32 %v590, %v1408
        %v1829 = vadd.f32 %v591, %v1637
        %v1830 = vadd.f32 %v592, %v1639
        %v1831 = vadd.f32 %v593, %v1412
        %v1832 = vadd.f32 %v594, %v1414
        %v1833 = vadd.f32 %v595, %v1643
        %v1834 = vadd.f32 %v596, %v1645
        %v1835 = vadd.f32 %v597, %v1416
        %v1836 = vadd.f32 %v598, %v1418
        %v1837 = vadd.f32 %v599, %v1647
        %v1838 = vadd.f32 %v600, %v1649
        %v1839 = vadd.f32 %v601, %v1422
        %v1840 = vadd.f32 %v602, %v1424
        %v1841 = vadd.f32 %v603, %v1653
        %v1842 = vadd.f32 %v604, %v1655
        %v1843 = vadd.f32 %v605, %v1426
        %v1844 = vadd.f32 %v606, %v1428
        %v1845 = vadd.f32 %v607, %v1657
        %v1846 = vadd.f32 %v608, %v1659
        %v1847 = vadd.f32 %v609, %v1432
        %v1848 = vadd.f32 %v610, %v1434
        %v1849 = vadd.f32 %v611, %v1663
        %v1850 = vadd.f32 %v612, %v1665
        %v1851 = vadd.f32 %v613, %v1436
        %v1852 = vadd.f32 %v614, %v1438
        %v1853 = vadd.f32 %v615, %v1667
        %v1854 = vadd.f32 %v616, %v1669
        %v1855 = vadd.f32 %v617, %v1442
        %v1856 = vadd.f32 %v618, %v1444
        %v1857 = vadd.f32 %v619, %v1673
        %v1858 = vadd.f32 %v620, %v1675
        %v1859 = vadd.f32 %v621, %v1446
        %v1860 = vadd.f32 %v622, %v1448
        %v1861 = vadd.f32 %v623, %v1677
        %v1862 = vadd.f32 %v624, %v1679
        %v1863 = vadd.f32 %v625, %v1452
        %v1864 = vadd.f32 %v626, %v1454
        %v1865 = vadd.f32 %v627, %v1683
        %v1866 = vadd.f32 %v628, %v1685
        %v1867 = vadd.f32 %v629, %v1456
        %v1868 = vadd.f32 %v630, %v1458
        %v1869 = vadd.f32 %v631, %v1687
        %v1870 = vadd.f32 %v632, %v1689
        %v1871 = vadd.f32 %v633, %v1462
        %v1872 = vadd.f32 %v634, %v1464
        %v1873 = vadd.f32 %v635, %v1693
        %v1874 = vadd.f32 %v636, %v1695
        %v1875 = vadd.f32 %v637, %v1466
        %v1876 = vadd.f32 %v638, %v1468
        %v1877 = vadd.f32 %v639, %v1697
        %v1878 = vadd.f32 %v640, %v1699
        %v1879 = vadd.f32 %v641, %v1472
        %v1880 = vadd.f32 %v642, %v1474
        %v1881 = vadd.f32 %v643, %v1703
        %v1882 = vadd.f32 %v644, %v1705
        %v1883 = vadd.f32 %v645, %v1476
        %v1884 = vadd.f32 %v646, %v1478
        %v1885 = vadd.f32 %v647, %v1707
        %v1886 = vadd.f32 %v648, %v1709
        %v1887 = vadd.f32 %v649, %v1482
        %v1888 = vadd.f32 %v650, %v1484
        %v1889 = vadd.f32 %v651, %v1713
        %v1890 = vadd.f32 %v652, %v1715
        %v1891 = vadd.f32 %v653, %v1486
        %v1892 = vadd.f32 %v654, %v1488
        %v1893 = vadd.f32 %v655, %v1717
        %v1894 = vadd.f32 %v656, %v1719
        %v1895 = vadd.f32 %v657, %v1492
        %v1896 = vadd.f32 %v658, %v1494
        %v1897 = vadd.f32 %v659, %v1723
        %v1898 = vadd.f32 %v660, %v1725
        %v1899 = vadd.f32 %v661, %v1496
        %v1900 = vadd.f32 %v662, %v1498
        %v1901 = vadd.f32 %v663, %v1727
        %v1902 = vadd.f32 %v664, %v1729
        %v1903 = vadd.f32 %v665, %v1502
        %v1904 = vadd.f32 %v666, %v1504
        %v1905 = vadd.f32 %v667, %v1733
        %v1906 = vadd.f32 %v668, %v1735
        %v1907 = vadd.f32 %v669, %v1506
        %v1908 = vadd.f32 %v670, %v1508
        %v1909 = vadd.f32 %v671, %v1737
        %v1910 = vadd.f32 %v672, %v1739
        %v1911 = vadd.f32 %v673, %v1512
        %v1912 = vadd.f32 %v674, %v1514
        %v1913 = vadd.f32 %v675, %v1743
        %v1914 = vadd.f32 %v676, %v1745
        %v1915 = vadd.f32 %v677, %v1516
        %v1916 = vadd.f32 %v678, %v1518
        %v1917 = vadd.f32 %v679, %v1747
        %v1918 = vadd.f32 %v680, %v1749
        %v1919 = vadd.f32 %v681, %v1522
        %v1920 = vadd.f32 %v682, %v1524
        %v1921 = vadd.f32 %v683, %v1753
        %v1922 = vadd.f32 %v684, %v1755
        %v1923 = vadd.f32 %v685, %v1526
        %v1924 = vadd.f32 %v686, %v1528
        %v1925 = vadd.f32 %v687, %v1757
        %v1926 = vadd.f32 %v688, %v1759
        %v1927 = vadd.f32 %v689, %v1532
        %v1928 = vadd.f32 %v690, %v1534
        %v1929 = vadd.f32 %v691, %v1763
        %v1930 = vadd.f32 %v692, %v1765
        %v1931 = vadd.f32 %v693, %v1536
        %v1932 = vadd.f32 %v694, %v1538
        %v1933 = vadd.f32 %v695, %v1767
        %v1934 = vadd.f32 %v696, %v1769
        %v1935 = vadd.f32 %v697, %v1542
        %v1936 = vadd.f32 %v698, %v1544
        %v1937 = vadd.f32 %v699, %v1773
        %v1938 = vadd.f32 %v700, %v1775
        %v1939 = vadd.f32 %v701, %v1546
        %v1940 = vadd.f32 %v702, %v1548
        %v1941 = vadd.f32 %v703, %v1777
        %v1942 = vadd.f32 %v704, %v1779
        %v1943 = vadd.f32 %v705, %v1552
        %v1944 = vadd.f32 %v706, %v1554
        %v1945 = vadd.f32 %v707, %v1783
        %v1946 = vadd.f32 %v708, %v1785
        %v1947 = vadd.f32 %v709, %v1556
        %v1948 = vadd.f32 %v710, %v1558
        %v1949 = vadd.f32 %v711, %v1787
        %v1950 = vadd.f32 %v712, %v1789
        %v1951 = vadd.f32 %v713, %v1562
        %v1952 = vadd.f32 %v714, %v1564
        %v1953 = vadd.f32 %v715, %v1793
        %v1954 = vadd.f32 %v716, %v1795
        %1955 = vst [vmem:[#allocation2] sm:$0xff] %v1799
        %1956 = vst [vmem:[#allocation2 + $0x8] sm:$0xff] %v1800
        %1957 = vst [vmem:[#allocation2 + $0x10] sm:$0xff] %v1801
        %1958 = vst [vmem:[#allocation2 + $0x18] sm:$0xff] %v1802
        %1959 = vst [vmem:[#allocation2 + $0x20] sm:$0xff] %v1803
        %1960 = vst [vmem:[#allocation2 + $0x28] sm:$0xff] %v1804
        %1961 = vst [vmem:[#allocation2 + $0x30] sm:$0xff] %v1805
        %1962 = vst [vmem:[#allocation2 + $0x38] sm:$0xff] %v1806
        %1963 = vst [vmem:[#allocation2 + $0x40] sm:$0xff] %v1807
        %1964 = vst [vmem:[#allocation2 + $0x48] sm:$0xff] %v1808
        %1965 = vst [vmem:[#allocation2 + $0x50] sm:$0xff] %v1809
        %1966 = vst [vmem:[#allocation2 + $0x58] sm:$0xff] %v1810
        %1967 = vst [vmem:[#allocation2 + $0x60] sm:$0xff] %v1811
        %1968 = vst [vmem:[#allocation2 + $0x68] sm:$0xff] %v1812
        %1969 = vst [vmem:[#allocation2 + $0x70] sm:$0xff] %v1813
        %1970 = vst [vmem:[#allocation2 + $0x78] sm:$0xff] %v1814
        %1971 = vst [vmem:[#allocation2 + $0x80] sm:$0xff] %v1815
        %1972 = vst [vmem:[#allocation2 + $0x88] sm:$0xff] %v1816
        %1973 = vst [vmem:[#allocation2 + $0x90] sm:$0xff] %v1817
        %1974 = vst [vmem:[#allocation2 + $0x98] sm:$0xff] %v1818
        %1975 = vst [vmem:[#allocation2 + $0xa0] sm:$0xff] %v1819
        %1976 = vst [vmem:[#allocation2 + $0xa8] sm:$0xff] %v1820
        %1977 = vst [vmem:[#allocation2 + $0xb0] sm:$0xff] %v1821
        %1978 = vst [vmem:[#allocation2 + $0xb8] sm:$0xff] %v1822
        %1979 = vst [vmem:[#allocation2 + $0xc0] sm:$0xff] %v1823
        %1980 = vst [vmem:[#allocation2 + $0xc8] sm:$0xff] %v1824
        %1981 = vst [vmem:[#allocation2 + $0xd0] sm:$0xff] %v1825
        %1982 = vst [vmem:[#allocation2 + $0xd8] sm:$0xff] %v1826
        %1983 = vst [vmem:[#allocation2 + $0xe0] sm:$0xff] %v1827
        %1984 = vst [vmem:[#allocation2 + $0xe8] sm:$0xff] %v1828
        %1985 = vst [vmem:[#allocation2 + $0xf0] sm:$0xff] %v1829
        %1986 = vst [vmem:[#allocation2 + $0xf8] sm:$0xff] %v1830
        %1987 = vst [vmem:[#allocation2 + $0x100] sm:$0xff] %v1831
        %1988 = vst [vmem:[#allocation2 + $0x108] sm:$0xff] %v1832
        %1989 = vst [vmem:[#allocation2 + $0x110] sm:$0xff] %v1833
        %1990 = vst [vmem:[#allocation2 + $0x118] sm:$0xff] %v1834
        %1991 = vst [vmem:[#allocation2 + $0x120] sm:$0xff] %v1835
        %1992 = vst [vmem:[#allocation2 + $0x128] sm:$0xff] %v1836
        %1993 = vst [vmem:[#allocation2 + $0x130] sm:$0xff] %v1837
        %1994 = vst [vmem:[#allocation2 + $0x138] sm:$0xff] %v1838
        %1995 = vst [vmem:[#allocation2 + $0x140] sm:$0xff] %v1839
        %1996 = vst [vmem:[#allocation2 + $0x148] sm:$0xff] %v1840
        %1997 = vst [vmem:[#allocation2 + $0x150] sm:$0xff] %v1841
        %1998 = vst [vmem:[#allocation2 + $0x158] sm:$0xff] %v1842
        %1999 = vst [vmem:[#allocation2 + $0x160] sm:$0xff] %v1843
        %2000 = vst [vmem:[#allocation2 + $0x168] sm:$0xff] %v1844
        %2001 = vst [vmem:[#allocation2 + $0x170] sm:$0xff] %v1845
        %2002 = vst [vmem:[#allocation2 + $0x178] sm:$0xff] %v1846
        %2003 = vst [vmem:[#allocation2 + $0x180] sm:$0xff] %v1847
        %2004 = vst [vmem:[#allocation2 + $0x188] sm:$0xff] %v1848
        %2005 = vst [vmem:[#allocation2 + $0x190] sm:$0xff] %v1849
        %2006 = vst [vmem:[#allocation2 + $0x198] sm:$0xff] %v1850
        %2007 = vst [vmem:[#allocation2 + $0x1a0] sm:$0xff] %v1851
        %2008 = vst [vmem:[#allocation2 + $0x1a8] sm:$0xff] %v1852
        %2009 = vst [vmem:[#allocation2 + $0x1b0] sm:$0xff] %v1853
        %2010 = vst [vmem:[#allocation2 + $0x1b8] sm:$0xff] %v1854
        %2011 = vst [vmem:[#allocation2 + $0x1c0] sm:$0xff] %v1855
        %2012 = vst [vmem:[#allocation2 + $0x1c8] sm:$0xff] %v1856
        %2013 = vst [vmem:[#allocation2 + $0x1d0] sm:$0xff] %v1857
        %2014 = vst [vmem:[#allocation2 + $0x1d8] sm:$0xff] %v1858
        %2015 = vst [vmem:[#allocation2 + $0x1e0] sm:$0xff] %v1859
        %2016 = vst [vmem:[#allocation2 + $0x1e8] sm:$0xff] %v1860
        %2017 = vst [vmem:[#allocation2 + $0x1f0] sm:$0xff] %v1861
        %2018 = vst [vmem:[#allocation2 + $0x1f8] sm:$0xff] %v1862
        %2019 = vst [vmem:[#allocation2 + $0x200] sm:$0xff] %v1863
        %2020 = vst [vmem:[#allocation2 + $0x208] sm:$0xff] %v1864
        %2021 = vst [vmem:[#allocation2 + $0x210] sm:$0xff] %v1865
        %2022 = vst [vmem:[#allocation2 + $0x218] sm:$0xff] %v1866
        %2023 = vst [vmem:[#allocation2 + $0x220] sm:$0xff] %v1867
        %2024 = vst [vmem:[#allocation2 + $0x228] sm:$0xff] %v1868
        %2025 = vst [vmem:[#allocation2 + $0x230] sm:$0xff] %v1869
        %2026 = vst [vmem:[#allocation2 + $0x238] sm:$0xff] %v1870
        %2027 = vst [vmem:[#allocation2 + $0x240] sm:$0xff] %v1871
        %2028 = vst [vmem:[#allocation2 + $0x248] sm:$0xff] %v1872
        %2029 = vst [vmem:[#allocation2 + $0x250] sm:$0xff] %v1873
        %2030 = vst [vmem:[#allocation2 + $0x258] sm:$0xff] %v1874
        %2031 = vst [vmem:[#allocation2 + $0x260] sm:$0xff] %v1875
        %2032 = vst [vmem:[#allocation2 + $0x268] sm:$0xff] %v1876
        %2033 = vst [vmem:[#allocation2 + $0x270] sm:$0xff] %v1877
        %2034 = vst [vmem:[#allocation2 + $0x278] sm:$0xff] %v1878
        %2035 = vst [vmem:[#allocation2 + $0x280] sm:$0xff] %v1879
        %2036 = vst [vmem:[#allocation2 + $0x288] sm:$0xff] %v1880
        %2037 = vst [vmem:[#allocation2 + $0x290] sm:$0xff] %v1881
        %2038 = vst [vmem:[#allocation2 + $0x298] sm:$0xff] %v1882
        %2039 = vst [vmem:[#allocation2 + $0x2a0] sm:$0xff] %v1883
        %2040 = vst [vmem:[#allocation2 + $0x2a8] sm:$0xff] %v1884
        %2041 = vst [vmem:[#allocation2 + $0x2b0] sm:$0xff] %v1885
        %2042 = vst [vmem:[#allocation2 + $0x2b8] sm:$0xff] %v1886
        %2043 = vst [vmem:[#allocation2 + $0x2c0] sm:$0xff] %v1887
        %2044 = vst [vmem:[#allocation2 + $0x2c8] sm:$0xff] %v1888
        %2045 = vst [vmem:[#allocation2 + $0x2d0] sm:$0xff] %v1889
        %2046 = vst [vmem:[#allocation2 + $0x2d8] sm:$0xff] %v1890
        %2047 = vst [vmem:[#allocation2 + $0x2e0] sm:$0xff] %v1891
        %2048 = vst [vmem:[#allocation2 + $0x2e8] sm:$0xff] %v1892
        %2049 = vst [vmem:[#allocation2 + $0x2f0] sm:$0xff] %v1893
        %2050 = vst [vmem:[#allocation2 + $0x2f8] sm:$0xff] %v1894
        %2051 = vst [vmem:[#allocation2 + $0x300] sm:$0xff] %v1895
        %2052 = vst [vmem:[#allocation2 + $0x308] sm:$0xff] %v1896
        %2053 = vst [vmem:[#allocation2 + $0x310] sm:$0xff] %v1897
        %2054 = vst [vmem:[#allocation2 + $0x318] sm:$0xff] %v1898
        %2055 = vst [vmem:[#allocation2 + $0x320] sm:$0xff] %v1899
        %2056 = vst [vmem:[#allocation2 + $0x328] sm:$0xff] %v1900
        %2057 = vst [vmem:[#allocation2 + $0x330] sm:$0xff] %v1901
        %2058 = vst [vmem:[#allocation2 + $0x338] sm:$0xff] %v1902
        %2059 = vst [vmem:[#allocation2 + $0x340] sm:$0xff] %v1903
        %2060 = vst [vmem:[#allocation2 + $0x348] sm:$0xff] %v1904
        %2061 = vst [vmem:[#allocation2 + $0x350] sm:$0xff] %v1905
        %2062 = vst [vmem:[#allocation2 + $0x358] sm:$0xff] %v1906
        %2063 = vst [vmem:[#allocation2 + $0x360] sm:$0xff] %v1907
        %2064 = vst [vmem:[#allocation2 + $0x368] sm:$0xff] %v1908
        %2065 = vst [vmem:[#allocation2 + $0x370] sm:$0xff] %v1909
        %2066 = vst [vmem:[#allocation2 + $0x378] sm:$0xff] %v1910
        %2067 = vst [vmem:[#allocation2 + $0x380] sm:$0xff] %v1911
        %2068 = vst [vmem:[#allocation2 + $0x388] sm:$0xff] %v1912
        %2069 = vst [vmem:[#allocation2 + $0x390] sm:$0xff] %v1913
        %2070 = vst [vmem:[#allocation2 + $0x398] sm:$0xff] %v1914
        %2071 = vst [vmem:[#allocation2 + $0x3a0] sm:$0xff] %v1915
        %2072 = vst [vmem:[#allocation2 + $0x3a8] sm:$0xff] %v1916
        %2073 = vst [vmem:[#allocation2 + $0x3b0] sm:$0xff] %v1917
        %2074 = vst [vmem:[#allocation2 + $0x3b8] sm:$0xff] %v1918
        %2075 = vst [vmem:[#allocation2 + $0x3c0] sm:$0xff] %v1919
        %2076 = vst [vmem:[#allocation2 + $0x3c8] sm:$0xff] %v1920
        %2077 = vst [vmem:[#allocation2 + $0x3d0] sm:$0xff] %v1921
        %2078 = vst [vmem:[#allocation2 + $0x3d8] sm:$0xff] %v1922
        %2079 = vst [vmem:[#allocation2 + $0x3e0] sm:$0xff] %v1923
        %2080 = vst [vmem:[#allocation2 + $0x3e8] sm:$0xff] %v1924
        %2081 = vst [vmem:[#allocation2 + $0x3f0] sm:$0xff] %v1925
        %2082 = vst [vmem:[#allocation2 + $0x3f8] sm:$0xff] %v1926
        %2083 = vst [vmem:[#allocation2 + $0x400] sm:$0xff] %v1927
        %2084 = vst [vmem:[#allocation2 + $0x408] sm:$0xff] %v1928
        %2085 = vst [vmem:[#allocation2 + $0x410] sm:$0xff] %v1929
        %2086 = vst [vmem:[#allocation2 + $0x418] sm:$0xff] %v1930
        %2087 = vst [vmem:[#allocation2 + $0x420] sm:$0xff] %v1931
        %2088 = vst [vmem:[#allocation2 + $0x428] sm:$0xff] %v1932
        %2089 = vst [vmem:[#allocation2 + $0x430] sm:$0xff] %v1933
        %2090 = vst [vmem:[#allocation2 + $0x438] sm:$0xff] %v1934
        %2091 = vst [vmem:[#allocation2 + $0x440] sm:$0xff] %v1935
        %2092 = vst [vmem:[#allocation2 + $0x448] sm:$0xff] %v1936
        %2093 = vst [vmem:[#allocation2 + $0x450] sm:$0xff] %v1937
        %2094 = vst [vmem:[#allocation2 + $0x458] sm:$0xff] %v1938
        %2095 = vst [vmem:[#allocation2 + $0x460] sm:$0xff] %v1939
        %2096 = vst [vmem:[#allocation2 + $0x468] sm:$0xff] %v1940
        %2097 = vst [vmem:[#allocation2 + $0x470] sm:$0xff] %v1941
        %2098 = vst [vmem:[#allocation2 + $0x478] sm:$0xff] %v1942
        %2099 = vst [vmem:[#allocation2 + $0x480] sm:$0xff] %v1943
        %2100 = vst [vmem:[#allocation2 + $0x488] sm:$0xff] %v1944
        %2101 = vst [vmem:[#allocation2 + $0x490] sm:$0xff] %v1945
        %2102 = vst [vmem:[#allocation2 + $0x498] sm:$0xff] %v1946
        %2103 = vst [vmem:[#allocation2 + $0x4a0] sm:$0xff] %v1947
        %2104 = vst [vmem:[#allocation2 + $0x4a8] sm:$0xff] %v1948
        %2105 = vst [vmem:[#allocation2 + $0x4b0] sm:$0xff] %v1949
        %2106 = vst [vmem:[#allocation2 + $0x4b8] sm:$0xff] %v1950
        %2107 = vst [vmem:[#allocation2 + $0x4c0] sm:$0x3] %v1951
        %2108 = vst [vmem:[#allocation2 + $0x4c8] sm:$0x3] %v1952
        %2109 = vst [vmem:[#allocation2 + $0x4d0] sm:$0x3] %v1953
        %2110 = vst [vmem:[#allocation2 + $0x4d8] sm:$0x3] %v1954
        // Predicated region
        $region60: #{model_forward.10} parent=50 // pred_check
          %p2111 = pneg %p401
        $region61: #{model_forward.10} parent=50 // pred_check_branch
          %2113 = sbr.rel (%p2111) target = $region63
        $region62: #{model_forward.10} parent=50 // pred_region
          %v2114 = vld [vmem:[#allocation2] sm:$0xff]
          %v2115 = vld [vmem:[#allocation2 + $0x8] sm:$0xff]
          %v2116 = vld [vmem:[#allocation2 + $0x10] sm:$0xff]
          %v2117 = vld [vmem:[#allocation2 + $0x18] sm:$0xff]
          %v2118 = vld [vmem:[#allocation2 + $0x20] sm:$0xff]
          %v2119 = vld [vmem:[#allocation2 + $0x28] sm:$0xff]
          %v2120 = vld [vmem:[#allocation2 + $0x30] sm:$0xff]
          %v2121 = vld [vmem:[#allocation2 + $0x38] sm:$0xff]
          %v2122 = vld [vmem:[#allocation2 + $0x40] sm:$0xff]
          %v2123 = vld [vmem:[#allocation2 + $0x48] sm:$0xff]
          %v2124 = vld [vmem:[#allocation2 + $0x50] sm:$0xff]
          %v2125 = vld [vmem:[#allocation2 + $0x58] sm:$0xff]
          %v2126 = vld [vmem:[#allocation2 + $0x60] sm:$0xff]
          %v2127 = vld [vmem:[#allocation2 + $0x68] sm:$0xff]
          %v2128 = vld [vmem:[#allocation2 + $0x70] sm:$0xff]
          %v2129 = vld [vmem:[#allocation2 + $0x78] sm:$0xff]
          %v2130 = vld [vmem:[#allocation2 + $0x80] sm:$0xff]
          %v2131 = vld [vmem:[#allocation2 + $0x88] sm:$0xff]
          %v2132 = vld [vmem:[#allocation2 + $0x90] sm:$0xff]
          %v2133 = vld [vmem:[#allocation2 + $0x98] sm:$0xff]
          %v2134 = vld [vmem:[#allocation2 + $0xa0] sm:$0xff]
          %v2135 = vld [vmem:[#allocation2 + $0xa8] sm:$0xff]
          %v2136 = vld [vmem:[#allocation2 + $0xb0] sm:$0xff]
          %v2137 = vld [vmem:[#allocation2 + $0xb8] sm:$0xff]
          %v2138 = vld [vmem:[#allocation2 + $0xc0] sm:$0xff]
          %v2139 = vld [vmem:[#allocation2 + $0xc8] sm:$0xff]
          %v2140 = vld [vmem:[#allocation2 + $0xd0] sm:$0xff]
          %v2141 = vld [vmem:[#allocation2 + $0xd8] sm:$0xff]
          %v2142 = vld [vmem:[#allocation2 + $0xe0] sm:$0xff]
          %v2143 = vld [vmem:[#allocation2 + $0xe8] sm:$0xff]
          %v2144 = vld [vmem:[#allocation2 + $0xf0] sm:$0xff]
          %v2145 = vld [vmem:[#allocation2 + $0xf8] sm:$0xff]
          %v2146 = vld [vmem:[#allocation2 + $0x100] sm:$0xff]
          %v2147 = vld [vmem:[#allocation2 + $0x108] sm:$0xff]
          %v2148 = vld [vmem:[#allocation2 + $0x110] sm:$0xff]
          %v2149 = vld [vmem:[#allocation2 + $0x118] sm:$0xff]
          %v2150 = vld [vmem:[#allocation2 + $0x120] sm:$0xff]
          %v2151 = vld [vmem:[#allocation2 + $0x128] sm:$0xff]
          %v2152 = vld [vmem:[#allocation2 + $0x130] sm:$0xff]
          %v2153 = vld [vmem:[#allocation2 + $0x138] sm:$0xff]
          %v2154 = vld [vmem:[#allocation2 + $0x140] sm:$0xff]
          %v2155 = vld [vmem:[#allocation2 + $0x148] sm:$0xff]
          %v2156 = vld [vmem:[#allocation2 + $0x150] sm:$0xff]
          %v2157 = vld [vmem:[#allocation2 + $0x158] sm:$0xff]
          %v2158 = vld [vmem:[#allocation2 + $0x160] sm:$0xff]
          %v2159 = vld [vmem:[#allocation2 + $0x168] sm:$0xff]
          %v2160 = vld [vmem:[#allocation2 + $0x170] sm:$0xff]
          %v2161 = vld [vmem:[#allocation2 + $0x178] sm:$0xff]
          %v2162 = vld [vmem:[#allocation2 + $0x180] sm:$0xff]
          %v2163 = vld [vmem:[#allocation2 + $0x188] sm:$0xff]
          %v2164 = vld [vmem:[#allocation2 + $0x190] sm:$0xff]
          %v2165 = vld [vmem:[#allocation2 + $0x198] sm:$0xff]
          %v2166 = vld [vmem:[#allocation2 + $0x1a0] sm:$0xff]
          %v2167 = vld [vmem:[#allocation2 + $0x1a8] sm:$0xff]
          %v2168 = vld [vmem:[#allocation2 + $0x1b0] sm:$0xff]
          %v2169 = vld [vmem:[#allocation2 + $0x1b8] sm:$0xff]
          %v2170 = vld [vmem:[#allocation2 + $0x1c0] sm:$0xff]
          %v2171 = vld [vmem:[#allocation2 + $0x1c8] sm:$0xff]
          %v2172 = vld [vmem:[#allocation2 + $0x1d0] sm:$0xff]
          %v2173 = vld [vmem:[#allocation2 + $0x1d8] sm:$0xff]
          %v2174 = vld [vmem:[#allocation2 + $0x1e0] sm:$0xff]
          %v2175 = vld [vmem:[#allocation2 + $0x1e8] sm:$0xff]
          %v2176 = vld [vmem:[#allocation2 + $0x1f0] sm:$0xff]
          %v2177 = vld [vmem:[#allocation2 + $0x1f8] sm:$0xff]
          %v2178 = vld [vmem:[#allocation2 + $0x200] sm:$0xff]
          %v2179 = vld [vmem:[#allocation2 + $0x208] sm:$0xff]
          %v2180 = vld [vmem:[#allocation2 + $0x210] sm:$0xff]
          %v2181 = vld [vmem:[#allocation2 + $0x218] sm:$0xff]
          %v2182 = vld [vmem:[#allocation2 + $0x220] sm:$0xff]
          %v2183 = vld [vmem:[#allocation2 + $0x228] sm:$0xff]
          %v2184 = vld [vmem:[#allocation2 + $0x230] sm:$0xff]
          %v2185 = vld [vmem:[#allocation2 + $0x238] sm:$0xff]
          %v2186 = vld [vmem:[#allocation2 + $0x240] sm:$0xff]
          %v2187 = vld [vmem:[#allocation2 + $0x248] sm:$0xff]
          %v2188 = vld [vmem:[#allocation2 + $0x250] sm:$0xff]
          %v2189 = vld [vmem:[#allocation2 + $0x258] sm:$0xff]
          %v2190 = vld [vmem:[#allocation2 + $0x260] sm:$0xff]
          %v2191 = vld [vmem:[#allocation2 + $0x268] sm:$0xff]
          %v2192 = vld [vmem:[#allocation2 + $0x270] sm:$0xff]
          %v2193 = vld [vmem:[#allocation2 + $0x278] sm:$0xff]
          %v2194 = vld [vmem:[#allocation2 + $0x280] sm:$0xff]
          %v2195 = vld [vmem:[#allocation2 + $0x288] sm:$0xff]
          %v2196 = vld [vmem:[#allocation2 + $0x290] sm:$0xff]
          %v2197 = vld [vmem:[#allocation2 + $0x298] sm:$0xff]
          %v2198 = vld [vmem:[#allocation2 + $0x2a0] sm:$0xff]
          %v2199 = vld [vmem:[#allocation2 + $0x2a8] sm:$0xff]
          %v2200 = vld [vmem:[#allocation2 + $0x2b0] sm:$0xff]
          %v2201 = vld [vmem:[#allocation2 + $0x2b8] sm:$0xff]
          %v2202 = vld [vmem:[#allocation2 + $0x2c0] sm:$0xff]
          %v2203 = vld [vmem:[#allocation2 + $0x2c8] sm:$0xff]
          %v2204 = vld [vmem:[#allocation2 + $0x2d0] sm:$0xff]
          %v2205 = vld [vmem:[#allocation2 + $0x2d8] sm:$0xff]
          %v2206 = vld [vmem:[#allocation2 + $0x2e0] sm:$0xff]
          %v2207 = vld [vmem:[#allocation2 + $0x2e8] sm:$0xff]
          %v2208 = vld [vmem:[#allocation2 + $0x2f0] sm:$0xff]
          %v2209 = vld [vmem:[#allocation2 + $0x2f8] sm:$0xff]
          %v2210 = vld [vmem:[#allocation2 + $0x300] sm:$0xff]
          %v2211 = vld [vmem:[#allocation2 + $0x308] sm:$0xff]
          %v2212 = vld [vmem:[#allocation2 + $0x310] sm:$0xff]
          %v2213 = vld [vmem:[#allocation2 + $0x318] sm:$0xff]
          %v2214 = vld [vmem:[#allocation2 + $0x320] sm:$0xff]
          %v2215 = vld [vmem:[#allocation2 + $0x328] sm:$0xff]
          %v2216 = vld [vmem:[#allocation2 + $0x330] sm:$0xff]
          %v2217 = vld [vmem:[#allocation2 + $0x338] sm:$0xff]
          %v2218 = vld [vmem:[#allocation2 + $0x340] sm:$0xff]
          %v2219 = vld [vmem:[#allocation2 + $0x348] sm:$0xff]
          %v2220 = vld [vmem:[#allocation2 + $0x350] sm:$0xff]
          %v2221 = vld [vmem:[#allocation2 + $0x358] sm:$0xff]
          %v2222 = vld [vmem:[#allocation2 + $0x360] sm:$0xff]
          %v2223 = vld [vmem:[#allocation2 + $0x368] sm:$0xff]
          %v2224 = vld [vmem:[#allocation2 + $0x370] sm:$0xff]
          %v2225 = vld [vmem:[#allocation2 + $0x378] sm:$0xff]
          %v2226 = vld [vmem:[#allocation2 + $0x380] sm:$0xff]
          %v2227 = vld [vmem:[#allocation2 + $0x388] sm:$0xff]
          %v2228 = vld [vmem:[#allocation2 + $0x390] sm:$0xff]
          %v2229 = vld [vmem:[#allocation2 + $0x398] sm:$0xff]
          %v2230 = vld [vmem:[#allocation2 + $0x3a0] sm:$0xff]
          %v2231 = vld [vmem:[#allocation2 + $0x3a8] sm:$0xff]
          %v2232 = vld [vmem:[#allocation2 + $0x3b0] sm:$0xff]
          %v2233 = vld [vmem:[#allocation2 + $0x3b8] sm:$0xff]
          %v2234 = vld [vmem:[#allocation2 + $0x3c0] sm:$0xff]
          %v2235 = vld [vmem:[#allocation2 + $0x3c8] sm:$0xff]
          %v2236 = vld [vmem:[#allocation2 + $0x3d0] sm:$0xff]
          %v2237 = vld [vmem:[#allocation2 + $0x3d8] sm:$0xff]
          %v2238 = vld [vmem:[#allocation2 + $0x3e0] sm:$0xff]
          %v2239 = vld [vmem:[#allocation2 + $0x3e8] sm:$0xff]
          %v2240 = vld [vmem:[#allocation2 + $0x3f0] sm:$0xff]
          %v2241 = vld [vmem:[#allocation2 + $0x3f8] sm:$0xff]
          %v2242 = vld [vmem:[#allocation2 + $0x400] sm:$0xff]
          %v2243 = vld [vmem:[#allocation2 + $0x408] sm:$0xff]
          %v2244 = vld [vmem:[#allocation2 + $0x410] sm:$0xff]
          %v2245 = vld [vmem:[#allocation2 + $0x418] sm:$0xff]
          %v2246 = vld [vmem:[#allocation2 + $0x420] sm:$0xff]
          %v2247 = vld [vmem:[#allocation2 + $0x428] sm:$0xff]
          %v2248 = vld [vmem:[#allocation2 + $0x430] sm:$0xff]
          %v2249 = vld [vmem:[#allocation2 + $0x438] sm:$0xff]
          %v2250 = vld [vmem:[#allocation2 + $0x440] sm:$0xff]
          %v2251 = vld [vmem:[#allocation2 + $0x448] sm:$0xff]
          %v2252 = vld [vmem:[#allocation2 + $0x450] sm:$0xff]
          %v2253 = vld [vmem:[#allocation2 + $0x458] sm:$0xff]
          %v2254 = vld [vmem:[#allocation2 + $0x460] sm:$0xff]
          %v2255 = vld [vmem:[#allocation2 + $0x468] sm:$0xff]
          %v2256 = vld [vmem:[#allocation2 + $0x470] sm:$0xff]
          %v2257 = vld [vmem:[#allocation2 + $0x478] sm:$0xff]
          %v2258 = vld [vmem:[#allocation2 + $0x480] sm:$0xff]
          %v2259 = vld [vmem:[#allocation2 + $0x488] sm:$0xff]
          %v2260 = vld [vmem:[#allocation2 + $0x490] sm:$0xff]
          %v2261 = vld [vmem:[#allocation2 + $0x498] sm:$0xff]
          %v2262 = vld [vmem:[#allocation2 + $0x4a0] sm:$0xff]
          %v2263 = vld [vmem:[#allocation2 + $0x4a8] sm:$0xff]
          %v2264 = vld [vmem:[#allocation2 + $0x4b0] sm:$0xff]
          %v2265 = vld [vmem:[#allocation2 + $0x4b8] sm:$0xff]
          %v2266 = vld [vmem:[#allocation2 + $0x4c0] sm:$0x3]
          %v2267 = vld [vmem:[#allocation2 + $0x4c8] sm:$0x3]
          %v2268 = vld [vmem:[#allocation2 + $0x4d0] sm:$0x3]
          %v2269 = vld [vmem:[#allocation2 + $0x4d8] sm:$0x3]
          %v2270 = vld [vmem:[%s397] sm:$0xf]
          %v2272 = vlaneseq
          %v2273 = vshrl.u32 %v2272, 7
          %v2274 = vsub.s32 0, %v2273
          %v2275 = vrot.slane %v2270, %v2274
          %v2276 = vlaneseq
          %v2277 = vshrl.u32 %v2276, 7
          %v2278 = vsub.s32 1, %v2277
          %v2279 = vrot.slane %v2270, %v2278
          %v2280 = vlaneseq
          %v2281 = vshrl.u32 %v2280, 7
          %v2282 = vsub.s32 2, %v2281
          %v2283 = vrot.slane %v2270, %v2282
          %v2284 = vlaneseq
          %v2285 = vshrl.u32 %v2284, 7
          %v2286 = vsub.s32 3, %v2285
          %v2287 = vrot.slane %v2270, %v2286
          %v2292 = vadd.f32 %v2114, %v2275
          %v2293 = vadd.f32 %v2115, %v2279
          %v2294 = vadd.f32 %v2116, %v2283
          %v2295 = vadd.f32 %v2117, %v2287
          %v2296 = vadd.f32 %v2118, %v2275
          %v2297 = vadd.f32 %v2119, %v2279
          %v2298 = vadd.f32 %v2120, %v2283
          %v2299 = vadd.f32 %v2121, %v2287
          %v2300 = vadd.f32 %v2122, %v2275
          %v2301 = vadd.f32 %v2123, %v2279
          %v2302 = vadd.f32 %v2124, %v2283
          %v2303 = vadd.f32 %v2125, %v2287
          %v2304 = vadd.f32 %v2126, %v2275
          %v2305 = vadd.f32 %v2127, %v2279
          %v2306 = vadd.f32 %v2128, %v2283
          %v2307 = vadd.f32 %v2129, %v2287
          %v2308 = vadd.f32 %v2130, %v2275
          %v2309 = vadd.f32 %v2131, %v2279
          %v2310 = vadd.f32 %v2132, %v2283
          %v2311 = vadd.f32 %v2133, %v2287
          %v2312 = vadd.f32 %v2134, %v2275
          %v2313 = vadd.f32 %v2135, %v2279
          %v2314 = vadd.f32 %v2136, %v2283
          %v2315 = vadd.f32 %v2137, %v2287
          %v2316 = vadd.f32 %v2138, %v2275
          %v2317 = vadd.f32 %v2139, %v2279
          %v2318 = vadd.f32 %v2140, %v2283
          %v2319 = vadd.f32 %v2141, %v2287
          %v2320 = vadd.f32 %v2142, %v2275
          %v2321 = vadd.f32 %v2143, %v2279
          %v2322 = vadd.f32 %v2144, %v2283
          %v2323 = vadd.f32 %v2145, %v2287
          %v2324 = vadd.f32 %v2146, %v2275
          %v2325 = vadd.f32 %v2147, %v2279
          %v2326 = vadd.f32 %v2148, %v2283
          %v2327 = vadd.f32 %v2149, %v2287
          %v2328 = vadd.f32 %v2150, %v2275
          %v2329 = vadd.f32 %v2151, %v2279
          %v2330 = vadd.f32 %v2152, %v2283
          %v2331 = vadd.f32 %v2153, %v2287
          %v2332 = vadd.f32 %v2154, %v2275
          %v2333 = vadd.f32 %v2155, %v2279
          %v2334 = vadd.f32 %v2156, %v2283
          %v2335 = vadd.f32 %v2157, %v2287
          %v2336 = vadd.f32 %v2158, %v2275
          %v2337 = vadd.f32 %v2159, %v2279
          %v2338 = vadd.f32 %v2160, %v2283
          %v2339 = vadd.f32 %v2161, %v2287
          %v2340 = vadd.f32 %v2162, %v2275
          %v2341 = vadd.f32 %v2163, %v2279
          %v2342 = vadd.f32 %v2164, %v2283
          %v2343 = vadd.f32 %v2165, %v2287
          %v2344 = vadd.f32 %v2166, %v2275
          %v2345 = vadd.f32 %v2167, %v2279
          %v2346 = vadd.f32 %v2168, %v2283
          %v2347 = vadd.f32 %v2169, %v2287
          %v2348 = vadd.f32 %v2170, %v2275
          %v2349 = vadd.f32 %v2171, %v2279
          %v2350 = vadd.f32 %v2172, %v2283
          %v2351 = vadd.f32 %v2173, %v2287
          %v2352 = vadd.f32 %v2174, %v2275
          %v2353 = vadd.f32 %v2175, %v2279
          %v2354 = vadd.f32 %v2176, %v2283
          %v2355 = vadd.f32 %v2177, %v2287
          %v2356 = vadd.f32 %v2178, %v2275
          %v2357 = vadd.f32 %v2179, %v2279
          %v2358 = vadd.f32 %v2180, %v2283
          %v2359 = vadd.f32 %v2181, %v2287
          %v2360 = vadd.f32 %v2182, %v2275
          %v2361 = vadd.f32 %v2183, %v2279
          %v2362 = vadd.f32 %v2184, %v2283
          %v2363 = vadd.f32 %v2185, %v2287
          %v2364 = vadd.f32 %v2186, %v2275
          %v2365 = vadd.f32 %v2187, %v2279
          %v2366 = vadd.f32 %v2188, %v2283
          %v2367 = vadd.f32 %v2189, %v2287
          %v2368 = vadd.f32 %v2190, %v2275
          %v2369 = vadd.f32 %v2191, %v2279
          %v2370 = vadd.f32 %v2192, %v2283
          %v2371 = vadd.f32 %v2193, %v2287
          %v2372 = vadd.f32 %v2194, %v2275
          %v2373 = vadd.f32 %v2195, %v2279
          %v2374 = vadd.f32 %v2196, %v2283
          %v2375 = vadd.f32 %v2197, %v2287
          %v2376 = vadd.f32 %v2198, %v2275
          %v2377 = vadd.f32 %v2199, %v2279
          %v2378 = vadd.f32 %v2200, %v2283
          %v2379 = vadd.f32 %v2201, %v2287
          %v2380 = vadd.f32 %v2202, %v2275
          %v2381 = vadd.f32 %v2203, %v2279
          %v2382 = vadd.f32 %v2204, %v2283
          %v2383 = vadd.f32 %v2205, %v2287
          %v2384 = vadd.f32 %v2206, %v2275
          %v2385 = vadd.f32 %v2207, %v2279
          %v2386 = vadd.f32 %v2208, %v2283
          %v2387 = vadd.f32 %v2209, %v2287
          %v2388 = vadd.f32 %v2210, %v2275
          %v2389 = vadd.f32 %v2211, %v2279
          %v2390 = vadd.f32 %v2212, %v2283
          %v2391 = vadd.f32 %v2213, %v2287
          %v2392 = vadd.f32 %v2214, %v2275
          %v2393 = vadd.f32 %v2215, %v2279
          %v2394 = vadd.f32 %v2216, %v2283
          %v2395 = vadd.f32 %v2217, %v2287
          %v2396 = vadd.f32 %v2218, %v2275
          %v2397 = vadd.f32 %v2219, %v2279
          %v2398 = vadd.f32 %v2220, %v2283
          %v2399 = vadd.f32 %v2221, %v2287
          %v2400 = vadd.f32 %v2222, %v2275
          %v2401 = vadd.f32 %v2223, %v2279
          %v2402 = vadd.f32 %v2224, %v2283
          %v2403 = vadd.f32 %v2225, %v2287
          %v2404 = vadd.f32 %v2226, %v2275
          %v2405 = vadd.f32 %v2227, %v2279
          %v2406 = vadd.f32 %v2228, %v2283
          %v2407 = vadd.f32 %v2229, %v2287
          %v2408 = vadd.f32 %v2230, %v2275
          %v2409 = vadd.f32 %v2231, %v2279
          %v2410 = vadd.f32 %v2232, %v2283
          %v2411 = vadd.f32 %v2233, %v2287
          %v2412 = vadd.f32 %v2234, %v2275
          %v2413 = vadd.f32 %v2235, %v2279
          %v2414 = vadd.f32 %v2236, %v2283
          %v2415 = vadd.f32 %v2237, %v2287
          %v2416 = vadd.f32 %v2238, %v2275
          %v2417 = vadd.f32 %v2239, %v2279
          %v2418 = vadd.f32 %v2240, %v2283
          %v2419 = vadd.f32 %v2241, %v2287
          %v2420 = vadd.f32 %v2242, %v2275
          %v2421 = vadd.f32 %v2243, %v2279
          %v2422 = vadd.f32 %v2244, %v2283
          %v2423 = vadd.f32 %v2245, %v2287
          %v2424 = vadd.f32 %v2246, %v2275
          %v2425 = vadd.f32 %v2247, %v2279
          %v2426 = vadd.f32 %v2248, %v2283
          %v2427 = vadd.f32 %v2249, %v2287
          %v2428 = vadd.f32 %v2250, %v2275
          %v2429 = vadd.f32 %v2251, %v2279
          %v2430 = vadd.f32 %v2252, %v2283
          %v2431 = vadd.f32 %v2253, %v2287
          %v2432 = vadd.f32 %v2254, %v2275
          %v2433 = vadd.f32 %v2255, %v2279
          %v2434 = vadd.f32 %v2256, %v2283
          %v2435 = vadd.f32 %v2257, %v2287
          %v2436 = vadd.f32 %v2258, %v2275
          %v2437 = vadd.f32 %v2259, %v2279
          %v2438 = vadd.f32 %v2260, %v2283
          %v2439 = vadd.f32 %v2261, %v2287
          %v2440 = vadd.f32 %v2262, %v2275
          %v2441 = vadd.f32 %v2263, %v2279
          %v2442 = vadd.f32 %v2264, %v2283
          %v2443 = vadd.f32 %v2265, %v2287
          %v2444 = vadd.f32 %v2266, %v2275
          %v2445 = vadd.f32 %v2267, %v2279
          %v2446 = vadd.f32 %v2268, %v2283
          %v2447 = vadd.f32 %v2269, %v2287
          %2448 = vst [vmem:[%s379] sm:$0xff] %v2292
          %2449 = vst [vmem:[%s379 + $0x8] sm:$0xff] %v2293
          %2450 = vst [vmem:[%s379 + $0x10] sm:$0xff] %v2294
          %2451 = vst [vmem:[%s379 + $0x18] sm:$0xff] %v2295
          %2452 = vst [vmem:[%s379 + $0x20] sm:$0xff] %v2296
          %2453 = vst [vmem:[%s379 + $0x28] sm:$0xff] %v2297
          %2454 = vst [vmem:[%s379 + $0x30] sm:$0xff] %v2298
          %2455 = vst [vmem:[%s379 + $0x38] sm:$0xff] %v2299
          %2456 = vst [vmem:[%s379 + $0x40] sm:$0xff] %v2300
          %2457 = vst [vmem:[%s379 + $0x48] sm:$0xff] %v2301
          %2458 = vst [vmem:[%s379 + $0x50] sm:$0xff] %v2302
          %2459 = vst [vmem:[%s379 + $0x58] sm:$0xff] %v2303
          %2460 = vst [vmem:[%s379 + $0x60] sm:$0xff] %v2304
          %2461 = vst [vmem:[%s379 + $0x68] sm:$0xff] %v2305
          %2462 = vst [vmem:[%s379 + $0x70] sm:$0xff] %v2306
          %2463 = vst [vmem:[%s379 + $0x78] sm:$0xff] %v2307
          %2464 = vst [vmem:[%s379 + $0x80] sm:$0xff] %v2308
          %2465 = vst [vmem:[%s379 + $0x88] sm:$0xff] %v2309
          %2466 = vst [vmem:[%s379 + $0x90] sm:$0xff] %v2310
          %2467 = vst [vmem:[%s379 + $0x98] sm:$0xff] %v2311
          %2468 = vst [vmem:[%s379 + $0xa0] sm:$0xff] %v2312
          %2469 = vst [vmem:[%s379 + $0xa8] sm:$0xff] %v2313
          %2470 = vst [vmem:[%s379 + $0xb0] sm:$0xff] %v2314
          %2471 = vst [vmem:[%s379 + $0xb8] sm:$0xff] %v2315
          %2472 = vst [vmem:[%s379 + $0xc0] sm:$0xff] %v2316
          %2473 = vst [vmem:[%s379 + $0xc8] sm:$0xff] %v2317
          %2474 = vst [vmem:[%s379 + $0xd0] sm:$0xff] %v2318
          %2475 = vst [vmem:[%s379 + $0xd8] sm:$0xff] %v2319
          %2476 = vst [vmem:[%s379 + $0xe0] sm:$0xff] %v2320
          %2477 = vst [vmem:[%s379 + $0xe8] sm:$0xff] %v2321
          %2478 = vst [vmem:[%s379 + $0xf0] sm:$0xff] %v2322
          %2479 = vst [vmem:[%s379 + $0xf8] sm:$0xff] %v2323
          %2480 = vst [vmem:[%s379 + $0x100] sm:$0xff] %v2324
          %2481 = vst [vmem:[%s379 + $0x108] sm:$0xff] %v2325
          %2482 = vst [vmem:[%s379 + $0x110] sm:$0xff] %v2326
          %2483 = vst [vmem:[%s379 + $0x118] sm:$0xff] %v2327
          %2484 = vst [vmem:[%s379 + $0x120] sm:$0xff] %v2328
          %2485 = vst [vmem:[%s379 + $0x128] sm:$0xff] %v2329
          %2486 = vst [vmem:[%s379 + $0x130] sm:$0xff] %v2330
          %2487 = vst [vmem:[%s379 + $0x138] sm:$0xff] %v2331
          %2488 = vst [vmem:[%s379 + $0x140] sm:$0xff] %v2332
          %2489 = vst [vmem:[%s379 + $0x148] sm:$0xff] %v2333
          %2490 = vst [vmem:[%s379 + $0x150] sm:$0xff] %v2334
          %2491 = vst [vmem:[%s379 + $0x158] sm:$0xff] %v2335
          %2492 = vst [vmem:[%s379 + $0x160] sm:$0xff] %v2336
          %2493 = vst [vmem:[%s379 + $0x168] sm:$0xff] %v2337
          %2494 = vst [vmem:[%s379 + $0x170] sm:$0xff] %v2338
          %2495 = vst [vmem:[%s379 + $0x178] sm:$0xff] %v2339
          %2496 = vst [vmem:[%s379 + $0x180] sm:$0xff] %v2340
          %2497 = vst [vmem:[%s379 + $0x188] sm:$0xff] %v2341
          %2498 = vst [vmem:[%s379 + $0x190] sm:$0xff] %v2342
          %2499 = vst [vmem:[%s379 + $0x198] sm:$0xff] %v2343
          %2500 = vst [vmem:[%s379 + $0x1a0] sm:$0xff] %v2344
          %2501 = vst [vmem:[%s379 + $0x1a8] sm:$0xff] %v2345
          %2502 = vst [vmem:[%s379 + $0x1b0] sm:$0xff] %v2346
          %2503 = vst [vmem:[%s379 + $0x1b8] sm:$0xff] %v2347
          %2504 = vst [vmem:[%s379 + $0x1c0] sm:$0xff] %v2348
          %2505 = vst [vmem:[%s379 + $0x1c8] sm:$0xff] %v2349
          %2506 = vst [vmem:[%s379 + $0x1d0] sm:$0xff] %v2350
          %2507 = vst [vmem:[%s379 + $0x1d8] sm:$0xff] %v2351
          %2508 = vst [vmem:[%s379 + $0x1e0] sm:$0xff] %v2352
          %2509 = vst [vmem:[%s379 + $0x1e8] sm:$0xff] %v2353
          %2510 = vst [vmem:[%s379 + $0x1f0] sm:$0xff] %v2354
          %2511 = vst [vmem:[%s379 + $0x1f8] sm:$0xff] %v2355
          %2512 = vst [vmem:[%s379 + $0x200] sm:$0xff] %v2356
          %2513 = vst [vmem:[%s379 + $0x208] sm:$0xff] %v2357
          %2514 = vst [vmem:[%s379 + $0x210] sm:$0xff] %v2358
          %2515 = vst [vmem:[%s379 + $0x218] sm:$0xff] %v2359
          %2516 = vst [vmem:[%s379 + $0x220] sm:$0xff] %v2360
          %2517 = vst [vmem:[%s379 + $0x228] sm:$0xff] %v2361
          %2518 = vst [vmem:[%s379 + $0x230] sm:$0xff] %v2362
          %2519 = vst [vmem:[%s379 + $0x238] sm:$0xff] %v2363
          %2520 = vst [vmem:[%s379 + $0x240] sm:$0xff] %v2364
          %2521 = vst [vmem:[%s379 + $0x248] sm:$0xff] %v2365
          %2522 = vst [vmem:[%s379 + $0x250] sm:$0xff] %v2366
          %2523 = vst [vmem:[%s379 + $0x258] sm:$0xff] %v2367
          %2524 = vst [vmem:[%s379 + $0x260] sm:$0xff] %v2368
          %2525 = vst [vmem:[%s379 + $0x268] sm:$0xff] %v2369
          %2526 = vst [vmem:[%s379 + $0x270] sm:$0xff] %v2370
          %2527 = vst [vmem:[%s379 + $0x278] sm:$0xff] %v2371
          %2528 = vst [vmem:[%s379 + $0x280] sm:$0xff] %v2372
          %2529 = vst [vmem:[%s379 + $0x288] sm:$0xff] %v2373
          %2530 = vst [vmem:[%s379 + $0x290] sm:$0xff] %v2374
          %2531 = vst [vmem:[%s379 + $0x298] sm:$0xff] %v2375
          %2532 = vst [vmem:[%s379 + $0x2a0] sm:$0xff] %v2376
          %2533 = vst [vmem:[%s379 + $0x2a8] sm:$0xff] %v2377
          %2534 = vst [vmem:[%s379 + $0x2b0] sm:$0xff] %v2378
          %2535 = vst [vmem:[%s379 + $0x2b8] sm:$0xff] %v2379
          %2536 = vst [vmem:[%s379 + $0x2c0] sm:$0xff] %v2380
          %2537 = vst [vmem:[%s379 + $0x2c8] sm:$0xff] %v2381
          %2538 = vst [vmem:[%s379 + $0x2d0] sm:$0xff] %v2382
          %2539 = vst [vmem:[%s379 + $0x2d8] sm:$0xff] %v2383
          %2540 = vst [vmem:[%s379 + $0x2e0] sm:$0xff] %v2384
          %2541 = vst [vmem:[%s379 + $0x2e8] sm:$0xff] %v2385
          %2542 = vst [vmem:[%s379 + $0x2f0] sm:$0xff] %v2386
          %2543 = vst [vmem:[%s379 + $0x2f8] sm:$0xff] %v2387
          %2544 = vst [vmem:[%s379 + $0x300] sm:$0xff] %v2388
          %2545 = vst [vmem:[%s379 + $0x308] sm:$0xff] %v2389
          %2546 = vst [vmem:[%s379 + $0x310] sm:$0xff] %v2390
          %2547 = vst [vmem:[%s379 + $0x318] sm:$0xff] %v2391
          %2548 = vst [vmem:[%s379 + $0x320] sm:$0xff] %v2392
          %2549 = vst [vmem:[%s379 + $0x328] sm:$0xff] %v2393
          %2550 = vst [vmem:[%s379 + $0x330] sm:$0xff] %v2394
          %2551 = vst [vmem:[%s379 + $0x338] sm:$0xff] %v2395
          %2552 = vst [vmem:[%s379 + $0x340] sm:$0xff] %v2396
          %2553 = vst [vmem:[%s379 + $0x348] sm:$0xff] %v2397
          %2554 = vst [vmem:[%s379 + $0x350] sm:$0xff] %v2398
          %2555 = vst [vmem:[%s379 + $0x358] sm:$0xff] %v2399
          %2556 = vst [vmem:[%s379 + $0x360] sm:$0xff] %v2400
          %2557 = vst [vmem:[%s379 + $0x368] sm:$0xff] %v2401
          %2558 = vst [vmem:[%s379 + $0x370] sm:$0xff] %v2402
          %2559 = vst [vmem:[%s379 + $0x378] sm:$0xff] %v2403
          %2560 = vst [vmem:[%s379 + $0x380] sm:$0xff] %v2404
          %2561 = vst [vmem:[%s379 + $0x388] sm:$0xff] %v2405
          %2562 = vst [vmem:[%s379 + $0x390] sm:$0xff] %v2406
          %2563 = vst [vmem:[%s379 + $0x398] sm:$0xff] %v2407
          %2564 = vst [vmem:[%s379 + $0x3a0] sm:$0xff] %v2408
          %2565 = vst [vmem:[%s379 + $0x3a8] sm:$0xff] %v2409
          %2566 = vst [vmem:[%s379 + $0x3b0] sm:$0xff] %v2410
          %2567 = vst [vmem:[%s379 + $0x3b8] sm:$0xff] %v2411
          %2568 = vst [vmem:[%s379 + $0x3c0] sm:$0xff] %v2412
          %2569 = vst [vmem:[%s379 + $0x3c8] sm:$0xff] %v2413
          %2570 = vst [vmem:[%s379 + $0x3d0] sm:$0xff] %v2414
          %2571 = vst [vmem:[%s379 + $0x3d8] sm:$0xff] %v2415
          %2572 = vst [vmem:[%s379 + $0x3e0] sm:$0xff] %v2416
          %2573 = vst [vmem:[%s379 + $0x3e8] sm:$0xff] %v2417
          %2574 = vst [vmem:[%s379 + $0x3f0] sm:$0xff] %v2418
          %2575 = vst [vmem:[%s379 + $0x3f8] sm:$0xff] %v2419
          %2576 = vst [vmem:[%s379 + $0x400] sm:$0xff] %v2420
          %2577 = vst [vmem:[%s379 + $0x408] sm:$0xff] %v2421
          %2578 = vst [vmem:[%s379 + $0x410] sm:$0xff] %v2422
          %2579 = vst [vmem:[%s379 + $0x418] sm:$0xff] %v2423
          %2580 = vst [vmem:[%s379 + $0x420] sm:$0xff] %v2424
          %2581 = vst [vmem:[%s379 + $0x428] sm:$0xff] %v2425
          %2582 = vst [vmem:[%s379 + $0x430] sm:$0xff] %v2426
          %2583 = vst [vmem:[%s379 + $0x438] sm:$0xff] %v2427
          %2584 = vst [vmem:[%s379 + $0x440] sm:$0xff] %v2428
          %2585 = vst [vmem:[%s379 + $0x448] sm:$0xff] %v2429
          %2586 = vst [vmem:[%s379 + $0x450] sm:$0xff] %v2430
          %2587 = vst [vmem:[%s379 + $0x458] sm:$0xff] %v2431
          %2588 = vst [vmem:[%s379 + $0x460] sm:$0xff] %v2432
          %2589 = vst [vmem:[%s379 + $0x468] sm:$0xff] %v2433
          %2590 = vst [vmem:[%s379 + $0x470] sm:$0xff] %v2434
          %2591 = vst [vmem:[%s379 + $0x478] sm:$0xff] %v2435
          %2592 = vst [vmem:[%s379 + $0x480] sm:$0xff] %v2436
          %2593 = vst [vmem:[%s379 + $0x488] sm:$0xff] %v2437
          %2594 = vst [vmem:[%s379 + $0x490] sm:$0xff] %v2438
          %2595 = vst [vmem:[%s379 + $0x498] sm:$0xff] %v2439
          %2596 = vst [vmem:[%s379 + $0x4a0] sm:$0xff] %v2440
          %2597 = vst [vmem:[%s379 + $0x4a8] sm:$0xff] %v2441
          %2598 = vst [vmem:[%s379 + $0x4b0] sm:$0xff] %v2442
          %2599 = vst [vmem:[%s379 + $0x4b8] sm:$0xff] %v2443
          %2600 = vst [vmem:[%s379 + $0x4c0] sm:$0x3] %v2444
          %2601 = vst [vmem:[%s379 + $0x4c8] sm:$0x3] %v2445
          %2602 = vst [vmem:[%s379 + $0x4d0] sm:$0x3] %v2446
          %2603 = vst [vmem:[%s379 + $0x4d8] sm:$0x3] %v2447
        $region63: #{model_forward.10} parent=50 // pred_fallthru
          _
        %s2604 = sand.u32 %s125, 1
        %s2605 = sand.u32 %s125, 1
        %s2606 = smul.addr %s2605, 1248
        %s2607 = scalar_lea.vmem [#allocation4], %s2606
        // Predicated region
        $region64: #{model_forward.10} parent=50 // pred_check
          %p2608 = pneg %p135
        $region65: #{model_forward.10} parent=50 // pred_check_branch
          %2610 = sbr.rel (%p2608) target = $region67
        $region66: #{model_forward.10} parent=50 // pred_region
          %s2611 = smul.u32 39, %s19
          %s2612 = smul.u32 4, %s20
          %s2613 = smul.addr %s2611, 8
          %s2614 = sadd.s32 %s2612, %s2613
          %s2615 = smul.addr %s2614, 8
          %s2616 = scalar_lea.vmem %s3, %s2615
          // Predicated region
          $region68: #{model_forward.10} parent=66 // pred_check
            _
          $region69: #{model_forward.10} parent=66 // pred_check_branch
            %2618 = sbr.rel (0) target = $region71
          $region70: #{model_forward.10} parent=66 // pred_region
            // Predicated region
            $region72: #{model_forward.10} parent=70 // pred_check
              _
            $region73: #{model_forward.10} parent=70 // pred_check_branch
              %2620 = sbr.rel (0) target = $region75
            $region74: #{model_forward.10} parent=70 // pred_region
              loop: start=0, step=1, limit=1
              $region76: #{model_forward.10} parent=74 // loop_pre_header
                _
              $region77: #{model_forward.10} parent=74 // loop_header
                %s2622 = sphi 0, %s2626
                %p2623 = scmp.ge.s32.totalorder %s2622, 1
                %s2627 = sphi %s2607, %s2607
                %s2628 = sphi %s2616, %s2616
              $region78: #{model_forward.10} parent=74 // loop_header_branch
                %2625 = sbr.rel (%p2623) target = $region82
              $region79: #{model_forward.10} parent=74 // loop_body
                %v2629 = vld [vmem:[%s2627] sm:$0xff]
                %2630 = vst [vmem:[%s2628] sm:$0xff] %v2629
                %v2631 = vld [vmem:[%s2627 + $0x8] sm:$0xff]
                %2632 = vst [vmem:[%s2628 + $0x8] sm:$0xff] %v2631
                %v2633 = vld [vmem:[%s2627 + $0x10] sm:$0xff]
                %2634 = vst [vmem:[%s2628 + $0x10] sm:$0xff] %v2633
                %v2635 = vld [vmem:[%s2627 + $0x18] sm:$0xff]
                %2636 = vst [vmem:[%s2628 + $0x18] sm:$0xff] %v2635
                %v2637 = vld [vmem:[%s2627 + $0x20] sm:$0xff]
                %2638 = vst [vmem:[%s2628 + $0x40] sm:$0xff] %v2637
                %v2639 = vld [vmem:[%s2627 + $0x28] sm:$0xff]
                %2640 = vst [vmem:[%s2628 + $0x48] sm:$0xff] %v2639
                %v2641 = vld [vmem:[%s2627 + $0x30] sm:$0xff]
                %2642 = vst [vmem:[%s2628 + $0x50] sm:$0xff] %v2641
                %v2643 = vld [vmem:[%s2627 + $0x38] sm:$0xff]
                %2644 = vst [vmem:[%s2628 + $0x58] sm:$0xff] %v2643
                %v2645 = vld [vmem:[%s2627 + $0x40] sm:$0xff]
                %2646 = vst [vmem:[%s2628 + $0x80] sm:$0xff] %v2645
                %v2647 = vld [vmem:[%s2627 + $0x48] sm:$0xff]
                %2648 = vst [vmem:[%s2628 + $0x88] sm:$0xff] %v2647
                %v2649 = vld [vmem:[%s2627 + $0x50] sm:$0xff]
                %2650 = vst [vmem:[%s2628 + $0x90] sm:$0xff] %v2649
                %v2651 = vld [vmem:[%s2627 + $0x58] sm:$0xff]
                %2652 = vst [vmem:[%s2628 + $0x98] sm:$0xff] %v2651
                %v2653 = vld [vmem:[%s2627 + $0x60] sm:$0xff]
                %2654 = vst [vmem:[%s2628 + $0xc0] sm:$0xff] %v2653
                %v2655 = vld [vmem:[%s2627 + $0x68] sm:$0xff]
                %2656 = vst [vmem:[%s2628 + $0xc8] sm:$0xff] %v2655
                %v2657 = vld [vmem:[%s2627 + $0x70] sm:$0xff]
                %2658 = vst [vmem:[%s2628 + $0xd0] sm:$0xff] %v2657
                %v2659 = vld [vmem:[%s2627 + $0x78] sm:$0xff]
                %2660 = vst [vmem:[%s2628 + $0xd8] sm:$0xff] %v2659
                %v2661 = vld [vmem:[%s2627 + $0x80] sm:$0xff]
                %2662 = vst [vmem:[%s2628 + $0x100] sm:$0xff] %v2661
                %v2663 = vld [vmem:[%s2627 + $0x88] sm:$0xff]
                %2664 = vst [vmem:[%s2628 + $0x108] sm:$0xff] %v2663
                %v2665 = vld [vmem:[%s2627 + $0x90] sm:$0xff]
                %2666 = vst [vmem:[%s2628 + $0x110] sm:$0xff] %v2665
                %v2667 = vld [vmem:[%s2627 + $0x98] sm:$0xff]
                %2668 = vst [vmem:[%s2628 + $0x118] sm:$0xff] %v2667
                %v2669 = vld [vmem:[%s2627 + $0xa0] sm:$0xff]
                %2670 = vst [vmem:[%s2628 + $0x140] sm:$0xff] %v2669
                %v2671 = vld [vmem:[%s2627 + $0xa8] sm:$0xff]
                %2672 = vst [vmem:[%s2628 + $0x148] sm:$0xff] %v2671
                %v2673 = vld [vmem:[%s2627 + $0xb0] sm:$0xff]
                %2674 = vst [vmem:[%s2628 + $0x150] sm:$0xff] %v2673
                %v2675 = vld [vmem:[%s2627 + $0xb8] sm:$0xff]
                %2676 = vst [vmem:[%s2628 + $0x158] sm:$0xff] %v2675
                %v2677 = vld [vmem:[%s2627 + $0xc0] sm:$0xff]
                %2678 = vst [vmem:[%s2628 + $0x180] sm:$0xff] %v2677
                %v2679 = vld [vmem:[%s2627 + $0xc8] sm:$0xff]
                %2680 = vst [vmem:[%s2628 + $0x188] sm:$0xff] %v2679
                %v2681 = vld [vmem:[%s2627 + $0xd0] sm:$0xff]
                %2682 = vst [vmem:[%s2628 + $0x190] sm:$0xff] %v2681
                %v2683 = vld [vmem:[%s2627 + $0xd8] sm:$0xff]
                %2684 = vst [vmem:[%s2628 + $0x198] sm:$0xff] %v2683
                %v2685 = vld [vmem:[%s2627 + $0xe0] sm:$0xff]
                %2686 = vst [vmem:[%s2628 + $0x1c0] sm:$0xff] %v2685
                %v2687 = vld [vmem:[%s2627 + $0xe8] sm:$0xff]
                %2688 = vst [vmem:[%s2628 + $0x1c8] sm:$0xff] %v2687
                %v2689 = vld [vmem:[%s2627 + $0xf0] sm:$0xff]
                %2690 = vst [vmem:[%s2628 + $0x1d0] sm:$0xff] %v2689
                %v2691 = vld [vmem:[%s2627 + $0xf8] sm:$0xff]
                %2692 = vst [vmem:[%s2628 + $0x1d8] sm:$0xff] %v2691
                %v2693 = vld [vmem:[%s2627 + $0x100] sm:$0xff]
                %2694 = vst [vmem:[%s2628 + $0x200] sm:$0xff] %v2693
                %v2695 = vld [vmem:[%s2627 + $0x108] sm:$0xff]
                %2696 = vst [vmem:[%s2628 + $0x208] sm:$0xff] %v2695
                %v2697 = vld [vmem:[%s2627 + $0x110] sm:$0xff]
                %2698 = vst [vmem:[%s2628 + $0x210] sm:$0xff] %v2697
                %v2699 = vld [vmem:[%s2627 + $0x118] sm:$0xff]
                %2700 = vst [vmem:[%s2628 + $0x218] sm:$0xff] %v2699
                %v2701 = vld [vmem:[%s2627 + $0x120] sm:$0xff]
                %2702 = vst [vmem:[%s2628 + $0x240] sm:$0xff] %v2701
                %v2703 = vld [vmem:[%s2627 + $0x128] sm:$0xff]
                %2704 = vst [vmem:[%s2628 + $0x248] sm:$0xff] %v2703
                %v2705 = vld [vmem:[%s2627 + $0x130] sm:$0xff]
                %2706 = vst [vmem:[%s2628 + $0x250] sm:$0xff] %v2705
                %v2707 = vld [vmem:[%s2627 + $0x138] sm:$0xff]
                %2708 = vst [vmem:[%s2628 + $0x258] sm:$0xff] %v2707
                %v2709 = vld [vmem:[%s2627 + $0x140] sm:$0xff]
                %2710 = vst [vmem:[%s2628 + $0x280] sm:$0xff] %v2709
                %v2711 = vld [vmem:[%s2627 + $0x148] sm:$0xff]
                %2712 = vst [vmem:[%s2628 + $0x288] sm:$0xff] %v2711
                %v2713 = vld [vmem:[%s2627 + $0x150] sm:$0xff]
                %2714 = vst [vmem:[%s2628 + $0x290] sm:$0xff] %v2713
                %v2715 = vld [vmem:[%s2627 + $0x158] sm:$0xff]
                %2716 = vst [vmem:[%s2628 + $0x298] sm:$0xff] %v2715
                %v2717 = vld [vmem:[%s2627 + $0x160] sm:$0xff]
                %2718 = vst [vmem:[%s2628 + $0x2c0] sm:$0xff] %v2717
                %v2719 = vld [vmem:[%s2627 + $0x168] sm:$0xff]
                %2720 = vst [vmem:[%s2628 + $0x2c8] sm:$0xff] %v2719
                %v2721 = vld [vmem:[%s2627 + $0x170] sm:$0xff]
                %2722 = vst [vmem:[%s2628 + $0x2d0] sm:$0xff] %v2721
                %v2723 = vld [vmem:[%s2627 + $0x178] sm:$0xff]
                %2724 = vst [vmem:[%s2628 + $0x2d8] sm:$0xff] %v2723
                %v2725 = vld [vmem:[%s2627 + $0x180] sm:$0xff]
                %2726 = vst [vmem:[%s2628 + $0x300] sm:$0xff] %v2725
                %v2727 = vld [vmem:[%s2627 + $0x188] sm:$0xff]
                %2728 = vst [vmem:[%s2628 + $0x308] sm:$0xff] %v2727
                %v2729 = vld [vmem:[%s2627 + $0x190] sm:$0xff]
                %2730 = vst [vmem:[%s2628 + $0x310] sm:$0xff] %v2729
                %v2731 = vld [vmem:[%s2627 + $0x198] sm:$0xff]
                %2732 = vst [vmem:[%s2628 + $0x318] sm:$0xff] %v2731
                %v2733 = vld [vmem:[%s2627 + $0x1a0] sm:$0xff]
                %2734 = vst [vmem:[%s2628 + $0x340] sm:$0xff] %v2733
                %v2735 = vld [vmem:[%s2627 + $0x1a8] sm:$0xff]
                %2736 = vst [vmem:[%s2628 + $0x348] sm:$0xff] %v2735
                %v2737 = vld [vmem:[%s2627 + $0x1b0] sm:$0xff]
                %2738 = vst [vmem:[%s2628 + $0x350] sm:$0xff] %v2737
                %v2739 = vld [vmem:[%s2627 + $0x1b8] sm:$0xff]
                %2740 = vst [vmem:[%s2628 + $0x358] sm:$0xff] %v2739
                %v2741 = vld [vmem:[%s2627 + $0x1c0] sm:$0xff]
                %2742 = vst [vmem:[%s2628 + $0x380] sm:$0xff] %v2741
                %v2743 = vld [vmem:[%s2627 + $0x1c8] sm:$0xff]
                %2744 = vst [vmem:[%s2628 + $0x388] sm:$0xff] %v2743
                %v2745 = vld [vmem:[%s2627 + $0x1d0] sm:$0xff]
                %2746 = vst [vmem:[%s2628 + $0x390] sm:$0xff] %v2745
                %v2747 = vld [vmem:[%s2627 + $0x1d8] sm:$0xff]
                %2748 = vst [vmem:[%s2628 + $0x398] sm:$0xff] %v2747
                %v2749 = vld [vmem:[%s2627 + $0x1e0] sm:$0xff]
                %2750 = vst [vmem:[%s2628 + $0x3c0] sm:$0xff] %v2749
                %v2751 = vld [vmem:[%s2627 + $0x1e8] sm:$0xff]
                %2752 = vst [vmem:[%s2628 + $0x3c8] sm:$0xff] %v2751
                %v2753 = vld [vmem:[%s2627 + $0x1f0] sm:$0xff]
                %2754 = vst [vmem:[%s2628 + $0x3d0] sm:$0xff] %v2753
                %v2755 = vld [vmem:[%s2627 + $0x1f8] sm:$0xff]
                %2756 = vst [vmem:[%s2628 + $0x3d8] sm:$0xff] %v2755
                %v2757 = vld [vmem:[%s2627 + $0x200] sm:$0xff]
                %2758 = vst [vmem:[%s2628 + $0x400] sm:$0xff] %v2757
                %v2759 = vld [vmem:[%s2627 + $0x208] sm:$0xff]
                %2760 = vst [vmem:[%s2628 + $0x408] sm:$0xff] %v2759
                %v2761 = vld [vmem:[%s2627 + $0x210] sm:$0xff]
                %2762 = vst [vmem:[%s2628 + $0x410] sm:$0xff] %v2761
                %v2763 = vld [vmem:[%s2627 + $0x218] sm:$0xff]
                %2764 = vst [vmem:[%s2628 + $0x418] sm:$0xff] %v2763
                %v2765 = vld [vmem:[%s2627 + $0x220] sm:$0xff]
                %2766 = vst [vmem:[%s2628 + $0x440] sm:$0xff] %v2765
                %v2767 = vld [vmem:[%s2627 + $0x228] sm:$0xff]
                %2768 = vst [vmem:[%s2628 + $0x448] sm:$0xff] %v2767
                %v2769 = vld [vmem:[%s2627 + $0x230] sm:$0xff]
                %2770 = vst [vmem:[%s2628 + $0x450] sm:$0xff] %v2769
                %v2771 = vld [vmem:[%s2627 + $0x238] sm:$0xff]
                %2772 = vst [vmem:[%s2628 + $0x458] sm:$0xff] %v2771
                %v2773 = vld [vmem:[%s2627 + $0x240] sm:$0xff]
                %2774 = vst [vmem:[%s2628 + $0x480] sm:$0xff] %v2773
                %v2775 = vld [vmem:[%s2627 + $0x248] sm:$0xff]
                %2776 = vst [vmem:[%s2628 + $0x488] sm:$0xff] %v2775
                %v2777 = vld [vmem:[%s2627 + $0x250] sm:$0xff]
                %2778 = vst [vmem:[%s2628 + $0x490] sm:$0xff] %v2777
                %v2779 = vld [vmem:[%s2627 + $0x258] sm:$0xff]
                %2780 = vst [vmem:[%s2628 + $0x498] sm:$0xff] %v2779
                %v2781 = vld [vmem:[%s2627 + $0x260] sm:$0xff]
                %2782 = vst [vmem:[%s2628 + $0x4c0] sm:$0xff] %v2781
                %v2783 = vld [vmem:[%s2627 + $0x268] sm:$0xff]
                %2784 = vst [vmem:[%s2628 + $0x4c8] sm:$0xff] %v2783
                %v2785 = vld [vmem:[%s2627 + $0x270] sm:$0xff]
                %2786 = vst [vmem:[%s2628 + $0x4d0] sm:$0xff] %v2785
                %v2787 = vld [vmem:[%s2627 + $0x278] sm:$0xff]
                %2788 = vst [vmem:[%s2628 + $0x4d8] sm:$0xff] %v2787
                %v2789 = vld [vmem:[%s2627 + $0x280] sm:$0xff]
                %2790 = vst [vmem:[%s2628 + $0x500] sm:$0xff] %v2789
                %v2791 = vld [vmem:[%s2627 + $0x288] sm:$0xff]
                %2792 = vst [vmem:[%s2628 + $0x508] sm:$0xff] %v2791
                %v2793 = vld [vmem:[%s2627 + $0x290] sm:$0xff]
                %2794 = vst [vmem:[%s2628 + $0x510] sm:$0xff] %v2793
                %v2795 = vld [vmem:[%s2627 + $0x298] sm:$0xff]
                %2796 = vst [vmem:[%s2628 + $0x518] sm:$0xff] %v2795
                %v2797 = vld [vmem:[%s2627 + $0x2a0] sm:$0xff]
                %2798 = vst [vmem:[%s2628 + $0x540] sm:$0xff] %v2797
                %v2799 = vld [vmem:[%s2627 + $0x2a8] sm:$0xff]
                %2800 = vst [vmem:[%s2628 + $0x548] sm:$0xff] %v2799
                %v2801 = vld [vmem:[%s2627 + $0x2b0] sm:$0xff]
                %2802 = vst [vmem:[%s2628 + $0x550] sm:$0xff] %v2801
                %v2803 = vld [vmem:[%s2627 + $0x2b8] sm:$0xff]
                %2804 = vst [vmem:[%s2628 + $0x558] sm:$0xff] %v2803
                %v2805 = vld [vmem:[%s2627 + $0x2c0] sm:$0xff]
                %2806 = vst [vmem:[%s2628 + $0x580] sm:$0xff] %v2805
                %v2807 = vld [vmem:[%s2627 + $0x2c8] sm:$0xff]
                %2808 = vst [vmem:[%s2628 + $0x588] sm:$0xff] %v2807
                %v2809 = vld [vmem:[%s2627 + $0x2d0] sm:$0xff]
                %2810 = vst [vmem:[%s2628 + $0x590] sm:$0xff] %v2809
                %v2811 = vld [vmem:[%s2627 + $0x2d8] sm:$0xff]
                %2812 = vst [vmem:[%s2628 + $0x598] sm:$0xff] %v2811
                %v2813 = vld [vmem:[%s2627 + $0x2e0] sm:$0xff]
                %2814 = vst [vmem:[%s2628 + $0x5c0] sm:$0xff] %v2813
                %v2815 = vld [vmem:[%s2627 + $0x2e8] sm:$0xff]
                %2816 = vst [vmem:[%s2628 + $0x5c8] sm:$0xff] %v2815
                %v2817 = vld [vmem:[%s2627 + $0x2f0] sm:$0xff]
                %2818 = vst [vmem:[%s2628 + $0x5d0] sm:$0xff] %v2817
                %v2819 = vld [vmem:[%s2627 + $0x2f8] sm:$0xff]
                %2820 = vst [vmem:[%s2628 + $0x5d8] sm:$0xff] %v2819
                %v2821 = vld [vmem:[%s2627 + $0x300] sm:$0xff]
                %2822 = vst [vmem:[%s2628 + $0x600] sm:$0xff] %v2821
                %v2823 = vld [vmem:[%s2627 + $0x308] sm:$0xff]
                %2824 = vst [vmem:[%s2628 + $0x608] sm:$0xff] %v2823
                %v2825 = vld [vmem:[%s2627 + $0x310] sm:$0xff]
                %2826 = vst [vmem:[%s2628 + $0x610] sm:$0xff] %v2825
                %v2827 = vld [vmem:[%s2627 + $0x318] sm:$0xff]
                %2828 = vst [vmem:[%s2628 + $0x618] sm:$0xff] %v2827
                %v2829 = vld [vmem:[%s2627 + $0x320] sm:$0xff]
                %2830 = vst [vmem:[%s2628 + $0x640] sm:$0xff] %v2829
                %v2831 = vld [vmem:[%s2627 + $0x328] sm:$0xff]
                %2832 = vst [vmem:[%s2628 + $0x648] sm:$0xff] %v2831
                %v2833 = vld [vmem:[%s2627 + $0x330] sm:$0xff]
                %2834 = vst [vmem:[%s2628 + $0x650] sm:$0xff] %v2833
                %v2835 = vld [vmem:[%s2627 + $0x338] sm:$0xff]
                %2836 = vst [vmem:[%s2628 + $0x658] sm:$0xff] %v2835
                %v2837 = vld [vmem:[%s2627 + $0x340] sm:$0xff]
                %2838 = vst [vmem:[%s2628 + $0x680] sm:$0xff] %v2837
                %v2839 = vld [vmem:[%s2627 + $0x348] sm:$0xff]
                %2840 = vst [vmem:[%s2628 + $0x688] sm:$0xff] %v2839
                %v2841 = vld [vmem:[%s2627 + $0x350] sm:$0xff]
                %2842 = vst [vmem:[%s2628 + $0x690] sm:$0xff] %v2841
                %v2843 = vld [vmem:[%s2627 + $0x358] sm:$0xff]
                %2844 = vst [vmem:[%s2628 + $0x698] sm:$0xff] %v2843
                %v2845 = vld [vmem:[%s2627 + $0x360] sm:$0xff]
                %2846 = vst [vmem:[%s2628 + $0x6c0] sm:$0xff] %v2845
                %v2847 = vld [vmem:[%s2627 + $0x368] sm:$0xff]
                %2848 = vst [vmem:[%s2628 + $0x6c8] sm:$0xff] %v2847
                %v2849 = vld [vmem:[%s2627 + $0x370] sm:$0xff]
                %2850 = vst [vmem:[%s2628 + $0x6d0] sm:$0xff] %v2849
                %v2851 = vld [vmem:[%s2627 + $0x378] sm:$0xff]
                %2852 = vst [vmem:[%s2628 + $0x6d8] sm:$0xff] %v2851
                %v2853 = vld [vmem:[%s2627 + $0x380] sm:$0xff]
                %2854 = vst [vmem:[%s2628 + $0x700] sm:$0xff] %v2853
                %v2855 = vld [vmem:[%s2627 + $0x388] sm:$0xff]
                %2856 = vst [vmem:[%s2628 + $0x708] sm:$0xff] %v2855
                %v2857 = vld [vmem:[%s2627 + $0x390] sm:$0xff]
                %2858 = vst [vmem:[%s2628 + $0x710] sm:$0xff] %v2857
                %v2859 = vld [vmem:[%s2627 + $0x398] sm:$0xff]
                %2860 = vst [vmem:[%s2628 + $0x718] sm:$0xff] %v2859
                %v2861 = vld [vmem:[%s2627 + $0x3a0] sm:$0xff]
                %2862 = vst [vmem:[%s2628 + $0x740] sm:$0xff] %v2861
                %v2863 = vld [vmem:[%s2627 + $0x3a8] sm:$0xff]
                %2864 = vst [vmem:[%s2628 + $0x748] sm:$0xff] %v2863
                %v2865 = vld [vmem:[%s2627 + $0x3b0] sm:$0xff]
                %2866 = vst [vmem:[%s2628 + $0x750] sm:$0xff] %v2865
                %v2867 = vld [vmem:[%s2627 + $0x3b8] sm:$0xff]
                %2868 = vst [vmem:[%s2628 + $0x758] sm:$0xff] %v2867
                %v2869 = vld [vmem:[%s2627 + $0x3c0] sm:$0xff]
                %2870 = vst [vmem:[%s2628 + $0x780] sm:$0xff] %v2869
                %v2871 = vld [vmem:[%s2627 + $0x3c8] sm:$0xff]
                %2872 = vst [vmem:[%s2628 + $0x788] sm:$0xff] %v2871
                %v2873 = vld [vmem:[%s2627 + $0x3d0] sm:$0xff]
                %2874 = vst [vmem:[%s2628 + $0x790] sm:$0xff] %v2873
                %v2875 = vld [vmem:[%s2627 + $0x3d8] sm:$0xff]
                %2876 = vst [vmem:[%s2628 + $0x798] sm:$0xff] %v2875
                %v2877 = vld [vmem:[%s2627 + $0x3e0] sm:$0xff]
                %2878 = vst [vmem:[%s2628 + $0x7c0] sm:$0xff] %v2877
                %v2879 = vld [vmem:[%s2627 + $0x3e8] sm:$0xff]
                %2880 = vst [vmem:[%s2628 + $0x7c8] sm:$0xff] %v2879
                %v2881 = vld [vmem:[%s2627 + $0x3f0] sm:$0xff]
                %2882 = vst [vmem:[%s2628 + $0x7d0] sm:$0xff] %v2881
                %v2883 = vld [vmem:[%s2627 + $0x3f8] sm:$0xff]
                %2884 = vst [vmem:[%s2628 + $0x7d8] sm:$0xff] %v2883
                %v2885 = vld [vmem:[%s2627 + $0x400] sm:$0xff]
                %2886 = vst [vmem:[%s2628 + $0x800] sm:$0xff] %v2885
                %v2887 = vld [vmem:[%s2627 + $0x408] sm:$0xff]
                %2888 = vst [vmem:[%s2628 + $0x808] sm:$0xff] %v2887
                %v2889 = vld [vmem:[%s2627 + $0x410] sm:$0xff]
                %2890 = vst [vmem:[%s2628 + $0x810] sm:$0xff] %v2889
                %v2891 = vld [vmem:[%s2627 + $0x418] sm:$0xff]
                %2892 = vst [vmem:[%s2628 + $0x818] sm:$0xff] %v2891
                %v2893 = vld [vmem:[%s2627 + $0x420] sm:$0xff]
                %2894 = vst [vmem:[%s2628 + $0x840] sm:$0xff] %v2893
                %v2895 = vld [vmem:[%s2627 + $0x428] sm:$0xff]
                %2896 = vst [vmem:[%s2628 + $0x848] sm:$0xff] %v2895
                %v2897 = vld [vmem:[%s2627 + $0x430] sm:$0xff]
                %2898 = vst [vmem:[%s2628 + $0x850] sm:$0xff] %v2897
                %v2899 = vld [vmem:[%s2627 + $0x438] sm:$0xff]
                %2900 = vst [vmem:[%s2628 + $0x858] sm:$0xff] %v2899
                %v2901 = vld [vmem:[%s2627 + $0x440] sm:$0xff]
                %2902 = vst [vmem:[%s2628 + $0x880] sm:$0xff] %v2901
                %v2903 = vld [vmem:[%s2627 + $0x448] sm:$0xff]
                %2904 = vst [vmem:[%s2628 + $0x888] sm:$0xff] %v2903
                %v2905 = vld [vmem:[%s2627 + $0x450] sm:$0xff]
                %2906 = vst [vmem:[%s2628 + $0x890] sm:$0xff] %v2905
                %v2907 = vld [vmem:[%s2627 + $0x458] sm:$0xff]
                %2908 = vst [vmem:[%s2628 + $0x898] sm:$0xff] %v2907
                %v2909 = vld [vmem:[%s2627 + $0x460] sm:$0xff]
                %2910 = vst [vmem:[%s2628 + $0x8c0] sm:$0xff] %v2909
                %v2911 = vld [vmem:[%s2627 + $0x468] sm:$0xff]
                %2912 = vst [vmem:[%s2628 + $0x8c8] sm:$0xff] %v2911
                %v2913 = vld [vmem:[%s2627 + $0x470] sm:$0xff]
                %2914 = vst [vmem:[%s2628 + $0x8d0] sm:$0xff] %v2913
                %v2915 = vld [vmem:[%s2627 + $0x478] sm:$0xff]
                %2916 = vst [vmem:[%s2628 + $0x8d8] sm:$0xff] %v2915
                %v2917 = vld [vmem:[%s2627 + $0x480] sm:$0xff]
                %2918 = vst [vmem:[%s2628 + $0x900] sm:$0xff] %v2917
                %v2919 = vld [vmem:[%s2627 + $0x488] sm:$0xff]
                %2920 = vst [vmem:[%s2628 + $0x908] sm:$0xff] %v2919
                %v2921 = vld [vmem:[%s2627 + $0x490] sm:$0xff]
                %2922 = vst [vmem:[%s2628 + $0x910] sm:$0xff] %v2921
                %v2923 = vld [vmem:[%s2627 + $0x498] sm:$0xff]
                %2924 = vst [vmem:[%s2628 + $0x918] sm:$0xff] %v2923
                %v2925 = vld [vmem:[%s2627 + $0x4a0] sm:$0xff]
                %2926 = vst [vmem:[%s2628 + $0x940] sm:$0xff] %v2925
                %v2927 = vld [vmem:[%s2627 + $0x4a8] sm:$0xff]
                %2928 = vst [vmem:[%s2628 + $0x948] sm:$0xff] %v2927
                %v2929 = vld [vmem:[%s2627 + $0x4b0] sm:$0xff]
                %2930 = vst [vmem:[%s2628 + $0x950] sm:$0xff] %v2929
                %v2931 = vld [vmem:[%s2627 + $0x4b8] sm:$0xff]
                %2932 = vst [vmem:[%s2628 + $0x958] sm:$0xff] %v2931
                %v2933 = vld [vmem:[%s2627 + $0x4c0] sm:$0xff]
                %2934 = vst [vmem:[%s2628 + $0x980] sm:$0xff] %v2933
                %v2935 = vld [vmem:[%s2627 + $0x4c8] sm:$0xff]
                %2936 = vst [vmem:[%s2628 + $0x988] sm:$0xff] %v2935
                %v2937 = vld [vmem:[%s2627 + $0x4d0] sm:$0xff]
                %2938 = vst [vmem:[%s2628 + $0x990] sm:$0xff] %v2937
                %v2939 = vld [vmem:[%s2627 + $0x4d8] sm:$0xff]
                %2940 = vst [vmem:[%s2628 + $0x998] sm:$0xff] %v2939
              $region80: #{model_forward.10} parent=74 // loop_footer
                %s2626 = sadd.s32 1, %s2622
              $region81: #{model_forward.10} parent=74 // loop_footer_branch
                %2621 = sbr.rel target = $region77
              $region82: #{model_forward.10} parent=74 // loop_exit
                _
            $region75: #{model_forward.10} parent=70 // pred_fallthru
              _
            // Predicated region
            $region83: #{model_forward.10} parent=70 // pred_check
              _
            $region84: #{model_forward.10} parent=70 // pred_check_branch
              %2942 = sbr.rel target = $region86
            $region85: #{model_forward.10} parent=70 // pred_region
              _
            $region86: #{model_forward.10} parent=70 // pred_fallthru
              _
          $region71: #{model_forward.10} parent=66 // pred_fallthru
            _
          %2943 = vnop
        $region67: #{model_forward.10} parent=50 // pred_fallthru
          _
      $region51: #{model_forward.10} parent=5 // pred_fallthru
        _
      %p2944 = scmp.le.s32.totalorder 2, %s9
      // Predicated region
      $region87: #{model_forward.10} parent=5 // pred_check
        %p2945 = pneg %p2944
      $region88: #{model_forward.10} parent=5 // pred_check_branch
        %2947 = sbr.rel (%p2945) target = $region90
      $region89: #{model_forward.10} parent=5 // pred_region
        %s2948 = ssub.s32 %s9, 2
        // Predicated region
        $region91: #{model_forward.10} parent=89 // pred_check
          %p2949 = pneg %p141
        $region92: #{model_forward.10} parent=89 // pred_check_branch
          %2951 = sbr.rel (%p2949) target = $region94
        $region93: #{model_forward.10} parent=89 // pred_region
          %s2952 = sand.u32 %s126, 1
          %s2953 = sand.u32 %s126, 1
          %s2954 = smul.addr %s2953, 1248
          %s2955 = scalar_lea.vmem [#allocation4], %s2954
        $region94: #{model_forward.10} parent=89 // pred_fallthru
          _
      $region90: #{model_forward.10} parent=5 // pred_fallthru
        _
    $region6: #{model_forward.10} parent=1 // loop_footer
      %s13 = sadd.s32 1, %s9
    $region7: #{model_forward.10} parent=1 // loop_footer_branch
      %8 = sbr.rel target = $region3
    $region8: #{model_forward.10} parent=1 // loop_exit
      _

// kernel: model_forward.11
$region0: #{model_forward.11}
  #allocation0 [shape = 'u32[]', space=smem, size = 0x4, offset = 0x4, fixed_abs, tag = 'smem constant byte address 0x4 - core index']
  #allocation1 [shape = 'u32[144,128]{1,0:T(1,128)}', space=vmem, size = 0x12000, scoped, tag = 'internal scratch']
  #allocation2 [shape = 'f32[306,256]{1,0:T(8,128)}', space=vmem, size = 0x4e000, scoped, tag = 'scratch operand']
  %s0 = inlined_call_operand.vmem [shape: bf16[306,1024], index: 0, kind: input, shape index: {}]
  %s1 = inlined_call_operand.vmem [shape: bf16[1024,256], index: 1, kind: input, shape index: {}]
  %s2 = inlined_call_operand.vmem [shape: f32[1,256], index: 2, kind: input, shape index: {}]
  %s3 = inlined_call_operand.vmem [shape: f32[306,256], index: 3, kind: input, shape index: {}]
  %s4 = inlined_call_operand.vmem [shape: f32[306,256], index: 4, kind: output, shape index: {}]
  %s5 = sld [smem:[#allocation0]]
  $region80: #{model_forward.11} parent=0
    _
  %s7 = ssub.s32 1, %s5
  %s8 = scalar_select 0, %s7, %s5
  $region1: #{model_forward.11} parent=0
    #allocation3 [shape = 'u8[638976]{0}', space=vmem, size = 0x9c000, scoped, tag = 'input window, operand 0']
    loop: start=0, step=1, limit=4
    $region2: #{model_forward.11} parent=1 // loop_pre_header
      _
    $region3: #{model_forward.11} parent=1 // loop_header
      %s10 = sphi 0, %s14
      %p11 = scmp.ge.s32.totalorder %s10, 4
      %s17 = sphi 0, %s36
      %s18 = sphi 0, %s32
      %s19 = sphi 0, %s28
      %s20 = sphi 0, %s17
      %s21 = sphi 0, %s18
      %s22 = sphi 0, %s19
      %s23 = sphi 0, %s20
      %s24 = sphi 0, %s21
      %s25 = sphi 0, %s22
      %s41 = sphi 0, %s43
      %s44 = sphi 0, %s41
      %s45 = sphi 0, %s44
      %s61 = sphi 0, %s45
      %s69 = sphi 0, %s71
      %s72 = sphi 0, %s69
      %s73 = sphi 0, %s72
      %s89 = sphi 0, %s73
      %s95 = sphi 0, %s97
      %s98 = sphi 0, %s95
      %s99 = sphi 0, %s98
      %s115 = sphi 0, %s99
      %s123 = sphi 0, %s125
      %s126 = sphi 0, %s123
      %s127 = sphi 0, %s126
      %s143 = sphi 0, %s127
      %s151 = sphi 0, %s153
      %s154 = sphi 0, %s151
      %s155 = sphi 0, %s154
      %s171 = sphi 0, %s155
    $region4: #{model_forward.11} parent=1 // loop_header_branch
      %13 = sbr.rel (%p11) target = $region8
    $region5: #{model_forward.11} parent=1 // loop_body
      %s15 = ssub.s32 %s10, 1
      %s16 = ssub.s32 %s10, 2
      %s26 = sadd.s32 1, %s19
      %p27 = scmp.ge.s32.totalorder %s26, 2
      %s28 = scalar_select %p27, 0, %s26
      %s29 = sadd.s32 1, %s18
      %s30 = scalar_select %p27, %s29, %s18
      %p31 = scmp.ge.s32.totalorder %s30, 1
      %s32 = scalar_select %p31, 0, %s30
      %s33 = sadd.s32 1, %s17
      %s34 = scalar_select %p31, %s33, %s17
      %p35 = scmp.ge.s32.totalorder %s34, 1
      %s36 = scalar_select %p35, 0, %s34
      %s37 = ssub.s32 %s17, %s36
      %s38 = ssub.s32 %s19, %s28
      %s39 = sor.u32 %s37, %s38
      %p40 = scmp.eq.s32.totalorder %s39, 0
      %s42 = sadd.s32 %s41, 1
      %s43 = scalar_select %p40, %s41, %s42
      %p46 = pneg %p40
      %p47 = scmp.eq.s32.totalorder %s10, 1
      %p48 = por %p46, %p47
      %p49 = scmp.ne.s32.totalorder %s41, %s44
      %p50 = scmp.eq.s32.totalorder %s10, 0
      %p51 = por %p49, %p50
      %p52 = scmp.ne.s32.totalorder %s41, %s44
      %p53 = scmp.eq.s32.totalorder %s15, 1
      %p54 = por %p52, %p53
      %p55 = scmp.ne.s32.totalorder %s44, %s45
      %p56 = scmp.eq.s32.totalorder %s15, 0
      %p57 = por %p55, %p56
      %p58 = scmp.ne.s32.totalorder %s44, %s45
      %p59 = scmp.eq.s32.totalorder %s16, 1
      %p60 = por %p58, %p59
      %p62 = scmp.ne.s32.totalorder %s45, %s61
      %p63 = scmp.eq.s32.totalorder %s16, 0
      %p64 = por %p62, %p63
      %s65 = ssub.s32 %s19, %s28
      %s66 = ssub.s32 %s18, %s32
      %s67 = sor.u32 %s65, %s66
      %p68 = scmp.eq.s32.totalorder %s67, 0
      %s70 = sadd.s32 %s69, 1
      %s71 = scalar_select %p68, %s69, %s70
      %p74 = pneg %p68
      %p75 = scmp.eq.s32.totalorder %s10, 1
      %p76 = por %p74, %p75
      %p77 = scmp.ne.s32.totalorder %s69, %s72
      %p78 = scmp.eq.s32.totalorder %s10, 0
      %p79 = por %p77, %p78
      %p80 = scmp.ne.s32.totalorder %s69, %s72
      %p81 = scmp.eq.s32.totalorder %s15, 1
      %p82 = por %p80, %p81
      %p83 = scmp.ne.s32.totalorder %s72, %s73
      %p84 = scmp.eq.s32.totalorder %s15, 0
      %p85 = por %p83, %p84
      %p86 = scmp.ne.s32.totalorder %s72, %s73
      %p87 = scmp.eq.s32.totalorder %s16, 1
      %p88 = por %p86, %p87
      %p90 = scmp.ne.s32.totalorder %s73, %s89
      %p91 = scmp.eq.s32.totalorder %s16, 0
      %p92 = por %p90, %p91
      %s93 = ssub.s32 %s18, %s32
      %p94 = scmp.eq.s32.totalorder %s93, 0
      %s96 = sadd.s32 %s95, 1
      %s97 = scalar_select %p94, %s95, %s96
      %p100 = pneg %p94
      %p101 = scmp.eq.s32.totalorder %s10, 1
      %p102 = por %p100, %p101
      %p103 = scmp.ne.s32.totalorder %s95, %s98
      %p104 = scmp.eq.s32.totalorder %s10, 0
      %p105 = por %p103, %p104
      %p106 = scmp.ne.s32.totalorder %s95, %s98
      %p107 = scmp.eq.s32.totalorder %s15, 1
      %p108 = por %p106, %p107
      %p109 = scmp.ne.s32.totalorder %s98, %s99
      %p110 = scmp.eq.s32.totalorder %s15, 0
      %p111 = por %p109, %p110
      %p112 = scmp.ne.s32.totalorder %s98, %s99
      %p113 = scmp.eq.s32.totalorder %s16, 1
      %p114 = por %p112, %p113
      %p116 = scmp.ne.s32.totalorder %s99, %s115
      %p117 = scmp.eq.s32.totalorder %s16, 0
      %p118 = por %p116, %p117
      %s119 = ssub.s32 %s17, %s36
      %s120 = ssub.s32 %s18, %s32
      %s121 = sor.u32 %s119, %s120
      %p122 = scmp.eq.s32.totalorder %s121, 0
      %s124 = sadd.s32 %s123, 1
      %s125 = scalar_select %p122, %s123, %s124
      %p128 = pneg %p122
      %p129 = scmp.eq.s32.totalorder %s10, 1
      %p130 = por %p128, %p129
      %p131 = scmp.ne.s32.totalorder %s123, %s126
      %p132 = scmp.eq.s32.totalorder %s10, 0
      %p133 = por %p131, %p132
      %p134 = scmp.ne.s32.totalorder %s123, %s126
      %p135 = scmp.eq.s32.totalorder %s15, 1
      %p136 = por %p134, %p135
      %p137 = scmp.ne.s32.totalorder %s126, %s127
      %p138 = scmp.eq.s32.totalorder %s15, 0
      %p139 = por %p137, %p138
      %p140 = scmp.ne.s32.totalorder %s126, %s127
      %p141 = scmp.eq.s32.totalorder %s16, 1
      %p142 = por %p140, %p141
      %p144 = scmp.ne.s32.totalorder %s127, %s143
      %p145 = scmp.eq.s32.totalorder %s16, 0
      %p146 = por %p144, %p145
      %s147 = ssub.s32 %s17, %s36
      %s148 = ssub.s32 %s18, %s32
      %s149 = sor.u32 %s147, %s148
      %p150 = scmp.eq.s32.totalorder %s149, 0
      %s152 = sadd.s32 %s151, 1
      %s153 = scalar_select %p150, %s151, %s152
      %p156 = pneg %p150
      %p157 = scmp.eq.s32.totalorder %s10, 1
      %p158 = por %p156, %p157
      %p159 = scmp.ne.s32.totalorder %s151, %s154
      %p160 = scmp.eq.s32.totalorder %s10, 0
      %p161 = por %p159, %p160
      %p162 = scmp.ne.s32.totalorder %s151, %s154
      %p163 = scmp.eq.s32.totalorder %s15, 1
      %p164 = por %p162, %p163
      %p165 = scmp.ne.s32.totalorder %s154, %s155
      %p166 = scmp.eq.s32.totalorder %s15, 0
      %p167 = por %p165, %p166
      %p168 = scmp.ne.s32.totalorder %s154, %s155
      %p169 = scmp.eq.s32.totalorder %s16, 1
      %p170 = por %p168, %p169
      %p172 = scmp.ne.s32.totalorder %s155, %s171
      %p173 = scmp.eq.s32.totalorder %s16, 0
      %p174 = por %p172, %p173
      %p175 = scmp.le.s32.totalorder 1, %s10
      %p176 = scmp.lt.s32.totalorder %s10, 3
      %p177 = pnand %p175, %p176
      %p178 = pneg %p177
      // Predicated region
      $region9: #{model_forward.11} parent=5 // pred_check
        _
      $region10: #{model_forward.11} parent=5 // pred_check_branch
        %180 = sbr.rel (%p177) target = $region12
      $region11: #{model_forward.11} parent=5 // pred_region
        %s181 = ssub.s32 %s10, 1
        // Predicated region
        $region13: #{model_forward.11} parent=11 // pred_check
          %p182 = pneg %p111
        $region14: #{model_forward.11} parent=11 // pred_check_branch
          %184 = sbr.rel (%p182) target = $region16
        $region15: #{model_forward.11} parent=11 // pred_region
          %s185 = smul.u32 2, %s21
          %p186 = scmp.lt.s32.totalorder %s185, 1
          %s187 = scalar_select %p186, %s185, 1
          %s188 = scalar_lea.vmem %s2, %s187
          %s189 = smul.u32 2, %s21
        $region16: #{model_forward.11} parent=11 // pred_fallthru
          _
        // Predicated region
        $region17: #{model_forward.11} parent=11 // pred_check
          %p190 = pneg %p139
        $region18: #{model_forward.11} parent=11 // pred_check_branch
          %192 = sbr.rel (%p190) target = $region20
        $region19: #{model_forward.11} parent=11 // pred_region
          %s193 = smul.u32 39, %s20
          %s194 = smul.u32 2, %s21
          %p195 = scmp.lt.s32.totalorder %s193, 38
          %s196 = scalar_select %p195, %s193, 38
          %p197 = scmp.lt.s32.totalorder %s194, 1
          %s198 = scalar_select %p197, %s194, 1
          %s199 = smul.addr %s196, 2
          %s200 = sadd.s32 %s198, %s199
          %s201 = smul.addr %s200, 8
          %s202 = scalar_lea.vmem %s3, %s201
          %s203 = smul.u32 39, %s20
          %s204 = smul.u32 2, %s21
        $region20: #{model_forward.11} parent=11 // pred_fallthru
          _
      $region12: #{model_forward.11} parent=5 // pred_fallthru
        _
      %p205 = scmp.lt.s32.totalorder %s10, 2
      // Predicated region
      $region21: #{model_forward.11} parent=5 // pred_check
        %p206 = pneg %p205
      $region22: #{model_forward.11} parent=5 // pred_check_branch
        %208 = sbr.rel (%p206) target = $region24
      $region23: #{model_forward.11} parent=5 // pred_region
        // Predicated region
        $region25: #{model_forward.11} parent=23 // pred_check
          %p209 = pneg %p51
        $region26: #{model_forward.11} parent=23 // pred_check_branch
          %211 = sbr.rel (%p209) target = $region28
        $region27: #{model_forward.11} parent=23 // pred_region
          %s212 = sand.u32 %s41, 1
          %s213 = sand.u32 %s41, 1
          %s214 = smul.addr %s213, 624
          %s215 = scalar_lea.vmem [#allocation3], %s214
          %s216 = smul.u32 39, %s17
          %s217 = smul.u32 4, %s19
          %s218 = smul.addr %s216, 8
          %s219 = sadd.s32 %s217, %s218
          %s220 = smul.addr %s219, 4
          %s221 = scalar_lea.vmem %s0, %s220
          // Predicated region
          $region29: #{model_forward.11} parent=27 // pred_check
            _
          $region30: #{model_forward.11} parent=27 // pred_check_branch
            %223 = sbr.rel (0) target = $region32
          $region31: #{model_forward.11} parent=27 // pred_region
            // Predicated region
            $region33: #{model_forward.11} parent=31 // pred_check
              _
            $region34: #{model_forward.11} parent=31 // pred_check_branch
              %225 = sbr.rel (0) target = $region36
            $region35: #{model_forward.11} parent=31 // pred_region
              loop: start=0, step=1, limit=1
              $region37: #{model_forward.11} parent=35 // loop_pre_header
                _
              $region38: #{model_forward.11} parent=35 // loop_header
                %s227 = sphi 0, %s231
                %p228 = scmp.ge.s32.totalorder %s227, 1
                %s232 = sphi %s221, %s221
                %s233 = sphi %s215, %s215
              $region39: #{model_forward.11} parent=35 // loop_header_branch
                %230 = sbr.rel (%p228) target = $region43
              $region40: #{model_forward.11} parent=35 // loop_body
                %v234 = vld [vmem:[%s232] sm:$0xff]
                %235 = vst [vmem:[%s233] sm:$0xff] %v234
                %v236 = vld [vmem:[%s232 + $0x8] sm:$0xff]
                %237 = vst [vmem:[%s233 + $0x8] sm:$0xff] %v236
                %v238 = vld [vmem:[%s232 + $0x20] sm:$0xff]
                %239 = vst [vmem:[%s233 + $0x10] sm:$0xff] %v238
                %v240 = vld [vmem:[%s232 + $0x28] sm:$0xff]
                %241 = vst [vmem:[%s233 + $0x18] sm:$0xff] %v240
                %v242 = vld [vmem:[%s232 + $0x40] sm:$0xff]
                %243 = vst [vmem:[%s233 + $0x20] sm:$0xff] %v242
                %v244 = vld [vmem:[%s232 + $0x48] sm:$0xff]
                %245 = vst [vmem:[%s233 + $0x28] sm:$0xff] %v244
                %v246 = vld [vmem:[%s232 + $0x60] sm:$0xff]
                %247 = vst [vmem:[%s233 + $0x30] sm:$0xff] %v246
                %v248 = vld [vmem:[%s232 + $0x68] sm:$0xff]
                %249 = vst [vmem:[%s233 + $0x38] sm:$0xff] %v248
                %v250 = vld [vmem:[%s232 + $0x80] sm:$0xff]
                %251 = vst [vmem:[%s233 + $0x40] sm:$0xff] %v250
                %v252 = vld [vmem:[%s232 + $0x88] sm:$0xff]
                %253 = vst [vmem:[%s233 + $0x48] sm:$0xff] %v252
                %v254 = vld [vmem:[%s232 + $0xa0] sm:$0xff]
                %255 = vst [vmem:[%s233 + $0x50] sm:$0xff] %v254
                %v256 = vld [vmem:[%s232 + $0xa8] sm:$0xff]
                %257 = vst [vmem:[%s233 + $0x58] sm:$0xff] %v256
                %v258 = vld [vmem:[%s232 + $0xc0] sm:$0xff]
                %259 = vst [vmem:[%s233 + $0x60] sm:$0xff] %v258
                %v260 = vld [vmem:[%s232 + $0xc8] sm:$0xff]
                %261 = vst [vmem:[%s233 + $0x68] sm:$0xff] %v260
                %v262 = vld [vmem:[%s232 + $0xe0] sm:$0xff]
                %263 = vst [vmem:[%s233 + $0x70] sm:$0xff] %v262
                %v264 = vld [vmem:[%s232 + $0xe8] sm:$0xff]
                %265 = vst [vmem:[%s233 + $0x78] sm:$0xff] %v264
                %v266 = vld [vmem:[%s232 + $0x100] sm:$0xff]
                %267 = vst [vmem:[%s233 + $0x80] sm:$0xff] %v266
                %v268 = vld [vmem:[%s232 + $0x108] sm:$0xff]
                %269 = vst [vmem:[%s233 + $0x88] sm:$0xff] %v268
                %v270 = vld [vmem:[%s232 + $0x120] sm:$0xff]
                %271 = vst [vmem:[%s233 + $0x90] sm:$0xff] %v270
                %v272 = vld [vmem:[%s232 + $0x128] sm:$0xff]
                %273 = vst [vmem:[%s233 + $0x98] sm:$0xff] %v272
                %v274 = vld [vmem:[%s232 + $0x140] sm:$0xff]
                %275 = vst [vmem:[%s233 + $0xa0] sm:$0xff] %v274
                %v276 = vld [vmem:[%s232 + $0x148] sm:$0xff]
                %277 = vst [vmem:[%s233 + $0xa8] sm:$0xff] %v276
                %v278 = vld [vmem:[%s232 + $0x160] sm:$0xff]
                %279 = vst [vmem:[%s233 + $0xb0] sm:$0xff] %v278
                %v280 = vld [vmem:[%s232 + $0x168] sm:$0xff]
                %281 = vst [vmem:[%s233 + $0xb8] sm:$0xff] %v280
                %v282 = vld [vmem:[%s232 + $0x180] sm:$0xff]
                %283 = vst [vmem:[%s233 + $0xc0] sm:$0xff] %v282
                %v284 = vld [vmem:[%s232 + $0x188] sm:$0xff]
                %285 = vst [vmem:[%s233 + $0xc8] sm:$0xff] %v284
                %v286 = vld [vmem:[%s232 + $0x1a0] sm:$0xff]
                %287 = vst [vmem:[%s233 + $0xd0] sm:$0xff] %v286
                %v288 = vld [vmem:[%s232 + $0x1a8] sm:$0xff]
                %289 = vst [vmem:[%s233 + $0xd8] sm:$0xff] %v288
                %v290 = vld [vmem:[%s232 + $0x1c0] sm:$0xff]
                %291 = vst [vmem:[%s233 + $0xe0] sm:$0xff] %v290
                %v292 = vld [vmem:[%s232 + $0x1c8] sm:$0xff]
                %293 = vst [vmem:[%s233 + $0xe8] sm:$0xff] %v292
                %v294 = vld [vmem:[%s232 + $0x1e0] sm:$0xff]
                %295 = vst [vmem:[%s233 + $0xf0] sm:$0xff] %v294
                %v296 = vld [vmem:[%s232 + $0x1e8] sm:$0xff]
                %297 = vst [vmem:[%s233 + $0xf8] sm:$0xff] %v296
                %v298 = vld [vmem:[%s232 + $0x200] sm:$0xff]
                %299 = vst [vmem:[%s233 + $0x100] sm:$0xff] %v298
                %v300 = vld [vmem:[%s232 + $0x208] sm:$0xff]
                %301 = vst [vmem:[%s233 + $0x108] sm:$0xff] %v300
                %v302 = vld [vmem:[%s232 + $0x220] sm:$0xff]
                %303 = vst [vmem:[%s233 + $0x110] sm:$0xff] %v302
                %v304 = vld [vmem:[%s232 + $0x228] sm:$0xff]
                %305 = vst [vmem:[%s233 + $0x118] sm:$0xff] %v304
                %v306 = vld [vmem:[%s232 + $0x240] sm:$0xff]
                %307 = vst [vmem:[%s233 + $0x120] sm:$0xff] %v306
                %v308 = vld [vmem:[%s232 + $0x248] sm:$0xff]
                %309 = vst [vmem:[%s233 + $0x128] sm:$0xff] %v308
                %v310 = vld [vmem:[%s232 + $0x260] sm:$0xff]
                %311 = vst [vmem:[%s233 + $0x130] sm:$0xff] %v310
                %v312 = vld [vmem:[%s232 + $0x268] sm:$0xff]
                %313 = vst [vmem:[%s233 + $0x138] sm:$0xff] %v312
                %v314 = vld [vmem:[%s232 + $0x280] sm:$0xff]
                %315 = vst [vmem:[%s233 + $0x140] sm:$0xff] %v314
                %v316 = vld [vmem:[%s232 + $0x288] sm:$0xff]
                %317 = vst [vmem:[%s233 + $0x148] sm:$0xff] %v316
                %v318 = vld [vmem:[%s232 + $0x2a0] sm:$0xff]
                %319 = vst [vmem:[%s233 + $0x150] sm:$0xff] %v318
                %v320 = vld [vmem:[%s232 + $0x2a8] sm:$0xff]
                %321 = vst [vmem:[%s233 + $0x158] sm:$0xff] %v320
                %v322 = vld [vmem:[%s232 + $0x2c0] sm:$0xff]
                %323 = vst [vmem:[%s233 + $0x160] sm:$0xff] %v322
                %v324 = vld [vmem:[%s232 + $0x2c8] sm:$0xff]
                %325 = vst [vmem:[%s233 + $0x168] sm:$0xff] %v324
                %v326 = vld [vmem:[%s232 + $0x2e0] sm:$0xff]
                %327 = vst [vmem:[%s233 + $0x170] sm:$0xff] %v326
                %v328 = vld [vmem:[%s232 + $0x2e8] sm:$0xff]
                %329 = vst [vmem:[%s233 + $0x178] sm:$0xff] %v328
                %v330 = vld [vmem:[%s232 + $0x300] sm:$0xff]
                %331 = vst [vmem:[%s233 + $0x180] sm:$0xff] %v330
                %v332 = vld [vmem:[%s232 + $0x308] sm:$0xff]
                %333 = vst [vmem:[%s233 + $0x188] sm:$0xff] %v332
                %v334 = vld [vmem:[%s232 + $0x320] sm:$0xff]
                %335 = vst [vmem:[%s233 + $0x190] sm:$0xff] %v334
                %v336 = vld [vmem:[%s232 + $0x328] sm:$0xff]
                %337 = vst [vmem:[%s233 + $0x198] sm:$0xff] %v336
                %v338 = vld [vmem:[%s232 + $0x340] sm:$0xff]
                %339 = vst [vmem:[%s233 + $0x1a0] sm:$0xff] %v338
                %v340 = vld [vmem:[%s232 + $0x348] sm:$0xff]
                %341 = vst [vmem:[%s233 + $0x1a8] sm:$0xff] %v340
                %v342 = vld [vmem:[%s232 + $0x360] sm:$0xff]
                %343 = vst [vmem:[%s233 + $0x1b0] sm:$0xff] %v342
                %v344 = vld [vmem:[%s232 + $0x368] sm:$0xff]
                %345 = vst [vmem:[%s233 + $0x1b8] sm:$0xff] %v344
                %v346 = vld [vmem:[%s232 + $0x380] sm:$0xff]
                %347 = vst [vmem:[%s233 + $0x1c0] sm:$0xff] %v346
                %v348 = vld [vmem:[%s232 + $0x388] sm:$0xff]
                %349 = vst [vmem:[%s233 + $0x1c8] sm:$0xff] %v348
                %v350 = vld [vmem:[%s232 + $0x3a0] sm:$0xff]
                %351 = vst [vmem:[%s233 + $0x1d0] sm:$0xff] %v350
                %v352 = vld [vmem:[%s232 + $0x3a8] sm:$0xff]
                %353 = vst [vmem:[%s233 + $0x1d8] sm:$0xff] %v352
                %v354 = vld [vmem:[%s232 + $0x3c0] sm:$0xff]
                %355 = vst [vmem:[%s233 + $0x1e0] sm:$0xff] %v354
                %v356 = vld [vmem:[%s232 + $0x3c8] sm:$0xff]
                %357 = vst [vmem:[%s233 + $0x1e8] sm:$0xff] %v356
                %v358 = vld [vmem:[%s232 + $0x3e0] sm:$0xff]
                %359 = vst [vmem:[%s233 + $0x1f0] sm:$0xff] %v358
                %v360 = vld [vmem:[%s232 + $0x3e8] sm:$0xff]
                %361 = vst [vmem:[%s233 + $0x1f8] sm:$0xff] %v360
                %v362 = vld [vmem:[%s232 + $0x400] sm:$0xff]
                %363 = vst [vmem:[%s233 + $0x200] sm:$0xff] %v362
                %v364 = vld [vmem:[%s232 + $0x408] sm:$0xff]
                %365 = vst [vmem:[%s233 + $0x208] sm:$0xff] %v364
                %v366 = vld [vmem:[%s232 + $0x420] sm:$0xff]
                %367 = vst [vmem:[%s233 + $0x210] sm:$0xff] %v366
                %v368 = vld [vmem:[%s232 + $0x428] sm:$0xff]
                %369 = vst [vmem:[%s233 + $0x218] sm:$0xff] %v368
                %v370 = vld [vmem:[%s232 + $0x440] sm:$0xff]
                %371 = vst [vmem:[%s233 + $0x220] sm:$0xff] %v370
                %v372 = vld [vmem:[%s232 + $0x448] sm:$0xff]
                %373 = vst [vmem:[%s233 + $0x228] sm:$0xff] %v372
                %v374 = vld [vmem:[%s232 + $0x460] sm:$0xff]
                %375 = vst [vmem:[%s233 + $0x230] sm:$0xff] %v374
                %v376 = vld [vmem:[%s232 + $0x468] sm:$0xff]
                %377 = vst [vmem:[%s233 + $0x238] sm:$0xff] %v376
                %v378 = vld [vmem:[%s232 + $0x480] sm:$0xff]
                %379 = vst [vmem:[%s233 + $0x240] sm:$0xff] %v378
                %v380 = vld [vmem:[%s232 + $0x488] sm:$0xff]
                %381 = vst [vmem:[%s233 + $0x248] sm:$0xff] %v380
                %v382 = vld [vmem:[%s232 + $0x4a0] sm:$0xff]
                %383 = vst [vmem:[%s233 + $0x250] sm:$0xff] %v382
                %v384 = vld [vmem:[%s232 + $0x4a8] sm:$0xff]
                %385 = vst [vmem:[%s233 + $0x258] sm:$0xff] %v384
                %v386 = vld [vmem:[%s232 + $0x4c0] sm:$0xff]
                %387 = vst [vmem:[%s233 + $0x260] sm:$0xff] %v386
                %v388 = vld [vmem:[%s232 + $0x4c8] sm:$0xff]
                %389 = vst [vmem:[%s233 + $0x268] sm:$0xff] %v388
              $region41: #{model_forward.11} parent=35 // loop_footer
                %s231 = sadd.s32 1, %s227
              $region42: #{model_forward.11} parent=35 // loop_footer_branch
                %226 = sbr.rel target = $region38
              $region43: #{model_forward.11} parent=35 // loop_exit
                _
            $region36: #{model_forward.11} parent=31 // pred_fallthru
              _
            // Predicated region
            $region44: #{model_forward.11} parent=31 // pred_check
              _
            $region45: #{model_forward.11} parent=31 // pred_check_branch
              %391 = sbr.rel target = $region47
            $region46: #{model_forward.11} parent=31 // pred_region
              _
            $region47: #{model_forward.11} parent=31 // pred_fallthru
              _
          $region32: #{model_forward.11} parent=27 // pred_fallthru
            _
          %392 = vnop
        $region28: #{model_forward.11} parent=23 // pred_fallthru
          _
        // Predicated region
        $region48: #{model_forward.11} parent=23 // pred_check
          %p393 = pneg %p79
        $region49: #{model_forward.11} parent=23 // pred_check_branch
          %395 = sbr.rel (%p393) target = $region51
        $region50: #{model_forward.11} parent=23 // pred_region
          %s396 = smul.u32 64, %s19
          %s397 = smul.u32 2, %s18
          %p398 = scmp.lt.s32.totalorder %s396, 127
          %s399 = scalar_select %p398, %s396, 127
          %p400 = scmp.lt.s32.totalorder %s397, 1
          %s401 = scalar_select %p400, %s397, 1
          %s402 = smul.addr %s399, 2
          %s403 = sadd.s32 %s401, %s402
          %s404 = smul.addr %s403, 4
          %s405 = scalar_lea.vmem %s1, %s404
          %s406 = smul.u32 64, %s19
          %s407 = smul.u32 2, %s18
        $region51: #{model_forward.11} parent=23 // pred_fallthru
          _
      $region24: #{model_forward.11} parent=5 // pred_fallthru
        _
      %p408 = scmp.le.s32.totalorder 1, %s10
      %p409 = scmp.lt.s32.totalorder %s10, 3
      %p410 = pnand %p408, %p409
      %p411 = pneg %p410
      // Predicated region
      $region52: #{model_forward.11} parent=5 // pred_check
        _
      $region53: #{model_forward.11} parent=5 // pred_check_branch
        %413 = sbr.rel (%p410) target = $region55
      $region54: #{model_forward.11} parent=5 // pred_region
        %s414 = ssub.s32 %s10, 1
        %s415 = sand.u32 %s44, 1
        %s416 = sand.u32 %s44, 1
        %s417 = smul.addr %s416, 624
        %s418 = scalar_lea.vmem [#allocation3], %s417
        // Predicated region
        $region56: #{model_forward.11} parent=54 // pred_check
          %p419 = pneg %p57
        $region57: #{model_forward.11} parent=54 // pred_check_branch
          %421 = sbr.rel (%p419) target = $region59
        $region58: #{model_forward.11} parent=54 // pred_region
          _
        $region59: #{model_forward.11} parent=54 // pred_fallthru
          _
        %s422 = sand.u32 %s44, 1
        %s423 = sand.u32 %s44, 1
        %s424 = smul.addr %s423, 624
        %s425 = scalar_lea.vmem [#allocation3], %s424
        %p426 = pneg %p57
        %p427 = pneg %p54
        %s428 = smul.u32 64, %s22
        %s429 = smul.u32 2, %s21
        %p430 = scmp.lt.s32.totalorder %s428, 127
        %s431 = scalar_select %p430, %s428, 127
        %p432 = scmp.lt.s32.totalorder %s429, 1
        %s433 = scalar_select %p432, %s429, 1
        %s434 = smul.addr %s431, 2
        %s435 = sadd.s32 %s433, %s434
        %s436 = smul.addr %s435, 4
        %s437 = scalar_lea.vmem %s1, %s436
        %p438 = pneg %p85
        %p439 = pneg %p82
        %s440 = smul.u32 2, %s21
        %p441 = scmp.lt.s32.totalorder %s440, 1
        %s442 = scalar_select %p441, %s440, 1
        %s443 = scalar_lea.vmem %s2, %s442
        %p444 = pneg %p111
        %p445 = pneg %p108
        %s446 = smul.u32 39, %s20
        %s447 = smul.u32 2, %s21
        %p448 = scmp.lt.s32.totalorder %s446, 38
        %s449 = scalar_select %p448, %s446, 38
        %p450 = scmp.lt.s32.totalorder %s447, 1
        %s451 = scalar_select %p450, %s447, 1
        %s452 = smul.addr %s449, 2
        %s453 = sadd.s32 %s451, %s452
        %s454 = smul.addr %s453, 8
        %s455 = scalar_lea.vmem %s3, %s454
        %p456 = pneg %p139
        %p457 = pneg %p136
        %p458 = pneg %p167
        %p459 = pneg %p164
        %s460 = smul.u32 39, %s20
        %s461 = smul.u32 2, %s21
        %p462 = scmp.lt.s32.totalorder %s460, 38
        %s463 = scalar_select %p462, %s460, 38
        %p464 = scmp.lt.s32.totalorder %s461, 1
        %s465 = scalar_select %p464, %s461, 1
        %s466 = smul.addr %s463, 2
        %s467 = sadd.s32 %s465, %s466
        %s468 = smul.addr %s467, 8
        %s469 = scalar_lea.vmem %s4, %s468
        %s470 = smul.u32 39, %s20
        %s471 = smul.u32 4, %s22
        %s472 = smul.u32 64, %s22
        %s473 = smul.u32 2, %s21
        %p474 = scmp.lt.s32.totalorder %s472, 127
        %s475 = scalar_select %p474, %s472, 127
        %p476 = scmp.lt.s32.totalorder %s473, 1
        %s477 = scalar_select %p476, %s473, 1
        %s478 = smul.addr %s475, 2
        %s479 = sadd.s32 %s477, %s478
        %s480 = smul.addr %s479, 4
        %s481 = scalar_lea.vmem %s1, %s480
        %s482 = smul.u32 64, %s22
        %s483 = smul.u32 2, %s21
        %s484 = smul.u32 2, %s21
        %p485 = scmp.lt.s32.totalorder %s484, 1
        %s486 = scalar_select %p485, %s484, 1
        %s487 = scalar_lea.vmem %s2, %s486
        %s488 = smul.u32 2, %s21
        %s489 = smul.u32 39, %s20
        %s490 = smul.u32 2, %s21
        %p491 = scmp.lt.s32.totalorder %s489, 38
        %s492 = scalar_select %p491, %s489, 38
        %p493 = scmp.lt.s32.totalorder %s490, 1
        %s494 = scalar_select %p493, %s490, 1
        %s495 = smul.addr %s492, 2
        %s496 = sadd.s32 %s494, %s495
        %s497 = smul.addr %s496, 8
        %s498 = scalar_lea.vmem %s3, %s497
        %s499 = smul.u32 39, %s20
        %s500 = smul.u32 2, %s21
        %s501 = smul.u32 39, %s20
        %s502 = smul.u32 2, %s21
        %p503 = scmp.lt.s32.totalorder %s501, 38
        %s504 = scalar_select %p503, %s501, 38
        %p505 = scmp.lt.s32.totalorder %s502, 1
        %s506 = scalar_select %p505, %s502, 1
        %s507 = smul.addr %s504, 2
        %s508 = sadd.s32 %s506, %s507
        %s509 = smul.addr %s508, 8
        %s510 = scalar_lea.vmem %s4, %s509
        %s511 = smul.u32 39, %s20
        %s512 = smul.u32 2, %s21
        %p513 = scmp.eq.s32.totalorder %s22, 0
        // Predicated region
        $region60: #{model_forward.11} parent=54 // pred_check
          %p514 = pneg %p513
        $region61: #{model_forward.11} parent=54 // pred_check_branch
          %516 = sbr.rel (%p514) target = $region63
        $region62: #{model_forward.11} parent=54 // pred_region
          %517 = vst [vmem:[#allocation2] sm:$0xff] 0.0
          %518 = vst [vmem:[#allocation2 + $0x8] sm:$0xff] 0.0
          %519 = vst [vmem:[#allocation2 + $0x10] sm:$0xff] 0.0
          %520 = vst [vmem:[#allocation2 + $0x18] sm:$0xff] 0.0
          %521 = vst [vmem:[#allocation2 + $0x20] sm:$0xff] 0.0
          %522 = vst [vmem:[#allocation2 + $0x28] sm:$0xff] 0.0
          %523 = vst [vmem:[#allocation2 + $0x30] sm:$0xff] 0.0
          %524 = vst [vmem:[#allocation2 + $0x38] sm:$0xff] 0.0
          %525 = vst [vmem:[#allocation2 + $0x40] sm:$0xff] 0.0
          %526 = vst [vmem:[#allocation2 + $0x48] sm:$0xff] 0.0
          %527 = vst [vmem:[#allocation2 + $0x50] sm:$0xff] 0.0
          %528 = vst [vmem:[#allocation2 + $0x58] sm:$0xff] 0.0
          %529 = vst [vmem:[#allocation2 + $0x60] sm:$0xff] 0.0
          %530 = vst [vmem:[#allocation2 + $0x68] sm:$0xff] 0.0
          %531 = vst [vmem:[#allocation2 + $0x70] sm:$0xff] 0.0
          %532 = vst [vmem:[#allocation2 + $0x78] sm:$0xff] 0.0
          %533 = vst [vmem:[#allocation2 + $0x80] sm:$0xff] 0.0
          %534 = vst [vmem:[#allocation2 + $0x88] sm:$0xff] 0.0
          %535 = vst [vmem:[#allocation2 + $0x90] sm:$0xff] 0.0
          %536 = vst [vmem:[#allocation2 + $0x98] sm:$0xff] 0.0
          %537 = vst [vmem:[#allocation2 + $0xa0] sm:$0xff] 0.0
          %538 = vst [vmem:[#allocation2 + $0xa8] sm:$0xff] 0.0
          %539 = vst [vmem:[#allocation2 + $0xb0] sm:$0xff] 0.0
          %540 = vst [vmem:[#allocation2 + $0xb8] sm:$0xff] 0.0
          %541 = vst [vmem:[#allocation2 + $0xc0] sm:$0xff] 0.0
          %542 = vst [vmem:[#allocation2 + $0xc8] sm:$0xff] 0.0
          %543 = vst [vmem:[#allocation2 + $0xd0] sm:$0xff] 0.0
          %544 = vst [vmem:[#allocation2 + $0xd8] sm:$0xff] 0.0
          %545 = vst [vmem:[#allocation2 + $0xe0] sm:$0xff] 0.0
          %546 = vst [vmem:[#allocation2 + $0xe8] sm:$0xff] 0.0
          %547 = vst [vmem:[#allocation2 + $0xf0] sm:$0xff] 0.0
          %548 = vst [vmem:[#allocation2 + $0xf8] sm:$0xff] 0.0
          %549 = vst [vmem:[#allocation2 + $0x100] sm:$0xff] 0.0
          %550 = vst [vmem:[#allocation2 + $0x108] sm:$0xff] 0.0
          %551 = vst [vmem:[#allocation2 + $0x110] sm:$0xff] 0.0
          %552 = vst [vmem:[#allocation2 + $0x118] sm:$0xff] 0.0
          %553 = vst [vmem:[#allocation2 + $0x120] sm:$0xff] 0.0
          %554 = vst [vmem:[#allocation2 + $0x128] sm:$0xff] 0.0
          %555 = vst [vmem:[#allocation2 + $0x130] sm:$0xff] 0.0
          %556 = vst [vmem:[#allocation2 + $0x138] sm:$0xff] 0.0
          %557 = vst [vmem:[#allocation2 + $0x140] sm:$0xff] 0.0
          %558 = vst [vmem:[#allocation2 + $0x148] sm:$0xff] 0.0
          %559 = vst [vmem:[#allocation2 + $0x150] sm:$0xff] 0.0
          %560 = vst [vmem:[#allocation2 + $0x158] sm:$0xff] 0.0
          %561 = vst [vmem:[#allocation2 + $0x160] sm:$0xff] 0.0
          %562 = vst [vmem:[#allocation2 + $0x168] sm:$0xff] 0.0
          %563 = vst [vmem:[#allocation2 + $0x170] sm:$0xff] 0.0
          %564 = vst [vmem:[#allocation2 + $0x178] sm:$0xff] 0.0
          %565 = vst [vmem:[#allocation2 + $0x180] sm:$0xff] 0.0
          %566 = vst [vmem:[#allocation2 + $0x188] sm:$0xff] 0.0
          %567 = vst [vmem:[#allocation2 + $0x190] sm:$0xff] 0.0
          %568 = vst [vmem:[#allocation2 + $0x198] sm:$0xff] 0.0
          %569 = vst [vmem:[#allocation2 + $0x1a0] sm:$0xff] 0.0
          %570 = vst [vmem:[#allocation2 + $0x1a8] sm:$0xff] 0.0
          %571 = vst [vmem:[#allocation2 + $0x1b0] sm:$0xff] 0.0
          %572 = vst [vmem:[#allocation2 + $0x1b8] sm:$0xff] 0.0
          %573 = vst [vmem:[#allocation2 + $0x1c0] sm:$0xff] 0.0
          %574 = vst [vmem:[#allocation2 + $0x1c8] sm:$0xff] 0.0
          %575 = vst [vmem:[#allocation2 + $0x1d0] sm:$0xff] 0.0
          %576 = vst [vmem:[#allocation2 + $0x1d8] sm:$0xff] 0.0
          %577 = vst [vmem:[#allocation2 + $0x1e0] sm:$0xff] 0.0
          %578 = vst [vmem:[#allocation2 + $0x1e8] sm:$0xff] 0.0
          %579 = vst [vmem:[#allocation2 + $0x1f0] sm:$0xff] 0.0
          %580 = vst [vmem:[#allocation2 + $0x1f8] sm:$0xff] 0.0
          %581 = vst [vmem:[#allocation2 + $0x200] sm:$0xff] 0.0
          %582 = vst [vmem:[#allocation2 + $0x208] sm:$0xff] 0.0
          %583 = vst [vmem:[#allocation2 + $0x210] sm:$0xff] 0.0
          %584 = vst [vmem:[#allocation2 + $0x218] sm:$0xff] 0.0
          %585 = vst [vmem:[#allocation2 + $0x220] sm:$0xff] 0.0
          %586 = vst [vmem:[#allocation2 + $0x228] sm:$0xff] 0.0
          %587 = vst [vmem:[#allocation2 + $0x230] sm:$0xff] 0.0
          %588 = vst [vmem:[#allocation2 + $0x238] sm:$0xff] 0.0
          %589 = vst [vmem:[#allocation2 + $0x240] sm:$0xff] 0.0
          %590 = vst [vmem:[#allocation2 + $0x248] sm:$0xff] 0.0
          %591 = vst [vmem:[#allocation2 + $0x250] sm:$0xff] 0.0
          %592 = vst [vmem:[#allocation2 + $0x258] sm:$0xff] 0.0
          %593 = vst [vmem:[#allocation2 + $0x260] sm:$0x3] 0.0
          %594 = vst [vmem:[#allocation2 + $0x268] sm:$0x3] 0.0
        $region63: #{model_forward.11} parent=54 // pred_fallthru
          _
        %v595 = vld [vmem:[#allocation2] sm:$0xff]
        %v596 = vld [vmem:[#allocation2 + $0x8] sm:$0xff]
        %v597 = vld [vmem:[#allocation2 + $0x10] sm:$0xff]
        %v598 = vld [vmem:[#allocation2 + $0x18] sm:$0xff]
        %v599 = vld [vmem:[#allocation2 + $0x20] sm:$0xff]
        %v600 = vld [vmem:[#allocation2 + $0x28] sm:$0xff]
        %v601 = vld [vmem:[#allocation2 + $0x30] sm:$0xff]
        %v602 = vld [vmem:[#allocation2 + $0x38] sm:$0xff]
        %v603 = vld [vmem:[#allocation2 + $0x40] sm:$0xff]
        %v604 = vld [vmem:[#allocation2 + $0x48] sm:$0xff]
        %v605 = vld [vmem:[#allocation2 + $0x50] sm:$0xff]
        %v606 = vld [vmem:[#allocation2 + $0x58] sm:$0xff]
        %v607 = vld [vmem:[#allocation2 + $0x60] sm:$0xff]
        %v608 = vld [vmem:[#allocation2 + $0x68] sm:$0xff]
        %v609 = vld [vmem:[#allocation2 + $0x70] sm:$0xff]
        %v610 = vld [vmem:[#allocation2 + $0x78] sm:$0xff]
        %v611 = vld [vmem:[#allocation2 + $0x80] sm:$0xff]
        %v612 = vld [vmem:[#allocation2 + $0x88] sm:$0xff]
        %v613 = vld [vmem:[#allocation2 + $0x90] sm:$0xff]
        %v614 = vld [vmem:[#allocation2 + $0x98] sm:$0xff]
        %v615 = vld [vmem:[#allocation2 + $0xa0] sm:$0xff]
        %v616 = vld [vmem:[#allocation2 + $0xa8] sm:$0xff]
        %v617 = vld [vmem:[#allocation2 + $0xb0] sm:$0xff]
        %v618 = vld [vmem:[#allocation2 + $0xb8] sm:$0xff]
        %v619 = vld [vmem:[#allocation2 + $0xc0] sm:$0xff]
        %v620 = vld [vmem:[#allocation2 + $0xc8] sm:$0xff]
        %v621 = vld [vmem:[#allocation2 + $0xd0] sm:$0xff]
        %v622 = vld [vmem:[#allocation2 + $0xd8] sm:$0xff]
        %v623 = vld [vmem:[#allocation2 + $0xe0] sm:$0xff]
        %v624 = vld [vmem:[#allocation2 + $0xe8] sm:$0xff]
        %v625 = vld [vmem:[#allocation2 + $0xf0] sm:$0xff]
        %v626 = vld [vmem:[#allocation2 + $0xf8] sm:$0xff]
        %v627 = vld [vmem:[#allocation2 + $0x100] sm:$0xff]
        %v628 = vld [vmem:[#allocation2 + $0x108] sm:$0xff]
        %v629 = vld [vmem:[#allocation2 + $0x110] sm:$0xff]
        %v630 = vld [vmem:[#allocation2 + $0x118] sm:$0xff]
        %v631 = vld [vmem:[#allocation2 + $0x120] sm:$0xff]
        %v632 = vld [vmem:[#allocation2 + $0x128] sm:$0xff]
        %v633 = vld [vmem:[#allocation2 + $0x130] sm:$0xff]
        %v634 = vld [vmem:[#allocation2 + $0x138] sm:$0xff]
        %v635 = vld [vmem:[#allocation2 + $0x140] sm:$0xff]
        %v636 = vld [vmem:[#allocation2 + $0x148] sm:$0xff]
        %v637 = vld [vmem:[#allocation2 + $0x150] sm:$0xff]
        %v638 = vld [vmem:[#allocation2 + $0x158] sm:$0xff]
        %v639 = vld [vmem:[#allocation2 + $0x160] sm:$0xff]
        %v640 = vld [vmem:[#allocation2 + $0x168] sm:$0xff]
        %v641 = vld [vmem:[#allocation2 + $0x170] sm:$0xff]
        %v642 = vld [vmem:[#allocation2 + $0x178] sm:$0xff]
        %v643 = vld [vmem:[#allocation2 + $0x180] sm:$0xff]
        %v644 = vld [vmem:[#allocation2 + $0x188] sm:$0xff]
        %v645 = vld [vmem:[#allocation2 + $0x190] sm:$0xff]
        %v646 = vld [vmem:[#allocation2 + $0x198] sm:$0xff]
        %v647 = vld [vmem:[#allocation2 + $0x1a0] sm:$0xff]
        %v648 = vld [vmem:[#allocation2 + $0x1a8] sm:$0xff]
        %v649 = vld [vmem:[#allocation2 + $0x1b0] sm:$0xff]
        %v650 = vld [vmem:[#allocation2 + $0x1b8] sm:$0xff]
        %v651 = vld [vmem:[#allocation2 + $0x1c0] sm:$0xff]
        %v652 = vld [vmem:[#allocation2 + $0x1c8] sm:$0xff]
        %v653 = vld [vmem:[#allocation2 + $0x1d0] sm:$0xff]
        %v654 = vld [vmem:[#allocation2 + $0x1d8] sm:$0xff]
        %v655 = vld [vmem:[#allocation2 + $0x1e0] sm:$0xff]
        %v656 = vld [vmem:[#allocation2 + $0x1e8] sm:$0xff]
        %v657 = vld [vmem:[#allocation2 + $0x1f0] sm:$0xff]
        %v658 = vld [vmem:[#allocation2 + $0x1f8] sm:$0xff]
        %v659 = vld [vmem:[#allocation2 + $0x200] sm:$0xff]
        %v660 = vld [vmem:[#allocation2 + $0x208] sm:$0xff]
        %v661 = vld [vmem:[#allocation2 + $0x210] sm:$0xff]
        %v662 = vld [vmem:[#allocation2 + $0x218] sm:$0xff]
        %v663 = vld [vmem:[#allocation2 + $0x220] sm:$0xff]
        %v664 = vld [vmem:[#allocation2 + $0x228] sm:$0xff]
        %v665 = vld [vmem:[#allocation2 + $0x230] sm:$0xff]
        %v666 = vld [vmem:[#allocation2 + $0x238] sm:$0xff]
        %v667 = vld [vmem:[#allocation2 + $0x240] sm:$0xff]
        %v668 = vld [vmem:[#allocation2 + $0x248] sm:$0xff]
        %v669 = vld [vmem:[#allocation2 + $0x250] sm:$0xff]
        %v670 = vld [vmem:[#allocation2 + $0x258] sm:$0xff]
        %v671 = vld [vmem:[#allocation2 + $0x260] sm:$0x3]
        %v672 = vld [vmem:[#allocation2 + $0x268] sm:$0x3]
        %v673 = vld [vmem:[%s418] sm:$0xff]
        %v674 = vld [vmem:[%s418 + $0x8] sm:$0xff]
        %v675 = vld [vmem:[%s418 + $0x10] sm:$0xff]
        %v676 = vld [vmem:[%s418 + $0x18] sm:$0xff]
        %v677 = vld [vmem:[%s418 + $0x20] sm:$0xff]
        %v678 = vld [vmem:[%s418 + $0x28] sm:$0xff]
        %v679 = vld [vmem:[%s418 + $0x30] sm:$0xff]
        %v680 = vld [vmem:[%s418 + $0x38] sm:$0xff]
        %v681 = vld [vmem:[%s418 + $0x40] sm:$0xff]
        %v682 = vld [vmem:[%s418 + $0x48] sm:$0xff]
        %v683 = vld [vmem:[%s418 + $0x50] sm:$0xff]
        %v684 = vld [vmem:[%s418 + $0x58] sm:$0xff]
        %v685 = vld [vmem:[%s418 + $0x60] sm:$0xff]
        %v686 = vld [vmem:[%s418 + $0x68] sm:$0xff]
        %v687 = vld [vmem:[%s418 + $0x70] sm:$0xff]
        %v688 = vld [vmem:[%s418 + $0x78] sm:$0xff]
        %v689 = vld [vmem:[%s418 + $0x80] sm:$0xff]
        %v690 = vld [vmem:[%s418 + $0x88] sm:$0xff]
        %v691 = vld [vmem:[%s418 + $0x90] sm:$0xff]
        %v692 = vld [vmem:[%s418 + $0x98] sm:$0xff]
        %v693 = vld [vmem:[%s418 + $0xa0] sm:$0xff]
        %v694 = vld [vmem:[%s418 + $0xa8] sm:$0xff]
        %v695 = vld [vmem:[%s418 + $0xb0] sm:$0xff]
        %v696 = vld [vmem:[%s418 + $0xb8] sm:$0xff]
        %v697 = vld [vmem:[%s418 + $0xc0] sm:$0xff]
        %v698 = vld [vmem:[%s418 + $0xc8] sm:$0xff]
        %v699 = vld [vmem:[%s418 + $0xd0] sm:$0xff]
        %v700 = vld [vmem:[%s418 + $0xd8] sm:$0xff]
        %v701 = vld [vmem:[%s418 + $0xe0] sm:$0xff]
        %v702 = vld [vmem:[%s418 + $0xe8] sm:$0xff]
        %v703 = vld [vmem:[%s418 + $0xf0] sm:$0xff]
        %v704 = vld [vmem:[%s418 + $0xf8] sm:$0xff]
        %v705 = vld [vmem:[%s418 + $0x100] sm:$0xff]
        %v706 = vld [vmem:[%s418 + $0x108] sm:$0xff]
        %v707 = vld [vmem:[%s418 + $0x110] sm:$0xff]
        %v708 = vld [vmem:[%s418 + $0x118] sm:$0xff]
        %v709 = vld [vmem:[%s418 + $0x120] sm:$0xff]
        %v710 = vld [vmem:[%s418 + $0x128] sm:$0xff]
        %v711 = vld [vmem:[%s418 + $0x130] sm:$0xff]
        %v712 = vld [vmem:[%s418 + $0x138] sm:$0xff]
        %v713 = vld [vmem:[%s418 + $0x140] sm:$0xff]
        %v714 = vld [vmem:[%s418 + $0x148] sm:$0xff]
        %v715 = vld [vmem:[%s418 + $0x150] sm:$0xff]
        %v716 = vld [vmem:[%s418 + $0x158] sm:$0xff]
        %v717 = vld [vmem:[%s418 + $0x160] sm:$0xff]
        %v718 = vld [vmem:[%s418 + $0x168] sm:$0xff]
        %v719 = vld [vmem:[%s418 + $0x170] sm:$0xff]
        %v720 = vld [vmem:[%s418 + $0x178] sm:$0xff]
        %v721 = vld [vmem:[%s418 + $0x180] sm:$0xff]
        %v722 = vld [vmem:[%s418 + $0x188] sm:$0xff]
        %v723 = vld [vmem:[%s418 + $0x190] sm:$0xff]
        %v724 = vld [vmem:[%s418 + $0x198] sm:$0xff]
        %v725 = vld [vmem:[%s418 + $0x1a0] sm:$0xff]
        %v726 = vld [vmem:[%s418 + $0x1a8] sm:$0xff]
        %v727 = vld [vmem:[%s418 + $0x1b0] sm:$0xff]
        %v728 = vld [vmem:[%s418 + $0x1b8] sm:$0xff]
        %v729 = vld [vmem:[%s418 + $0x1c0] sm:$0xff]
        %v730 = vld [vmem:[%s418 + $0x1c8] sm:$0xff]
        %v731 = vld [vmem:[%s418 + $0x1d0] sm:$0xff]
        %v732 = vld [vmem:[%s418 + $0x1d8] sm:$0xff]
        %v733 = vld [vmem:[%s418 + $0x1e0] sm:$0xff]
        %v734 = vld [vmem:[%s418 + $0x1e8] sm:$0xff]
        %v735 = vld [vmem:[%s418 + $0x1f0] sm:$0xff]
        %v736 = vld [vmem:[%s418 + $0x1f8] sm:$0xff]
        %v737 = vld [vmem:[%s418 + $0x200] sm:$0xff]
        %v738 = vld [vmem:[%s418 + $0x208] sm:$0xff]
        %v739 = vld [vmem:[%s418 + $0x210] sm:$0xff]
        %v740 = vld [vmem:[%s418 + $0x218] sm:$0xff]
        %v741 = vld [vmem:[%s418 + $0x220] sm:$0xff]
        %v742 = vld [vmem:[%s418 + $0x228] sm:$0xff]
        %v743 = vld [vmem:[%s418 + $0x230] sm:$0xff]
        %v744 = vld [vmem:[%s418 + $0x238] sm:$0xff]
        %v745 = vld [vmem:[%s418 + $0x240] sm:$0xff]
        %v746 = vld [vmem:[%s418 + $0x248] sm:$0xff]
        %v747 = vld [vmem:[%s418 + $0x250] sm:$0xff]
        %v748 = vld [vmem:[%s418 + $0x258] sm:$0xff]
        %v749 = vld [vmem:[%s418 + $0x260] sm:$0x11]
        %v750 = vld [vmem:[%s418 + $0x268] sm:$0x11]
        %v751 = vld [vmem:[%s481] sm:$0xff]
        %v752 = vld [vmem:[%s481 + $0x8] sm:$0xff]
        %v753 = vld [vmem:[%s481 + $0x10] sm:$0xff]
        %v754 = vld [vmem:[%s481 + $0x18] sm:$0xff]
        %v755 = vld [vmem:[%s481 + $0x20] sm:$0xff]
        %v756 = vld [vmem:[%s481 + $0x28] sm:$0xff]
        %v757 = vld [vmem:[%s481 + $0x30] sm:$0xff]
        %v758 = vld [vmem:[%s481 + $0x38] sm:$0xff]
        %v759 = vld [vmem:[%s481 + $0x40] sm:$0xff]
        %v760 = vld [vmem:[%s481 + $0x48] sm:$0xff]
        %v761 = vld [vmem:[%s481 + $0x50] sm:$0xff]
        %v762 = vld [vmem:[%s481 + $0x58] sm:$0xff]
        %v763 = vld [vmem:[%s481 + $0x60] sm:$0xff]
        %v764 = vld [vmem:[%s481 + $0x68] sm:$0xff]
        %v765 = vld [vmem:[%s481 + $0x70] sm:$0xff]
        %v766 = vld [vmem:[%s481 + $0x78] sm:$0xff]
        %v767 = vld [vmem:[%s481 + $0x80] sm:$0xff]
        %v768 = vld [vmem:[%s481 + $0x88] sm:$0xff]
        %v769 = vld [vmem:[%s481 + $0x90] sm:$0xff]
        %v770 = vld [vmem:[%s481 + $0x98] sm:$0xff]
        %v771 = vld [vmem:[%s481 + $0xa0] sm:$0xff]
        %v772 = vld [vmem:[%s481 + $0xa8] sm:$0xff]
        %v773 = vld [vmem:[%s481 + $0xb0] sm:$0xff]
        %v774 = vld [vmem:[%s481 + $0xb8] sm:$0xff]
        %v775 = vld [vmem:[%s481 + $0xc0] sm:$0xff]
        %v776 = vld [vmem:[%s481 + $0xc8] sm:$0xff]
        %v777 = vld [vmem:[%s481 + $0xd0] sm:$0xff]
        %v778 = vld [vmem:[%s481 + $0xd8] sm:$0xff]
        %v779 = vld [vmem:[%s481 + $0xe0] sm:$0xff]
        %v780 = vld [vmem:[%s481 + $0xe8] sm:$0xff]
        %v781 = vld [vmem:[%s481 + $0xf0] sm:$0xff]
        %v782 = vld [vmem:[%s481 + $0xf8] sm:$0xff]
        %v783 = vld [vmem:[%s481 + $0x100] sm:$0xff]
        %v784 = vld [vmem:[%s481 + $0x108] sm:$0xff]
        %v785 = vld [vmem:[%s481 + $0x110] sm:$0xff]
        %v786 = vld [vmem:[%s481 + $0x118] sm:$0xff]
        %v787 = vld [vmem:[%s481 + $0x120] sm:$0xff]
        %v788 = vld [vmem:[%s481 + $0x128] sm:$0xff]
        %v789 = vld [vmem:[%s481 + $0x130] sm:$0xff]
        %v790 = vld [vmem:[%s481 + $0x138] sm:$0xff]
        %v791 = vld [vmem:[%s481 + $0x140] sm:$0xff]
        %v792 = vld [vmem:[%s481 + $0x148] sm:$0xff]
        %v793 = vld [vmem:[%s481 + $0x150] sm:$0xff]
        %v794 = vld [vmem:[%s481 + $0x158] sm:$0xff]
        %v795 = vld [vmem:[%s481 + $0x160] sm:$0xff]
        %v796 = vld [vmem:[%s481 + $0x168] sm:$0xff]
        %v797 = vld [vmem:[%s481 + $0x170] sm:$0xff]
        %v798 = vld [vmem:[%s481 + $0x178] sm:$0xff]
        %v799 = vld [vmem:[%s481 + $0x180] sm:$0xff]
        %v800 = vld [vmem:[%s481 + $0x188] sm:$0xff]
        %v801 = vld [vmem:[%s481 + $0x190] sm:$0xff]
        %v802 = vld [vmem:[%s481 + $0x198] sm:$0xff]
        %v803 = vld [vmem:[%s481 + $0x1a0] sm:$0xff]
        %v804 = vld [vmem:[%s481 + $0x1a8] sm:$0xff]
        %v805 = vld [vmem:[%s481 + $0x1b0] sm:$0xff]
        %v806 = vld [vmem:[%s481 + $0x1b8] sm:$0xff]
        %v807 = vld [vmem:[%s481 + $0x1c0] sm:$0xff]
        %v808 = vld [vmem:[%s481 + $0x1c8] sm:$0xff]
        %v809 = vld [vmem:[%s481 + $0x1d0] sm:$0xff]
        %v810 = vld [vmem:[%s481 + $0x1d8] sm:$0xff]
        %v811 = vld [vmem:[%s481 + $0x1e0] sm:$0xff]
        %v812 = vld [vmem:[%s481 + $0x1e8] sm:$0xff]
        %v813 = vld [vmem:[%s481 + $0x1f0] sm:$0xff]
        %v814 = vld [vmem:[%s481 + $0x1f8] sm:$0xff]
        %v893 = vunpack.c.l.b16 %v673
        %v894 = vunpack.c.h.b16 %v673
        %v895 = vunpack.c.l.b16 %v674
        %v896 = vunpack.c.h.b16 %v674
        %v897 = vunpack.c.l.b16 %v675
        %v898 = vunpack.c.h.b16 %v675
        %v899 = vunpack.c.l.b16 %v676
        %v900 = vunpack.c.h.b16 %v676
        %v901 = vunpack.c.l.b16 %v677
        %v902 = vunpack.c.h.b16 %v677
        %v903 = vunpack.c.l.b16 %v678
        %v904 = vunpack.c.h.b16 %v678
        %v905 = vunpack.c.l.b16 %v679
        %v906 = vunpack.c.h.b16 %v679
        %v907 = vunpack.c.l.b16 %v680
        %v908 = vunpack.c.h.b16 %v680
        %v909 = vunpack.c.l.b16 %v681
        %v910 = vunpack.c.h.b16 %v681
        %v911 = vunpack.c.l.b16 %v682
        %v912 = vunpack.c.h.b16 %v682
        %v913 = vunpack.c.l.b16 %v683
        %v914 = vunpack.c.h.b16 %v683
        %v915 = vunpack.c.l.b16 %v684
        %v916 = vunpack.c.h.b16 %v684
        %v917 = vunpack.c.l.b16 %v685
        %v918 = vunpack.c.h.b16 %v685
        %v919 = vunpack.c.l.b16 %v686
        %v920 = vunpack.c.h.b16 %v686
        %v921 = vunpack.c.l.b16 %v687
        %v922 = vunpack.c.h.b16 %v687
        %v923 = vunpack.c.l.b16 %v688
        %v924 = vunpack.c.h.b16 %v688
        %v925 = vunpack.c.l.b16 %v689
        %v926 = vunpack.c.h.b16 %v689
        %v927 = vunpack.c.l.b16 %v690
        %v928 = vunpack.c.h.b16 %v690
        %v929 = vunpack.c.l.b16 %v691
        %v930 = vunpack.c.h.b16 %v691
        %v931 = vunpack.c.l.b16 %v692
        %v932 = vunpack.c.h.b16 %v692
        %v933 = vunpack.c.l.b16 %v693
        %v934 = vunpack.c.h.b16 %v693
        %v935 = vunpack.c.l.b16 %v694
        %v936 = vunpack.c.h.b16 %v694
        %v937 = vunpack.c.l.b16 %v695
        %v938 = vunpack.c.h.b16 %v695
        %v939 = vunpack.c.l.b16 %v696
        %v940 = vunpack.c.h.b16 %v696
        %v941 = vunpack.c.l.b16 %v697
        %v942 = vunpack.c.h.b16 %v697
        %v943 = vunpack.c.l.b16 %v698
        %v944 = vunpack.c.h.b16 %v698
        %v945 = vunpack.c.l.b16 %v699
        %v946 = vunpack.c.h.b16 %v699
        %v947 = vunpack.c.l.b16 %v700
        %v948 = vunpack.c.h.b16 %v700
        %v949 = vunpack.c.l.b16 %v701
        %v950 = vunpack.c.h.b16 %v701
        %v951 = vunpack.c.l.b16 %v702
        %v952 = vunpack.c.h.b16 %v702
        %v953 = vunpack.c.l.b16 %v703
        %v954 = vunpack.c.h.b16 %v703
        %v955 = vunpack.c.l.b16 %v704
        %v956 = vunpack.c.h.b16 %v704
        %v957 = vunpack.c.l.b16 %v705
        %v958 = vunpack.c.h.b16 %v705
        %v959 = vunpack.c.l.b16 %v706
        %v960 = vunpack.c.h.b16 %v706
        %v961 = vunpack.c.l.b16 %v707
        %v962 = vunpack.c.h.b16 %v707
        %v963 = vunpack.c.l.b16 %v708
        %v964 = vunpack.c.h.b16 %v708
        %v965 = vunpack.c.l.b16 %v709
        %v966 = vunpack.c.h.b16 %v709
        %v967 = vunpack.c.l.b16 %v710
        %v968 = vunpack.c.h.b16 %v710
        %v969 = vunpack.c.l.b16 %v711
        %v970 = vunpack.c.h.b16 %v711
        %v971 = vunpack.c.l.b16 %v712
        %v972 = vunpack.c.h.b16 %v712
        %v973 = vunpack.c.l.b16 %v713
        %v974 = vunpack.c.h.b16 %v713
        %v975 = vunpack.c.l.b16 %v714
        %v976 = vunpack.c.h.b16 %v714
        %v977 = vunpack.c.l.b16 %v715
        %v978 = vunpack.c.h.b16 %v715
        %v979 = vunpack.c.l.b16 %v716
        %v980 = vunpack.c.h.b16 %v716
        %v981 = vunpack.c.l.b16 %v717
        %v982 = vunpack.c.h.b16 %v717
        %v983 = vunpack.c.l.b16 %v718
        %v984 = vunpack.c.h.b16 %v718
        %v985 = vunpack.c.l.b16 %v719
        %v986 = vunpack.c.h.b16 %v719
        %v987 = vunpack.c.l.b16 %v720
        %v988 = vunpack.c.h.b16 %v720
        %v989 = vunpack.c.l.b16 %v721
        %v990 = vunpack.c.h.b16 %v721
        %v991 = vunpack.c.l.b16 %v722
        %v992 = vunpack.c.h.b16 %v722
        %v993 = vunpack.c.l.b16 %v723
        %v994 = vunpack.c.h.b16 %v723
        %v995 = vunpack.c.l.b16 %v724
        %v996 = vunpack.c.h.b16 %v724
        %v997 = vunpack.c.l.b16 %v725
        %v998 = vunpack.c.h.b16 %v725
        %v999 = vunpack.c.l.b16 %v726
        %v1000 = vunpack.c.h.b16 %v726
        %v1001 = vunpack.c.l.b16 %v727
        %v1002 = vunpack.c.h.b16 %v727
        %v1003 = vunpack.c.l.b16 %v728
        %v1004 = vunpack.c.h.b16 %v728
        %v1005 = vunpack.c.l.b16 %v729
        %v1006 = vunpack.c.h.b16 %v729
        %v1007 = vunpack.c.l.b16 %v730
        %v1008 = vunpack.c.h.b16 %v730
        %v1009 = vunpack.c.l.b16 %v731
        %v1010 = vunpack.c.h.b16 %v731
        %v1011 = vunpack.c.l.b16 %v732
        %v1012 = vunpack.c.h.b16 %v732
        %v1013 = vunpack.c.l.b16 %v733
        %v1014 = vunpack.c.h.b16 %v733
        %v1015 = vunpack.c.l.b16 %v734
        %v1016 = vunpack.c.h.b16 %v734
        %v1017 = vunpack.c.l.b16 %v735
        %v1018 = vunpack.c.h.b16 %v735
        %v1019 = vunpack.c.l.b16 %v736
        %v1020 = vunpack.c.h.b16 %v736
        %v1021 = vunpack.c.l.b16 %v737
        %v1022 = vunpack.c.h.b16 %v737
        %v1023 = vunpack.c.l.b16 %v738
        %v1024 = vunpack.c.h.b16 %v738
        %v1025 = vunpack.c.l.b16 %v739
        %v1026 = vunpack.c.h.b16 %v739
        %v1027 = vunpack.c.l.b16 %v740
        %v1028 = vunpack.c.h.b16 %v740
        %v1029 = vunpack.c.l.b16 %v741
        %v1030 = vunpack.c.h.b16 %v741
        %v1031 = vunpack.c.l.b16 %v742
        %v1032 = vunpack.c.h.b16 %v742
        %v1033 = vunpack.c.l.b16 %v743
        %v1034 = vunpack.c.h.b16 %v743
        %v1035 = vunpack.c.l.b16 %v744
        %v1036 = vunpack.c.h.b16 %v744
        %v1037 = vunpack.c.l.b16 %v745
        %v1038 = vunpack.c.h.b16 %v745
        %v1039 = vunpack.c.l.b16 %v746
        %v1040 = vunpack.c.h.b16 %v746
        %v1041 = vunpack.c.l.b16 %v747
        %v1042 = vunpack.c.h.b16 %v747
        %v1043 = vunpack.c.l.b16 %v748
        %v1044 = vunpack.c.h.b16 %v748
        %v1045 = vunpack.c.l.b16 %v749
        %v1046 = vunpack.c.h.b16 %v749
        %v1047 = vunpack.c.l.b16 %v750
        %v1048 = vunpack.c.h.b16 %v750
        %v1049 = vpack.c.b16 %v897, %v893
        %v1050 = vpack.c.b16 %v898, %v894
        %v1051 = vpack.c.b16 %v899, %v895
        %v1052 = vpack.c.b16 %v900, %v896
        %v1053 = vpack.c.b16 %v905, %v901
        %v1054 = vpack.c.b16 %v906, %v902
        %v1055 = vpack.c.b16 %v907, %v903
        %v1056 = vpack.c.b16 %v908, %v904
        %v1057 = vpack.c.b16 %v913, %v909
        %v1058 = vpack.c.b16 %v914, %v910
        %v1059 = vpack.c.b16 %v915, %v911
        %v1060 = vpack.c.b16 %v916, %v912
        %v1061 = vpack.c.b16 %v921, %v917
        %v1062 = vpack.c.b16 %v922, %v918
        %v1063 = vpack.c.b16 %v923, %v919
        %v1064 = vpack.c.b16 %v924, %v920
        %v1065 = vpack.c.b16 %v929, %v925
        %v1066 = vpack.c.b16 %v930, %v926
        %v1067 = vpack.c.b16 %v931, %v927
        %v1068 = vpack.c.b16 %v932, %v928
        %v1069 = vpack.c.b16 %v937, %v933
        %v1070 = vpack.c.b16 %v938, %v934
        %v1071 = vpack.c.b16 %v939, %v935
        %v1072 = vpack.c.b16 %v940, %v936
        %v1073 = vpack.c.b16 %v945, %v941
        %v1074 = vpack.c.b16 %v946, %v942
        %v1075 = vpack.c.b16 %v947, %v943
        %v1076 = vpack.c.b16 %v948, %v944
        %v1077 = vpack.c.b16 %v953, %v949
        %v1078 = vpack.c.b16 %v954, %v950
        %v1079 = vpack.c.b16 %v955, %v951
        %v1080 = vpack.c.b16 %v956, %v952
        %v1081 = vpack.c.b16 %v961, %v957
        %v1082 = vpack.c.b16 %v962, %v958
        %v1083 = vpack.c.b16 %v963, %v959
        %v1084 = vpack.c.b16 %v964, %v960
        %v1085 = vpack.c.b16 %v969, %v965
        %v1086 = vpack.c.b16 %v970, %v966
        %v1087 = vpack.c.b16 %v971, %v967
        %v1088 = vpack.c.b16 %v972, %v968
        %v1089 = vpack.c.b16 %v977, %v973
        %v1090 = vpack.c.b16 %v978, %v974
        %v1091 = vpack.c.b16 %v979, %v975
        %v1092 = vpack.c.b16 %v980, %v976
        %v1093 = vpack.c.b16 %v985, %v981
        %v1094 = vpack.c.b16 %v986, %v982
        %v1095 = vpack.c.b16 %v987, %v983
        %v1096 = vpack.c.b16 %v988, %v984
        %v1097 = vpack.c.b16 %v993, %v989
        %v1098 = vpack.c.b16 %v994, %v990
        %v1099 = vpack.c.b16 %v995, %v991
        %v1100 = vpack.c.b16 %v996, %v992
        %v1101 = vpack.c.b16 %v1001, %v997
        %v1102 = vpack.c.b16 %v1002, %v998
        %v1103 = vpack.c.b16 %v1003, %v999
        %v1104 = vpack.c.b16 %v1004, %v1000
        %v1105 = vpack.c.b16 %v1009, %v1005
        %v1106 = vpack.c.b16 %v1010, %v1006
        %v1107 = vpack.c.b16 %v1011, %v1007
        %v1108 = vpack.c.b16 %v1012, %v1008
        %v1109 = vpack.c.b16 %v1017, %v1013
        %v1110 = vpack.c.b16 %v1018, %v1014
        %v1111 = vpack.c.b16 %v1019, %v1015
        %v1112 = vpack.c.b16 %v1020, %v1016
        %v1113 = vpack.c.b16 %v1025, %v1021
        %v1114 = vpack.c.b16 %v1026, %v1022
        %v1115 = vpack.c.b16 %v1027, %v1023
        %v1116 = vpack.c.b16 %v1028, %v1024
        %v1117 = vpack.c.b16 %v1033, %v1029
        %v1118 = vpack.c.b16 %v1034, %v1030
        %v1119 = vpack.c.b16 %v1035, %v1031
        %v1120 = vpack.c.b16 %v1036, %v1032
        %v1121 = vpack.c.b16 %v1041, %v1037
        %v1122 = vpack.c.b16 %v1042, %v1038
        %v1123 = vpack.c.b16 %v1043, %v1039
        %v1124 = vpack.c.b16 %v1044, %v1040
        %v1125 = vpack.c.b16 %v1045, %v1045
        %v1126 = vpack.c.b16 %v1046, %v1046
        %v1127 = vpack.c.b16 %v1047, %v1047
        %v1128 = vpack.c.b16 %v1048, %v1048
        %v1273 = vunpack.c.l.b16 %v751
        %v1274 = vunpack.c.h.b16 %v751
        %v1275 = vunpack.c.l.b16 %v752
        %v1276 = vunpack.c.h.b16 %v752
        %v1277 = vunpack.c.l.b16 %v753
        %v1278 = vunpack.c.h.b16 %v753
        %v1279 = vunpack.c.l.b16 %v754
        %v1280 = vunpack.c.h.b16 %v754
        %v1281 = vunpack.c.l.b16 %v755
        %v1282 = vunpack.c.h.b16 %v755
        %v1283 = vunpack.c.l.b16 %v756
        %v1284 = vunpack.c.h.b16 %v756
        %v1285 = vunpack.c.l.b16 %v757
        %v1286 = vunpack.c.h.b16 %v757
        %v1287 = vunpack.c.l.b16 %v758
        %v1288 = vunpack.c.h.b16 %v758
        %v1289 = vunpack.c.l.b16 %v759
        %v1290 = vunpack.c.h.b16 %v759
        %v1291 = vunpack.c.l.b16 %v760
        %v1292 = vunpack.c.h.b16 %v760
        %v1293 = vunpack.c.l.b16 %v761
        %v1294 = vunpack.c.h.b16 %v761
        %v1295 = vunpack.c.l.b16 %v762
        %v1296 = vunpack.c.h.b16 %v762
        %v1297 = vunpack.c.l.b16 %v763
        %v1298 = vunpack.c.h.b16 %v763
        %v1299 = vunpack.c.l.b16 %v764
        %v1300 = vunpack.c.h.b16 %v764
        %v1301 = vunpack.c.l.b16 %v765
        %v1302 = vunpack.c.h.b16 %v765
        %v1303 = vunpack.c.l.b16 %v766
        %v1304 = vunpack.c.h.b16 %v766
        %v1305 = vunpack.c.l.b16 %v767
        %v1306 = vunpack.c.h.b16 %v767
        %v1307 = vunpack.c.l.b16 %v768
        %v1308 = vunpack.c.h.b16 %v768
        %v1309 = vunpack.c.l.b16 %v769
        %v1310 = vunpack.c.h.b16 %v769
        %v1311 = vunpack.c.l.b16 %v770
        %v1312 = vunpack.c.h.b16 %v770
        %v1313 = vunpack.c.l.b16 %v771
        %v1314 = vunpack.c.h.b16 %v771
        %v1315 = vunpack.c.l.b16 %v772
        %v1316 = vunpack.c.h.b16 %v772
        %v1317 = vunpack.c.l.b16 %v773
        %v1318 = vunpack.c.h.b16 %v773
        %v1319 = vunpack.c.l.b16 %v774
        %v1320 = vunpack.c.h.b16 %v774
        %v1321 = vunpack.c.l.b16 %v775
        %v1322 = vunpack.c.h.b16 %v775
        %v1323 = vunpack.c.l.b16 %v776
        %v1324 = vunpack.c.h.b16 %v776
        %v1325 = vunpack.c.l.b16 %v777
        %v1326 = vunpack.c.h.b16 %v777
        %v1327 = vunpack.c.l.b16 %v778
        %v1328 = vunpack.c.h.b16 %v778
        %v1329 = vunpack.c.l.b16 %v779
        %v1330 = vunpack.c.h.b16 %v779
        %v1331 = vunpack.c.l.b16 %v780
        %v1332 = vunpack.c.h.b16 %v780
        %v1333 = vunpack.c.l.b16 %v781
        %v1334 = vunpack.c.h.b16 %v781
        %v1335 = vunpack.c.l.b16 %v782
        %v1336 = vunpack.c.h.b16 %v782
        %v1337 = vunpack.c.l.b16 %v783
        %v1338 = vunpack.c.h.b16 %v783
        %v1339 = vunpack.c.l.b16 %v784
        %v1340 = vunpack.c.h.b16 %v784
        %v1341 = vunpack.c.l.b16 %v785
        %v1342 = vunpack.c.h.b16 %v785
        %v1343 = vunpack.c.l.b16 %v786
        %v1344 = vunpack.c.h.b16 %v786
        %v1345 = vunpack.c.l.b16 %v787
        %v1346 = vunpack.c.h.b16 %v787
        %v1347 = vunpack.c.l.b16 %v788
        %v1348 = vunpack.c.h.b16 %v788
        %v1349 = vunpack.c.l.b16 %v789
        %v1350 = vunpack.c.h.b16 %v789
        %v1351 = vunpack.c.l.b16 %v790
        %v1352 = vunpack.c.h.b16 %v790
        %v1353 = vunpack.c.l.b16 %v791
        %v1354 = vunpack.c.h.b16 %v791
        %v1355 = vunpack.c.l.b16 %v792
        %v1356 = vunpack.c.h.b16 %v792
        %v1357 = vunpack.c.l.b16 %v793
        %v1358 = vunpack.c.h.b16 %v793
        %v1359 = vunpack.c.l.b16 %v794
        %v1360 = vunpack.c.h.b16 %v794
        %v1361 = vunpack.c.l.b16 %v795
        %v1362 = vunpack.c.h.b16 %v795
        %v1363 = vunpack.c.l.b16 %v796
        %v1364 = vunpack.c.h.b16 %v796
        %v1365 = vunpack.c.l.b16 %v797
        %v1366 = vunpack.c.h.b16 %v797
        %v1367 = vunpack.c.l.b16 %v798
        %v1368 = vunpack.c.h.b16 %v798
        %v1369 = vunpack.c.l.b16 %v799
        %v1370 = vunpack.c.h.b16 %v799
        %v1371 = vunpack.c.l.b16 %v800
        %v1372 = vunpack.c.h.b16 %v800
        %v1373 = vunpack.c.l.b16 %v801
        %v1374 = vunpack.c.h.b16 %v801
        %v1375 = vunpack.c.l.b16 %v802
        %v1376 = vunpack.c.h.b16 %v802
        %v1377 = vunpack.c.l.b16 %v803
        %v1378 = vunpack.c.h.b16 %v803
        %v1379 = vunpack.c.l.b16 %v804
        %v1380 = vunpack.c.h.b16 %v804
        %v1381 = vunpack.c.l.b16 %v805
        %v1382 = vunpack.c.h.b16 %v805
        %v1383 = vunpack.c.l.b16 %v806
        %v1384 = vunpack.c.h.b16 %v806
        %v1385 = vunpack.c.l.b16 %v807
        %v1386 = vunpack.c.h.b16 %v807
        %v1387 = vunpack.c.l.b16 %v808
        %v1388 = vunpack.c.h.b16 %v808
        %v1389 = vunpack.c.l.b16 %v809
        %v1390 = vunpack.c.h.b16 %v809
        %v1391 = vunpack.c.l.b16 %v810
        %v1392 = vunpack.c.h.b16 %v810
        %v1393 = vunpack.c.l.b16 %v811
        %v1394 = vunpack.c.h.b16 %v811
        %v1395 = vunpack.c.l.b16 %v812
        %v1396 = vunpack.c.h.b16 %v812
        %v1397 = vunpack.c.l.b16 %v813
        %v1398 = vunpack.c.h.b16 %v813
        %v1399 = vunpack.c.l.b16 %v814
        %v1400 = vunpack.c.h.b16 %v814
        %v1401 = vpack.c.b16 %v1275, %v1273
        %v1402 = vpack.c.b16 %v1276, %v1274
        %v1403 = vpack.c.b16 %v1279, %v1277
        %v1404 = vpack.c.b16 %v1280, %v1278
        %v1405 = vpack.c.b16 %v1283, %v1281
        %v1406 = vpack.c.b16 %v1284, %v1282
        %v1407 = vpack.c.b16 %v1287, %v1285
        %v1408 = vpack.c.b16 %v1288, %v1286
        %v1409 = vpack.c.b16 %v1291, %v1289
        %v1410 = vpack.c.b16 %v1292, %v1290
        %v1411 = vpack.c.b16 %v1295, %v1293
        %v1412 = vpack.c.b16 %v1296, %v1294
        %v1413 = vpack.c.b16 %v1299, %v1297
        %v1414 = vpack.c.b16 %v1300, %v1298
        %v1415 = vpack.c.b16 %v1303, %v1301
        %v1416 = vpack.c.b16 %v1304, %v1302
        %v1417 = vpack.c.b16 %v1307, %v1305
        %v1418 = vpack.c.b16 %v1308, %v1306
        %v1419 = vpack.c.b16 %v1311, %v1309
        %v1420 = vpack.c.b16 %v1312, %v1310
        %v1421 = vpack.c.b16 %v1315, %v1313
        %v1422 = vpack.c.b16 %v1316, %v1314
        %v1423 = vpack.c.b16 %v1319, %v1317
        %v1424 = vpack.c.b16 %v1320, %v1318
        %v1425 = vpack.c.b16 %v1323, %v1321
        %v1426 = vpack.c.b16 %v1324, %v1322
        %v1427 = vpack.c.b16 %v1327, %v1325
        %v1428 = vpack.c.b16 %v1328, %v1326
        %v1429 = vpack.c.b16 %v1331, %v1329
        %v1430 = vpack.c.b16 %v1332, %v1330
        %v1431 = vpack.c.b16 %v1335, %v1333
        %v1432 = vpack.c.b16 %v1336, %v1334
        %v1433 = vpack.c.b16 %v1339, %v1337
        %v1434 = vpack.c.b16 %v1340, %v1338
        %v1435 = vpack.c.b16 %v1343, %v1341
        %v1436 = vpack.c.b16 %v1344, %v1342
        %v1437 = vpack.c.b16 %v1347, %v1345
        %v1438 = vpack.c.b16 %v1348, %v1346
        %v1439 = vpack.c.b16 %v1351, %v1349
        %v1440 = vpack.c.b16 %v1352, %v1350
        %v1441 = vpack.c.b16 %v1355, %v1353
        %v1442 = vpack.c.b16 %v1356, %v1354
        %v1443 = vpack.c.b16 %v1359, %v1357
        %v1444 = vpack.c.b16 %v1360, %v1358
        %v1445 = vpack.c.b16 %v1363, %v1361
        %v1446 = vpack.c.b16 %v1364, %v1362
        %v1447 = vpack.c.b16 %v1367, %v1365
        %v1448 = vpack.c.b16 %v1368, %v1366
        %v1449 = vpack.c.b16 %v1371, %v1369
        %v1450 = vpack.c.b16 %v1372, %v1370
        %v1451 = vpack.c.b16 %v1375, %v1373
        %v1452 = vpack.c.b16 %v1376, %v1374
        %v1453 = vpack.c.b16 %v1379, %v1377
        %v1454 = vpack.c.b16 %v1380, %v1378
        %v1455 = vpack.c.b16 %v1383, %v1381
        %v1456 = vpack.c.b16 %v1384, %v1382
        %v1457 = vpack.c.b16 %v1387, %v1385
        %v1458 = vpack.c.b16 %v1388, %v1386
        %v1459 = vpack.c.b16 %v1391, %v1389
        %v1460 = vpack.c.b16 %v1392, %v1390
        %v1461 = vpack.c.b16 %v1395, %v1393
        %v1462 = vpack.c.b16 %v1396, %v1394
        %v1463 = vpack.c.b16 %v1399, %v1397
        %v1464 = vpack.c.b16 %v1400, %v1398
        %1529 = vmatprep.subr.bf16.mxu0 %v1402
        %1530 = vmatpush1.bf16.msra.mxu0 %v1401
        %1531 = vmatprep.subr.bf16.mxu0 %v1404
        %1532 = vmatpush1.bf16.msra.mxu0 %v1403
        %1533 = vmatprep.subr.bf16.mxu0 %v1406
        %1534 = vmatpush1.bf16.msra.mxu0 %v1405
        %1535 = vmatprep.subr.bf16.mxu0 %v1408
        %1536 = vmatpush1.bf16.msra.mxu0 %v1407
        %1537 = vmatprep.subr.bf16.mxu0 %v1410
        %1538 = vmatpush1.bf16.msra.mxu0 %v1409
        %1539 = vmatprep.subr.bf16.mxu0 %v1412
        %1540 = vmatpush1.bf16.msra.mxu0 %v1411
        %1541 = vmatprep.subr.bf16.mxu0 %v1414
        %1542 = vmatpush1.bf16.msra.mxu0 %v1413
        %1543 = vmatprep.subr.bf16.mxu0 %v1416
        %1544 = vmatpush1.bf16.msra.mxu0 %v1415
        %1545 = vmatprep.subr.bf16.mxu0 %v1418
        %1546 = vmatpush1.bf16.msra.mxu0 %v1417
        %1547 = vmatprep.subr.bf16.mxu0 %v1420
        %1548 = vmatpush1.bf16.msra.mxu0 %v1419
        %1549 = vmatprep.subr.bf16.mxu0 %v1422
        %1550 = vmatpush1.bf16.msra.mxu0 %v1421
        %1551 = vmatprep.subr.bf16.mxu0 %v1424
        %1552 = vmatpush1.bf16.msra.mxu0 %v1423
        %1553 = vmatprep.subr.bf16.mxu0 %v1426
        %1554 = vmatpush1.bf16.msra.mxu0 %v1425
        %1555 = vmatprep.subr.bf16.mxu0 %v1428
        %1556 = vmatpush1.bf16.msra.mxu0 %v1427
        %1557 = vmatprep.subr.bf16.mxu0 %v1430
        %1558 = vmatpush1.bf16.msra.mxu0 %v1429
        %1559 = vmatprep.subr.bf16.mxu0 %v1432
        %1560 = vmatpush1.bf16.msra.mxu0 %v1431
        %1561 = vmatprep.mubr.bf16.mxu0 %v1050
        %1562 = vmatmul.mubr.bf16.gmra.mrb[0].mxu0 %v1049
        %v1563 = vpop.f32.mrb[0].mxu0
        %v1564 = vadd.f32 0.0, %v1563
        %v1565 = vpop.f32.mrb[0].mxu0
        %v1566 = vadd.f32 0.0, %v1565
        %v1567 = vpop.f32.mrb[0].mxu0
        %v1568 = vadd.f32 0.0, %v1567
        %v1569 = vpop.f32.mrb[0].mxu0
        %v1570 = vadd.f32 0.0, %v1569
        %1571 = vmatprep.mubr.bf16.mxu0 %v1054
        %1572 = vmatmul.mubr.bf16.gmra.mrb[0].mxu0 %v1053
        %v1573 = vpop.f32.mrb[0].mxu0
        %v1574 = vadd.f32 0.0, %v1573
        %v1575 = vpop.f32.mrb[0].mxu0
        %v1576 = vadd.f32 0.0, %v1575
        %v1577 = vpop.f32.mrb[0].mxu0
        %v1578 = vadd.f32 0.0, %v1577
        %v1579 = vpop.f32.mrb[0].mxu0
        %v1580 = vadd.f32 0.0, %v1579
        %1581 = vmatprep.mubr.bf16.mxu0 %v1058
        %1582 = vmatmul.mubr.bf16.gmra.mrb[0].mxu0 %v1057
        %v1583 = vpop.f32.mrb[0].mxu0
        %v1584 = vadd.f32 0.0, %v1583
        %v1585 = vpop.f32.mrb[0].mxu0
        %v1586 = vadd.f32 0.0, %v1585
        %v1587 = vpop.f32.mrb[0].mxu0
        %v1588 = vadd.f32 0.0, %v1587
        %v1589 = vpop.f32.mrb[0].mxu0
        %v1590 = vadd.f32 0.0, %v1589
        %1591 = vmatprep.mubr.bf16.mxu0 %v1062
        %1592 = vmatmul.mubr.bf16.gmra.mrb[0].mxu0 %v1061
        %v1593 = vpop.f32.mrb[0].mxu0
        %v1594 = vadd.f32 0.0, %v1593
        %v1595 = vpop.f32.mrb[0].mxu0
        %v1596 = vadd.f32 0.0, %v1595
        %v1597 = vpop.f32.mrb[0].mxu0
        %v1598 = vadd.f32 0.0, %v1597
        %v1599 = vpop.f32.mrb[0].mxu0
        %v1600 = vadd.f32 0.0, %v1599
        %1601 = vmatprep.mubr.bf16.mxu0 %v1066
        %1602 = vmatmul.mubr.bf16.gmra.mrb[0].mxu0 %v1065
        %v1603 = vpop.f32.mrb[0].mxu0
        %v1604 = vadd.f32 0.0, %v1603
        %v1605 = vpop.f32.mrb[0].mxu0
        %v1606 = vadd.f32 0.0, %v1605
        %v1607 = vpop.f32.mrb[0].mxu0
        %v1608 = vadd.f32 0.0, %v1607
        %v1609 = vpop.f32.mrb[0].mxu0
        %v1610 = vadd.f32 0.0, %v1609
        %1611 = vmatprep.mubr.bf16.mxu0 %v1070
        %1612 = vmatmul.mubr.bf16.gmra.mrb[0].mxu0 %v1069
        %v1613 = vpop.f32.mrb[0].mxu0
        %v1614 = vadd.f32 0.0, %v1613
        %v1615 = vpop.f32.mrb[0].mxu0
        %v1616 = vadd.f32 0.0, %v1615
        %v1617 = vpop.f32.mrb[0].mxu0
        %v1618 = vadd.f32 0.0, %v1617
        %v1619 = vpop.f32.mrb[0].mxu0
        %v1620 = vadd.f32 0.0, %v1619
        %1621 = vmatprep.mubr.bf16.mxu0 %v1074
        %1622 = vmatmul.mubr.bf16.gmra.mrb[0].mxu0 %v1073
        %v1623 = vpop.f32.mrb[0].mxu0
        %v1624 = vadd.f32 0.0, %v1623
        %v1625 = vpop.f32.mrb[0].mxu0
        %v1626 = vadd.f32 0.0, %v1625
        %v1627 = vpop.f32.mrb[0].mxu0
        %v1628 = vadd.f32 0.0, %v1627
        %v1629 = vpop.f32.mrb[0].mxu0
        %v1630 = vadd.f32 0.0, %v1629
        %1631 = vmatprep.mubr.bf16.mxu0 %v1078
        %1632 = vmatmul.mubr.bf16.gmra.mrb[0].mxu0 %v1077
        %v1633 = vpop.f32.mrb[0].mxu0
        %v1634 = vadd.f32 0.0, %v1633
        %v1635 = vpop.f32.mrb[0].mxu0
        %v1636 = vadd.f32 0.0, %v1635
        %v1637 = vpop.f32.mrb[0].mxu0
        %v1638 = vadd.f32 0.0, %v1637
        %v1639 = vpop.f32.mrb[0].mxu0
        %v1640 = vadd.f32 0.0, %v1639
        %1641 = vmatprep.mubr.bf16.mxu0 %v1082
        %1642 = vmatmul.mubr.bf16.gmra.mrb[0].mxu0 %v1081
        %v1643 = vpop.f32.mrb[0].mxu0
        %v1644 = vadd.f32 0.0, %v1643
        %v1645 = vpop.f32.mrb[0].mxu0
        %v1646 = vadd.f32 0.0, %v1645
        %v1647 = vpop.f32.mrb[0].mxu0
        %v1648 = vadd.f32 0.0, %v1647
        %v1649 = vpop.f32.mrb[0].mxu0
        %v1650 = vadd.f32 0.0, %v1649
        %1651 = vmatprep.mubr.bf16.mxu0 %v1086
        %1652 = vmatmul.mubr.bf16.gmra.mrb[0].mxu0 %v1085
        %v1653 = vpop.f32.mrb[0].mxu0
        %v1654 = vadd.f32 0.0, %v1653
        %v1655 = vpop.f32.mrb[0].mxu0
        %v1656 = vadd.f32 0.0, %v1655
        %v1657 = vpop.f32.mrb[0].mxu0
        %v1658 = vadd.f32 0.0, %v1657
        %v1659 = vpop.f32.mrb[0].mxu0
        %v1660 = vadd.f32 0.0, %v1659
        %1661 = vmatprep.mubr.bf16.mxu0 %v1090
        %1662 = vmatmul.mubr.bf16.gmra.mrb[0].mxu0 %v1089
        %v1663 = vpop.f32.mrb[0].mxu0
        %v1664 = vadd.f32 0.0, %v1663
        %v1665 = vpop.f32.mrb[0].mxu0
        %v1666 = vadd.f32 0.0, %v1665
        %v1667 = vpop.f32.mrb[0].mxu0
        %v1668 = vadd.f32 0.0, %v1667
        %v1669 = vpop.f32.mrb[0].mxu0
        %v1670 = vadd.f32 0.0, %v1669
        %1671 = vmatprep.mubr.bf16.mxu0 %v1094
        %1672 = vmatmul.mubr.bf16.gmra.mrb[0].mxu0 %v1093
        %v1673 = vpop.f32.mrb[0].mxu0
        %v1674 = vadd.f32 0.0, %v1673
        %v1675 = vpop.f32.mrb[0].mxu0
        %v1676 = vadd.f32 0.0, %v1675
        %v1677 = vpop.f32.mrb[0].mxu0
        %v1678 = vadd.f32 0.0, %v1677
        %v1679 = vpop.f32.mrb[0].mxu0
        %v1680 = vadd.f32 0.0, %v1679
        %1681 = vmatprep.mubr.bf16.mxu0 %v1098
        %1682 = vmatmul.mubr.bf16.gmra.mrb[0].mxu0 %v1097
        %v1683 = vpop.f32.mrb[0].mxu0
        %v1684 = vadd.f32 0.0, %v1683
        %v1685 = vpop.f32.mrb[0].mxu0
        %v1686 = vadd.f32 0.0, %v1685
        %v1687 = vpop.f32.mrb[0].mxu0
        %v1688 = vadd.f32 0.0, %v1687
        %v1689 = vpop.f32.mrb[0].mxu0
        %v1690 = vadd.f32 0.0, %v1689
        %1691 = vmatprep.mubr.bf16.mxu0 %v1102
        %1692 = vmatmul.mubr.bf16.gmra.mrb[0].mxu0 %v1101
        %v1693 = vpop.f32.mrb[0].mxu0
        %v1694 = vadd.f32 0.0, %v1693
        %v1695 = vpop.f32.mrb[0].mxu0
        %v1696 = vadd.f32 0.0, %v1695
        %v1697 = vpop.f32.mrb[0].mxu0
        %v1698 = vadd.f32 0.0, %v1697
        %v1699 = vpop.f32.mrb[0].mxu0
        %v1700 = vadd.f32 0.0, %v1699
        %1701 = vmatprep.mubr.bf16.mxu0 %v1106
        %1702 = vmatmul.mubr.bf16.gmra.mrb[0].mxu0 %v1105
        %v1703 = vpop.f32.mrb[0].mxu0
        %v1704 = vadd.f32 0.0, %v1703
        %v1705 = vpop.f32.mrb[0].mxu0
        %v1706 = vadd.f32 0.0, %v1705
        %v1707 = vpop.f32.mrb[0].mxu0
        %v1708 = vadd.f32 0.0, %v1707
        %v1709 = vpop.f32.mrb[0].mxu0
        %v1710 = vadd.f32 0.0, %v1709
        %1711 = vmatprep.mubr.bf16.mxu0 %v1110
        %1712 = vmatmul.mubr.bf16.gmra.mrb[0].mxu0 %v1109
        %v1713 = vpop.f32.mrb[0].mxu0
        %v1714 = vadd.f32 0.0, %v1713
        %v1715 = vpop.f32.mrb[0].mxu0
        %v1716 = vadd.f32 0.0, %v1715
        %v1717 = vpop.f32.mrb[0].mxu0
        %v1718 = vadd.f32 0.0, %v1717
        %v1719 = vpop.f32.mrb[0].mxu0
        %v1720 = vadd.f32 0.0, %v1719
        %1721 = vmatprep.mubr.bf16.mxu0 %v1114
        %1722 = vmatmul.mubr.bf16.gmra.mrb[0].mxu0 %v1113
        %v1723 = vpop.f32.mrb[0].mxu0
        %v1724 = vadd.f32 0.0, %v1723
        %v1725 = vpop.f32.mrb[0].mxu0
        %v1726 = vadd.f32 0.0, %v1725
        %v1727 = vpop.f32.mrb[0].mxu0
        %v1728 = vadd.f32 0.0, %v1727
        %v1729 = vpop.f32.mrb[0].mxu0
        %v1730 = vadd.f32 0.0, %v1729
        %1731 = vmatprep.mubr.bf16.mxu0 %v1118
        %1732 = vmatmul.mubr.bf16.gmra.mrb[0].mxu0 %v1117
        %v1733 = vpop.f32.mrb[0].mxu0
        %v1734 = vadd.f32 0.0, %v1733
        %v1735 = vpop.f32.mrb[0].mxu0
        %v1736 = vadd.f32 0.0, %v1735
        %v1737 = vpop.f32.mrb[0].mxu0
        %v1738 = vadd.f32 0.0, %v1737
        %v1739 = vpop.f32.mrb[0].mxu0
        %v1740 = vadd.f32 0.0, %v1739
        %1741 = vmatprep.mubr.bf16.mxu0 %v1122
        %1742 = vmatmul.mubr.bf16.gmra.mrb[0].mxu0 %v1121
        %v1743 = vpop.f32.mrb[0].mxu0
        %v1744 = vadd.f32 0.0, %v1743
        %v1745 = vpop.f32.mrb[0].mxu0
        %v1746 = vadd.f32 0.0, %v1745
        %v1747 = vpop.f32.mrb[0].mxu0
        %v1748 = vadd.f32 0.0, %v1747
        %v1749 = vpop.f32.mrb[0].mxu0
        %v1750 = vadd.f32 0.0, %v1749
        %1751 = vmatprep.mubr.bf16.mxu0 %v1126
        %1752 = vmatmul.mubr.bf16.gmra.mrb[0].mxu0 %v1125
        %v1753 = vpop.f32.mrb[0].mxu0
        %v1754 = vadd.f32 0.0, %v1753
        %v1755 = vpop.f32.mrb[0].mxu0
        %v1756 = vadd.f32 0.0, %v1755
        %v1757 = vpop.f32.mrb[0].mxu0
        %v1758 = vpop.f32.mrb[0].mxu0
        %1759 = vdwg.mxu0
        %1760 = vmatprep.subr.bf16.mxu0 %v1434
        %1761 = vmatpush1.bf16.msra.mxu0 %v1433
        %1762 = vmatprep.subr.bf16.mxu0 %v1436
        %1763 = vmatpush1.bf16.msra.mxu0 %v1435
        %1764 = vmatprep.subr.bf16.mxu0 %v1438
        %1765 = vmatpush1.bf16.msra.mxu0 %v1437
        %1766 = vmatprep.subr.bf16.mxu0 %v1440
        %1767 = vmatpush1.bf16.msra.mxu0 %v1439
        %1768 = vmatprep.subr.bf16.mxu0 %v1442
        %1769 = vmatpush1.bf16.msra.mxu0 %v1441
        %1770 = vmatprep.subr.bf16.mxu0 %v1444
        %1771 = vmatpush1.bf16.msra.mxu0 %v1443
        %1772 = vmatprep.subr.bf16.mxu0 %v1446
        %1773 = vmatpush1.bf16.msra.mxu0 %v1445
        %1774 = vmatprep.subr.bf16.mxu0 %v1448
        %1775 = vmatpush1.bf16.msra.mxu0 %v1447
        %1776 = vmatprep.subr.bf16.mxu0 %v1450
        %1777 = vmatpush1.bf16.msra.mxu0 %v1449
        %1778 = vmatprep.subr.bf16.mxu0 %v1452
        %1779 = vmatpush1.bf16.msra.mxu0 %v1451
        %1780 = vmatprep.subr.bf16.mxu0 %v1454
        %1781 = vmatpush1.bf16.msra.mxu0 %v1453
        %1782 = vmatprep.subr.bf16.mxu0 %v1456
        %1783 = vmatpush1.bf16.msra.mxu0 %v1455
        %1784 = vmatprep.subr.bf16.mxu0 %v1458
        %1785 = vmatpush1.bf16.msra.mxu0 %v1457
        %1786 = vmatprep.subr.bf16.mxu0 %v1460
        %1787 = vmatpush1.bf16.msra.mxu0 %v1459
        %1788 = vmatprep.subr.bf16.mxu0 %v1462
        %1789 = vmatpush1.bf16.msra.mxu0 %v1461
        %1790 = vmatprep.subr.bf16.mxu0 %v1464
        %1791 = vmatpush1.bf16.msra.mxu0 %v1463
        %1792 = vmatprep.mubr.bf16.mxu0 %v1052
        %1793 = vmatmul.mubr.bf16.gmra.mrb[0].mxu0 %v1051
        %v1794 = vpop.f32.mrb[0].mxu0
        %v1795 = vadd.f32 %v1564, %v1794
        %v1796 = vpop.f32.mrb[0].mxu0
        %v1797 = vadd.f32 %v1566, %v1796
        %v1798 = vpop.f32.mrb[0].mxu0
        %v1799 = vadd.f32 %v1568, %v1798
        %v1800 = vpop.f32.mrb[0].mxu0
        %v1801 = vadd.f32 %v1570, %v1800
        %1802 = vmatprep.mubr.bf16.mxu0 %v1056
        %1803 = vmatmul.mubr.bf16.gmra.mrb[0].mxu0 %v1055
        %v1804 = vpop.f32.mrb[0].mxu0
        %v1805 = vadd.f32 %v1574, %v1804
        %v1806 = vpop.f32.mrb[0].mxu0
        %v1807 = vadd.f32 %v1576, %v1806
        %v1808 = vpop.f32.mrb[0].mxu0
        %v1809 = vadd.f32 %v1578, %v1808
        %v1810 = vpop.f32.mrb[0].mxu0
        %v1811 = vadd.f32 %v1580, %v1810
        %1812 = vmatprep.mubr.bf16.mxu0 %v1060
        %1813 = vmatmul.mubr.bf16.gmra.mrb[0].mxu0 %v1059
        %v1814 = vpop.f32.mrb[0].mxu0
        %v1815 = vadd.f32 %v1584, %v1814
        %v1816 = vpop.f32.mrb[0].mxu0
        %v1817 = vadd.f32 %v1586, %v1816
        %v1818 = vpop.f32.mrb[0].mxu0
        %v1819 = vadd.f32 %v1588, %v1818
        %v1820 = vpop.f32.mrb[0].mxu0
        %v1821 = vadd.f32 %v1590, %v1820
        %1822 = vmatprep.mubr.bf16.mxu0 %v1064
        %1823 = vmatmul.mubr.bf16.gmra.mrb[0].mxu0 %v1063
        %v1824 = vpop.f32.mrb[0].mxu0
        %v1825 = vadd.f32 %v1594, %v1824
        %v1826 = vpop.f32.mrb[0].mxu0
        %v1827 = vadd.f32 %v1596, %v1826
        %v1828 = vpop.f32.mrb[0].mxu0
        %v1829 = vadd.f32 %v1598, %v1828
        %v1830 = vpop.f32.mrb[0].mxu0
        %v1831 = vadd.f32 %v1600, %v1830
        %1832 = vmatprep.mubr.bf16.mxu0 %v1068
        %1833 = vmatmul.mubr.bf16.gmra.mrb[0].mxu0 %v1067
        %v1834 = vpop.f32.mrb[0].mxu0
        %v1835 = vadd.f32 %v1604, %v1834
        %v1836 = vpop.f32.mrb[0].mxu0
        %v1837 = vadd.f32 %v1606, %v1836
        %v1838 = vpop.f32.mrb[0].mxu0
        %v1839 = vadd.f32 %v1608, %v1838
        %v1840 = vpop.f32.mrb[0].mxu0
        %v1841 = vadd.f32 %v1610, %v1840
        %1842 = vmatprep.mubr.bf16.mxu0 %v1072
        %1843 = vmatmul.mubr.bf16.gmra.mrb[0].mxu0 %v1071
        %v1844 = vpop.f32.mrb[0].mxu0
        %v1845 = vadd.f32 %v1614, %v1844
        %v1846 = vpop.f32.mrb[0].mxu0
        %v1847 = vadd.f32 %v1616, %v1846
        %v1848 = vpop.f32.mrb[0].mxu0
        %v1849 = vadd.f32 %v1618, %v1848
        %v1850 = vpop.f32.mrb[0].mxu0
        %v1851 = vadd.f32 %v1620, %v1850
        %1852 = vmatprep.mubr.bf16.mxu0 %v1076
        %1853 = vmatmul.mubr.bf16.gmra.mrb[0].mxu0 %v1075
        %v1854 = vpop.f32.mrb[0].mxu0
        %v1855 = vadd.f32 %v1624, %v1854
        %v1856 = vpop.f32.mrb[0].mxu0
        %v1857 = vadd.f32 %v1626, %v1856
        %v1858 = vpop.f32.mrb[0].mxu0
        %v1859 = vadd.f32 %v1628, %v1858
        %v1860 = vpop.f32.mrb[0].mxu0
        %v1861 = vadd.f32 %v1630, %v1860
        %1862 = vmatprep.mubr.bf16.mxu0 %v1080
        %1863 = vmatmul.mubr.bf16.gmra.mrb[0].mxu0 %v1079
        %v1864 = vpop.f32.mrb[0].mxu0
        %v1865 = vadd.f32 %v1634, %v1864
        %v1866 = vpop.f32.mrb[0].mxu0
        %v1867 = vadd.f32 %v1636, %v1866
        %v1868 = vpop.f32.mrb[0].mxu0
        %v1869 = vadd.f32 %v1638, %v1868
        %v1870 = vpop.f32.mrb[0].mxu0
        %v1871 = vadd.f32 %v1640, %v1870
        %1872 = vmatprep.mubr.bf16.mxu0 %v1084
        %1873 = vmatmul.mubr.bf16.gmra.mrb[0].mxu0 %v1083
        %v1874 = vpop.f32.mrb[0].mxu0
        %v1875 = vadd.f32 %v1644, %v1874
        %v1876 = vpop.f32.mrb[0].mxu0
        %v1877 = vadd.f32 %v1646, %v1876
        %v1878 = vpop.f32.mrb[0].mxu0
        %v1879 = vadd.f32 %v1648, %v1878
        %v1880 = vpop.f32.mrb[0].mxu0
        %v1881 = vadd.f32 %v1650, %v1880
        %1882 = vmatprep.mubr.bf16.mxu0 %v1088
        %1883 = vmatmul.mubr.bf16.gmra.mrb[0].mxu0 %v1087
        %v1884 = vpop.f32.mrb[0].mxu0
        %v1885 = vadd.f32 %v1654, %v1884
        %v1886 = vpop.f32.mrb[0].mxu0
        %v1887 = vadd.f32 %v1656, %v1886
        %v1888 = vpop.f32.mrb[0].mxu0
        %v1889 = vadd.f32 %v1658, %v1888
        %v1890 = vpop.f32.mrb[0].mxu0
        %v1891 = vadd.f32 %v1660, %v1890
        %1892 = vmatprep.mubr.bf16.mxu0 %v1092
        %1893 = vmatmul.mubr.bf16.gmra.mrb[0].mxu0 %v1091
        %v1894 = vpop.f32.mrb[0].mxu0
        %v1895 = vadd.f32 %v1664, %v1894
        %v1896 = vpop.f32.mrb[0].mxu0
        %v1897 = vadd.f32 %v1666, %v1896
        %v1898 = vpop.f32.mrb[0].mxu0
        %v1899 = vadd.f32 %v1668, %v1898
        %v1900 = vpop.f32.mrb[0].mxu0
        %v1901 = vadd.f32 %v1670, %v1900
        %1902 = vmatprep.mubr.bf16.mxu0 %v1096
        %1903 = vmatmul.mubr.bf16.gmra.mrb[0].mxu0 %v1095
        %v1904 = vpop.f32.mrb[0].mxu0
        %v1905 = vadd.f32 %v1674, %v1904
        %v1906 = vpop.f32.mrb[0].mxu0
        %v1907 = vadd.f32 %v1676, %v1906
        %v1908 = vpop.f32.mrb[0].mxu0
        %v1909 = vadd.f32 %v1678, %v1908
        %v1910 = vpop.f32.mrb[0].mxu0
        %v1911 = vadd.f32 %v1680, %v1910
        %1912 = vmatprep.mubr.bf16.mxu0 %v1100
        %1913 = vmatmul.mubr.bf16.gmra.mrb[0].mxu0 %v1099
        %v1914 = vpop.f32.mrb[0].mxu0
        %v1915 = vadd.f32 %v1684, %v1914
        %v1916 = vpop.f32.mrb[0].mxu0
        %v1917 = vadd.f32 %v1686, %v1916
        %v1918 = vpop.f32.mrb[0].mxu0
        %v1919 = vadd.f32 %v1688, %v1918
        %v1920 = vpop.f32.mrb[0].mxu0
        %v1921 = vadd.f32 %v1690, %v1920
        %1922 = vmatprep.mubr.bf16.mxu0 %v1104
        %1923 = vmatmul.mubr.bf16.gmra.mrb[0].mxu0 %v1103
        %v1924 = vpop.f32.mrb[0].mxu0
        %v1925 = vadd.f32 %v1694, %v1924
        %v1926 = vpop.f32.mrb[0].mxu0
        %v1927 = vadd.f32 %v1696, %v1926
        %v1928 = vpop.f32.mrb[0].mxu0
        %v1929 = vadd.f32 %v1698, %v1928
        %v1930 = vpop.f32.mrb[0].mxu0
        %v1931 = vadd.f32 %v1700, %v1930
        %1932 = vmatprep.mubr.bf16.mxu0 %v1108
        %1933 = vmatmul.mubr.bf16.gmra.mrb[0].mxu0 %v1107
        %v1934 = vpop.f32.mrb[0].mxu0
        %v1935 = vadd.f32 %v1704, %v1934
        %v1936 = vpop.f32.mrb[0].mxu0
        %v1937 = vadd.f32 %v1706, %v1936
        %v1938 = vpop.f32.mrb[0].mxu0
        %v1939 = vadd.f32 %v1708, %v1938
        %v1940 = vpop.f32.mrb[0].mxu0
        %v1941 = vadd.f32 %v1710, %v1940
        %1942 = vmatprep.mubr.bf16.mxu0 %v1112
        %1943 = vmatmul.mubr.bf16.gmra.mrb[0].mxu0 %v1111
        %v1944 = vpop.f32.mrb[0].mxu0
        %v1945 = vadd.f32 %v1714, %v1944
        %v1946 = vpop.f32.mrb[0].mxu0
        %v1947 = vadd.f32 %v1716, %v1946
        %v1948 = vpop.f32.mrb[0].mxu0
        %v1949 = vadd.f32 %v1718, %v1948
        %v1950 = vpop.f32.mrb[0].mxu0
        %v1951 = vadd.f32 %v1720, %v1950
        %1952 = vmatprep.mubr.bf16.mxu0 %v1116
        %1953 = vmatmul.mubr.bf16.gmra.mrb[0].mxu0 %v1115
        %v1954 = vpop.f32.mrb[0].mxu0
        %v1955 = vadd.f32 %v1724, %v1954
        %v1956 = vpop.f32.mrb[0].mxu0
        %v1957 = vadd.f32 %v1726, %v1956
        %v1958 = vpop.f32.mrb[0].mxu0
        %v1959 = vadd.f32 %v1728, %v1958
        %v1960 = vpop.f32.mrb[0].mxu0
        %v1961 = vadd.f32 %v1730, %v1960
        %1962 = vmatprep.mubr.bf16.mxu0 %v1120
        %1963 = vmatmul.mubr.bf16.gmra.mrb[0].mxu0 %v1119
        %v1964 = vpop.f32.mrb[0].mxu0
        %v1965 = vadd.f32 %v1734, %v1964
        %v1966 = vpop.f32.mrb[0].mxu0
        %v1967 = vadd.f32 %v1736, %v1966
        %v1968 = vpop.f32.mrb[0].mxu0
        %v1969 = vadd.f32 %v1738, %v1968
        %v1970 = vpop.f32.mrb[0].mxu0
        %v1971 = vadd.f32 %v1740, %v1970
        %1972 = vmatprep.mubr.bf16.mxu0 %v1124
        %1973 = vmatmul.mubr.bf16.gmra.mrb[0].mxu0 %v1123
        %v1974 = vpop.f32.mrb[0].mxu0
        %v1975 = vadd.f32 %v1744, %v1974
        %v1976 = vpop.f32.mrb[0].mxu0
        %v1977 = vadd.f32 %v1746, %v1976
        %v1978 = vpop.f32.mrb[0].mxu0
        %v1979 = vadd.f32 %v1748, %v1978
        %v1980 = vpop.f32.mrb[0].mxu0
        %v1981 = vadd.f32 %v1750, %v1980
        %1982 = vmatprep.mubr.bf16.mxu0 %v1128
        %1983 = vmatmul.mubr.bf16.gmra.mrb[0].mxu0 %v1127
        %v1984 = vpop.f32.mrb[0].mxu0
        %v1985 = vadd.f32 %v1754, %v1984
        %v1986 = vpop.f32.mrb[0].mxu0
        %v1987 = vadd.f32 %v1756, %v1986
        %v1988 = vpop.f32.mrb[0].mxu0
        %v1989 = vpop.f32.mrb[0].mxu0
        %1990 = vdwg.mxu0
        %v1991 = vadd.f32 %v595, %v1795
        %v1992 = vadd.f32 %v596, %v1797
        %v1993 = vadd.f32 %v597, %v1799
        %v1994 = vadd.f32 %v598, %v1801
        %v1995 = vadd.f32 %v599, %v1805
        %v1996 = vadd.f32 %v600, %v1807
        %v1997 = vadd.f32 %v601, %v1809
        %v1998 = vadd.f32 %v602, %v1811
        %v1999 = vadd.f32 %v603, %v1815
        %v2000 = vadd.f32 %v604, %v1817
        %v2001 = vadd.f32 %v605, %v1819
        %v2002 = vadd.f32 %v606, %v1821
        %v2003 = vadd.f32 %v607, %v1825
        %v2004 = vadd.f32 %v608, %v1827
        %v2005 = vadd.f32 %v609, %v1829
        %v2006 = vadd.f32 %v610, %v1831
        %v2007 = vadd.f32 %v611, %v1835
        %v2008 = vadd.f32 %v612, %v1837
        %v2009 = vadd.f32 %v613, %v1839
        %v2010 = vadd.f32 %v614, %v1841
        %v2011 = vadd.f32 %v615, %v1845
        %v2012 = vadd.f32 %v616, %v1847
        %v2013 = vadd.f32 %v617, %v1849
        %v2014 = vadd.f32 %v618, %v1851
        %v2015 = vadd.f32 %v619, %v1855
        %v2016 = vadd.f32 %v620, %v1857
        %v2017 = vadd.f32 %v621, %v1859
        %v2018 = vadd.f32 %v622, %v1861
        %v2019 = vadd.f32 %v623, %v1865
        %v2020 = vadd.f32 %v624, %v1867
        %v2021 = vadd.f32 %v625, %v1869
        %v2022 = vadd.f32 %v626, %v1871
        %v2023 = vadd.f32 %v627, %v1875
        %v2024 = vadd.f32 %v628, %v1877
        %v2025 = vadd.f32 %v629, %v1879
        %v2026 = vadd.f32 %v630, %v1881
        %v2027 = vadd.f32 %v631, %v1885
        %v2028 = vadd.f32 %v632, %v1887
        %v2029 = vadd.f32 %v633, %v1889
        %v2030 = vadd.f32 %v634, %v1891
        %v2031 = vadd.f32 %v635, %v1895
        %v2032 = vadd.f32 %v636, %v1897
        %v2033 = vadd.f32 %v637, %v1899
        %v2034 = vadd.f32 %v638, %v1901
        %v2035 = vadd.f32 %v639, %v1905
        %v2036 = vadd.f32 %v640, %v1907
        %v2037 = vadd.f32 %v641, %v1909
        %v2038 = vadd.f32 %v642, %v1911
        %v2039 = vadd.f32 %v643, %v1915
        %v2040 = vadd.f32 %v644, %v1917
        %v2041 = vadd.f32 %v645, %v1919
        %v2042 = vadd.f32 %v646, %v1921
        %v2043 = vadd.f32 %v647, %v1925
        %v2044 = vadd.f32 %v648, %v1927
        %v2045 = vadd.f32 %v649, %v1929
        %v2046 = vadd.f32 %v650, %v1931
        %v2047 = vadd.f32 %v651, %v1935
        %v2048 = vadd.f32 %v652, %v1937
        %v2049 = vadd.f32 %v653, %v1939
        %v2050 = vadd.f32 %v654, %v1941
        %v2051 = vadd.f32 %v655, %v1945
        %v2052 = vadd.f32 %v656, %v1947
        %v2053 = vadd.f32 %v657, %v1949
        %v2054 = vadd.f32 %v658, %v1951
        %v2055 = vadd.f32 %v659, %v1955
        %v2056 = vadd.f32 %v660, %v1957
        %v2057 = vadd.f32 %v661, %v1959
        %v2058 = vadd.f32 %v662, %v1961
        %v2059 = vadd.f32 %v663, %v1965
        %v2060 = vadd.f32 %v664, %v1967
        %v2061 = vadd.f32 %v665, %v1969
        %v2062 = vadd.f32 %v666, %v1971
        %v2063 = vadd.f32 %v667, %v1975
        %v2064 = vadd.f32 %v668, %v1977
        %v2065 = vadd.f32 %v669, %v1979
        %v2066 = vadd.f32 %v670, %v1981
        %v2067 = vadd.f32 %v671, %v1985
        %v2068 = vadd.f32 %v672, %v1987
        %2069 = vst [vmem:[#allocation2] sm:$0xff] %v1991
        %2070 = vst [vmem:[#allocation2 + $0x8] sm:$0xff] %v1992
        %2071 = vst [vmem:[#allocation2 + $0x10] sm:$0xff] %v1993
        %2072 = vst [vmem:[#allocation2 + $0x18] sm:$0xff] %v1994
        %2073 = vst [vmem:[#allocation2 + $0x20] sm:$0xff] %v1995
        %2074 = vst [vmem:[#allocation2 + $0x28] sm:$0xff] %v1996
        %2075 = vst [vmem:[#allocation2 + $0x30] sm:$0xff] %v1997
        %2076 = vst [vmem:[#allocation2 + $0x38] sm:$0xff] %v1998
        %2077 = vst [vmem:[#allocation2 + $0x40] sm:$0xff] %v1999
        %2078 = vst [vmem:[#allocation2 + $0x48] sm:$0xff] %v2000
        %2079 = vst [vmem:[#allocation2 + $0x50] sm:$0xff] %v2001
        %2080 = vst [vmem:[#allocation2 + $0x58] sm:$0xff] %v2002
        %2081 = vst [vmem:[#allocation2 + $0x60] sm:$0xff] %v2003
        %2082 = vst [vmem:[#allocation2 + $0x68] sm:$0xff] %v2004
        %2083 = vst [vmem:[#allocation2 + $0x70] sm:$0xff] %v2005
        %2084 = vst [vmem:[#allocation2 + $0x78] sm:$0xff] %v2006
        %2085 = vst [vmem:[#allocation2 + $0x80] sm:$0xff] %v2007
        %2086 = vst [vmem:[#allocation2 + $0x88] sm:$0xff] %v2008
        %2087 = vst [vmem:[#allocation2 + $0x90] sm:$0xff] %v2009
        %2088 = vst [vmem:[#allocation2 + $0x98] sm:$0xff] %v2010
        %2089 = vst [vmem:[#allocation2 + $0xa0] sm:$0xff] %v2011
        %2090 = vst [vmem:[#allocation2 + $0xa8] sm:$0xff] %v2012
        %2091 = vst [vmem:[#allocation2 + $0xb0] sm:$0xff] %v2013
        %2092 = vst [vmem:[#allocation2 + $0xb8] sm:$0xff] %v2014
        %2093 = vst [vmem:[#allocation2 + $0xc0] sm:$0xff] %v2015
        %2094 = vst [vmem:[#allocation2 + $0xc8] sm:$0xff] %v2016
        %2095 = vst [vmem:[#allocation2 + $0xd0] sm:$0xff] %v2017
        %2096 = vst [vmem:[#allocation2 + $0xd8] sm:$0xff] %v2018
        %2097 = vst [vmem:[#allocation2 + $0xe0] sm:$0xff] %v2019
        %2098 = vst [vmem:[#allocation2 + $0xe8] sm:$0xff] %v2020
        %2099 = vst [vmem:[#allocation2 + $0xf0] sm:$0xff] %v2021
        %2100 = vst [vmem:[#allocation2 + $0xf8] sm:$0xff] %v2022
        %2101 = vst [vmem:[#allocation2 + $0x100] sm:$0xff] %v2023
        %2102 = vst [vmem:[#allocation2 + $0x108] sm:$0xff] %v2024
        %2103 = vst [vmem:[#allocation2 + $0x110] sm:$0xff] %v2025
        %2104 = vst [vmem:[#allocation2 + $0x118] sm:$0xff] %v2026
        %2105 = vst [vmem:[#allocation2 + $0x120] sm:$0xff] %v2027
        %2106 = vst [vmem:[#allocation2 + $0x128] sm:$0xff] %v2028
        %2107 = vst [vmem:[#allocation2 + $0x130] sm:$0xff] %v2029
        %2108 = vst [vmem:[#allocation2 + $0x138] sm:$0xff] %v2030
        %2109 = vst [vmem:[#allocation2 + $0x140] sm:$0xff] %v2031
        %2110 = vst [vmem:[#allocation2 + $0x148] sm:$0xff] %v2032
        %2111 = vst [vmem:[#allocation2 + $0x150] sm:$0xff] %v2033
        %2112 = vst [vmem:[#allocation2 + $0x158] sm:$0xff] %v2034
        %2113 = vst [vmem:[#allocation2 + $0x160] sm:$0xff] %v2035
        %2114 = vst [vmem:[#allocation2 + $0x168] sm:$0xff] %v2036
        %2115 = vst [vmem:[#allocation2 + $0x170] sm:$0xff] %v2037
        %2116 = vst [vmem:[#allocation2 + $0x178] sm:$0xff] %v2038
        %2117 = vst [vmem:[#allocation2 + $0x180] sm:$0xff] %v2039
        %2118 = vst [vmem:[#allocation2 + $0x188] sm:$0xff] %v2040
        %2119 = vst [vmem:[#allocation2 + $0x190] sm:$0xff] %v2041
        %2120 = vst [vmem:[#allocation2 + $0x198] sm:$0xff] %v2042
        %2121 = vst [vmem:[#allocation2 + $0x1a0] sm:$0xff] %v2043
        %2122 = vst [vmem:[#allocation2 + $0x1a8] sm:$0xff] %v2044
        %2123 = vst [vmem:[#allocation2 + $0x1b0] sm:$0xff] %v2045
        %2124 = vst [vmem:[#allocation2 + $0x1b8] sm:$0xff] %v2046
        %2125 = vst [vmem:[#allocation2 + $0x1c0] sm:$0xff] %v2047
        %2126 = vst [vmem:[#allocation2 + $0x1c8] sm:$0xff] %v2048
        %2127 = vst [vmem:[#allocation2 + $0x1d0] sm:$0xff] %v2049
        %2128 = vst [vmem:[#allocation2 + $0x1d8] sm:$0xff] %v2050
        %2129 = vst [vmem:[#allocation2 + $0x1e0] sm:$0xff] %v2051
        %2130 = vst [vmem:[#allocation2 + $0x1e8] sm:$0xff] %v2052
        %2131 = vst [vmem:[#allocation2 + $0x1f0] sm:$0xff] %v2053
        %2132 = vst [vmem:[#allocation2 + $0x1f8] sm:$0xff] %v2054
        %2133 = vst [vmem:[#allocation2 + $0x200] sm:$0xff] %v2055
        %2134 = vst [vmem:[#allocation2 + $0x208] sm:$0xff] %v2056
        %2135 = vst [vmem:[#allocation2 + $0x210] sm:$0xff] %v2057
        %2136 = vst [vmem:[#allocation2 + $0x218] sm:$0xff] %v2058
        %2137 = vst [vmem:[#allocation2 + $0x220] sm:$0xff] %v2059
        %2138 = vst [vmem:[#allocation2 + $0x228] sm:$0xff] %v2060
        %2139 = vst [vmem:[#allocation2 + $0x230] sm:$0xff] %v2061
        %2140 = vst [vmem:[#allocation2 + $0x238] sm:$0xff] %v2062
        %2141 = vst [vmem:[#allocation2 + $0x240] sm:$0xff] %v2063
        %2142 = vst [vmem:[#allocation2 + $0x248] sm:$0xff] %v2064
        %2143 = vst [vmem:[#allocation2 + $0x250] sm:$0xff] %v2065
        %2144 = vst [vmem:[#allocation2 + $0x258] sm:$0xff] %v2066
        %2145 = vst [vmem:[#allocation2 + $0x260] sm:$0x3] %v2067
        %2146 = vst [vmem:[#allocation2 + $0x268] sm:$0x3] %v2068
        %p2147 = scmp.eq.s32.totalorder %s22, 1
        // Predicated region
        $region64: #{model_forward.11} parent=54 // pred_check
          %p2148 = pneg %p2147
        $region65: #{model_forward.11} parent=54 // pred_check_branch
          %2150 = sbr.rel (%p2148) target = $region67
        $region66: #{model_forward.11} parent=54 // pred_region
          %v2151 = vld [vmem:[#allocation2] sm:$0xff]
          %v2152 = vld [vmem:[#allocation2 + $0x8] sm:$0xff]
          %v2153 = vld [vmem:[#allocation2 + $0x10] sm:$0xff]
          %v2154 = vld [vmem:[#allocation2 + $0x18] sm:$0xff]
          %v2155 = vld [vmem:[#allocation2 + $0x20] sm:$0xff]
          %v2156 = vld [vmem:[#allocation2 + $0x28] sm:$0xff]
          %v2157 = vld [vmem:[#allocation2 + $0x30] sm:$0xff]
          %v2158 = vld [vmem:[#allocation2 + $0x38] sm:$0xff]
          %v2159 = vld [vmem:[#allocation2 + $0x40] sm:$0xff]
          %v2160 = vld [vmem:[#allocation2 + $0x48] sm:$0xff]
          %v2161 = vld [vmem:[#allocation2 + $0x50] sm:$0xff]
          %v2162 = vld [vmem:[#allocation2 + $0x58] sm:$0xff]
          %v2163 = vld [vmem:[#allocation2 + $0x60] sm:$0xff]
          %v2164 = vld [vmem:[#allocation2 + $0x68] sm:$0xff]
          %v2165 = vld [vmem:[#allocation2 + $0x70] sm:$0xff]
          %v2166 = vld [vmem:[#allocation2 + $0x78] sm:$0xff]
          %v2167 = vld [vmem:[#allocation2 + $0x80] sm:$0xff]
          %v2168 = vld [vmem:[#allocation2 + $0x88] sm:$0xff]
          %v2169 = vld [vmem:[#allocation2 + $0x90] sm:$0xff]
          %v2170 = vld [vmem:[#allocation2 + $0x98] sm:$0xff]
          %v2171 = vld [vmem:[#allocation2 + $0xa0] sm:$0xff]
          %v2172 = vld [vmem:[#allocation2 + $0xa8] sm:$0xff]
          %v2173 = vld [vmem:[#allocation2 + $0xb0] sm:$0xff]
          %v2174 = vld [vmem:[#allocation2 + $0xb8] sm:$0xff]
          %v2175 = vld [vmem:[#allocation2 + $0xc0] sm:$0xff]
          %v2176 = vld [vmem:[#allocation2 + $0xc8] sm:$0xff]
          %v2177 = vld [vmem:[#allocation2 + $0xd0] sm:$0xff]
          %v2178 = vld [vmem:[#allocation2 + $0xd8] sm:$0xff]
          %v2179 = vld [vmem:[#allocation2 + $0xe0] sm:$0xff]
          %v2180 = vld [vmem:[#allocation2 + $0xe8] sm:$0xff]
          %v2181 = vld [vmem:[#allocation2 + $0xf0] sm:$0xff]
          %v2182 = vld [vmem:[#allocation2 + $0xf8] sm:$0xff]
          %v2183 = vld [vmem:[#allocation2 + $0x100] sm:$0xff]
          %v2184 = vld [vmem:[#allocation2 + $0x108] sm:$0xff]
          %v2185 = vld [vmem:[#allocation2 + $0x110] sm:$0xff]
          %v2186 = vld [vmem:[#allocation2 + $0x118] sm:$0xff]
          %v2187 = vld [vmem:[#allocation2 + $0x120] sm:$0xff]
          %v2188 = vld [vmem:[#allocation2 + $0x128] sm:$0xff]
          %v2189 = vld [vmem:[#allocation2 + $0x130] sm:$0xff]
          %v2190 = vld [vmem:[#allocation2 + $0x138] sm:$0xff]
          %v2191 = vld [vmem:[#allocation2 + $0x140] sm:$0xff]
          %v2192 = vld [vmem:[#allocation2 + $0x148] sm:$0xff]
          %v2193 = vld [vmem:[#allocation2 + $0x150] sm:$0xff]
          %v2194 = vld [vmem:[#allocation2 + $0x158] sm:$0xff]
          %v2195 = vld [vmem:[#allocation2 + $0x160] sm:$0xff]
          %v2196 = vld [vmem:[#allocation2 + $0x168] sm:$0xff]
          %v2197 = vld [vmem:[#allocation2 + $0x170] sm:$0xff]
          %v2198 = vld [vmem:[#allocation2 + $0x178] sm:$0xff]
          %v2199 = vld [vmem:[#allocation2 + $0x180] sm:$0xff]
          %v2200 = vld [vmem:[#allocation2 + $0x188] sm:$0xff]
          %v2201 = vld [vmem:[#allocation2 + $0x190] sm:$0xff]
          %v2202 = vld [vmem:[#allocation2 + $0x198] sm:$0xff]
          %v2203 = vld [vmem:[#allocation2 + $0x1a0] sm:$0xff]
          %v2204 = vld [vmem:[#allocation2 + $0x1a8] sm:$0xff]
          %v2205 = vld [vmem:[#allocation2 + $0x1b0] sm:$0xff]
          %v2206 = vld [vmem:[#allocation2 + $0x1b8] sm:$0xff]
          %v2207 = vld [vmem:[#allocation2 + $0x1c0] sm:$0xff]
          %v2208 = vld [vmem:[#allocation2 + $0x1c8] sm:$0xff]
          %v2209 = vld [vmem:[#allocation2 + $0x1d0] sm:$0xff]
          %v2210 = vld [vmem:[#allocation2 + $0x1d8] sm:$0xff]
          %v2211 = vld [vmem:[#allocation2 + $0x1e0] sm:$0xff]
          %v2212 = vld [vmem:[#allocation2 + $0x1e8] sm:$0xff]
          %v2213 = vld [vmem:[#allocation2 + $0x1f0] sm:$0xff]
          %v2214 = vld [vmem:[#allocation2 + $0x1f8] sm:$0xff]
          %v2215 = vld [vmem:[#allocation2 + $0x200] sm:$0xff]
          %v2216 = vld [vmem:[#allocation2 + $0x208] sm:$0xff]
          %v2217 = vld [vmem:[#allocation2 + $0x210] sm:$0xff]
          %v2218 = vld [vmem:[#allocation2 + $0x218] sm:$0xff]
          %v2219 = vld [vmem:[#allocation2 + $0x220] sm:$0xff]
          %v2220 = vld [vmem:[#allocation2 + $0x228] sm:$0xff]
          %v2221 = vld [vmem:[#allocation2 + $0x230] sm:$0xff]
          %v2222 = vld [vmem:[#allocation2 + $0x238] sm:$0xff]
          %v2223 = vld [vmem:[#allocation2 + $0x240] sm:$0xff]
          %v2224 = vld [vmem:[#allocation2 + $0x248] sm:$0xff]
          %v2225 = vld [vmem:[#allocation2 + $0x250] sm:$0xff]
          %v2226 = vld [vmem:[#allocation2 + $0x258] sm:$0xff]
          %v2227 = vld [vmem:[#allocation2 + $0x260] sm:$0x3]
          %v2228 = vld [vmem:[#allocation2 + $0x268] sm:$0x3]
          %v2229 = vld [vmem:[%s487] sm:$0x3]
          %v2231 = vlaneseq
          %v2232 = vshrl.u32 %v2231, 7
          %v2233 = vsub.s32 0, %v2232
          %v2234 = vrot.slane %v2229, %v2233
          %v2235 = vlaneseq
          %v2236 = vshrl.u32 %v2235, 7
          %v2237 = vsub.s32 1, %v2236
          %v2238 = vrot.slane %v2229, %v2237
          %v2241 = vadd.f32 %v2151, %v2234
          %v2242 = vadd.f32 %v2152, %v2238
          %v2243 = vadd.f32 %v2153, %v2234
          %v2244 = vadd.f32 %v2154, %v2238
          %v2245 = vadd.f32 %v2155, %v2234
          %v2246 = vadd.f32 %v2156, %v2238
          %v2247 = vadd.f32 %v2157, %v2234
          %v2248 = vadd.f32 %v2158, %v2238
          %v2249 = vadd.f32 %v2159, %v2234
          %v2250 = vadd.f32 %v2160, %v2238
          %v2251 = vadd.f32 %v2161, %v2234
          %v2252 = vadd.f32 %v2162, %v2238
          %v2253 = vadd.f32 %v2163, %v2234
          %v2254 = vadd.f32 %v2164, %v2238
          %v2255 = vadd.f32 %v2165, %v2234
          %v2256 = vadd.f32 %v2166, %v2238
          %v2257 = vadd.f32 %v2167, %v2234
          %v2258 = vadd.f32 %v2168, %v2238
          %v2259 = vadd.f32 %v2169, %v2234
          %v2260 = vadd.f32 %v2170, %v2238
          %v2261 = vadd.f32 %v2171, %v2234
          %v2262 = vadd.f32 %v2172, %v2238
          %v2263 = vadd.f32 %v2173, %v2234
          %v2264 = vadd.f32 %v2174, %v2238
          %v2265 = vadd.f32 %v2175, %v2234
          %v2266 = vadd.f32 %v2176, %v2238
          %v2267 = vadd.f32 %v2177, %v2234
          %v2268 = vadd.f32 %v2178, %v2238
          %v2269 = vadd.f32 %v2179, %v2234
          %v2270 = vadd.f32 %v2180, %v2238
          %v2271 = vadd.f32 %v2181, %v2234
          %v2272 = vadd.f32 %v2182, %v2238
          %v2273 = vadd.f32 %v2183, %v2234
          %v2274 = vadd.f32 %v2184, %v2238
          %v2275 = vadd.f32 %v2185, %v2234
          %v2276 = vadd.f32 %v2186, %v2238
          %v2277 = vadd.f32 %v2187, %v2234
          %v2278 = vadd.f32 %v2188, %v2238
          %v2279 = vadd.f32 %v2189, %v2234
          %v2280 = vadd.f32 %v2190, %v2238
          %v2281 = vadd.f32 %v2191, %v2234
          %v2282 = vadd.f32 %v2192, %v2238
          %v2283 = vadd.f32 %v2193, %v2234
          %v2284 = vadd.f32 %v2194, %v2238
          %v2285 = vadd.f32 %v2195, %v2234
          %v2286 = vadd.f32 %v2196, %v2238
          %v2287 = vadd.f32 %v2197, %v2234
          %v2288 = vadd.f32 %v2198, %v2238
          %v2289 = vadd.f32 %v2199, %v2234
          %v2290 = vadd.f32 %v2200, %v2238
          %v2291 = vadd.f32 %v2201, %v2234
          %v2292 = vadd.f32 %v2202, %v2238
          %v2293 = vadd.f32 %v2203, %v2234
          %v2294 = vadd.f32 %v2204, %v2238
          %v2295 = vadd.f32 %v2205, %v2234
          %v2296 = vadd.f32 %v2206, %v2238
          %v2297 = vadd.f32 %v2207, %v2234
          %v2298 = vadd.f32 %v2208, %v2238
          %v2299 = vadd.f32 %v2209, %v2234
          %v2300 = vadd.f32 %v2210, %v2238
          %v2301 = vadd.f32 %v2211, %v2234
          %v2302 = vadd.f32 %v2212, %v2238
          %v2303 = vadd.f32 %v2213, %v2234
          %v2304 = vadd.f32 %v2214, %v2238
          %v2305 = vadd.f32 %v2215, %v2234
          %v2306 = vadd.f32 %v2216, %v2238
          %v2307 = vadd.f32 %v2217, %v2234
          %v2308 = vadd.f32 %v2218, %v2238
          %v2309 = vadd.f32 %v2219, %v2234
          %v2310 = vadd.f32 %v2220, %v2238
          %v2311 = vadd.f32 %v2221, %v2234
          %v2312 = vadd.f32 %v2222, %v2238
          %v2313 = vadd.f32 %v2223, %v2234
          %v2314 = vadd.f32 %v2224, %v2238
          %v2315 = vadd.f32 %v2225, %v2234
          %v2316 = vadd.f32 %v2226, %v2238
          %v2317 = vadd.f32 %v2227, %v2234
          %v2318 = vadd.f32 %v2228, %v2238
          %v2319 = vld [vmem:[%s498] sm:$0xff]
          %v2320 = vld [vmem:[%s498 + $0x8] sm:$0xff]
          %v2321 = vld [vmem:[%s498 + $0x10] sm:$0xff]
          %v2322 = vld [vmem:[%s498 + $0x18] sm:$0xff]
          %v2323 = vld [vmem:[%s498 + $0x20] sm:$0xff]
          %v2324 = vld [vmem:[%s498 + $0x28] sm:$0xff]
          %v2325 = vld [vmem:[%s498 + $0x30] sm:$0xff]
          %v2326 = vld [vmem:[%s498 + $0x38] sm:$0xff]
          %v2327 = vld [vmem:[%s498 + $0x40] sm:$0xff]
          %v2328 = vld [vmem:[%s498 + $0x48] sm:$0xff]
          %v2329 = vld [vmem:[%s498 + $0x50] sm:$0xff]
          %v2330 = vld [vmem:[%s498 + $0x58] sm:$0xff]
          %v2331 = vld [vmem:[%s498 + $0x60] sm:$0xff]
          %v2332 = vld [vmem:[%s498 + $0x68] sm:$0xff]
          %v2333 = vld [vmem:[%s498 + $0x70] sm:$0xff]
          %v2334 = vld [vmem:[%s498 + $0x78] sm:$0xff]
          %v2335 = vld [vmem:[%s498 + $0x80] sm:$0xff]
          %v2336 = vld [vmem:[%s498 + $0x88] sm:$0xff]
          %v2337 = vld [vmem:[%s498 + $0x90] sm:$0xff]
          %v2338 = vld [vmem:[%s498 + $0x98] sm:$0xff]
          %v2339 = vld [vmem:[%s498 + $0xa0] sm:$0xff]
          %v2340 = vld [vmem:[%s498 + $0xa8] sm:$0xff]
          %v2341 = vld [vmem:[%s498 + $0xb0] sm:$0xff]
          %v2342 = vld [vmem:[%s498 + $0xb8] sm:$0xff]
          %v2343 = vld [vmem:[%s498 + $0xc0] sm:$0xff]
          %v2344 = vld [vmem:[%s498 + $0xc8] sm:$0xff]
          %v2345 = vld [vmem:[%s498 + $0xd0] sm:$0xff]
          %v2346 = vld [vmem:[%s498 + $0xd8] sm:$0xff]
          %v2347 = vld [vmem:[%s498 + $0xe0] sm:$0xff]
          %v2348 = vld [vmem:[%s498 + $0xe8] sm:$0xff]
          %v2349 = vld [vmem:[%s498 + $0xf0] sm:$0xff]
          %v2350 = vld [vmem:[%s498 + $0xf8] sm:$0xff]
          %v2351 = vld [vmem:[%s498 + $0x100] sm:$0xff]
          %v2352 = vld [vmem:[%s498 + $0x108] sm:$0xff]
          %v2353 = vld [vmem:[%s498 + $0x110] sm:$0xff]
          %v2354 = vld [vmem:[%s498 + $0x118] sm:$0xff]
          %v2355 = vld [vmem:[%s498 + $0x120] sm:$0xff]
          %v2356 = vld [vmem:[%s498 + $0x128] sm:$0xff]
          %v2357 = vld [vmem:[%s498 + $0x130] sm:$0xff]
          %v2358 = vld [vmem:[%s498 + $0x138] sm:$0xff]
          %v2359 = vld [vmem:[%s498 + $0x140] sm:$0xff]
          %v2360 = vld [vmem:[%s498 + $0x148] sm:$0xff]
          %v2361 = vld [vmem:[%s498 + $0x150] sm:$0xff]
          %v2362 = vld [vmem:[%s498 + $0x158] sm:$0xff]
          %v2363 = vld [vmem:[%s498 + $0x160] sm:$0xff]
          %v2364 = vld [vmem:[%s498 + $0x168] sm:$0xff]
          %v2365 = vld [vmem:[%s498 + $0x170] sm:$0xff]
          %v2366 = vld [vmem:[%s498 + $0x178] sm:$0xff]
          %v2367 = vld [vmem:[%s498 + $0x180] sm:$0xff]
          %v2368 = vld [vmem:[%s498 + $0x188] sm:$0xff]
          %v2369 = vld [vmem:[%s498 + $0x190] sm:$0xff]
          %v2370 = vld [vmem:[%s498 + $0x198] sm:$0xff]
          %v2371 = vld [vmem:[%s498 + $0x1a0] sm:$0xff]
          %v2372 = vld [vmem:[%s498 + $0x1a8] sm:$0xff]
          %v2373 = vld [vmem:[%s498 + $0x1b0] sm:$0xff]
          %v2374 = vld [vmem:[%s498 + $0x1b8] sm:$0xff]
          %v2375 = vld [vmem:[%s498 + $0x1c0] sm:$0xff]
          %v2376 = vld [vmem:[%s498 + $0x1c8] sm:$0xff]
          %v2377 = vld [vmem:[%s498 + $0x1d0] sm:$0xff]
          %v2378 = vld [vmem:[%s498 + $0x1d8] sm:$0xff]
          %v2379 = vld [vmem:[%s498 + $0x1e0] sm:$0xff]
          %v2380 = vld [vmem:[%s498 + $0x1e8] sm:$0xff]
          %v2381 = vld [vmem:[%s498 + $0x1f0] sm:$0xff]
          %v2382 = vld [vmem:[%s498 + $0x1f8] sm:$0xff]
          %v2383 = vld [vmem:[%s498 + $0x200] sm:$0xff]
          %v2384 = vld [vmem:[%s498 + $0x208] sm:$0xff]
          %v2385 = vld [vmem:[%s498 + $0x210] sm:$0xff]
          %v2386 = vld [vmem:[%s498 + $0x218] sm:$0xff]
          %v2387 = vld [vmem:[%s498 + $0x220] sm:$0xff]
          %v2388 = vld [vmem:[%s498 + $0x228] sm:$0xff]
          %v2389 = vld [vmem:[%s498 + $0x230] sm:$0xff]
          %v2390 = vld [vmem:[%s498 + $0x238] sm:$0xff]
          %v2391 = vld [vmem:[%s498 + $0x240] sm:$0xff]
          %v2392 = vld [vmem:[%s498 + $0x248] sm:$0xff]
          %v2393 = vld [vmem:[%s498 + $0x250] sm:$0xff]
          %v2394 = vld [vmem:[%s498 + $0x258] sm:$0xff]
          %v2395 = vld [vmem:[%s498 + $0x260] sm:$0x3]
          %v2396 = vld [vmem:[%s498 + $0x268] sm:$0x3]
          %v2397 = vadd.f32 %v2241, %v2319
          %v2398 = vadd.f32 %v2242, %v2320
          %v2399 = vadd.f32 %v2243, %v2321
          %v2400 = vadd.f32 %v2244, %v2322
          %v2401 = vadd.f32 %v2245, %v2323
          %v2402 = vadd.f32 %v2246, %v2324
          %v2403 = vadd.f32 %v2247, %v2325
          %v2404 = vadd.f32 %v2248, %v2326
          %v2405 = vadd.f32 %v2249, %v2327
          %v2406 = vadd.f32 %v2250, %v2328
          %v2407 = vadd.f32 %v2251, %v2329
          %v2408 = vadd.f32 %v2252, %v2330
          %v2409 = vadd.f32 %v2253, %v2331
          %v2410 = vadd.f32 %v2254, %v2332
          %v2411 = vadd.f32 %v2255, %v2333
          %v2412 = vadd.f32 %v2256, %v2334
          %v2413 = vadd.f32 %v2257, %v2335
          %v2414 = vadd.f32 %v2258, %v2336
          %v2415 = vadd.f32 %v2259, %v2337
          %v2416 = vadd.f32 %v2260, %v2338
          %v2417 = vadd.f32 %v2261, %v2339
          %v2418 = vadd.f32 %v2262, %v2340
          %v2419 = vadd.f32 %v2263, %v2341
          %v2420 = vadd.f32 %v2264, %v2342
          %v2421 = vadd.f32 %v2265, %v2343
          %v2422 = vadd.f32 %v2266, %v2344
          %v2423 = vadd.f32 %v2267, %v2345
          %v2424 = vadd.f32 %v2268, %v2346
          %v2425 = vadd.f32 %v2269, %v2347
          %v2426 = vadd.f32 %v2270, %v2348
          %v2427 = vadd.f32 %v2271, %v2349
          %v2428 = vadd.f32 %v2272, %v2350
          %v2429 = vadd.f32 %v2273, %v2351
          %v2430 = vadd.f32 %v2274, %v2352
          %v2431 = vadd.f32 %v2275, %v2353
          %v2432 = vadd.f32 %v2276, %v2354
          %v2433 = vadd.f32 %v2277, %v2355
          %v2434 = vadd.f32 %v2278, %v2356
          %v2435 = vadd.f32 %v2279, %v2357
          %v2436 = vadd.f32 %v2280, %v2358
          %v2437 = vadd.f32 %v2281, %v2359
          %v2438 = vadd.f32 %v2282, %v2360
          %v2439 = vadd.f32 %v2283, %v2361
          %v2440 = vadd.f32 %v2284, %v2362
          %v2441 = vadd.f32 %v2285, %v2363
          %v2442 = vadd.f32 %v2286, %v2364
          %v2443 = vadd.f32 %v2287, %v2365
          %v2444 = vadd.f32 %v2288, %v2366
          %v2445 = vadd.f32 %v2289, %v2367
          %v2446 = vadd.f32 %v2290, %v2368
          %v2447 = vadd.f32 %v2291, %v2369
          %v2448 = vadd.f32 %v2292, %v2370
          %v2449 = vadd.f32 %v2293, %v2371
          %v2450 = vadd.f32 %v2294, %v2372
          %v2451 = vadd.f32 %v2295, %v2373
          %v2452 = vadd.f32 %v2296, %v2374
          %v2453 = vadd.f32 %v2297, %v2375
          %v2454 = vadd.f32 %v2298, %v2376
          %v2455 = vadd.f32 %v2299, %v2377
          %v2456 = vadd.f32 %v2300, %v2378
          %v2457 = vadd.f32 %v2301, %v2379
          %v2458 = vadd.f32 %v2302, %v2380
          %v2459 = vadd.f32 %v2303, %v2381
          %v2460 = vadd.f32 %v2304, %v2382
          %v2461 = vadd.f32 %v2305, %v2383
          %v2462 = vadd.f32 %v2306, %v2384
          %v2463 = vadd.f32 %v2307, %v2385
          %v2464 = vadd.f32 %v2308, %v2386
          %v2465 = vadd.f32 %v2309, %v2387
          %v2466 = vadd.f32 %v2310, %v2388
          %v2467 = vadd.f32 %v2311, %v2389
          %v2468 = vadd.f32 %v2312, %v2390
          %v2469 = vadd.f32 %v2313, %v2391
          %v2470 = vadd.f32 %v2314, %v2392
          %v2471 = vadd.f32 %v2315, %v2393
          %v2472 = vadd.f32 %v2316, %v2394
          %v2473 = vadd.f32 %v2317, %v2395
          %v2474 = vadd.f32 %v2318, %v2396
          %2475 = vst [vmem:[%s510] sm:$0xff] %v2397
          %2476 = vst [vmem:[%s510 + $0x8] sm:$0xff] %v2398
          %2477 = vst [vmem:[%s510 + $0x10] sm:$0xff] %v2399
          %2478 = vst [vmem:[%s510 + $0x18] sm:$0xff] %v2400
          %2479 = vst [vmem:[%s510 + $0x20] sm:$0xff] %v2401
          %2480 = vst [vmem:[%s510 + $0x28] sm:$0xff] %v2402
          %2481 = vst [vmem:[%s510 + $0x30] sm:$0xff] %v2403
          %2482 = vst [vmem:[%s510 + $0x38] sm:$0xff] %v2404
          %2483 = vst [vmem:[%s510 + $0x40] sm:$0xff] %v2405
          %2484 = vst [vmem:[%s510 + $0x48] sm:$0xff] %v2406
          %2485 = vst [vmem:[%s510 + $0x50] sm:$0xff] %v2407
          %2486 = vst [vmem:[%s510 + $0x58] sm:$0xff] %v2408
          %2487 = vst [vmem:[%s510 + $0x60] sm:$0xff] %v2409
          %2488 = vst [vmem:[%s510 + $0x68] sm:$0xff] %v2410
          %2489 = vst [vmem:[%s510 + $0x70] sm:$0xff] %v2411
          %2490 = vst [vmem:[%s510 + $0x78] sm:$0xff] %v2412
          %2491 = vst [vmem:[%s510 + $0x80] sm:$0xff] %v2413
          %2492 = vst [vmem:[%s510 + $0x88] sm:$0xff] %v2414
          %2493 = vst [vmem:[%s510 + $0x90] sm:$0xff] %v2415
          %2494 = vst [vmem:[%s510 + $0x98] sm:$0xff] %v2416
          %2495 = vst [vmem:[%s510 + $0xa0] sm:$0xff] %v2417
          %2496 = vst [vmem:[%s510 + $0xa8] sm:$0xff] %v2418
          %2497 = vst [vmem:[%s510 + $0xb0] sm:$0xff] %v2419
          %2498 = vst [vmem:[%s510 + $0xb8] sm:$0xff] %v2420
          %2499 = vst [vmem:[%s510 + $0xc0] sm:$0xff] %v2421
          %2500 = vst [vmem:[%s510 + $0xc8] sm:$0xff] %v2422
          %2501 = vst [vmem:[%s510 + $0xd0] sm:$0xff] %v2423
          %2502 = vst [vmem:[%s510 + $0xd8] sm:$0xff] %v2424
          %2503 = vst [vmem:[%s510 + $0xe0] sm:$0xff] %v2425
          %2504 = vst [vmem:[%s510 + $0xe8] sm:$0xff] %v2426
          %2505 = vst [vmem:[%s510 + $0xf0] sm:$0xff] %v2427
          %2506 = vst [vmem:[%s510 + $0xf8] sm:$0xff] %v2428
          %2507 = vst [vmem:[%s510 + $0x100] sm:$0xff] %v2429
          %2508 = vst [vmem:[%s510 + $0x108] sm:$0xff] %v2430
          %2509 = vst [vmem:[%s510 + $0x110] sm:$0xff] %v2431
          %2510 = vst [vmem:[%s510 + $0x118] sm:$0xff] %v2432
          %2511 = vst [vmem:[%s510 + $0x120] sm:$0xff] %v2433
          %2512 = vst [vmem:[%s510 + $0x128] sm:$0xff] %v2434
          %2513 = vst [vmem:[%s510 + $0x130] sm:$0xff] %v2435
          %2514 = vst [vmem:[%s510 + $0x138] sm:$0xff] %v2436
          %2515 = vst [vmem:[%s510 + $0x140] sm:$0xff] %v2437
          %2516 = vst [vmem:[%s510 + $0x148] sm:$0xff] %v2438
          %2517 = vst [vmem:[%s510 + $0x150] sm:$0xff] %v2439
          %2518 = vst [vmem:[%s510 + $0x158] sm:$0xff] %v2440
          %2519 = vst [vmem:[%s510 + $0x160] sm:$0xff] %v2441
          %2520 = vst [vmem:[%s510 + $0x168] sm:$0xff] %v2442
          %2521 = vst [vmem:[%s510 + $0x170] sm:$0xff] %v2443
          %2522 = vst [vmem:[%s510 + $0x178] sm:$0xff] %v2444
          %2523 = vst [vmem:[%s510 + $0x180] sm:$0xff] %v2445
          %2524 = vst [vmem:[%s510 + $0x188] sm:$0xff] %v2446
          %2525 = vst [vmem:[%s510 + $0x190] sm:$0xff] %v2447
          %2526 = vst [vmem:[%s510 + $0x198] sm:$0xff] %v2448
          %2527 = vst [vmem:[%s510 + $0x1a0] sm:$0xff] %v2449
          %2528 = vst [vmem:[%s510 + $0x1a8] sm:$0xff] %v2450
          %2529 = vst [vmem:[%s510 + $0x1b0] sm:$0xff] %v2451
          %2530 = vst [vmem:[%s510 + $0x1b8] sm:$0xff] %v2452
          %2531 = vst [vmem:[%s510 + $0x1c0] sm:$0xff] %v2453
          %2532 = vst [vmem:[%s510 + $0x1c8] sm:$0xff] %v2454
          %2533 = vst [vmem:[%s510 + $0x1d0] sm:$0xff] %v2455
          %2534 = vst [vmem:[%s510 + $0x1d8] sm:$0xff] %v2456
          %2535 = vst [vmem:[%s510 + $0x1e0] sm:$0xff] %v2457
          %2536 = vst [vmem:[%s510 + $0x1e8] sm:$0xff] %v2458
          %2537 = vst [vmem:[%s510 + $0x1f0] sm:$0xff] %v2459
          %2538 = vst [vmem:[%s510 + $0x1f8] sm:$0xff] %v2460
          %2539 = vst [vmem:[%s510 + $0x200] sm:$0xff] %v2461
          %2540 = vst [vmem:[%s510 + $0x208] sm:$0xff] %v2462
          %2541 = vst [vmem:[%s510 + $0x210] sm:$0xff] %v2463
          %2542 = vst [vmem:[%s510 + $0x218] sm:$0xff] %v2464
          %2543 = vst [vmem:[%s510 + $0x220] sm:$0xff] %v2465
          %2544 = vst [vmem:[%s510 + $0x228] sm:$0xff] %v2466
          %2545 = vst [vmem:[%s510 + $0x230] sm:$0xff] %v2467
          %2546 = vst [vmem:[%s510 + $0x238] sm:$0xff] %v2468
          %2547 = vst [vmem:[%s510 + $0x240] sm:$0xff] %v2469
          %2548 = vst [vmem:[%s510 + $0x248] sm:$0xff] %v2470
          %2549 = vst [vmem:[%s510 + $0x250] sm:$0xff] %v2471
          %2550 = vst [vmem:[%s510 + $0x258] sm:$0xff] %v2472
          %2551 = vst [vmem:[%s510 + $0x260] sm:$0x3] %v2473
          %2552 = vst [vmem:[%s510 + $0x268] sm:$0x3] %v2474
        $region67: #{model_forward.11} parent=54 // pred_fallthru
          _
        %s2553 = smul.u32 39, %s20
        %s2554 = smul.u32 2, %s21
        %p2555 = scmp.lt.s32.totalorder %s2553, 38
        %s2556 = scalar_select %p2555, %s2553, 38
        %p2557 = scmp.lt.s32.totalorder %s2554, 1
        %s2558 = scalar_select %p2557, %s2554, 1
        %s2559 = smul.addr %s2556, 2
        %s2560 = sadd.s32 %s2558, %s2559
        %s2561 = smul.addr %s2560, 8
        %s2562 = scalar_lea.vmem %s4, %s2561
        // Predicated region
        $region68: #{model_forward.11} parent=54 // pred_check
          %p2563 = pneg %p164
        $region69: #{model_forward.11} parent=54 // pred_check_branch
          %2565 = sbr.rel (%p2563) target = $region71
        $region70: #{model_forward.11} parent=54 // pred_region
          %s2566 = smul.u32 39, %s20
          %s2567 = smul.u32 2, %s21
        $region71: #{model_forward.11} parent=54 // pred_fallthru
          _
        // Predicated region
        $region72: #{model_forward.11} parent=54 // pred_check
          %p2568 = pneg %p164
        $region73: #{model_forward.11} parent=54 // pred_check_branch
          %2570 = sbr.rel (%p2568) target = $region75
        $region74: #{model_forward.11} parent=54 // pred_region
          %s2571 = smul.u32 39, %s20
          %s2572 = smul.u32 2, %s21
          %p2573 = scmp.lt.s32.totalorder %s2571, 38
          %s2574 = scalar_select %p2573, %s2571, 38
          %p2575 = scmp.lt.s32.totalorder %s2572, 1
          %s2576 = scalar_select %p2575, %s2572, 1
          %s2577 = smul.addr %s2574, 2
          %s2578 = sadd.s32 %s2576, %s2577
          %s2579 = smul.addr %s2578, 8
          %s2580 = scalar_lea.vmem %s4, %s2579
        $region75: #{model_forward.11} parent=54 // pred_fallthru
          _
      $region55: #{model_forward.11} parent=5 // pred_fallthru
        _
      %p2581 = scmp.le.s32.totalorder 2, %s10
      // Predicated region
      $region76: #{model_forward.11} parent=5 // pred_check
        %p2582 = pneg %p2581
      $region77: #{model_forward.11} parent=5 // pred_check_branch
        %2584 = sbr.rel (%p2582) target = $region79
      $region78: #{model_forward.11} parent=5 // pred_region
        %s2585 = ssub.s32 %s10, 2
      $region79: #{model_forward.11} parent=5 // pred_fallthru
        _
    $region6: #{model_forward.11} parent=1 // loop_footer
      %s14 = sadd.s32 1, %s10
    $region7: #{model_forward.11} parent=1 // loop_footer_branch
      %9 = sbr.rel target = $region3
    $region8: #{model_forward.11} parent=1 // loop_exit
      _

</llo_original>
